<compile_context>
chip_gen: v7x
topology: tpu7x:2x2x1
jax: 0.10.0
libtpu: 0.0.40
codegen_flags: <defaults>
</compile_context>

<pallas_src>
import functools

import jax
import jax.numpy as jnp
from jax.experimental import pallas as pl
from jax.experimental.pallas import tpu as pltpu


def _fused_kernel(x1_ref, x2_ref,
                  bn1_scale_ref, bn1_shift_ref,
                  w_ref, bn2_scale_ref, bn2_shift_ref,
                  o_ref):
    # BN1 (folded, per input channel == per row), residual add, ReLU.
    # Kept in f32 on the VPU; cast to bf16 only for the MXU feed.
    x = x1_ref[...] * bn1_scale_ref[...] + bn1_shift_ref[...]
    x = jnp.maximum(x + x2_ref[...], 0.0).astype(jnp.bfloat16)
    # 1x1 conv: (tn, Cin) @ (Cin, HWp) on the MXU, f32 accumulation.
    y = jnp.dot(w_ref[...], x, preferred_element_type=jnp.float32)
    # BN2 (folded, per output channel == per row) on the f32 accumulator.
    o_ref[...] = y * bn2_scale_ref[...] + bn2_shift_ref[...]


def prepare_params(conv_w,
                   bn1_gamma, bn1_beta, bn1_mean, bn1_var,
                   bn2_gamma, bn2_beta, bn2_mean, bn2_var,
                   eps=1e-5):
    """One-time packing (call OUTSIDE the hot path).

    conv_w: (Cout, Cin, 1, 1) f32.  Returns the bf16 (Cout, Cin) weight in its
    natural layout (no transpose) plus folded BN vectors.
    """
    Cout, Cin = conv_w.shape[0], conv_w.shape[1]
    w = conv_w.reshape(Cout, Cin).astype(jnp.bfloat16)

    s1 = bn1_gamma / jnp.sqrt(bn1_var + eps)
    bn1_scale = s1.reshape(Cin, 1).astype(jnp.float32)
    bn1_shift = (bn1_beta - bn1_mean * s1).reshape(Cin, 1).astype(jnp.float32)

    s2 = bn2_gamma / jnp.sqrt(bn2_var + eps)
    bn2_scale = s2.reshape(Cout, 1).astype(jnp.float32)
    bn2_shift = (bn2_beta - bn2_mean * s2).reshape(Cout, 1).astype(jnp.float32)
    return w, bn1_scale, bn1_shift, bn2_scale, bn2_shift


def _pick_weight_tile(cout):
    """Cout tile size per generation: larger tiles (fewer pipeline steps) on
    single-TensorCore v5e/v6e; 256 keeps >=2 steps per core on dual-TC parts."""
    tn = 256
    try:
        kind = jax.devices()[0].device_kind.lower()
        if ("v5 lite" in kind) or ("v5e" in kind) or ("v6" in kind):
            tn = 512
    except Exception:
        pass
    while tn > 8 and cout % tn != 0:
        tn //= 2
    return tn


def build_fused_forward(tn):
    @jax.jit
    def fused_forward(x317, x320, w, bn1_scale, bn1_shift, bn2_scale, bn2_shift):
        N, Cin, H, W = x317.shape
        Cout = w.shape[0]
        assert N == 1, "kernel specialised for N == 1 (module spec)"
        # TODO(synk): N > 1 would need a (N,Cin,H,W)->(Cin,N*H*W) transpose; the
        # module only ever runs with batch 1 so that path is not implemented.
        assert Cout % tn == 0 and Cin % 8 == 0

        HW = H * W
        HWp = ((HW + 127) // 128) * 128          # pad spatial dim to 128 lanes

        # NCHW with N==1 is already (Cin, HW); only a lane pad is needed.
        x1 = x317.reshape(Cin, HW)
        x2 = x320.reshape(Cin, HW)
        if HWp != HW:
            x1 = jnp.pad(x1, ((0, 0), (0, HWp - HW)))
            x2 = jnp.pad(x2, ((0, 0), (0, HWp - HW)))

        grid = (Cout // tn,)
        out = pl.pallas_call(
            _fused_kernel,
            out_shape=jax.ShapeDtypeStruct((Cout, HWp), jnp.float32),
            grid=grid,
            in_specs=[
                pl.BlockSpec((Cin, HWp), lambda j: (0, 0)),   # x1 (resident)
                pl.BlockSpec((Cin, HWp), lambda j: (0, 0)),   # x2 (resident)
                pl.BlockSpec((Cin, 1),   lambda j: (0, 0)),   # bn1 scale
                pl.BlockSpec((Cin, 1),   lambda j: (0, 0)),   # bn1 shift
                pl.BlockSpec((tn, Cin),  lambda j: (j, 0)),   # weight row tile (streamed)
                pl.BlockSpec((tn, 1),    lambda j: (j, 0)),   # bn2 scale tile
                pl.BlockSpec((tn, 1),    lambda j: (j, 0)),   # bn2 shift tile
            ],
            out_specs=pl.BlockSpec((tn, HWp), lambda j: (j, 0)),
            compiler_params=pltpu.CompilerParams(
                dimension_semantics=("parallel",),
                vmem_limit_bytes=32 * 1024 * 1024,
            ),
        )(x1, x2, bn1_scale, bn1_shift, w, bn2_scale, bn2_shift)

        # (Cout, HWp) -> drop lane padding -> NCHW (no transpose needed)
        return out[:, :HW].reshape(1, Cout, H, W)

    return fused_forward


def _reference(x317, x320, conv_w,
               bn1_gamma, bn1_beta, bn1_mean, bn1_var,
               bn2_gamma, bn2_beta, bn2_mean, bn2_var, eps=1e-5):
    def bn(x, g, b, m, v):
        g = g.reshape(1, -1, 1, 1); b = b.reshape(1, -1, 1, 1)
        m = m.reshape(1, -1, 1, 1); v = v.reshape(1, -1, 1, 1)
        return (x - m) / jnp.sqrt(v + eps) * g + b
    y = bn(x317, bn1_gamma, bn1_beta, bn1_mean, bn1_var)
    y = jnp.maximum(y + x320, 0.0)
    y = jax.lax.conv_general_dilated(y, conv_w, (1, 1), 'VALID',
                                     dimension_numbers=('NCHW', 'OIHW', 'NCHW'))
    return bn(y, bn2_gamma, bn2_beta, bn2_mean, bn2_var)


if __name__ == "__main__":
    # shapes from the module: x317, x320 : [1, 2048, 7, 7]; conv 2048 -> 1024, 1x1
    N, Cin, H, W = 1, 2048, 7, 7
    Cout = 1024

    key = jax.random.PRNGKey(0)
    ks = jax.random.split(key, 10)
    x317 = jax.random.normal(ks[0], (N, Cin, H, W), jnp.float32)
    x320 = jax.random.normal(ks[1], (N, Cin, H, W), jnp.float32)
    conv_w = jax.random.normal(ks[2], (Cout, Cin, 1, 1), jnp.float32) * 0.02

    bn1_gamma = jax.random.normal(ks[3], (Cin,), jnp.float32) * 0.1 + 1.0
    bn1_beta = jax.random.normal(ks[4], (Cin,), jnp.float32) * 0.1
    bn1_mean = jax.random.normal(ks[5], (Cin,), jnp.float32) * 0.1
    bn1_var = jax.random.uniform(ks[6], (Cin,), jnp.float32, 0.5, 1.5)

    bn2_gamma = jax.random.normal(ks[7], (Cout,), jnp.float32) * 0.1 + 1.0
    bn2_beta = jax.random.normal(ks[8], (Cout,), jnp.float32) * 0.1
    bn2_mean = jnp.zeros((Cout,), jnp.float32)
    bn2_var = jax.random.uniform(ks[9], (Cout,), jnp.float32, 0.5, 1.5)

    # One-time parameter packing (outside the hot path).
    packed = prepare_params(conv_w,
                            bn1_gamma, bn1_beta, bn1_mean, bn1_var,
                            bn2_gamma, bn2_beta, bn2_mean, bn2_var)
    packed = jax.tree_util.tree_map(jax.block_until_ready, packed)

    tn = _pick_weight_tile(Cout)
    fused_forward = build_fused_forward(tn)

    out = fused_forward(x317, x320, *packed)
    out = jax.block_until_ready(out)

    ref = _reference(x317, x320, conv_w,
                     bn1_gamma, bn1_beta, bn1_mean, bn1_var,
                     bn2_gamma, bn2_beta, bn2_mean, bn2_var)
    ref = jax.block_until_ready(ref)

    assert out.shape == (N, Cout, H, W)
    # Tolerance reflects bf16 weight / post-ReLU-activation quantization only;
    # accumulation and both BN applications stay in f32.
    assert jnp.allclose(out, ref, atol=2e-2, rtol=2e-2), (
        "mismatch vs reference, max abs err = "
        f"{float(jnp.max(jnp.abs(out - ref)))}")
    print("KERNEL_OK")
</pallas_src>

<mosaic_0001>
module attributes {stable_mosaic.version = 11 : i64} {
  func.func @_fused_kernel(%arg0: i32, %arg1: memref<2048x128xf32, #tpu.memory_space<vmem>>, %arg2: memref<2048x128xf32, #tpu.memory_space<vmem>>, %arg3: memref<2048x1xf32, #tpu.memory_space<vmem>>, %arg4: memref<2048x1xf32, #tpu.memory_space<vmem>>, %arg5: memref<256x2048xbf16, #tpu.memory_space<vmem>>, %arg6: memref<256x1xf32, #tpu.memory_space<vmem>>, %arg7: memref<256x1xf32, #tpu.memory_space<vmem>>, %arg8: memref<256x128xf32, #tpu.memory_space<vmem>>) attributes {dimension_semantics = [#tpu.dimension_semantics<parallel>], iteration_bounds = array<i64: 4>, scalar_prefetch = 0 : i64, scratch_operands = 0 : i64, tpu.core_type = #tpu.core_type<tc>, window_params = [{pipeline_mode = #tpu.pipeline_mode<synchronous>, transform_indices = @transform_0, window_bounds = array<i64: 2048, 128>}, {pipeline_mode = #tpu.pipeline_mode<synchronous>, transform_indices = @transform_1, window_bounds = array<i64: 2048, 128>}, {pipeline_mode = #tpu.pipeline_mode<synchronous>, transform_indices = @transform_2, window_bounds = array<i64: 2048, 1>}, {pipeline_mode = #tpu.pipeline_mode<synchronous>, transform_indices = @transform_3, window_bounds = array<i64: 2048, 1>}, {transform_indices = @transform_4, window_bounds = array<i64: 256, 2048>}, {transform_indices = @transform_5, window_bounds = array<i64: 256, 1>}, {transform_indices = @transform_6, window_bounds = array<i64: 256, 1>}, {transform_indices = @transform_7, window_bounds = array<i64: 256, 128>}]} {
    %c0 = arith.constant 0 : index
    %c0_0 = arith.constant 0 : index
    %0 = vector.load %arg1[%c0, %c0_0] : memref<2048x128xf32, #tpu.memory_space<vmem>>, vector<2048x128xf32>
    %c0_1 = arith.constant 0 : index
    %c0_2 = arith.constant 0 : index
    %1 = vector.load %arg3[%c0_1, %c0_2] : memref<2048x1xf32, #tpu.memory_space<vmem>>, vector<2048x1xf32>
    %2 = vector.broadcast %1 : vector<2048x1xf32> to vector<2048x128xf32>
    %3 = arith.mulf %0, %2 : vector<2048x128xf32>
    %c0_3 = arith.constant 0 : index
    %c0_4 = arith.constant 0 : index
    %4 = vector.load %arg4[%c0_3, %c0_4] : memref<2048x1xf32, #tpu.memory_space<vmem>>, vector<2048x1xf32>
    %5 = vector.broadcast %4 : vector<2048x1xf32> to vector<2048x128xf32>
    %6 = arith.addf %3, %5 : vector<2048x128xf32>
    %c0_5 = arith.constant 0 : index
    %c0_6 = arith.constant 0 : index
    %7 = vector.load %arg2[%c0_5, %c0_6] : memref<2048x128xf32, #tpu.memory_space<vmem>>, vector<2048x128xf32>
    %8 = arith.addf %6, %7 : vector<2048x128xf32>
    %cst = arith.constant 0.000000e+00 : f32
    %9 = vector.broadcast %cst : f32 to vector<2048x128xf32>
    %10 = arith.maximumf %8, %9 : vector<2048x128xf32>
    %11 = arith.truncf %10 : vector<2048x128xf32> to vector<2048x128xbf16>
    %c0_7 = arith.constant 0 : index
    %c0_8 = arith.constant 0 : index
    %12 = vector.load %arg5[%c0_7, %c0_8] : memref<256x2048xbf16, #tpu.memory_space<vmem>>, vector<256x2048xbf16>
    %cst_9 = arith.constant dense<0.000000e+00> : vector<256x128xf32>
    %13 = tpu.matmul %12, %11, %cst_9 {dimension_numbers = #tpu.dot_dimension_numbers<[1], [0], [0], [1], [0, 0, 1, 1], [], []>} : vector<256x2048xbf16>, vector<2048x128xbf16>, vector<256x128xf32> -> vector<256x128xf32>
    %c0_10 = arith.constant 0 : index
    %c0_11 = arith.constant 0 : index
    %14 = vector.load %arg6[%c0_10, %c0_11] : memref<256x1xf32, #tpu.memory_space<vmem>>, vector<256x1xf32>
    %15 = vector.broadcast %14 : vector<256x1xf32> to vector<256x128xf32>
    %16 = arith.mulf %13, %15 : vector<256x128xf32>
    %c0_12 = arith.constant 0 : index
    %c0_13 = arith.constant 0 : index
    %17 = vector.load %arg7[%c0_12, %c0_13] : memref<256x1xf32, #tpu.memory_space<vmem>>, vector<256x1xf32>
    %18 = vector.broadcast %17 : vector<256x1xf32> to vector<256x128xf32>
    %19 = arith.addf %16, %18 : vector<256x128xf32>
    %c0_14 = arith.constant 0 : index
    %c0_15 = arith.constant 0 : index
    %20 = vector.load %arg8[%c0_14, %c0_15] : memref<256x128xf32, #tpu.memory_space<vmem>>, vector<256x128xf32>
    tpu.vector_store %arg8[%c0_14, %c0_15], %19 {strides = array<i32>} : memref<256x128xf32, #tpu.memory_space<vmem>>, vector<256x128xf32>,
    return
  }
  func.func @transform_0(%arg0: i32) -> (i32, i32) {
    %c0_i32 = arith.constant 0 : i32
    %c0_i32_0 = arith.constant 0 : i32
    %c0_i32_1 = arith.constant 0 : i32
    return %c0_i32, %c0_i32_0 : i32, i32
  }
  func.func @transform_1(%arg0: i32) -> (i32, i32) {
    %c0_i32 = arith.constant 0 : i32
    %c0_i32_0 = arith.constant 0 : i32
    %c0_i32_1 = arith.constant 0 : i32
    return %c0_i32, %c0_i32_0 : i32, i32
  }
  func.func @transform_2(%arg0: i32) -> (i32, i32) {
    %c0_i32 = arith.constant 0 : i32
    %c0_i32_0 = arith.constant 0 : i32
    %c0_i32_1 = arith.constant 0 : i32
    return %c0_i32, %c0_i32_0 : i32, i32
  }
  func.func @transform_3(%arg0: i32) -> (i32, i32) {
    %c0_i32 = arith.constant 0 : i32
    %c0_i32_0 = arith.constant 0 : i32
    %c0_i32_1 = arith.constant 0 : i32
    return %c0_i32, %c0_i32_0 : i32, i32
  }
  func.func @transform_4(%arg0: i32) -> (i32, i32) {
    %c0_i32 = arith.constant 0 : i32
    %c0_i32_0 = arith.constant 0 : i32
    return %arg0, %c0_i32 : i32, i32
  }
  func.func @transform_5(%arg0: i32) -> (i32, i32) {
    %c0_i32 = arith.constant 0 : i32
    %c0_i32_0 = arith.constant 0 : i32
    return %arg0, %c0_i32 : i32, i32
  }
  func.func @transform_6(%arg0: i32) -> (i32, i32) {
    %c0_i32 = arith.constant 0 : i32
    %c0_i32_0 = arith.constant 0 : i32
    return %arg0, %c0_i32 : i32, i32
  }
  func.func @transform_7(%arg0: i32) -> (i32, i32) {
    %c0_i32 = arith.constant 0 : i32
    %c0_i32_0 = arith.constant 0 : i32
    return %arg0, %c0_i32 : i32, i32
  }
}

</mosaic_0001>

<llo_original>
// kernel: fused_forward.1
$region0: #{fused_forward.1}
  #allocation0 [shape = 'u32[]', space=smem, size = 0x4, offset = 0x4, fixed_abs, tag = 'smem constant byte address 0x4 - core index']
  #allocation1 [shape = 'u32[144,128]{1,0:T(1,128)}', space=vmem, size = 0x12000, scoped, tag = 'internal scratch']
  %s0 = inlined_call_operand.vmem [shape: f32[2048,128], index: 0, kind: input, shape index: {}]
  %s1 = inlined_call_operand.vmem [shape: f32[2048,128], index: 1, kind: input, shape index: {}]
  %s2 = inlined_call_operand.vmem [shape: f32[2048,1], index: 2, kind: input, shape index: {}]
  %s3 = inlined_call_operand.vmem [shape: f32[2048,1], index: 3, kind: input, shape index: {}]
  %s4 = inlined_call_operand.vmem [shape: bf16[1024,2048], index: 4, kind: input, shape index: {}]
  %s5 = inlined_call_operand.vmem [shape: f32[1024,1], index: 5, kind: input, shape index: {}]
  %s6 = inlined_call_operand.vmem [shape: f32[1024,1], index: 6, kind: input, shape index: {}]
  %s7 = inlined_call_operand.vmem [shape: f32[1024,128], index: 7, kind: output, shape index: {}]
  %s8 = sld [smem:[#allocation0]]
  $region61: #{fused_forward.1} parent=0
    _
  %s10 = ssub.s32 1, %s8
  %s11 = scalar_select 0, %s10, %s8
  loop: start=0, step=1, limit=6
  $region2: #{fused_forward.1} parent=0 // loop_pre_header
    _
  $region3: #{fused_forward.1} parent=0 // loop_header
    %s13 = sphi 0, %s17
    %p14 = scmp.ge.s32.totalorder %s13, 6
    %s21 = sphi 0, %s21
    %s23 = sphi 0, %s21
    %s24 = sphi 0, %s23
    %s38 = sphi 0, %s24
    %s42 = sphi 0, %s42
    %s44 = sphi 0, %s42
    %s45 = sphi 0, %s44
    %s59 = sphi 0, %s45
    %s63 = sphi 0, %s63
    %s65 = sphi 0, %s63
    %s66 = sphi 0, %s65
    %s80 = sphi 0, %s66
    %s84 = sphi 0, %s84
    %s86 = sphi 0, %s84
    %s87 = sphi 0, %s86
    %s101 = sphi 0, %s87
    %s107 = sphi 0, %s109
    %s110 = sphi 0, %s107
    %s111 = sphi 0, %s110
    %s127 = sphi 0, %s111
    %s133 = sphi 0, %s135
    %s136 = sphi 0, %s133
    %s137 = sphi 0, %s136
    %s153 = sphi 0, %s137
    %s159 = sphi 0, %s161
    %s162 = sphi 0, %s159
    %s163 = sphi 0, %s162
    %s179 = sphi 0, %s163
    %s185 = sphi 0, %s187
    %s188 = sphi 0, %s185
    %s189 = sphi 0, %s188
    %s205 = sphi 0, %s189
  $region4: #{fused_forward.1} parent=0 // loop_header_branch
    %16 = sbr.rel (%p14) target = $region8
  $region5: #{fused_forward.1} parent=0 // loop_body
    %s18 = ssub.s32 %s13, 1
    %s19 = ssub.s32 %s13, 2
    %s20 = sadd.s32 %s13, 1
    %s22 = sadd.s32 %s21, 1
    %p25 = scmp.eq.s32.totalorder %s13, 3
    %p26 = scmp.ne.s32.totalorder %s21, %s23
    %p27 = scmp.eq.s32.totalorder %s13, 0
    %p28 = por %p26, %p27
    %p29 = scmp.ne.s32.totalorder %s21, %s23
    %p30 = scmp.eq.s32.totalorder %s18, 3
    %p31 = por %p29, %p30
    %p32 = scmp.ne.s32.totalorder %s23, %s24
    %p33 = scmp.eq.s32.totalorder %s18, 0
    %p34 = por %p32, %p33
    %p35 = scmp.ne.s32.totalorder %s23, %s24
    %p36 = scmp.eq.s32.totalorder %s19, 3
    %p37 = por %p35, %p36
    %p39 = scmp.ne.s32.totalorder %s24, %s38
    %p40 = scmp.eq.s32.totalorder %s19, 0
    %p41 = por %p39, %p40
    %s43 = sadd.s32 %s42, 1
    %p46 = scmp.eq.s32.totalorder %s13, 3
    %p47 = scmp.ne.s32.totalorder %s42, %s44
    %p48 = scmp.eq.s32.totalorder %s13, 0
    %p49 = por %p47, %p48
    %p50 = scmp.ne.s32.totalorder %s42, %s44
    %p51 = scmp.eq.s32.totalorder %s18, 3
    %p52 = por %p50, %p51
    %p53 = scmp.ne.s32.totalorder %s44, %s45
    %p54 = scmp.eq.s32.totalorder %s18, 0
    %p55 = por %p53, %p54
    %p56 = scmp.ne.s32.totalorder %s44, %s45
    %p57 = scmp.eq.s32.totalorder %s19, 3
    %p58 = por %p56, %p57
    %p60 = scmp.ne.s32.totalorder %s45, %s59
    %p61 = scmp.eq.s32.totalorder %s19, 0
    %p62 = por %p60, %p61
    %s64 = sadd.s32 %s63, 1
    %p67 = scmp.eq.s32.totalorder %s13, 3
    %p68 = scmp.ne.s32.totalorder %s63, %s65
    %p69 = scmp.eq.s32.totalorder %s13, 0
    %p70 = por %p68, %p69
    %p71 = scmp.ne.s32.totalorder %s63, %s65
    %p72 = scmp.eq.s32.totalorder %s18, 3
    %p73 = por %p71, %p72
    %p74 = scmp.ne.s32.totalorder %s65, %s66
    %p75 = scmp.eq.s32.totalorder %s18, 0
    %p76 = por %p74, %p75
    %p77 = scmp.ne.s32.totalorder %s65, %s66
    %p78 = scmp.eq.s32.totalorder %s19, 3
    %p79 = por %p77, %p78
    %p81 = scmp.ne.s32.totalorder %s66, %s80
    %p82 = scmp.eq.s32.totalorder %s19, 0
    %p83 = por %p81, %p82
    %s85 = sadd.s32 %s84, 1
    %p88 = scmp.eq.s32.totalorder %s13, 3
    %p89 = scmp.ne.s32.totalorder %s84, %s86
    %p90 = scmp.eq.s32.totalorder %s13, 0
    %p91 = por %p89, %p90
    %p92 = scmp.ne.s32.totalorder %s84, %s86
    %p93 = scmp.eq.s32.totalorder %s18, 3
    %p94 = por %p92, %p93
    %p95 = scmp.ne.s32.totalorder %s86, %s87
    %p96 = scmp.eq.s32.totalorder %s18, 0
    %p97 = por %p95, %p96
    %p98 = scmp.ne.s32.totalorder %s86, %s87
    %p99 = scmp.eq.s32.totalorder %s19, 3
    %p100 = por %p98, %p99
    %p102 = scmp.ne.s32.totalorder %s87, %s101
    %p103 = scmp.eq.s32.totalorder %s19, 0
    %p104 = por %p102, %p103
    %s105 = ssub.s32 %s13, %s20
    %p106 = scmp.eq.s32.totalorder %s105, 0
    %s108 = sadd.s32 %s107, 1
    %s109 = scalar_select %p106, %s107, %s108
    %p112 = pneg %p106
    %p113 = scmp.eq.s32.totalorder %s13, 3
    %p114 = por %p112, %p113
    %p115 = scmp.ne.s32.totalorder %s107, %s110
    %p116 = scmp.eq.s32.totalorder %s13, 0
    %p117 = por %p115, %p116
    %p118 = scmp.ne.s32.totalorder %s107, %s110
    %p119 = scmp.eq.s32.totalorder %s18, 3
    %p120 = por %p118, %p119
    %p121 = scmp.ne.s32.totalorder %s110, %s111
    %p122 = scmp.eq.s32.totalorder %s18, 0
    %p123 = por %p121, %p122
    %p124 = scmp.ne.s32.totalorder %s110, %s111
    %p125 = scmp.eq.s32.totalorder %s19, 3
    %p126 = por %p124, %p125
    %p128 = scmp.ne.s32.totalorder %s111, %s127
    %p129 = scmp.eq.s32.totalorder %s19, 0
    %p130 = por %p128, %p129
    %s131 = ssub.s32 %s13, %s20
    %p132 = scmp.eq.s32.totalorder %s131, 0
    %s134 = sadd.s32 %s133, 1
    %s135 = scalar_select %p132, %s133, %s134
    %p138 = pneg %p132
    %p139 = scmp.eq.s32.totalorder %s13, 3
    %p140 = por %p138, %p139
    %p141 = scmp.ne.s32.totalorder %s133, %s136
    %p142 = scmp.eq.s32.totalorder %s13, 0
    %p143 = por %p141, %p142
    %p144 = scmp.ne.s32.totalorder %s133, %s136
    %p145 = scmp.eq.s32.totalorder %s18, 3
    %p146 = por %p144, %p145
    %p147 = scmp.ne.s32.totalorder %s136, %s137
    %p148 = scmp.eq.s32.totalorder %s18, 0
    %p149 = por %p147, %p148
    %p150 = scmp.ne.s32.totalorder %s136, %s137
    %p151 = scmp.eq.s32.totalorder %s19, 3
    %p152 = por %p150, %p151
    %p154 = scmp.ne.s32.totalorder %s137, %s153
    %p155 = scmp.eq.s32.totalorder %s19, 0
    %p156 = por %p154, %p155
    %s157 = ssub.s32 %s13, %s20
    %p158 = scmp.eq.s32.totalorder %s157, 0
    %s160 = sadd.s32 %s159, 1
    %s161 = scalar_select %p158, %s159, %s160
    %p164 = pneg %p158
    %p165 = scmp.eq.s32.totalorder %s13, 3
    %p166 = por %p164, %p165
    %p167 = scmp.ne.s32.totalorder %s159, %s162
    %p168 = scmp.eq.s32.totalorder %s13, 0
    %p169 = por %p167, %p168
    %p170 = scmp.ne.s32.totalorder %s159, %s162
    %p171 = scmp.eq.s32.totalorder %s18, 3
    %p172 = por %p170, %p171
    %p173 = scmp.ne.s32.totalorder %s162, %s163
    %p174 = scmp.eq.s32.totalorder %s18, 0
    %p175 = por %p173, %p174
    %p176 = scmp.ne.s32.totalorder %s162, %s163
    %p177 = scmp.eq.s32.totalorder %s19, 3
    %p178 = por %p176, %p177
    %p180 = scmp.ne.s32.totalorder %s163, %s179
    %p181 = scmp.eq.s32.totalorder %s19, 0
    %p182 = por %p180, %p181
    %s183 = ssub.s32 %s13, %s20
    %p184 = scmp.eq.s32.totalorder %s183, 0
    %s186 = sadd.s32 %s185, 1
    %s187 = scalar_select %p184, %s185, %s186
    %p190 = pneg %p184
    %p191 = scmp.eq.s32.totalorder %s13, 3
    %p192 = por %p190, %p191
    %p193 = scmp.ne.s32.totalorder %s185, %s188
    %p194 = scmp.eq.s32.totalorder %s13, 0
    %p195 = por %p193, %p194
    %p196 = scmp.ne.s32.totalorder %s185, %s188
    %p197 = scmp.eq.s32.totalorder %s18, 3
    %p198 = por %p196, %p197
    %p199 = scmp.ne.s32.totalorder %s188, %s189
    %p200 = scmp.eq.s32.totalorder %s18, 0
    %p201 = por %p199, %p200
    %p202 = scmp.ne.s32.totalorder %s188, %s189
    %p203 = scmp.eq.s32.totalorder %s19, 3
    %p204 = por %p202, %p203
    %p206 = scmp.ne.s32.totalorder %s189, %s205
    %p207 = scmp.eq.s32.totalorder %s19, 0
    %p208 = por %p206, %p207
    %p209 = scmp.le.s32.totalorder 1, %s13
    %p210 = scmp.lt.s32.totalorder %s13, 5
    %p211 = pnand %p209, %p210
    %p212 = pneg %p211
    // Predicated region
    $region9: #{fused_forward.1} parent=5 // pred_check
      _
    $region10: #{fused_forward.1} parent=5 // pred_check_branch
      %214 = sbr.rel (%p211) target = $region12
    $region11: #{fused_forward.1} parent=5 // pred_region
      %s215 = ssub.s32 %s13, 1
      // Predicated region
      $region13: #{fused_forward.1} parent=11 // pred_check
        %p216 = pneg %p34
      $region14: #{fused_forward.1} parent=11 // pred_check_branch
        %218 = sbr.rel (%p216) target = $region16
      $region15: #{fused_forward.1} parent=11 // pred_region
        _
      $region16: #{fused_forward.1} parent=11 // pred_fallthru
        _
      // Predicated region
      $region17: #{fused_forward.1} parent=11 // pred_check
        %p219 = pneg %p55
      $region18: #{fused_forward.1} parent=11 // pred_check_branch
        %221 = sbr.rel (%p219) target = $region20
      $region19: #{fused_forward.1} parent=11 // pred_region
        _
      $region20: #{fused_forward.1} parent=11 // pred_fallthru
        _
      // Predicated region
      $region21: #{fused_forward.1} parent=11 // pred_check
        %p222 = pneg %p76
      $region22: #{fused_forward.1} parent=11 // pred_check_branch
        %224 = sbr.rel (%p222) target = $region24
      $region23: #{fused_forward.1} parent=11 // pred_region
        _
      $region24: #{fused_forward.1} parent=11 // pred_fallthru
        _
      // Predicated region
      $region25: #{fused_forward.1} parent=11 // pred_check
        %p225 = pneg %p97
      $region26: #{fused_forward.1} parent=11 // pred_check_branch
        %227 = sbr.rel (%p225) target = $region28
      $region27: #{fused_forward.1} parent=11 // pred_region
        _
      $region28: #{fused_forward.1} parent=11 // pred_fallthru
        _
    $region12: #{fused_forward.1} parent=5 // pred_fallthru
      _
    %p228 = scmp.lt.s32.totalorder %s13, 4
    // Predicated region
    $region29: #{fused_forward.1} parent=5 // pred_check
      %p229 = pneg %p228
    $region30: #{fused_forward.1} parent=5 // pred_check_branch
      %231 = sbr.rel (%p229) target = $region32
    $region31: #{fused_forward.1} parent=5 // pred_region
      // Predicated region
      $region33: #{fused_forward.1} parent=31 // pred_check
        %p232 = pneg %p117
      $region34: #{fused_forward.1} parent=31 // pred_check_branch
        %234 = sbr.rel (%p232) target = $region36
      $region35: #{fused_forward.1} parent=31 // pred_region
        %s235 = smul.u32 32, %s13
        %p236 = scmp.lt.s32.totalorder %s235, 127
        %s237 = scalar_select %p236, %s235, 127
        %s238 = smul.addr %s237, 16
        %s239 = smul.addr %s238, 4
        %s240 = scalar_lea.vmem %s4, %s239
        %s241 = smul.u32 32, %s13
      $region36: #{fused_forward.1} parent=31 // pred_fallthru
        _
      // Predicated region
      $region37: #{fused_forward.1} parent=31 // pred_check
        %p242 = pneg %p143
      $region38: #{fused_forward.1} parent=31 // pred_check_branch
        %244 = sbr.rel (%p242) target = $region40
      $region39: #{fused_forward.1} parent=31 // pred_region
        %s245 = smul.u32 32, %s13
        %p246 = scmp.lt.s32.totalorder %s245, 127
        %s247 = scalar_select %p246, %s245, 127
        %s248 = smul.addr %s247, 8
        %s249 = scalar_lea.vmem %s5, %s248
        %s250 = smul.u32 32, %s13
      $region40: #{fused_forward.1} parent=31 // pred_fallthru
        _
      // Predicated region
      $region41: #{fused_forward.1} parent=31 // pred_check
        %p251 = pneg %p169
      $region42: #{fused_forward.1} parent=31 // pred_check_branch
        %253 = sbr.rel (%p251) target = $region44
      $region43: #{fused_forward.1} parent=31 // pred_region
        %s254 = smul.u32 32, %s13
        %p255 = scmp.lt.s32.totalorder %s254, 127
        %s256 = scalar_select %p255, %s254, 127
        %s257 = smul.addr %s256, 8
        %s258 = scalar_lea.vmem %s6, %s257
        %s259 = smul.u32 32, %s13
      $region44: #{fused_forward.1} parent=31 // pred_fallthru
        _
    $region32: #{fused_forward.1} parent=5 // pred_fallthru
      _
    %p260 = scmp.le.s32.totalorder 1, %s13
    %p261 = scmp.lt.s32.totalorder %s13, 5
    %p262 = pnand %p260, %p261
    %p263 = pneg %p262
    // Predicated region
    $region45: #{fused_forward.1} parent=5 // pred_check
      _
    $region46: #{fused_forward.1} parent=5 // pred_check_branch
      %265 = sbr.rel (%p262) target = $region48
    $region47: #{fused_forward.1} parent=5 // pred_region
      %s266 = ssub.s32 %s13, 1
      %p267 = pneg %p34
      %p268 = pneg %p31
      %p269 = pneg %p55
      %p270 = pneg %p52
      %p271 = pneg %p76
      %p272 = pneg %p73
      %p273 = pneg %p97
      %p274 = pneg %p94
      %s275 = smul.u32 32, %s18
      %p276 = scmp.lt.s32.totalorder %s275, 127
      %s277 = scalar_select %p276, %s275, 127
      %s278 = smul.addr %s277, 16
      %s279 = smul.addr %s278, 4
      %s280 = scalar_lea.vmem %s4, %s279
      %p281 = pneg %p123
      %p282 = pneg %p120
      %s283 = smul.u32 32, %s18
      %p284 = scmp.lt.s32.totalorder %s283, 127
      %s285 = scalar_select %p284, %s283, 127
      %s286 = smul.addr %s285, 8
      %s287 = scalar_lea.vmem %s5, %s286
      %p288 = pneg %p149
      %p289 = pneg %p146
      %s290 = smul.u32 32, %s18
      %p291 = scmp.lt.s32.totalorder %s290, 127
      %s292 = scalar_select %p291, %s290, 127
      %s293 = smul.addr %s292, 8
      %s294 = scalar_lea.vmem %s6, %s293
      %p295 = pneg %p175
      %p296 = pneg %p172
      %p297 = pneg %p201
      %p298 = pneg %p198
      %s299 = smul.u32 32, %s18
      %p300 = scmp.lt.s32.totalorder %s299, 127
      %s301 = scalar_select %p300, %s299, 127
      %s302 = smul.addr %s301, 8
      %s303 = scalar_lea.vmem %s7, %s302
      %s304 = smul.u32 32, %s18
      %p305 = scmp.lt.s32.totalorder %s304, 127
      %s306 = scalar_select %p305, %s304, 127
      %s307 = smul.addr %s306, 16
      %s308 = smul.addr %s307, 4
      %s309 = scalar_lea.vmem %s4, %s308
      %s310 = smul.u32 32, %s18
      %s311 = smul.u32 32, %s18
      %p312 = scmp.lt.s32.totalorder %s311, 127
      %s313 = scalar_select %p312, %s311, 127
      %s314 = smul.addr %s313, 8
      %s315 = scalar_lea.vmem %s5, %s314
      %s316 = smul.u32 32, %s18
      %s317 = smul.u32 32, %s18
      %p318 = scmp.lt.s32.totalorder %s317, 127
      %s319 = scalar_select %p318, %s317, 127
      %s320 = smul.addr %s319, 8
      %s321 = scalar_lea.vmem %s6, %s320
      %s322 = smul.u32 32, %s18
      %s323 = smul.u32 32, %s18
      %p324 = scmp.lt.s32.totalorder %s323, 127
      %s325 = scalar_select %p324, %s323, 127
      %s326 = smul.addr %s325, 8
      %s327 = scalar_lea.vmem %s7, %s326
      %s328 = smul.u32 32, %s18
      %v330 = vld [vmem:[%s0] sm:$0xff]
      %v331 = vld [vmem:[%s0 + $0x8] sm:$0xff]
      %v332 = vld [vmem:[%s0 + $0x10] sm:$0xff]
      %v333 = vld [vmem:[%s0 + $0x18] sm:$0xff]
      %v334 = vld [vmem:[%s0 + $0x20] sm:$0xff]
      %v335 = vld [vmem:[%s0 + $0x28] sm:$0xff]
      %v336 = vld [vmem:[%s0 + $0x30] sm:$0xff]
      %v337 = vld [vmem:[%s0 + $0x38] sm:$0xff]
      %v338 = vld [vmem:[%s0 + $0x40] sm:$0xff]
      %v339 = vld [vmem:[%s0 + $0x48] sm:$0xff]
      %v340 = vld [vmem:[%s0 + $0x50] sm:$0xff]
      %v341 = vld [vmem:[%s0 + $0x58] sm:$0xff]
      %v342 = vld [vmem:[%s0 + $0x60] sm:$0xff]
      %v343 = vld [vmem:[%s0 + $0x68] sm:$0xff]
      %v344 = vld [vmem:[%s0 + $0x70] sm:$0xff]
      %v345 = vld [vmem:[%s0 + $0x78] sm:$0xff]
      %v346 = vld [vmem:[%s0 + $0x80] sm:$0xff]
      %v347 = vld [vmem:[%s0 + $0x88] sm:$0xff]
      %v348 = vld [vmem:[%s0 + $0x90] sm:$0xff]
      %v349 = vld [vmem:[%s0 + $0x98] sm:$0xff]
      %v350 = vld [vmem:[%s0 + $0xa0] sm:$0xff]
      %v351 = vld [vmem:[%s0 + $0xa8] sm:$0xff]
      %v352 = vld [vmem:[%s0 + $0xb0] sm:$0xff]
      %v353 = vld [vmem:[%s0 + $0xb8] sm:$0xff]
      %v354 = vld [vmem:[%s0 + $0xc0] sm:$0xff]
      %v355 = vld [vmem:[%s0 + $0xc8] sm:$0xff]
      %v356 = vld [vmem:[%s0 + $0xd0] sm:$0xff]
      %v357 = vld [vmem:[%s0 + $0xd8] sm:$0xff]
      %v358 = vld [vmem:[%s0 + $0xe0] sm:$0xff]
      %v359 = vld [vmem:[%s0 + $0xe8] sm:$0xff]
      %v360 = vld [vmem:[%s0 + $0xf0] sm:$0xff]
      %v361 = vld [vmem:[%s0 + $0xf8] sm:$0xff]
      %v362 = vld [vmem:[%s0 + $0x100] sm:$0xff]
      %v363 = vld [vmem:[%s0 + $0x108] sm:$0xff]
      %v364 = vld [vmem:[%s0 + $0x110] sm:$0xff]
      %v365 = vld [vmem:[%s0 + $0x118] sm:$0xff]
      %v366 = vld [vmem:[%s0 + $0x120] sm:$0xff]
      %v367 = vld [vmem:[%s0 + $0x128] sm:$0xff]
      %v368 = vld [vmem:[%s0 + $0x130] sm:$0xff]
      %v369 = vld [vmem:[%s0 + $0x138] sm:$0xff]
      %v370 = vld [vmem:[%s0 + $0x140] sm:$0xff]
      %v371 = vld [vmem:[%s0 + $0x148] sm:$0xff]
      %v372 = vld [vmem:[%s0 + $0x150] sm:$0xff]
      %v373 = vld [vmem:[%s0 + $0x158] sm:$0xff]
      %v374 = vld [vmem:[%s0 + $0x160] sm:$0xff]
      %v375 = vld [vmem:[%s0 + $0x168] sm:$0xff]
      %v376 = vld [vmem:[%s0 + $0x170] sm:$0xff]
      %v377 = vld [vmem:[%s0 + $0x178] sm:$0xff]
      %v378 = vld [vmem:[%s0 + $0x180] sm:$0xff]
      %v379 = vld [vmem:[%s0 + $0x188] sm:$0xff]
      %v380 = vld [vmem:[%s0 + $0x190] sm:$0xff]
      %v381 = vld [vmem:[%s0 + $0x198] sm:$0xff]
      %v382 = vld [vmem:[%s0 + $0x1a0] sm:$0xff]
      %v383 = vld [vmem:[%s0 + $0x1a8] sm:$0xff]
      %v384 = vld [vmem:[%s0 + $0x1b0] sm:$0xff]
      %v385 = vld [vmem:[%s0 + $0x1b8] sm:$0xff]
      %v386 = vld [vmem:[%s0 + $0x1c0] sm:$0xff]
      %v387 = vld [vmem:[%s0 + $0x1c8] sm:$0xff]
      %v388 = vld [vmem:[%s0 + $0x1d0] sm:$0xff]
      %v389 = vld [vmem:[%s0 + $0x1d8] sm:$0xff]
      %v390 = vld [vmem:[%s0 + $0x1e0] sm:$0xff]
      %v391 = vld [vmem:[%s0 + $0x1e8] sm:$0xff]
      %v392 = vld [vmem:[%s0 + $0x1f0] sm:$0xff]
      %v393 = vld [vmem:[%s0 + $0x1f8] sm:$0xff]
      %v394 = vld [vmem:[%s0 + $0x200] sm:$0xff]
      %v395 = vld [vmem:[%s0 + $0x208] sm:$0xff]
      %v396 = vld [vmem:[%s0 + $0x210] sm:$0xff]
      %v397 = vld [vmem:[%s0 + $0x218] sm:$0xff]
      %v398 = vld [vmem:[%s0 + $0x220] sm:$0xff]
      %v399 = vld [vmem:[%s0 + $0x228] sm:$0xff]
      %v400 = vld [vmem:[%s0 + $0x230] sm:$0xff]
      %v401 = vld [vmem:[%s0 + $0x238] sm:$0xff]
      %v402 = vld [vmem:[%s0 + $0x240] sm:$0xff]
      %v403 = vld [vmem:[%s0 + $0x248] sm:$0xff]
      %v404 = vld [vmem:[%s0 + $0x250] sm:$0xff]
      %v405 = vld [vmem:[%s0 + $0x258] sm:$0xff]
      %v406 = vld [vmem:[%s0 + $0x260] sm:$0xff]
      %v407 = vld [vmem:[%s0 + $0x268] sm:$0xff]
      %v408 = vld [vmem:[%s0 + $0x270] sm:$0xff]
      %v409 = vld [vmem:[%s0 + $0x278] sm:$0xff]
      %v410 = vld [vmem:[%s0 + $0x280] sm:$0xff]
      %v411 = vld [vmem:[%s0 + $0x288] sm:$0xff]
      %v412 = vld [vmem:[%s0 + $0x290] sm:$0xff]
      %v413 = vld [vmem:[%s0 + $0x298] sm:$0xff]
      %v414 = vld [vmem:[%s0 + $0x2a0] sm:$0xff]
      %v415 = vld [vmem:[%s0 + $0x2a8] sm:$0xff]
      %v416 = vld [vmem:[%s0 + $0x2b0] sm:$0xff]
      %v417 = vld [vmem:[%s0 + $0x2b8] sm:$0xff]
      %v418 = vld [vmem:[%s0 + $0x2c0] sm:$0xff]
      %v419 = vld [vmem:[%s0 + $0x2c8] sm:$0xff]
      %v420 = vld [vmem:[%s0 + $0x2d0] sm:$0xff]
      %v421 = vld [vmem:[%s0 + $0x2d8] sm:$0xff]
      %v422 = vld [vmem:[%s0 + $0x2e0] sm:$0xff]
      %v423 = vld [vmem:[%s0 + $0x2e8] sm:$0xff]
      %v424 = vld [vmem:[%s0 + $0x2f0] sm:$0xff]
      %v425 = vld [vmem:[%s0 + $0x2f8] sm:$0xff]
      %v426 = vld [vmem:[%s0 + $0x300] sm:$0xff]
      %v427 = vld [vmem:[%s0 + $0x308] sm:$0xff]
      %v428 = vld [vmem:[%s0 + $0x310] sm:$0xff]
      %v429 = vld [vmem:[%s0 + $0x318] sm:$0xff]
      %v430 = vld [vmem:[%s0 + $0x320] sm:$0xff]
      %v431 = vld [vmem:[%s0 + $0x328] sm:$0xff]
      %v432 = vld [vmem:[%s0 + $0x330] sm:$0xff]
      %v433 = vld [vmem:[%s0 + $0x338] sm:$0xff]
      %v434 = vld [vmem:[%s0 + $0x340] sm:$0xff]
      %v435 = vld [vmem:[%s0 + $0x348] sm:$0xff]
      %v436 = vld [vmem:[%s0 + $0x350] sm:$0xff]
      %v437 = vld [vmem:[%s0 + $0x358] sm:$0xff]
      %v438 = vld [vmem:[%s0 + $0x360] sm:$0xff]
      %v439 = vld [vmem:[%s0 + $0x368] sm:$0xff]
      %v440 = vld [vmem:[%s0 + $0x370] sm:$0xff]
      %v441 = vld [vmem:[%s0 + $0x378] sm:$0xff]
      %v442 = vld [vmem:[%s0 + $0x380] sm:$0xff]
      %v443 = vld [vmem:[%s0 + $0x388] sm:$0xff]
      %v444 = vld [vmem:[%s0 + $0x390] sm:$0xff]
      %v445 = vld [vmem:[%s0 + $0x398] sm:$0xff]
      %v446 = vld [vmem:[%s0 + $0x3a0] sm:$0xff]
      %v447 = vld [vmem:[%s0 + $0x3a8] sm:$0xff]
      %v448 = vld [vmem:[%s0 + $0x3b0] sm:$0xff]
      %v449 = vld [vmem:[%s0 + $0x3b8] sm:$0xff]
      %v450 = vld [vmem:[%s0 + $0x3c0] sm:$0xff]
      %v451 = vld [vmem:[%s0 + $0x3c8] sm:$0xff]
      %v452 = vld [vmem:[%s0 + $0x3d0] sm:$0xff]
      %v453 = vld [vmem:[%s0 + $0x3d8] sm:$0xff]
      %v454 = vld [vmem:[%s0 + $0x3e0] sm:$0xff]
      %v455 = vld [vmem:[%s0 + $0x3e8] sm:$0xff]
      %v456 = vld [vmem:[%s0 + $0x3f0] sm:$0xff]
      %v457 = vld [vmem:[%s0 + $0x3f8] sm:$0xff]
      %v458 = vld [vmem:[%s0 + $0x400] sm:$0xff]
      %v459 = vld [vmem:[%s0 + $0x408] sm:$0xff]
      %v460 = vld [vmem:[%s0 + $0x410] sm:$0xff]
      %v461 = vld [vmem:[%s0 + $0x418] sm:$0xff]
      %v462 = vld [vmem:[%s0 + $0x420] sm:$0xff]
      %v463 = vld [vmem:[%s0 + $0x428] sm:$0xff]
      %v464 = vld [vmem:[%s0 + $0x430] sm:$0xff]
      %v465 = vld [vmem:[%s0 + $0x438] sm:$0xff]
      %v466 = vld [vmem:[%s0 + $0x440] sm:$0xff]
      %v467 = vld [vmem:[%s0 + $0x448] sm:$0xff]
      %v468 = vld [vmem:[%s0 + $0x450] sm:$0xff]
      %v469 = vld [vmem:[%s0 + $0x458] sm:$0xff]
      %v470 = vld [vmem:[%s0 + $0x460] sm:$0xff]
      %v471 = vld [vmem:[%s0 + $0x468] sm:$0xff]
      %v472 = vld [vmem:[%s0 + $0x470] sm:$0xff]
      %v473 = vld [vmem:[%s0 + $0x478] sm:$0xff]
      %v474 = vld [vmem:[%s0 + $0x480] sm:$0xff]
      %v475 = vld [vmem:[%s0 + $0x488] sm:$0xff]
      %v476 = vld [vmem:[%s0 + $0x490] sm:$0xff]
      %v477 = vld [vmem:[%s0 + $0x498] sm:$0xff]
      %v478 = vld [vmem:[%s0 + $0x4a0] sm:$0xff]
      %v479 = vld [vmem:[%s0 + $0x4a8] sm:$0xff]
      %v480 = vld [vmem:[%s0 + $0x4b0] sm:$0xff]
      %v481 = vld [vmem:[%s0 + $0x4b8] sm:$0xff]
      %v482 = vld [vmem:[%s0 + $0x4c0] sm:$0xff]
      %v483 = vld [vmem:[%s0 + $0x4c8] sm:$0xff]
      %v484 = vld [vmem:[%s0 + $0x4d0] sm:$0xff]
      %v485 = vld [vmem:[%s0 + $0x4d8] sm:$0xff]
      %v486 = vld [vmem:[%s0 + $0x4e0] sm:$0xff]
      %v487 = vld [vmem:[%s0 + $0x4e8] sm:$0xff]
      %v488 = vld [vmem:[%s0 + $0x4f0] sm:$0xff]
      %v489 = vld [vmem:[%s0 + $0x4f8] sm:$0xff]
      %v490 = vld [vmem:[%s0 + $0x500] sm:$0xff]
      %v491 = vld [vmem:[%s0 + $0x508] sm:$0xff]
      %v492 = vld [vmem:[%s0 + $0x510] sm:$0xff]
      %v493 = vld [vmem:[%s0 + $0x518] sm:$0xff]
      %v494 = vld [vmem:[%s0 + $0x520] sm:$0xff]
      %v495 = vld [vmem:[%s0 + $0x528] sm:$0xff]
      %v496 = vld [vmem:[%s0 + $0x530] sm:$0xff]
      %v497 = vld [vmem:[%s0 + $0x538] sm:$0xff]
      %v498 = vld [vmem:[%s0 + $0x540] sm:$0xff]
      %v499 = vld [vmem:[%s0 + $0x548] sm:$0xff]
      %v500 = vld [vmem:[%s0 + $0x550] sm:$0xff]
      %v501 = vld [vmem:[%s0 + $0x558] sm:$0xff]
      %v502 = vld [vmem:[%s0 + $0x560] sm:$0xff]
      %v503 = vld [vmem:[%s0 + $0x568] sm:$0xff]
      %v504 = vld [vmem:[%s0 + $0x570] sm:$0xff]
      %v505 = vld [vmem:[%s0 + $0x578] sm:$0xff]
      %v506 = vld [vmem:[%s0 + $0x580] sm:$0xff]
      %v507 = vld [vmem:[%s0 + $0x588] sm:$0xff]
      %v508 = vld [vmem:[%s0 + $0x590] sm:$0xff]
      %v509 = vld [vmem:[%s0 + $0x598] sm:$0xff]
      %v510 = vld [vmem:[%s0 + $0x5a0] sm:$0xff]
      %v511 = vld [vmem:[%s0 + $0x5a8] sm:$0xff]
      %v512 = vld [vmem:[%s0 + $0x5b0] sm:$0xff]
      %v513 = vld [vmem:[%s0 + $0x5b8] sm:$0xff]
      %v514 = vld [vmem:[%s0 + $0x5c0] sm:$0xff]
      %v515 = vld [vmem:[%s0 + $0x5c8] sm:$0xff]
      %v516 = vld [vmem:[%s0 + $0x5d0] sm:$0xff]
      %v517 = vld [vmem:[%s0 + $0x5d8] sm:$0xff]
      %v518 = vld [vmem:[%s0 + $0x5e0] sm:$0xff]
      %v519 = vld [vmem:[%s0 + $0x5e8] sm:$0xff]
      %v520 = vld [vmem:[%s0 + $0x5f0] sm:$0xff]
      %v521 = vld [vmem:[%s0 + $0x5f8] sm:$0xff]
      %v522 = vld [vmem:[%s0 + $0x600] sm:$0xff]
      %v523 = vld [vmem:[%s0 + $0x608] sm:$0xff]
      %v524 = vld [vmem:[%s0 + $0x610] sm:$0xff]
      %v525 = vld [vmem:[%s0 + $0x618] sm:$0xff]
      %v526 = vld [vmem:[%s0 + $0x620] sm:$0xff]
      %v527 = vld [vmem:[%s0 + $0x628] sm:$0xff]
      %v528 = vld [vmem:[%s0 + $0x630] sm:$0xff]
      %v529 = vld [vmem:[%s0 + $0x638] sm:$0xff]
      %v530 = vld [vmem:[%s0 + $0x640] sm:$0xff]
      %v531 = vld [vmem:[%s0 + $0x648] sm:$0xff]
      %v532 = vld [vmem:[%s0 + $0x650] sm:$0xff]
      %v533 = vld [vmem:[%s0 + $0x658] sm:$0xff]
      %v534 = vld [vmem:[%s0 + $0x660] sm:$0xff]
      %v535 = vld [vmem:[%s0 + $0x668] sm:$0xff]
      %v536 = vld [vmem:[%s0 + $0x670] sm:$0xff]
      %v537 = vld [vmem:[%s0 + $0x678] sm:$0xff]
      %v538 = vld [vmem:[%s0 + $0x680] sm:$0xff]
      %v539 = vld [vmem:[%s0 + $0x688] sm:$0xff]
      %v540 = vld [vmem:[%s0 + $0x690] sm:$0xff]
      %v541 = vld [vmem:[%s0 + $0x698] sm:$0xff]
      %v542 = vld [vmem:[%s0 + $0x6a0] sm:$0xff]
      %v543 = vld [vmem:[%s0 + $0x6a8] sm:$0xff]
      %v544 = vld [vmem:[%s0 + $0x6b0] sm:$0xff]
      %v545 = vld [vmem:[%s0 + $0x6b8] sm:$0xff]
      %v546 = vld [vmem:[%s0 + $0x6c0] sm:$0xff]
      %v547 = vld [vmem:[%s0 + $0x6c8] sm:$0xff]
      %v548 = vld [vmem:[%s0 + $0x6d0] sm:$0xff]
      %v549 = vld [vmem:[%s0 + $0x6d8] sm:$0xff]
      %v550 = vld [vmem:[%s0 + $0x6e0] sm:$0xff]
      %v551 = vld [vmem:[%s0 + $0x6e8] sm:$0xff]
      %v552 = vld [vmem:[%s0 + $0x6f0] sm:$0xff]
      %v553 = vld [vmem:[%s0 + $0x6f8] sm:$0xff]
      %v554 = vld [vmem:[%s0 + $0x700] sm:$0xff]
      %v555 = vld [vmem:[%s0 + $0x708] sm:$0xff]
      %v556 = vld [vmem:[%s0 + $0x710] sm:$0xff]
      %v557 = vld [vmem:[%s0 + $0x718] sm:$0xff]
      %v558 = vld [vmem:[%s0 + $0x720] sm:$0xff]
      %v559 = vld [vmem:[%s0 + $0x728] sm:$0xff]
      %v560 = vld [vmem:[%s0 + $0x730] sm:$0xff]
      %v561 = vld [vmem:[%s0 + $0x738] sm:$0xff]
      %v562 = vld [vmem:[%s0 + $0x740] sm:$0xff]
      %v563 = vld [vmem:[%s0 + $0x748] sm:$0xff]
      %v564 = vld [vmem:[%s0 + $0x750] sm:$0xff]
      %v565 = vld [vmem:[%s0 + $0x758] sm:$0xff]
      %v566 = vld [vmem:[%s0 + $0x760] sm:$0xff]
      %v567 = vld [vmem:[%s0 + $0x768] sm:$0xff]
      %v568 = vld [vmem:[%s0 + $0x770] sm:$0xff]
      %v569 = vld [vmem:[%s0 + $0x778] sm:$0xff]
      %v570 = vld [vmem:[%s0 + $0x780] sm:$0xff]
      %v571 = vld [vmem:[%s0 + $0x788] sm:$0xff]
      %v572 = vld [vmem:[%s0 + $0x790] sm:$0xff]
      %v573 = vld [vmem:[%s0 + $0x798] sm:$0xff]
      %v574 = vld [vmem:[%s0 + $0x7a0] sm:$0xff]
      %v575 = vld [vmem:[%s0 + $0x7a8] sm:$0xff]
      %v576 = vld [vmem:[%s0 + $0x7b0] sm:$0xff]
      %v577 = vld [vmem:[%s0 + $0x7b8] sm:$0xff]
      %v578 = vld [vmem:[%s0 + $0x7c0] sm:$0xff]
      %v579 = vld [vmem:[%s0 + $0x7c8] sm:$0xff]
      %v580 = vld [vmem:[%s0 + $0x7d0] sm:$0xff]
      %v581 = vld [vmem:[%s0 + $0x7d8] sm:$0xff]
      %v582 = vld [vmem:[%s0 + $0x7e0] sm:$0xff]
      %v583 = vld [vmem:[%s0 + $0x7e8] sm:$0xff]
      %v584 = vld [vmem:[%s0 + $0x7f0] sm:$0xff]
      %v585 = vld [vmem:[%s0 + $0x7f8] sm:$0xff]
      %v586 = vld [vmem:[%s2] sm:$0xff]
      %v587 = vld [vmem:[%s2 + $0x8] sm:$0xff]
      %v588 = vld [vmem:[%s2 + $0x10] sm:$0xff]
      %v589 = vld [vmem:[%s2 + $0x18] sm:$0xff]
      %v590 = vld [vmem:[%s2 + $0x20] sm:$0xff]
      %v591 = vld [vmem:[%s2 + $0x28] sm:$0xff]
      %v592 = vld [vmem:[%s2 + $0x30] sm:$0xff]
      %v593 = vld [vmem:[%s2 + $0x38] sm:$0xff]
      %v594 = vld [vmem:[%s2 + $0x40] sm:$0xff]
      %v595 = vld [vmem:[%s2 + $0x48] sm:$0xff]
      %v596 = vld [vmem:[%s2 + $0x50] sm:$0xff]
      %v597 = vld [vmem:[%s2 + $0x58] sm:$0xff]
      %v598 = vld [vmem:[%s2 + $0x60] sm:$0xff]
      %v599 = vld [vmem:[%s2 + $0x68] sm:$0xff]
      %v600 = vld [vmem:[%s2 + $0x70] sm:$0xff]
      %v601 = vld [vmem:[%s2 + $0x78] sm:$0xff]
      %v602 = vld [vmem:[%s2 + $0x80] sm:$0xff]
      %v603 = vld [vmem:[%s2 + $0x88] sm:$0xff]
      %v604 = vld [vmem:[%s2 + $0x90] sm:$0xff]
      %v605 = vld [vmem:[%s2 + $0x98] sm:$0xff]
      %v606 = vld [vmem:[%s2 + $0xa0] sm:$0xff]
      %v607 = vld [vmem:[%s2 + $0xa8] sm:$0xff]
      %v608 = vld [vmem:[%s2 + $0xb0] sm:$0xff]
      %v609 = vld [vmem:[%s2 + $0xb8] sm:$0xff]
      %v610 = vld [vmem:[%s2 + $0xc0] sm:$0xff]
      %v611 = vld [vmem:[%s2 + $0xc8] sm:$0xff]
      %v612 = vld [vmem:[%s2 + $0xd0] sm:$0xff]
      %v613 = vld [vmem:[%s2 + $0xd8] sm:$0xff]
      %v614 = vld [vmem:[%s2 + $0xe0] sm:$0xff]
      %v615 = vld [vmem:[%s2 + $0xe8] sm:$0xff]
      %v616 = vld [vmem:[%s2 + $0xf0] sm:$0xff]
      %v617 = vld [vmem:[%s2 + $0xf8] sm:$0xff]
      %v618 = vld [vmem:[%s2 + $0x100] sm:$0xff]
      %v619 = vld [vmem:[%s2 + $0x108] sm:$0xff]
      %v620 = vld [vmem:[%s2 + $0x110] sm:$0xff]
      %v621 = vld [vmem:[%s2 + $0x118] sm:$0xff]
      %v622 = vld [vmem:[%s2 + $0x120] sm:$0xff]
      %v623 = vld [vmem:[%s2 + $0x128] sm:$0xff]
      %v624 = vld [vmem:[%s2 + $0x130] sm:$0xff]
      %v625 = vld [vmem:[%s2 + $0x138] sm:$0xff]
      %v626 = vld [vmem:[%s2 + $0x140] sm:$0xff]
      %v627 = vld [vmem:[%s2 + $0x148] sm:$0xff]
      %v628 = vld [vmem:[%s2 + $0x150] sm:$0xff]
      %v629 = vld [vmem:[%s2 + $0x158] sm:$0xff]
      %v630 = vld [vmem:[%s2 + $0x160] sm:$0xff]
      %v631 = vld [vmem:[%s2 + $0x168] sm:$0xff]
      %v632 = vld [vmem:[%s2 + $0x170] sm:$0xff]
      %v633 = vld [vmem:[%s2 + $0x178] sm:$0xff]
      %v634 = vld [vmem:[%s2 + $0x180] sm:$0xff]
      %v635 = vld [vmem:[%s2 + $0x188] sm:$0xff]
      %v636 = vld [vmem:[%s2 + $0x190] sm:$0xff]
      %v637 = vld [vmem:[%s2 + $0x198] sm:$0xff]
      %v638 = vld [vmem:[%s2 + $0x1a0] sm:$0xff]
      %v639 = vld [vmem:[%s2 + $0x1a8] sm:$0xff]
      %v640 = vld [vmem:[%s2 + $0x1b0] sm:$0xff]
      %v641 = vld [vmem:[%s2 + $0x1b8] sm:$0xff]
      %v642 = vld [vmem:[%s2 + $0x1c0] sm:$0xff]
      %v643 = vld [vmem:[%s2 + $0x1c8] sm:$0xff]
      %v644 = vld [vmem:[%s2 + $0x1d0] sm:$0xff]
      %v645 = vld [vmem:[%s2 + $0x1d8] sm:$0xff]
      %v646 = vld [vmem:[%s2 + $0x1e0] sm:$0xff]
      %v647 = vld [vmem:[%s2 + $0x1e8] sm:$0xff]
      %v648 = vld [vmem:[%s2 + $0x1f0] sm:$0xff]
      %v649 = vld [vmem:[%s2 + $0x1f8] sm:$0xff]
      %v650 = vld [vmem:[%s2 + $0x200] sm:$0xff]
      %v651 = vld [vmem:[%s2 + $0x208] sm:$0xff]
      %v652 = vld [vmem:[%s2 + $0x210] sm:$0xff]
      %v653 = vld [vmem:[%s2 + $0x218] sm:$0xff]
      %v654 = vld [vmem:[%s2 + $0x220] sm:$0xff]
      %v655 = vld [vmem:[%s2 + $0x228] sm:$0xff]
      %v656 = vld [vmem:[%s2 + $0x230] sm:$0xff]
      %v657 = vld [vmem:[%s2 + $0x238] sm:$0xff]
      %v658 = vld [vmem:[%s2 + $0x240] sm:$0xff]
      %v659 = vld [vmem:[%s2 + $0x248] sm:$0xff]
      %v660 = vld [vmem:[%s2 + $0x250] sm:$0xff]
      %v661 = vld [vmem:[%s2 + $0x258] sm:$0xff]
      %v662 = vld [vmem:[%s2 + $0x260] sm:$0xff]
      %v663 = vld [vmem:[%s2 + $0x268] sm:$0xff]
      %v664 = vld [vmem:[%s2 + $0x270] sm:$0xff]
      %v665 = vld [vmem:[%s2 + $0x278] sm:$0xff]
      %v666 = vld [vmem:[%s2 + $0x280] sm:$0xff]
      %v667 = vld [vmem:[%s2 + $0x288] sm:$0xff]
      %v668 = vld [vmem:[%s2 + $0x290] sm:$0xff]
      %v669 = vld [vmem:[%s2 + $0x298] sm:$0xff]
      %v670 = vld [vmem:[%s2 + $0x2a0] sm:$0xff]
      %v671 = vld [vmem:[%s2 + $0x2a8] sm:$0xff]
      %v672 = vld [vmem:[%s2 + $0x2b0] sm:$0xff]
      %v673 = vld [vmem:[%s2 + $0x2b8] sm:$0xff]
      %v674 = vld [vmem:[%s2 + $0x2c0] sm:$0xff]
      %v675 = vld [vmem:[%s2 + $0x2c8] sm:$0xff]
      %v676 = vld [vmem:[%s2 + $0x2d0] sm:$0xff]
      %v677 = vld [vmem:[%s2 + $0x2d8] sm:$0xff]
      %v678 = vld [vmem:[%s2 + $0x2e0] sm:$0xff]
      %v679 = vld [vmem:[%s2 + $0x2e8] sm:$0xff]
      %v680 = vld [vmem:[%s2 + $0x2f0] sm:$0xff]
      %v681 = vld [vmem:[%s2 + $0x2f8] sm:$0xff]
      %v682 = vld [vmem:[%s2 + $0x300] sm:$0xff]
      %v683 = vld [vmem:[%s2 + $0x308] sm:$0xff]
      %v684 = vld [vmem:[%s2 + $0x310] sm:$0xff]
      %v685 = vld [vmem:[%s2 + $0x318] sm:$0xff]
      %v686 = vld [vmem:[%s2 + $0x320] sm:$0xff]
      %v687 = vld [vmem:[%s2 + $0x328] sm:$0xff]
      %v688 = vld [vmem:[%s2 + $0x330] sm:$0xff]
      %v689 = vld [vmem:[%s2 + $0x338] sm:$0xff]
      %v690 = vld [vmem:[%s2 + $0x340] sm:$0xff]
      %v691 = vld [vmem:[%s2 + $0x348] sm:$0xff]
      %v692 = vld [vmem:[%s2 + $0x350] sm:$0xff]
      %v693 = vld [vmem:[%s2 + $0x358] sm:$0xff]
      %v694 = vld [vmem:[%s2 + $0x360] sm:$0xff]
      %v695 = vld [vmem:[%s2 + $0x368] sm:$0xff]
      %v696 = vld [vmem:[%s2 + $0x370] sm:$0xff]
      %v697 = vld [vmem:[%s2 + $0x378] sm:$0xff]
      %v698 = vld [vmem:[%s2 + $0x380] sm:$0xff]
      %v699 = vld [vmem:[%s2 + $0x388] sm:$0xff]
      %v700 = vld [vmem:[%s2 + $0x390] sm:$0xff]
      %v701 = vld [vmem:[%s2 + $0x398] sm:$0xff]
      %v702 = vld [vmem:[%s2 + $0x3a0] sm:$0xff]
      %v703 = vld [vmem:[%s2 + $0x3a8] sm:$0xff]
      %v704 = vld [vmem:[%s2 + $0x3b0] sm:$0xff]
      %v705 = vld [vmem:[%s2 + $0x3b8] sm:$0xff]
      %v706 = vld [vmem:[%s2 + $0x3c0] sm:$0xff]
      %v707 = vld [vmem:[%s2 + $0x3c8] sm:$0xff]
      %v708 = vld [vmem:[%s2 + $0x3d0] sm:$0xff]
      %v709 = vld [vmem:[%s2 + $0x3d8] sm:$0xff]
      %v710 = vld [vmem:[%s2 + $0x3e0] sm:$0xff]
      %v711 = vld [vmem:[%s2 + $0x3e8] sm:$0xff]
      %v712 = vld [vmem:[%s2 + $0x3f0] sm:$0xff]
      %v713 = vld [vmem:[%s2 + $0x3f8] sm:$0xff]
      %v714 = vld [vmem:[%s2 + $0x400] sm:$0xff]
      %v715 = vld [vmem:[%s2 + $0x408] sm:$0xff]
      %v716 = vld [vmem:[%s2 + $0x410] sm:$0xff]
      %v717 = vld [vmem:[%s2 + $0x418] sm:$0xff]
      %v718 = vld [vmem:[%s2 + $0x420] sm:$0xff]
      %v719 = vld [vmem:[%s2 + $0x428] sm:$0xff]
      %v720 = vld [vmem:[%s2 + $0x430] sm:$0xff]
      %v721 = vld [vmem:[%s2 + $0x438] sm:$0xff]
      %v722 = vld [vmem:[%s2 + $0x440] sm:$0xff]
      %v723 = vld [vmem:[%s2 + $0x448] sm:$0xff]
      %v724 = vld [vmem:[%s2 + $0x450] sm:$0xff]
      %v725 = vld [vmem:[%s2 + $0x458] sm:$0xff]
      %v726 = vld [vmem:[%s2 + $0x460] sm:$0xff]
      %v727 = vld [vmem:[%s2 + $0x468] sm:$0xff]
      %v728 = vld [vmem:[%s2 + $0x470] sm:$0xff]
      %v729 = vld [vmem:[%s2 + $0x478] sm:$0xff]
      %v730 = vld [vmem:[%s2 + $0x480] sm:$0xff]
      %v731 = vld [vmem:[%s2 + $0x488] sm:$0xff]
      %v732 = vld [vmem:[%s2 + $0x490] sm:$0xff]
      %v733 = vld [vmem:[%s2 + $0x498] sm:$0xff]
      %v734 = vld [vmem:[%s2 + $0x4a0] sm:$0xff]
      %v735 = vld [vmem:[%s2 + $0x4a8] sm:$0xff]
      %v736 = vld [vmem:[%s2 + $0x4b0] sm:$0xff]
      %v737 = vld [vmem:[%s2 + $0x4b8] sm:$0xff]
      %v738 = vld [vmem:[%s2 + $0x4c0] sm:$0xff]
      %v739 = vld [vmem:[%s2 + $0x4c8] sm:$0xff]
      %v740 = vld [vmem:[%s2 + $0x4d0] sm:$0xff]
      %v741 = vld [vmem:[%s2 + $0x4d8] sm:$0xff]
      %v742 = vld [vmem:[%s2 + $0x4e0] sm:$0xff]
      %v743 = vld [vmem:[%s2 + $0x4e8] sm:$0xff]
      %v744 = vld [vmem:[%s2 + $0x4f0] sm:$0xff]
      %v745 = vld [vmem:[%s2 + $0x4f8] sm:$0xff]
      %v746 = vld [vmem:[%s2 + $0x500] sm:$0xff]
      %v747 = vld [vmem:[%s2 + $0x508] sm:$0xff]
      %v748 = vld [vmem:[%s2 + $0x510] sm:$0xff]
      %v749 = vld [vmem:[%s2 + $0x518] sm:$0xff]
      %v750 = vld [vmem:[%s2 + $0x520] sm:$0xff]
      %v751 = vld [vmem:[%s2 + $0x528] sm:$0xff]
      %v752 = vld [vmem:[%s2 + $0x530] sm:$0xff]
      %v753 = vld [vmem:[%s2 + $0x538] sm:$0xff]
      %v754 = vld [vmem:[%s2 + $0x540] sm:$0xff]
      %v755 = vld [vmem:[%s2 + $0x548] sm:$0xff]
      %v756 = vld [vmem:[%s2 + $0x550] sm:$0xff]
      %v757 = vld [vmem:[%s2 + $0x558] sm:$0xff]
      %v758 = vld [vmem:[%s2 + $0x560] sm:$0xff]
      %v759 = vld [vmem:[%s2 + $0x568] sm:$0xff]
      %v760 = vld [vmem:[%s2 + $0x570] sm:$0xff]
      %v761 = vld [vmem:[%s2 + $0x578] sm:$0xff]
      %v762 = vld [vmem:[%s2 + $0x580] sm:$0xff]
      %v763 = vld [vmem:[%s2 + $0x588] sm:$0xff]
      %v764 = vld [vmem:[%s2 + $0x590] sm:$0xff]
      %v765 = vld [vmem:[%s2 + $0x598] sm:$0xff]
      %v766 = vld [vmem:[%s2 + $0x5a0] sm:$0xff]
      %v767 = vld [vmem:[%s2 + $0x5a8] sm:$0xff]
      %v768 = vld [vmem:[%s2 + $0x5b0] sm:$0xff]
      %v769 = vld [vmem:[%s2 + $0x5b8] sm:$0xff]
      %v770 = vld [vmem:[%s2 + $0x5c0] sm:$0xff]
      %v771 = vld [vmem:[%s2 + $0x5c8] sm:$0xff]
      %v772 = vld [vmem:[%s2 + $0x5d0] sm:$0xff]
      %v773 = vld [vmem:[%s2 + $0x5d8] sm:$0xff]
      %v774 = vld [vmem:[%s2 + $0x5e0] sm:$0xff]
      %v775 = vld [vmem:[%s2 + $0x5e8] sm:$0xff]
      %v776 = vld [vmem:[%s2 + $0x5f0] sm:$0xff]
      %v777 = vld [vmem:[%s2 + $0x5f8] sm:$0xff]
      %v778 = vld [vmem:[%s2 + $0x600] sm:$0xff]
      %v779 = vld [vmem:[%s2 + $0x608] sm:$0xff]
      %v780 = vld [vmem:[%s2 + $0x610] sm:$0xff]
      %v781 = vld [vmem:[%s2 + $0x618] sm:$0xff]
      %v782 = vld [vmem:[%s2 + $0x620] sm:$0xff]
      %v783 = vld [vmem:[%s2 + $0x628] sm:$0xff]
      %v784 = vld [vmem:[%s2 + $0x630] sm:$0xff]
      %v785 = vld [vmem:[%s2 + $0x638] sm:$0xff]
      %v786 = vld [vmem:[%s2 + $0x640] sm:$0xff]
      %v787 = vld [vmem:[%s2 + $0x648] sm:$0xff]
      %v788 = vld [vmem:[%s2 + $0x650] sm:$0xff]
      %v789 = vld [vmem:[%s2 + $0x658] sm:$0xff]
      %v790 = vld [vmem:[%s2 + $0x660] sm:$0xff]
      %v791 = vld [vmem:[%s2 + $0x668] sm:$0xff]
      %v792 = vld [vmem:[%s2 + $0x670] sm:$0xff]
      %v793 = vld [vmem:[%s2 + $0x678] sm:$0xff]
      %v794 = vld [vmem:[%s2 + $0x680] sm:$0xff]
      %v795 = vld [vmem:[%s2 + $0x688] sm:$0xff]
      %v796 = vld [vmem:[%s2 + $0x690] sm:$0xff]
      %v797 = vld [vmem:[%s2 + $0x698] sm:$0xff]
      %v798 = vld [vmem:[%s2 + $0x6a0] sm:$0xff]
      %v799 = vld [vmem:[%s2 + $0x6a8] sm:$0xff]
      %v800 = vld [vmem:[%s2 + $0x6b0] sm:$0xff]
      %v801 = vld [vmem:[%s2 + $0x6b8] sm:$0xff]
      %v802 = vld [vmem:[%s2 + $0x6c0] sm:$0xff]
      %v803 = vld [vmem:[%s2 + $0x6c8] sm:$0xff]
      %v804 = vld [vmem:[%s2 + $0x6d0] sm:$0xff]
      %v805 = vld [vmem:[%s2 + $0x6d8] sm:$0xff]
      %v806 = vld [vmem:[%s2 + $0x6e0] sm:$0xff]
      %v807 = vld [vmem:[%s2 + $0x6e8] sm:$0xff]
      %v808 = vld [vmem:[%s2 + $0x6f0] sm:$0xff]
      %v809 = vld [vmem:[%s2 + $0x6f8] sm:$0xff]
      %v810 = vld [vmem:[%s2 + $0x700] sm:$0xff]
      %v811 = vld [vmem:[%s2 + $0x708] sm:$0xff]
      %v812 = vld [vmem:[%s2 + $0x710] sm:$0xff]
      %v813 = vld [vmem:[%s2 + $0x718] sm:$0xff]
      %v814 = vld [vmem:[%s2 + $0x720] sm:$0xff]
      %v815 = vld [vmem:[%s2 + $0x728] sm:$0xff]
      %v816 = vld [vmem:[%s2 + $0x730] sm:$0xff]
      %v817 = vld [vmem:[%s2 + $0x738] sm:$0xff]
      %v818 = vld [vmem:[%s2 + $0x740] sm:$0xff]
      %v819 = vld [vmem:[%s2 + $0x748] sm:$0xff]
      %v820 = vld [vmem:[%s2 + $0x750] sm:$0xff]
      %v821 = vld [vmem:[%s2 + $0x758] sm:$0xff]
      %v822 = vld [vmem:[%s2 + $0x760] sm:$0xff]
      %v823 = vld [vmem:[%s2 + $0x768] sm:$0xff]
      %v824 = vld [vmem:[%s2 + $0x770] sm:$0xff]
      %v825 = vld [vmem:[%s2 + $0x778] sm:$0xff]
      %v826 = vld [vmem:[%s2 + $0x780] sm:$0xff]
      %v827 = vld [vmem:[%s2 + $0x788] sm:$0xff]
      %v828 = vld [vmem:[%s2 + $0x790] sm:$0xff]
      %v829 = vld [vmem:[%s2 + $0x798] sm:$0xff]
      %v830 = vld [vmem:[%s2 + $0x7a0] sm:$0xff]
      %v831 = vld [vmem:[%s2 + $0x7a8] sm:$0xff]
      %v832 = vld [vmem:[%s2 + $0x7b0] sm:$0xff]
      %v833 = vld [vmem:[%s2 + $0x7b8] sm:$0xff]
      %v834 = vld [vmem:[%s2 + $0x7c0] sm:$0xff]
      %v835 = vld [vmem:[%s2 + $0x7c8] sm:$0xff]
      %v836 = vld [vmem:[%s2 + $0x7d0] sm:$0xff]
      %v837 = vld [vmem:[%s2 + $0x7d8] sm:$0xff]
      %v838 = vld [vmem:[%s2 + $0x7e0] sm:$0xff]
      %v839 = vld [vmem:[%s2 + $0x7e8] sm:$0xff]
      %v840 = vld [vmem:[%s2 + $0x7f0] sm:$0xff]
      %v841 = vld [vmem:[%s2 + $0x7f8] sm:$0xff]
      %843 = vset.pattern.permute.xlu0 0
      %844 = vperm.xlu0 %843, %v586
      %v845 = vpop.permute.xlu0 %844
      %848 = vset.pattern.permute.xlu0 0
      %849 = vperm.xlu0 %848, %v587
      %v850 = vpop.permute.xlu0 %849
      %853 = vset.pattern.permute.xlu0 0
      %854 = vperm.xlu0 %853, %v588
      %v855 = vpop.permute.xlu0 %854
      %858 = vset.pattern.permute.xlu0 0
      %859 = vperm.xlu0 %858, %v589
      %v860 = vpop.permute.xlu0 %859
      %863 = vset.pattern.permute.xlu0 0
      %864 = vperm.xlu0 %863, %v590
      %v865 = vpop.permute.xlu0 %864
      %868 = vset.pattern.permute.xlu0 0
      %869 = vperm.xlu0 %868, %v591
      %v870 = vpop.permute.xlu0 %869
      %873 = vset.pattern.permute.xlu0 0
      %874 = vperm.xlu0 %873, %v592
      %v875 = vpop.permute.xlu0 %874
      %878 = vset.pattern.permute.xlu0 0
      %879 = vperm.xlu0 %878, %v593
      %v880 = vpop.permute.xlu0 %879
      %883 = vset.pattern.permute.xlu0 0
      %884 = vperm.xlu0 %883, %v594
      %v885 = vpop.permute.xlu0 %884
      %888 = vset.pattern.permute.xlu0 0
      %889 = vperm.xlu0 %888, %v595
      %v890 = vpop.permute.xlu0 %889
      %893 = vset.pattern.permute.xlu0 0
      %894 = vperm.xlu0 %893, %v596
      %v895 = vpop.permute.xlu0 %894
      %898 = vset.pattern.permute.xlu0 0
      %899 = vperm.xlu0 %898, %v597
      %v900 = vpop.permute.xlu0 %899
      %903 = vset.pattern.permute.xlu0 0
      %904 = vperm.xlu0 %903, %v598
      %v905 = vpop.permute.xlu0 %904
      %908 = vset.pattern.permute.xlu0 0
      %909 = vperm.xlu0 %908, %v599
      %v910 = vpop.permute.xlu0 %909
      %913 = vset.pattern.permute.xlu0 0
      %914 = vperm.xlu0 %913, %v600
      %v915 = vpop.permute.xlu0 %914
      %918 = vset.pattern.permute.xlu0 0
      %919 = vperm.xlu0 %918, %v601
      %v920 = vpop.permute.xlu0 %919
      %923 = vset.pattern.permute.xlu0 0
      %924 = vperm.xlu0 %923, %v602
      %v925 = vpop.permute.xlu0 %924
      %928 = vset.pattern.permute.xlu0 0
      %929 = vperm.xlu0 %928, %v603
      %v930 = vpop.permute.xlu0 %929
      %933 = vset.pattern.permute.xlu0 0
      %934 = vperm.xlu0 %933, %v604
      %v935 = vpop.permute.xlu0 %934
      %938 = vset.pattern.permute.xlu0 0
      %939 = vperm.xlu0 %938, %v605
      %v940 = vpop.permute.xlu0 %939
      %943 = vset.pattern.permute.xlu0 0
      %944 = vperm.xlu0 %943, %v606
      %v945 = vpop.permute.xlu0 %944
      %948 = vset.pattern.permute.xlu0 0
      %949 = vperm.xlu0 %948, %v607
      %v950 = vpop.permute.xlu0 %949
      %953 = vset.pattern.permute.xlu0 0
      %954 = vperm.xlu0 %953, %v608
      %v955 = vpop.permute.xlu0 %954
      %958 = vset.pattern.permute.xlu0 0
      %959 = vperm.xlu0 %958, %v609
      %v960 = vpop.permute.xlu0 %959
      %963 = vset.pattern.permute.xlu0 0
      %964 = vperm.xlu0 %963, %v610
      %v965 = vpop.permute.xlu0 %964
      %968 = vset.pattern.permute.xlu0 0
      %969 = vperm.xlu0 %968, %v611
      %v970 = vpop.permute.xlu0 %969
      %973 = vset.pattern.permute.xlu0 0
      %974 = vperm.xlu0 %973, %v612
      %v975 = vpop.permute.xlu0 %974
      %978 = vset.pattern.permute.xlu0 0
      %979 = vperm.xlu0 %978, %v613
      %v980 = vpop.permute.xlu0 %979
      %983 = vset.pattern.permute.xlu0 0
      %984 = vperm.xlu0 %983, %v614
      %v985 = vpop.permute.xlu0 %984
      %988 = vset.pattern.permute.xlu0 0
      %989 = vperm.xlu0 %988, %v615
      %v990 = vpop.permute.xlu0 %989
      %993 = vset.pattern.permute.xlu0 0
      %994 = vperm.xlu0 %993, %v616
      %v995 = vpop.permute.xlu0 %994
      %998 = vset.pattern.permute.xlu0 0
      %999 = vperm.xlu0 %998, %v617
      %v1000 = vpop.permute.xlu0 %999
      %1003 = vset.pattern.permute.xlu0 0
      %1004 = vperm.xlu0 %1003, %v618
      %v1005 = vpop.permute.xlu0 %1004
      %1008 = vset.pattern.permute.xlu0 0
      %1009 = vperm.xlu0 %1008, %v619
      %v1010 = vpop.permute.xlu0 %1009
      %1013 = vset.pattern.permute.xlu0 0
      %1014 = vperm.xlu0 %1013, %v620
      %v1015 = vpop.permute.xlu0 %1014
      %1018 = vset.pattern.permute.xlu0 0
      %1019 = vperm.xlu0 %1018, %v621
      %v1020 = vpop.permute.xlu0 %1019
      %1023 = vset.pattern.permute.xlu0 0
      %1024 = vperm.xlu0 %1023, %v622
      %v1025 = vpop.permute.xlu0 %1024
      %1028 = vset.pattern.permute.xlu0 0
      %1029 = vperm.xlu0 %1028, %v623
      %v1030 = vpop.permute.xlu0 %1029
      %1033 = vset.pattern.permute.xlu0 0
      %1034 = vperm.xlu0 %1033, %v624
      %v1035 = vpop.permute.xlu0 %1034
      %1038 = vset.pattern.permute.xlu0 0
      %1039 = vperm.xlu0 %1038, %v625
      %v1040 = vpop.permute.xlu0 %1039
      %1043 = vset.pattern.permute.xlu0 0
      %1044 = vperm.xlu0 %1043, %v626
      %v1045 = vpop.permute.xlu0 %1044
      %1048 = vset.pattern.permute.xlu0 0
      %1049 = vperm.xlu0 %1048, %v627
      %v1050 = vpop.permute.xlu0 %1049
      %1053 = vset.pattern.permute.xlu0 0
      %1054 = vperm.xlu0 %1053, %v628
      %v1055 = vpop.permute.xlu0 %1054
      %1058 = vset.pattern.permute.xlu0 0
      %1059 = vperm.xlu0 %1058, %v629
      %v1060 = vpop.permute.xlu0 %1059
      %1063 = vset.pattern.permute.xlu0 0
      %1064 = vperm.xlu0 %1063, %v630
      %v1065 = vpop.permute.xlu0 %1064
      %1068 = vset.pattern.permute.xlu0 0
      %1069 = vperm.xlu0 %1068, %v631
      %v1070 = vpop.permute.xlu0 %1069
      %1073 = vset.pattern.permute.xlu0 0
      %1074 = vperm.xlu0 %1073, %v632
      %v1075 = vpop.permute.xlu0 %1074
      %1078 = vset.pattern.permute.xlu0 0
      %1079 = vperm.xlu0 %1078, %v633
      %v1080 = vpop.permute.xlu0 %1079
      %1083 = vset.pattern.permute.xlu0 0
      %1084 = vperm.xlu0 %1083, %v634
      %v1085 = vpop.permute.xlu0 %1084
      %1088 = vset.pattern.permute.xlu0 0
      %1089 = vperm.xlu0 %1088, %v635
      %v1090 = vpop.permute.xlu0 %1089
      %1093 = vset.pattern.permute.xlu0 0
      %1094 = vperm.xlu0 %1093, %v636
      %v1095 = vpop.permute.xlu0 %1094
      %1098 = vset.pattern.permute.xlu0 0
      %1099 = vperm.xlu0 %1098, %v637
      %v1100 = vpop.permute.xlu0 %1099
      %1103 = vset.pattern.permute.xlu0 0
      %1104 = vperm.xlu0 %1103, %v638
      %v1105 = vpop.permute.xlu0 %1104
      %1108 = vset.pattern.permute.xlu0 0
      %1109 = vperm.xlu0 %1108, %v639
      %v1110 = vpop.permute.xlu0 %1109
      %1113 = vset.pattern.permute.xlu0 0
      %1114 = vperm.xlu0 %1113, %v640
      %v1115 = vpop.permute.xlu0 %1114
      %1118 = vset.pattern.permute.xlu0 0
      %1119 = vperm.xlu0 %1118, %v641
      %v1120 = vpop.permute.xlu0 %1119
      %1123 = vset.pattern.permute.xlu0 0
      %1124 = vperm.xlu0 %1123, %v642
      %v1125 = vpop.permute.xlu0 %1124
      %1128 = vset.pattern.permute.xlu0 0
      %1129 = vperm.xlu0 %1128, %v643
      %v1130 = vpop.permute.xlu0 %1129
      %1133 = vset.pattern.permute.xlu0 0
      %1134 = vperm.xlu0 %1133, %v644
      %v1135 = vpop.permute.xlu0 %1134
      %1138 = vset.pattern.permute.xlu0 0
      %1139 = vperm.xlu0 %1138, %v645
      %v1140 = vpop.permute.xlu0 %1139
      %1143 = vset.pattern.permute.xlu0 0
      %1144 = vperm.xlu0 %1143, %v646
      %v1145 = vpop.permute.xlu0 %1144
      %1148 = vset.pattern.permute.xlu0 0
      %1149 = vperm.xlu0 %1148, %v647
      %v1150 = vpop.permute.xlu0 %1149
      %1153 = vset.pattern.permute.xlu0 0
      %1154 = vperm.xlu0 %1153, %v648
      %v1155 = vpop.permute.xlu0 %1154
      %1158 = vset.pattern.permute.xlu0 0
      %1159 = vperm.xlu0 %1158, %v649
      %v1160 = vpop.permute.xlu0 %1159
      %1163 = vset.pattern.permute.xlu0 0
      %1164 = vperm.xlu0 %1163, %v650
      %v1165 = vpop.permute.xlu0 %1164
      %1168 = vset.pattern.permute.xlu0 0
      %1169 = vperm.xlu0 %1168, %v651
      %v1170 = vpop.permute.xlu0 %1169
      %1173 = vset.pattern.permute.xlu0 0
      %1174 = vperm.xlu0 %1173, %v652
      %v1175 = vpop.permute.xlu0 %1174
      %1178 = vset.pattern.permute.xlu0 0
      %1179 = vperm.xlu0 %1178, %v653
      %v1180 = vpop.permute.xlu0 %1179
      %1183 = vset.pattern.permute.xlu0 0
      %1184 = vperm.xlu0 %1183, %v654
      %v1185 = vpop.permute.xlu0 %1184
      %1188 = vset.pattern.permute.xlu0 0
      %1189 = vperm.xlu0 %1188, %v655
      %v1190 = vpop.permute.xlu0 %1189
      %1193 = vset.pattern.permute.xlu0 0
      %1194 = vperm.xlu0 %1193, %v656
      %v1195 = vpop.permute.xlu0 %1194
      %1198 = vset.pattern.permute.xlu0 0
      %1199 = vperm.xlu0 %1198, %v657
      %v1200 = vpop.permute.xlu0 %1199
      %1203 = vset.pattern.permute.xlu0 0
      %1204 = vperm.xlu0 %1203, %v658
      %v1205 = vpop.permute.xlu0 %1204
      %1208 = vset.pattern.permute.xlu0 0
      %1209 = vperm.xlu0 %1208, %v659
      %v1210 = vpop.permute.xlu0 %1209
      %1213 = vset.pattern.permute.xlu0 0
      %1214 = vperm.xlu0 %1213, %v660
      %v1215 = vpop.permute.xlu0 %1214
      %1218 = vset.pattern.permute.xlu0 0
      %1219 = vperm.xlu0 %1218, %v661
      %v1220 = vpop.permute.xlu0 %1219
      %1223 = vset.pattern.permute.xlu0 0
      %1224 = vperm.xlu0 %1223, %v662
      %v1225 = vpop.permute.xlu0 %1224
      %1228 = vset.pattern.permute.xlu0 0
      %1229 = vperm.xlu0 %1228, %v663
      %v1230 = vpop.permute.xlu0 %1229
      %1233 = vset.pattern.permute.xlu0 0
      %1234 = vperm.xlu0 %1233, %v664
      %v1235 = vpop.permute.xlu0 %1234
      %1238 = vset.pattern.permute.xlu0 0
      %1239 = vperm.xlu0 %1238, %v665
      %v1240 = vpop.permute.xlu0 %1239
      %1243 = vset.pattern.permute.xlu0 0
      %1244 = vperm.xlu0 %1243, %v666
      %v1245 = vpop.permute.xlu0 %1244
      %1248 = vset.pattern.permute.xlu0 0
      %1249 = vperm.xlu0 %1248, %v667
      %v1250 = vpop.permute.xlu0 %1249
      %1253 = vset.pattern.permute.xlu0 0
      %1254 = vperm.xlu0 %1253, %v668
      %v1255 = vpop.permute.xlu0 %1254
      %1258 = vset.pattern.permute.xlu0 0
      %1259 = vperm.xlu0 %1258, %v669
      %v1260 = vpop.permute.xlu0 %1259
      %1263 = vset.pattern.permute.xlu0 0
      %1264 = vperm.xlu0 %1263, %v670
      %v1265 = vpop.permute.xlu0 %1264
      %1268 = vset.pattern.permute.xlu0 0
      %1269 = vperm.xlu0 %1268, %v671
      %v1270 = vpop.permute.xlu0 %1269
      %1273 = vset.pattern.permute.xlu0 0
      %1274 = vperm.xlu0 %1273, %v672
      %v1275 = vpop.permute.xlu0 %1274
      %1278 = vset.pattern.permute.xlu0 0
      %1279 = vperm.xlu0 %1278, %v673
      %v1280 = vpop.permute.xlu0 %1279
      %1283 = vset.pattern.permute.xlu0 0
      %1284 = vperm.xlu0 %1283, %v674
      %v1285 = vpop.permute.xlu0 %1284
      %1288 = vset.pattern.permute.xlu0 0
      %1289 = vperm.xlu0 %1288, %v675
      %v1290 = vpop.permute.xlu0 %1289
      %1293 = vset.pattern.permute.xlu0 0
      %1294 = vperm.xlu0 %1293, %v676
      %v1295 = vpop.permute.xlu0 %1294
      %1298 = vset.pattern.permute.xlu0 0
      %1299 = vperm.xlu0 %1298, %v677
      %v1300 = vpop.permute.xlu0 %1299
      %1303 = vset.pattern.permute.xlu0 0
      %1304 = vperm.xlu0 %1303, %v678
      %v1305 = vpop.permute.xlu0 %1304
      %1308 = vset.pattern.permute.xlu0 0
      %1309 = vperm.xlu0 %1308, %v679
      %v1310 = vpop.permute.xlu0 %1309
      %1313 = vset.pattern.permute.xlu0 0
      %1314 = vperm.xlu0 %1313, %v680
      %v1315 = vpop.permute.xlu0 %1314
      %1318 = vset.pattern.permute.xlu0 0
      %1319 = vperm.xlu0 %1318, %v681
      %v1320 = vpop.permute.xlu0 %1319
      %1323 = vset.pattern.permute.xlu0 0
      %1324 = vperm.xlu0 %1323, %v682
      %v1325 = vpop.permute.xlu0 %1324
      %1328 = vset.pattern.permute.xlu0 0
      %1329 = vperm.xlu0 %1328, %v683
      %v1330 = vpop.permute.xlu0 %1329
      %1333 = vset.pattern.permute.xlu0 0
      %1334 = vperm.xlu0 %1333, %v684
      %v1335 = vpop.permute.xlu0 %1334
      %1338 = vset.pattern.permute.xlu0 0
      %1339 = vperm.xlu0 %1338, %v685
      %v1340 = vpop.permute.xlu0 %1339
      %1343 = vset.pattern.permute.xlu0 0
      %1344 = vperm.xlu0 %1343, %v686
      %v1345 = vpop.permute.xlu0 %1344
      %1348 = vset.pattern.permute.xlu0 0
      %1349 = vperm.xlu0 %1348, %v687
      %v1350 = vpop.permute.xlu0 %1349
      %1353 = vset.pattern.permute.xlu0 0
      %1354 = vperm.xlu0 %1353, %v688
      %v1355 = vpop.permute.xlu0 %1354
      %1358 = vset.pattern.permute.xlu0 0
      %1359 = vperm.xlu0 %1358, %v689
      %v1360 = vpop.permute.xlu0 %1359
      %1363 = vset.pattern.permute.xlu0 0
      %1364 = vperm.xlu0 %1363, %v690
      %v1365 = vpop.permute.xlu0 %1364
      %1368 = vset.pattern.permute.xlu0 0
      %1369 = vperm.xlu0 %1368, %v691
      %v1370 = vpop.permute.xlu0 %1369
      %1373 = vset.pattern.permute.xlu0 0
      %1374 = vperm.xlu0 %1373, %v692
      %v1375 = vpop.permute.xlu0 %1374
      %1378 = vset.pattern.permute.xlu0 0
      %1379 = vperm.xlu0 %1378, %v693
      %v1380 = vpop.permute.xlu0 %1379
      %1383 = vset.pattern.permute.xlu0 0
      %1384 = vperm.xlu0 %1383, %v694
      %v1385 = vpop.permute.xlu0 %1384
      %1388 = vset.pattern.permute.xlu0 0
      %1389 = vperm.xlu0 %1388, %v695
      %v1390 = vpop.permute.xlu0 %1389
      %1393 = vset.pattern.permute.xlu0 0
      %1394 = vperm.xlu0 %1393, %v696
      %v1395 = vpop.permute.xlu0 %1394
      %1398 = vset.pattern.permute.xlu0 0
      %1399 = vperm.xlu0 %1398, %v697
      %v1400 = vpop.permute.xlu0 %1399
      %1403 = vset.pattern.permute.xlu0 0
      %1404 = vperm.xlu0 %1403, %v698
      %v1405 = vpop.permute.xlu0 %1404
      %1408 = vset.pattern.permute.xlu0 0
      %1409 = vperm.xlu0 %1408, %v699
      %v1410 = vpop.permute.xlu0 %1409
      %1413 = vset.pattern.permute.xlu0 0
      %1414 = vperm.xlu0 %1413, %v700
      %v1415 = vpop.permute.xlu0 %1414
      %1418 = vset.pattern.permute.xlu0 0
      %1419 = vperm.xlu0 %1418, %v701
      %v1420 = vpop.permute.xlu0 %1419
      %1423 = vset.pattern.permute.xlu0 0
      %1424 = vperm.xlu0 %1423, %v702
      %v1425 = vpop.permute.xlu0 %1424
      %1428 = vset.pattern.permute.xlu0 0
      %1429 = vperm.xlu0 %1428, %v703
      %v1430 = vpop.permute.xlu0 %1429
      %1433 = vset.pattern.permute.xlu0 0
      %1434 = vperm.xlu0 %1433, %v704
      %v1435 = vpop.permute.xlu0 %1434
      %1438 = vset.pattern.permute.xlu0 0
      %1439 = vperm.xlu0 %1438, %v705
      %v1440 = vpop.permute.xlu0 %1439
      %1443 = vset.pattern.permute.xlu0 0
      %1444 = vperm.xlu0 %1443, %v706
      %v1445 = vpop.permute.xlu0 %1444
      %1448 = vset.pattern.permute.xlu0 0
      %1449 = vperm.xlu0 %1448, %v707
      %v1450 = vpop.permute.xlu0 %1449
      %1453 = vset.pattern.permute.xlu0 0
      %1454 = vperm.xlu0 %1453, %v708
      %v1455 = vpop.permute.xlu0 %1454
      %1458 = vset.pattern.permute.xlu0 0
      %1459 = vperm.xlu0 %1458, %v709
      %v1460 = vpop.permute.xlu0 %1459
      %1463 = vset.pattern.permute.xlu0 0
      %1464 = vperm.xlu0 %1463, %v710
      %v1465 = vpop.permute.xlu0 %1464
      %1468 = vset.pattern.permute.xlu0 0
      %1469 = vperm.xlu0 %1468, %v711
      %v1470 = vpop.permute.xlu0 %1469
      %1473 = vset.pattern.permute.xlu0 0
      %1474 = vperm.xlu0 %1473, %v712
      %v1475 = vpop.permute.xlu0 %1474
      %1478 = vset.pattern.permute.xlu0 0
      %1479 = vperm.xlu0 %1478, %v713
      %v1480 = vpop.permute.xlu0 %1479
      %1483 = vset.pattern.permute.xlu0 0
      %1484 = vperm.xlu0 %1483, %v714
      %v1485 = vpop.permute.xlu0 %1484
      %1488 = vset.pattern.permute.xlu0 0
      %1489 = vperm.xlu0 %1488, %v715
      %v1490 = vpop.permute.xlu0 %1489
      %1493 = vset.pattern.permute.xlu0 0
      %1494 = vperm.xlu0 %1493, %v716
      %v1495 = vpop.permute.xlu0 %1494
      %1498 = vset.pattern.permute.xlu0 0
      %1499 = vperm.xlu0 %1498, %v717
      %v1500 = vpop.permute.xlu0 %1499
      %1503 = vset.pattern.permute.xlu0 0
      %1504 = vperm.xlu0 %1503, %v718
      %v1505 = vpop.permute.xlu0 %1504
      %1508 = vset.pattern.permute.xlu0 0
      %1509 = vperm.xlu0 %1508, %v719
      %v1510 = vpop.permute.xlu0 %1509
      %1513 = vset.pattern.permute.xlu0 0
      %1514 = vperm.xlu0 %1513, %v720
      %v1515 = vpop.permute.xlu0 %1514
      %1518 = vset.pattern.permute.xlu0 0
      %1519 = vperm.xlu0 %1518, %v721
      %v1520 = vpop.permute.xlu0 %1519
      %1523 = vset.pattern.permute.xlu0 0
      %1524 = vperm.xlu0 %1523, %v722
      %v1525 = vpop.permute.xlu0 %1524
      %1528 = vset.pattern.permute.xlu0 0
      %1529 = vperm.xlu0 %1528, %v723
      %v1530 = vpop.permute.xlu0 %1529
      %1533 = vset.pattern.permute.xlu0 0
      %1534 = vperm.xlu0 %1533, %v724
      %v1535 = vpop.permute.xlu0 %1534
      %1538 = vset.pattern.permute.xlu0 0
      %1539 = vperm.xlu0 %1538, %v725
      %v1540 = vpop.permute.xlu0 %1539
      %1543 = vset.pattern.permute.xlu0 0
      %1544 = vperm.xlu0 %1543, %v726
      %v1545 = vpop.permute.xlu0 %1544
      %1548 = vset.pattern.permute.xlu0 0
      %1549 = vperm.xlu0 %1548, %v727
      %v1550 = vpop.permute.xlu0 %1549
      %1553 = vset.pattern.permute.xlu0 0
      %1554 = vperm.xlu0 %1553, %v728
      %v1555 = vpop.permute.xlu0 %1554
      %1558 = vset.pattern.permute.xlu0 0
      %1559 = vperm.xlu0 %1558, %v729
      %v1560 = vpop.permute.xlu0 %1559
      %1563 = vset.pattern.permute.xlu0 0
      %1564 = vperm.xlu0 %1563, %v730
      %v1565 = vpop.permute.xlu0 %1564
      %1568 = vset.pattern.permute.xlu0 0
      %1569 = vperm.xlu0 %1568, %v731
      %v1570 = vpop.permute.xlu0 %1569
      %1573 = vset.pattern.permute.xlu0 0
      %1574 = vperm.xlu0 %1573, %v732
      %v1575 = vpop.permute.xlu0 %1574
      %1578 = vset.pattern.permute.xlu0 0
      %1579 = vperm.xlu0 %1578, %v733
      %v1580 = vpop.permute.xlu0 %1579
      %1583 = vset.pattern.permute.xlu0 0
      %1584 = vperm.xlu0 %1583, %v734
      %v1585 = vpop.permute.xlu0 %1584
      %1588 = vset.pattern.permute.xlu0 0
      %1589 = vperm.xlu0 %1588, %v735
      %v1590 = vpop.permute.xlu0 %1589
      %1593 = vset.pattern.permute.xlu0 0
      %1594 = vperm.xlu0 %1593, %v736
      %v1595 = vpop.permute.xlu0 %1594
      %1598 = vset.pattern.permute.xlu0 0
      %1599 = vperm.xlu0 %1598, %v737
      %v1600 = vpop.permute.xlu0 %1599
      %1603 = vset.pattern.permute.xlu0 0
      %1604 = vperm.xlu0 %1603, %v738
      %v1605 = vpop.permute.xlu0 %1604
      %1608 = vset.pattern.permute.xlu0 0
      %1609 = vperm.xlu0 %1608, %v739
      %v1610 = vpop.permute.xlu0 %1609
      %1613 = vset.pattern.permute.xlu0 0
      %1614 = vperm.xlu0 %1613, %v740
      %v1615 = vpop.permute.xlu0 %1614
      %1618 = vset.pattern.permute.xlu0 0
      %1619 = vperm.xlu0 %1618, %v741
      %v1620 = vpop.permute.xlu0 %1619
      %1623 = vset.pattern.permute.xlu0 0
      %1624 = vperm.xlu0 %1623, %v742
      %v1625 = vpop.permute.xlu0 %1624
      %1628 = vset.pattern.permute.xlu0 0
      %1629 = vperm.xlu0 %1628, %v743
      %v1630 = vpop.permute.xlu0 %1629
      %1633 = vset.pattern.permute.xlu0 0
      %1634 = vperm.xlu0 %1633, %v744
      %v1635 = vpop.permute.xlu0 %1634
      %1638 = vset.pattern.permute.xlu0 0
      %1639 = vperm.xlu0 %1638, %v745
      %v1640 = vpop.permute.xlu0 %1639
      %1643 = vset.pattern.permute.xlu0 0
      %1644 = vperm.xlu0 %1643, %v746
      %v1645 = vpop.permute.xlu0 %1644
      %1648 = vset.pattern.permute.xlu0 0
      %1649 = vperm.xlu0 %1648, %v747
      %v1650 = vpop.permute.xlu0 %1649
      %1653 = vset.pattern.permute.xlu0 0
      %1654 = vperm.xlu0 %1653, %v748
      %v1655 = vpop.permute.xlu0 %1654
      %1658 = vset.pattern.permute.xlu0 0
      %1659 = vperm.xlu0 %1658, %v749
      %v1660 = vpop.permute.xlu0 %1659
      %1663 = vset.pattern.permute.xlu0 0
      %1664 = vperm.xlu0 %1663, %v750
      %v1665 = vpop.permute.xlu0 %1664
      %1668 = vset.pattern.permute.xlu0 0
      %1669 = vperm.xlu0 %1668, %v751
      %v1670 = vpop.permute.xlu0 %1669
      %1673 = vset.pattern.permute.xlu0 0
      %1674 = vperm.xlu0 %1673, %v752
      %v1675 = vpop.permute.xlu0 %1674
      %1678 = vset.pattern.permute.xlu0 0
      %1679 = vperm.xlu0 %1678, %v753
      %v1680 = vpop.permute.xlu0 %1679
      %1683 = vset.pattern.permute.xlu0 0
      %1684 = vperm.xlu0 %1683, %v754
      %v1685 = vpop.permute.xlu0 %1684
      %1688 = vset.pattern.permute.xlu0 0
      %1689 = vperm.xlu0 %1688, %v755
      %v1690 = vpop.permute.xlu0 %1689
      %1693 = vset.pattern.permute.xlu0 0
      %1694 = vperm.xlu0 %1693, %v756
      %v1695 = vpop.permute.xlu0 %1694
      %1698 = vset.pattern.permute.xlu0 0
      %1699 = vperm.xlu0 %1698, %v757
      %v1700 = vpop.permute.xlu0 %1699
      %1703 = vset.pattern.permute.xlu0 0
      %1704 = vperm.xlu0 %1703, %v758
      %v1705 = vpop.permute.xlu0 %1704
      %1708 = vset.pattern.permute.xlu0 0
      %1709 = vperm.xlu0 %1708, %v759
      %v1710 = vpop.permute.xlu0 %1709
      %1713 = vset.pattern.permute.xlu0 0
      %1714 = vperm.xlu0 %1713, %v760
      %v1715 = vpop.permute.xlu0 %1714
      %1718 = vset.pattern.permute.xlu0 0
      %1719 = vperm.xlu0 %1718, %v761
      %v1720 = vpop.permute.xlu0 %1719
      %1723 = vset.pattern.permute.xlu0 0
      %1724 = vperm.xlu0 %1723, %v762
      %v1725 = vpop.permute.xlu0 %1724
      %1728 = vset.pattern.permute.xlu0 0
      %1729 = vperm.xlu0 %1728, %v763
      %v1730 = vpop.permute.xlu0 %1729
      %1733 = vset.pattern.permute.xlu0 0
      %1734 = vperm.xlu0 %1733, %v764
      %v1735 = vpop.permute.xlu0 %1734
      %1738 = vset.pattern.permute.xlu0 0
      %1739 = vperm.xlu0 %1738, %v765
      %v1740 = vpop.permute.xlu0 %1739
      %1743 = vset.pattern.permute.xlu0 0
      %1744 = vperm.xlu0 %1743, %v766
      %v1745 = vpop.permute.xlu0 %1744
      %1748 = vset.pattern.permute.xlu0 0
      %1749 = vperm.xlu0 %1748, %v767
      %v1750 = vpop.permute.xlu0 %1749
      %1753 = vset.pattern.permute.xlu0 0
      %1754 = vperm.xlu0 %1753, %v768
      %v1755 = vpop.permute.xlu0 %1754
      %1758 = vset.pattern.permute.xlu0 0
      %1759 = vperm.xlu0 %1758, %v769
      %v1760 = vpop.permute.xlu0 %1759
      %1763 = vset.pattern.permute.xlu0 0
      %1764 = vperm.xlu0 %1763, %v770
      %v1765 = vpop.permute.xlu0 %1764
      %1768 = vset.pattern.permute.xlu0 0
      %1769 = vperm.xlu0 %1768, %v771
      %v1770 = vpop.permute.xlu0 %1769
      %1773 = vset.pattern.permute.xlu0 0
      %1774 = vperm.xlu0 %1773, %v772
      %v1775 = vpop.permute.xlu0 %1774
      %1778 = vset.pattern.permute.xlu0 0
      %1779 = vperm.xlu0 %1778, %v773
      %v1780 = vpop.permute.xlu0 %1779
      %1783 = vset.pattern.permute.xlu0 0
      %1784 = vperm.xlu0 %1783, %v774
      %v1785 = vpop.permute.xlu0 %1784
      %1788 = vset.pattern.permute.xlu0 0
      %1789 = vperm.xlu0 %1788, %v775
      %v1790 = vpop.permute.xlu0 %1789
      %1793 = vset.pattern.permute.xlu0 0
      %1794 = vperm.xlu0 %1793, %v776
      %v1795 = vpop.permute.xlu0 %1794
      %1798 = vset.pattern.permute.xlu0 0
      %1799 = vperm.xlu0 %1798, %v777
      %v1800 = vpop.permute.xlu0 %1799
      %1803 = vset.pattern.permute.xlu0 0
      %1804 = vperm.xlu0 %1803, %v778
      %v1805 = vpop.permute.xlu0 %1804
      %1808 = vset.pattern.permute.xlu0 0
      %1809 = vperm.xlu0 %1808, %v779
      %v1810 = vpop.permute.xlu0 %1809
      %1813 = vset.pattern.permute.xlu0 0
      %1814 = vperm.xlu0 %1813, %v780
      %v1815 = vpop.permute.xlu0 %1814
      %1818 = vset.pattern.permute.xlu0 0
      %1819 = vperm.xlu0 %1818, %v781
      %v1820 = vpop.permute.xlu0 %1819
      %1823 = vset.pattern.permute.xlu0 0
      %1824 = vperm.xlu0 %1823, %v782
      %v1825 = vpop.permute.xlu0 %1824
      %1828 = vset.pattern.permute.xlu0 0
      %1829 = vperm.xlu0 %1828, %v783
      %v1830 = vpop.permute.xlu0 %1829
      %1833 = vset.pattern.permute.xlu0 0
      %1834 = vperm.xlu0 %1833, %v784
      %v1835 = vpop.permute.xlu0 %1834
      %1838 = vset.pattern.permute.xlu0 0
      %1839 = vperm.xlu0 %1838, %v785
      %v1840 = vpop.permute.xlu0 %1839
      %1843 = vset.pattern.permute.xlu0 0
      %1844 = vperm.xlu0 %1843, %v786
      %v1845 = vpop.permute.xlu0 %1844
      %1848 = vset.pattern.permute.xlu0 0
      %1849 = vperm.xlu0 %1848, %v787
      %v1850 = vpop.permute.xlu0 %1849
      %1853 = vset.pattern.permute.xlu0 0
      %1854 = vperm.xlu0 %1853, %v788
      %v1855 = vpop.permute.xlu0 %1854
      %1858 = vset.pattern.permute.xlu0 0
      %1859 = vperm.xlu0 %1858, %v789
      %v1860 = vpop.permute.xlu0 %1859
      %1863 = vset.pattern.permute.xlu0 0
      %1864 = vperm.xlu0 %1863, %v790
      %v1865 = vpop.permute.xlu0 %1864
      %1868 = vset.pattern.permute.xlu0 0
      %1869 = vperm.xlu0 %1868, %v791
      %v1870 = vpop.permute.xlu0 %1869
      %1873 = vset.pattern.permute.xlu0 0
      %1874 = vperm.xlu0 %1873, %v792
      %v1875 = vpop.permute.xlu0 %1874
      %1878 = vset.pattern.permute.xlu0 0
      %1879 = vperm.xlu0 %1878, %v793
      %v1880 = vpop.permute.xlu0 %1879
      %1883 = vset.pattern.permute.xlu0 0
      %1884 = vperm.xlu0 %1883, %v794
      %v1885 = vpop.permute.xlu0 %1884
      %1888 = vset.pattern.permute.xlu0 0
      %1889 = vperm.xlu0 %1888, %v795
      %v1890 = vpop.permute.xlu0 %1889
      %1893 = vset.pattern.permute.xlu0 0
      %1894 = vperm.xlu0 %1893, %v796
      %v1895 = vpop.permute.xlu0 %1894
      %1898 = vset.pattern.permute.xlu0 0
      %1899 = vperm.xlu0 %1898, %v797
      %v1900 = vpop.permute.xlu0 %1899
      %1903 = vset.pattern.permute.xlu0 0
      %1904 = vperm.xlu0 %1903, %v798
      %v1905 = vpop.permute.xlu0 %1904
      %1908 = vset.pattern.permute.xlu0 0
      %1909 = vperm.xlu0 %1908, %v799
      %v1910 = vpop.permute.xlu0 %1909
      %1913 = vset.pattern.permute.xlu0 0
      %1914 = vperm.xlu0 %1913, %v800
      %v1915 = vpop.permute.xlu0 %1914
      %1918 = vset.pattern.permute.xlu0 0
      %1919 = vperm.xlu0 %1918, %v801
      %v1920 = vpop.permute.xlu0 %1919
      %1923 = vset.pattern.permute.xlu0 0
      %1924 = vperm.xlu0 %1923, %v802
      %v1925 = vpop.permute.xlu0 %1924
      %1928 = vset.pattern.permute.xlu0 0
      %1929 = vperm.xlu0 %1928, %v803
      %v1930 = vpop.permute.xlu0 %1929
      %1933 = vset.pattern.permute.xlu0 0
      %1934 = vperm.xlu0 %1933, %v804
      %v1935 = vpop.permute.xlu0 %1934
      %1938 = vset.pattern.permute.xlu0 0
      %1939 = vperm.xlu0 %1938, %v805
      %v1940 = vpop.permute.xlu0 %1939
      %1943 = vset.pattern.permute.xlu0 0
      %1944 = vperm.xlu0 %1943, %v806
      %v1945 = vpop.permute.xlu0 %1944
      %1948 = vset.pattern.permute.xlu0 0
      %1949 = vperm.xlu0 %1948, %v807
      %v1950 = vpop.permute.xlu0 %1949
      %1953 = vset.pattern.permute.xlu0 0
      %1954 = vperm.xlu0 %1953, %v808
      %v1955 = vpop.permute.xlu0 %1954
      %1958 = vset.pattern.permute.xlu0 0
      %1959 = vperm.xlu0 %1958, %v809
      %v1960 = vpop.permute.xlu0 %1959
      %1963 = vset.pattern.permute.xlu0 0
      %1964 = vperm.xlu0 %1963, %v810
      %v1965 = vpop.permute.xlu0 %1964
      %1968 = vset.pattern.permute.xlu0 0
      %1969 = vperm.xlu0 %1968, %v811
      %v1970 = vpop.permute.xlu0 %1969
      %1973 = vset.pattern.permute.xlu0 0
      %1974 = vperm.xlu0 %1973, %v812
      %v1975 = vpop.permute.xlu0 %1974
      %1978 = vset.pattern.permute.xlu0 0
      %1979 = vperm.xlu0 %1978, %v813
      %v1980 = vpop.permute.xlu0 %1979
      %1983 = vset.pattern.permute.xlu0 0
      %1984 = vperm.xlu0 %1983, %v814
      %v1985 = vpop.permute.xlu0 %1984
      %1988 = vset.pattern.permute.xlu0 0
      %1989 = vperm.xlu0 %1988, %v815
      %v1990 = vpop.permute.xlu0 %1989
      %1993 = vset.pattern.permute.xlu0 0
      %1994 = vperm.xlu0 %1993, %v816
      %v1995 = vpop.permute.xlu0 %1994
      %1998 = vset.pattern.permute.xlu0 0
      %1999 = vperm.xlu0 %1998, %v817
      %v2000 = vpop.permute.xlu0 %1999
      %2003 = vset.pattern.permute.xlu0 0
      %2004 = vperm.xlu0 %2003, %v818
      %v2005 = vpop.permute.xlu0 %2004
      %2008 = vset.pattern.permute.xlu0 0
      %2009 = vperm.xlu0 %2008, %v819
      %v2010 = vpop.permute.xlu0 %2009
      %2013 = vset.pattern.permute.xlu0 0
      %2014 = vperm.xlu0 %2013, %v820
      %v2015 = vpop.permute.xlu0 %2014
      %2018 = vset.pattern.permute.xlu0 0
      %2019 = vperm.xlu0 %2018, %v821
      %v2020 = vpop.permute.xlu0 %2019
      %2023 = vset.pattern.permute.xlu0 0
      %2024 = vperm.xlu0 %2023, %v822
      %v2025 = vpop.permute.xlu0 %2024
      %2028 = vset.pattern.permute.xlu0 0
      %2029 = vperm.xlu0 %2028, %v823
      %v2030 = vpop.permute.xlu0 %2029
      %2033 = vset.pattern.permute.xlu0 0
      %2034 = vperm.xlu0 %2033, %v824
      %v2035 = vpop.permute.xlu0 %2034
      %2038 = vset.pattern.permute.xlu0 0
      %2039 = vperm.xlu0 %2038, %v825
      %v2040 = vpop.permute.xlu0 %2039
      %2043 = vset.pattern.permute.xlu0 0
      %2044 = vperm.xlu0 %2043, %v826
      %v2045 = vpop.permute.xlu0 %2044
      %2048 = vset.pattern.permute.xlu0 0
      %2049 = vperm.xlu0 %2048, %v827
      %v2050 = vpop.permute.xlu0 %2049
      %2053 = vset.pattern.permute.xlu0 0
      %2054 = vperm.xlu0 %2053, %v828
      %v2055 = vpop.permute.xlu0 %2054
      %2058 = vset.pattern.permute.xlu0 0
      %2059 = vperm.xlu0 %2058, %v829
      %v2060 = vpop.permute.xlu0 %2059
      %2063 = vset.pattern.permute.xlu0 0
      %2064 = vperm.xlu0 %2063, %v830
      %v2065 = vpop.permute.xlu0 %2064
      %2068 = vset.pattern.permute.xlu0 0
      %2069 = vperm.xlu0 %2068, %v831
      %v2070 = vpop.permute.xlu0 %2069
      %2073 = vset.pattern.permute.xlu0 0
      %2074 = vperm.xlu0 %2073, %v832
      %v2075 = vpop.permute.xlu0 %2074
      %2078 = vset.pattern.permute.xlu0 0
      %2079 = vperm.xlu0 %2078, %v833
      %v2080 = vpop.permute.xlu0 %2079
      %2083 = vset.pattern.permute.xlu0 0
      %2084 = vperm.xlu0 %2083, %v834
      %v2085 = vpop.permute.xlu0 %2084
      %2088 = vset.pattern.permute.xlu0 0
      %2089 = vperm.xlu0 %2088, %v835
      %v2090 = vpop.permute.xlu0 %2089
      %2093 = vset.pattern.permute.xlu0 0
      %2094 = vperm.xlu0 %2093, %v836
      %v2095 = vpop.permute.xlu0 %2094
      %2098 = vset.pattern.permute.xlu0 0
      %2099 = vperm.xlu0 %2098, %v837
      %v2100 = vpop.permute.xlu0 %2099
      %2103 = vset.pattern.permute.xlu0 0
      %2104 = vperm.xlu0 %2103, %v838
      %v2105 = vpop.permute.xlu0 %2104
      %2108 = vset.pattern.permute.xlu0 0
      %2109 = vperm.xlu0 %2108, %v839
      %v2110 = vpop.permute.xlu0 %2109
      %2113 = vset.pattern.permute.xlu0 0
      %2114 = vperm.xlu0 %2113, %v840
      %v2115 = vpop.permute.xlu0 %2114
      %2118 = vset.pattern.permute.xlu0 0
      %2119 = vperm.xlu0 %2118, %v841
      %v2120 = vpop.permute.xlu0 %2119
      %v2122 = vmul.f32 %v330, %v845
      %v2123 = vmul.f32 %v331, %v850
      %v2124 = vmul.f32 %v332, %v855
      %v2125 = vmul.f32 %v333, %v860
      %v2126 = vmul.f32 %v334, %v865
      %v2127 = vmul.f32 %v335, %v870
      %v2128 = vmul.f32 %v336, %v875
      %v2129 = vmul.f32 %v337, %v880
      %v2130 = vmul.f32 %v338, %v885
      %v2131 = vmul.f32 %v339, %v890
      %v2132 = vmul.f32 %v340, %v895
      %v2133 = vmul.f32 %v341, %v900
      %v2134 = vmul.f32 %v342, %v905
      %v2135 = vmul.f32 %v343, %v910
      %v2136 = vmul.f32 %v344, %v915
      %v2137 = vmul.f32 %v345, %v920
      %v2138 = vmul.f32 %v346, %v925
      %v2139 = vmul.f32 %v347, %v930
      %v2140 = vmul.f32 %v348, %v935
      %v2141 = vmul.f32 %v349, %v940
      %v2142 = vmul.f32 %v350, %v945
      %v2143 = vmul.f32 %v351, %v950
      %v2144 = vmul.f32 %v352, %v955
      %v2145 = vmul.f32 %v353, %v960
      %v2146 = vmul.f32 %v354, %v965
      %v2147 = vmul.f32 %v355, %v970
      %v2148 = vmul.f32 %v356, %v975
      %v2149 = vmul.f32 %v357, %v980
      %v2150 = vmul.f32 %v358, %v985
      %v2151 = vmul.f32 %v359, %v990
      %v2152 = vmul.f32 %v360, %v995
      %v2153 = vmul.f32 %v361, %v1000
      %v2154 = vmul.f32 %v362, %v1005
      %v2155 = vmul.f32 %v363, %v1010
      %v2156 = vmul.f32 %v364, %v1015
      %v2157 = vmul.f32 %v365, %v1020
      %v2158 = vmul.f32 %v366, %v1025
      %v2159 = vmul.f32 %v367, %v1030
      %v2160 = vmul.f32 %v368, %v1035
      %v2161 = vmul.f32 %v369, %v1040
      %v2162 = vmul.f32 %v370, %v1045
      %v2163 = vmul.f32 %v371, %v1050
      %v2164 = vmul.f32 %v372, %v1055
      %v2165 = vmul.f32 %v373, %v1060
      %v2166 = vmul.f32 %v374, %v1065
      %v2167 = vmul.f32 %v375, %v1070
      %v2168 = vmul.f32 %v376, %v1075
      %v2169 = vmul.f32 %v377, %v1080
      %v2170 = vmul.f32 %v378, %v1085
      %v2171 = vmul.f32 %v379, %v1090
      %v2172 = vmul.f32 %v380, %v1095
      %v2173 = vmul.f32 %v381, %v1100
      %v2174 = vmul.f32 %v382, %v1105
      %v2175 = vmul.f32 %v383, %v1110
      %v2176 = vmul.f32 %v384, %v1115
      %v2177 = vmul.f32 %v385, %v1120
      %v2178 = vmul.f32 %v386, %v1125
      %v2179 = vmul.f32 %v387, %v1130
      %v2180 = vmul.f32 %v388, %v1135
      %v2181 = vmul.f32 %v389, %v1140
      %v2182 = vmul.f32 %v390, %v1145
      %v2183 = vmul.f32 %v391, %v1150
      %v2184 = vmul.f32 %v392, %v1155
      %v2185 = vmul.f32 %v393, %v1160
      %v2186 = vmul.f32 %v394, %v1165
      %v2187 = vmul.f32 %v395, %v1170
      %v2188 = vmul.f32 %v396, %v1175
      %v2189 = vmul.f32 %v397, %v1180
      %v2190 = vmul.f32 %v398, %v1185
      %v2191 = vmul.f32 %v399, %v1190
      %v2192 = vmul.f32 %v400, %v1195
      %v2193 = vmul.f32 %v401, %v1200
      %v2194 = vmul.f32 %v402, %v1205
      %v2195 = vmul.f32 %v403, %v1210
      %v2196 = vmul.f32 %v404, %v1215
      %v2197 = vmul.f32 %v405, %v1220
      %v2198 = vmul.f32 %v406, %v1225
      %v2199 = vmul.f32 %v407, %v1230
      %v2200 = vmul.f32 %v408, %v1235
      %v2201 = vmul.f32 %v409, %v1240
      %v2202 = vmul.f32 %v410, %v1245
      %v2203 = vmul.f32 %v411, %v1250
      %v2204 = vmul.f32 %v412, %v1255
      %v2205 = vmul.f32 %v413, %v1260
      %v2206 = vmul.f32 %v414, %v1265
      %v2207 = vmul.f32 %v415, %v1270
      %v2208 = vmul.f32 %v416, %v1275
      %v2209 = vmul.f32 %v417, %v1280
      %v2210 = vmul.f32 %v418, %v1285
      %v2211 = vmul.f32 %v419, %v1290
      %v2212 = vmul.f32 %v420, %v1295
      %v2213 = vmul.f32 %v421, %v1300
      %v2214 = vmul.f32 %v422, %v1305
      %v2215 = vmul.f32 %v423, %v1310
      %v2216 = vmul.f32 %v424, %v1315
      %v2217 = vmul.f32 %v425, %v1320
      %v2218 = vmul.f32 %v426, %v1325
      %v2219 = vmul.f32 %v427, %v1330
      %v2220 = vmul.f32 %v428, %v1335
      %v2221 = vmul.f32 %v429, %v1340
      %v2222 = vmul.f32 %v430, %v1345
      %v2223 = vmul.f32 %v431, %v1350
      %v2224 = vmul.f32 %v432, %v1355
      %v2225 = vmul.f32 %v433, %v1360
      %v2226 = vmul.f32 %v434, %v1365
      %v2227 = vmul.f32 %v435, %v1370
      %v2228 = vmul.f32 %v436, %v1375
      %v2229 = vmul.f32 %v437, %v1380
      %v2230 = vmul.f32 %v438, %v1385
      %v2231 = vmul.f32 %v439, %v1390
      %v2232 = vmul.f32 %v440, %v1395
      %v2233 = vmul.f32 %v441, %v1400
      %v2234 = vmul.f32 %v442, %v1405
      %v2235 = vmul.f32 %v443, %v1410
      %v2236 = vmul.f32 %v444, %v1415
      %v2237 = vmul.f32 %v445, %v1420
      %v2238 = vmul.f32 %v446, %v1425
      %v2239 = vmul.f32 %v447, %v1430
      %v2240 = vmul.f32 %v448, %v1435
      %v2241 = vmul.f32 %v449, %v1440
      %v2242 = vmul.f32 %v450, %v1445
      %v2243 = vmul.f32 %v451, %v1450
      %v2244 = vmul.f32 %v452, %v1455
      %v2245 = vmul.f32 %v453, %v1460
      %v2246 = vmul.f32 %v454, %v1465
      %v2247 = vmul.f32 %v455, %v1470
      %v2248 = vmul.f32 %v456, %v1475
      %v2249 = vmul.f32 %v457, %v1480
      %v2250 = vmul.f32 %v458, %v1485
      %v2251 = vmul.f32 %v459, %v1490
      %v2252 = vmul.f32 %v460, %v1495
      %v2253 = vmul.f32 %v461, %v1500
      %v2254 = vmul.f32 %v462, %v1505
      %v2255 = vmul.f32 %v463, %v1510
      %v2256 = vmul.f32 %v464, %v1515
      %v2257 = vmul.f32 %v465, %v1520
      %v2258 = vmul.f32 %v466, %v1525
      %v2259 = vmul.f32 %v467, %v1530
      %v2260 = vmul.f32 %v468, %v1535
      %v2261 = vmul.f32 %v469, %v1540
      %v2262 = vmul.f32 %v470, %v1545
      %v2263 = vmul.f32 %v471, %v1550
      %v2264 = vmul.f32 %v472, %v1555
      %v2265 = vmul.f32 %v473, %v1560
      %v2266 = vmul.f32 %v474, %v1565
      %v2267 = vmul.f32 %v475, %v1570
      %v2268 = vmul.f32 %v476, %v1575
      %v2269 = vmul.f32 %v477, %v1580
      %v2270 = vmul.f32 %v478, %v1585
      %v2271 = vmul.f32 %v479, %v1590
      %v2272 = vmul.f32 %v480, %v1595
      %v2273 = vmul.f32 %v481, %v1600
      %v2274 = vmul.f32 %v482, %v1605
      %v2275 = vmul.f32 %v483, %v1610
      %v2276 = vmul.f32 %v484, %v1615
      %v2277 = vmul.f32 %v485, %v1620
      %v2278 = vmul.f32 %v486, %v1625
      %v2279 = vmul.f32 %v487, %v1630
      %v2280 = vmul.f32 %v488, %v1635
      %v2281 = vmul.f32 %v489, %v1640
      %v2282 = vmul.f32 %v490, %v1645
      %v2283 = vmul.f32 %v491, %v1650
      %v2284 = vmul.f32 %v492, %v1655
      %v2285 = vmul.f32 %v493, %v1660
      %v2286 = vmul.f32 %v494, %v1665
      %v2287 = vmul.f32 %v495, %v1670
      %v2288 = vmul.f32 %v496, %v1675
      %v2289 = vmul.f32 %v497, %v1680
      %v2290 = vmul.f32 %v498, %v1685
      %v2291 = vmul.f32 %v499, %v1690
      %v2292 = vmul.f32 %v500, %v1695
      %v2293 = vmul.f32 %v501, %v1700
      %v2294 = vmul.f32 %v502, %v1705
      %v2295 = vmul.f32 %v503, %v1710
      %v2296 = vmul.f32 %v504, %v1715
      %v2297 = vmul.f32 %v505, %v1720
      %v2298 = vmul.f32 %v506, %v1725
      %v2299 = vmul.f32 %v507, %v1730
      %v2300 = vmul.f32 %v508, %v1735
      %v2301 = vmul.f32 %v509, %v1740
      %v2302 = vmul.f32 %v510, %v1745
      %v2303 = vmul.f32 %v511, %v1750
      %v2304 = vmul.f32 %v512, %v1755
      %v2305 = vmul.f32 %v513, %v1760
      %v2306 = vmul.f32 %v514, %v1765
      %v2307 = vmul.f32 %v515, %v1770
      %v2308 = vmul.f32 %v516, %v1775
      %v2309 = vmul.f32 %v517, %v1780
      %v2310 = vmul.f32 %v518, %v1785
      %v2311 = vmul.f32 %v519, %v1790
      %v2312 = vmul.f32 %v520, %v1795
      %v2313 = vmul.f32 %v521, %v1800
      %v2314 = vmul.f32 %v522, %v1805
      %v2315 = vmul.f32 %v523, %v1810
      %v2316 = vmul.f32 %v524, %v1815
      %v2317 = vmul.f32 %v525, %v1820
      %v2318 = vmul.f32 %v526, %v1825
      %v2319 = vmul.f32 %v527, %v1830
      %v2320 = vmul.f32 %v528, %v1835
      %v2321 = vmul.f32 %v529, %v1840
      %v2322 = vmul.f32 %v530, %v1845
      %v2323 = vmul.f32 %v531, %v1850
      %v2324 = vmul.f32 %v532, %v1855
      %v2325 = vmul.f32 %v533, %v1860
      %v2326 = vmul.f32 %v534, %v1865
      %v2327 = vmul.f32 %v535, %v1870
      %v2328 = vmul.f32 %v536, %v1875
      %v2329 = vmul.f32 %v537, %v1880
      %v2330 = vmul.f32 %v538, %v1885
      %v2331 = vmul.f32 %v539, %v1890
      %v2332 = vmul.f32 %v540, %v1895
      %v2333 = vmul.f32 %v541, %v1900
      %v2334 = vmul.f32 %v542, %v1905
      %v2335 = vmul.f32 %v543, %v1910
      %v2336 = vmul.f32 %v544, %v1915
      %v2337 = vmul.f32 %v545, %v1920
      %v2338 = vmul.f32 %v546, %v1925
      %v2339 = vmul.f32 %v547, %v1930
      %v2340 = vmul.f32 %v548, %v1935
      %v2341 = vmul.f32 %v549, %v1940
      %v2342 = vmul.f32 %v550, %v1945
      %v2343 = vmul.f32 %v551, %v1950
      %v2344 = vmul.f32 %v552, %v1955
      %v2345 = vmul.f32 %v553, %v1960
      %v2346 = vmul.f32 %v554, %v1965
      %v2347 = vmul.f32 %v555, %v1970
      %v2348 = vmul.f32 %v556, %v1975
      %v2349 = vmul.f32 %v557, %v1980
      %v2350 = vmul.f32 %v558, %v1985
      %v2351 = vmul.f32 %v559, %v1990
      %v2352 = vmul.f32 %v560, %v1995
      %v2353 = vmul.f32 %v561, %v2000
      %v2354 = vmul.f32 %v562, %v2005
      %v2355 = vmul.f32 %v563, %v2010
      %v2356 = vmul.f32 %v564, %v2015
      %v2357 = vmul.f32 %v565, %v2020
      %v2358 = vmul.f32 %v566, %v2025
      %v2359 = vmul.f32 %v567, %v2030
      %v2360 = vmul.f32 %v568, %v2035
      %v2361 = vmul.f32 %v569, %v2040
      %v2362 = vmul.f32 %v570, %v2045
      %v2363 = vmul.f32 %v571, %v2050
      %v2364 = vmul.f32 %v572, %v2055
      %v2365 = vmul.f32 %v573, %v2060
      %v2366 = vmul.f32 %v574, %v2065
      %v2367 = vmul.f32 %v575, %v2070
      %v2368 = vmul.f32 %v576, %v2075
      %v2369 = vmul.f32 %v577, %v2080
      %v2370 = vmul.f32 %v578, %v2085
      %v2371 = vmul.f32 %v579, %v2090
      %v2372 = vmul.f32 %v580, %v2095
      %v2373 = vmul.f32 %v581, %v2100
      %v2374 = vmul.f32 %v582, %v2105
      %v2375 = vmul.f32 %v583, %v2110
      %v2376 = vmul.f32 %v584, %v2115
      %v2377 = vmul.f32 %v585, %v2120
      %v2378 = vld [vmem:[%s3] sm:$0xff]
      %v2379 = vld [vmem:[%s3 + $0x8] sm:$0xff]
      %v2380 = vld [vmem:[%s3 + $0x10] sm:$0xff]
      %v2381 = vld [vmem:[%s3 + $0x18] sm:$0xff]
      %v2382 = vld [vmem:[%s3 + $0x20] sm:$0xff]
      %v2383 = vld [vmem:[%s3 + $0x28] sm:$0xff]
      %v2384 = vld [vmem:[%s3 + $0x30] sm:$0xff]
      %v2385 = vld [vmem:[%s3 + $0x38] sm:$0xff]
      %v2386 = vld [vmem:[%s3 + $0x40] sm:$0xff]
      %v2387 = vld [vmem:[%s3 + $0x48] sm:$0xff]
      %v2388 = vld [vmem:[%s3 + $0x50] sm:$0xff]
      %v2389 = vld [vmem:[%s3 + $0x58] sm:$0xff]
      %v2390 = vld [vmem:[%s3 + $0x60] sm:$0xff]
      %v2391 = vld [vmem:[%s3 + $0x68] sm:$0xff]
      %v2392 = vld [vmem:[%s3 + $0x70] sm:$0xff]
      %v2393 = vld [vmem:[%s3 + $0x78] sm:$0xff]
      %v2394 = vld [vmem:[%s3 + $0x80] sm:$0xff]
      %v2395 = vld [vmem:[%s3 + $0x88] sm:$0xff]
      %v2396 = vld [vmem:[%s3 + $0x90] sm:$0xff]
      %v2397 = vld [vmem:[%s3 + $0x98] sm:$0xff]
      %v2398 = vld [vmem:[%s3 + $0xa0] sm:$0xff]
      %v2399 = vld [vmem:[%s3 + $0xa8] sm:$0xff]
      %v2400 = vld [vmem:[%s3 + $0xb0] sm:$0xff]
      %v2401 = vld [vmem:[%s3 + $0xb8] sm:$0xff]
      %v2402 = vld [vmem:[%s3 + $0xc0] sm:$0xff]
      %v2403 = vld [vmem:[%s3 + $0xc8] sm:$0xff]
      %v2404 = vld [vmem:[%s3 + $0xd0] sm:$0xff]
      %v2405 = vld [vmem:[%s3 + $0xd8] sm:$0xff]
      %v2406 = vld [vmem:[%s3 + $0xe0] sm:$0xff]
      %v2407 = vld [vmem:[%s3 + $0xe8] sm:$0xff]
      %v2408 = vld [vmem:[%s3 + $0xf0] sm:$0xff]
      %v2409 = vld [vmem:[%s3 + $0xf8] sm:$0xff]
      %v2410 = vld [vmem:[%s3 + $0x100] sm:$0xff]
      %v2411 = vld [vmem:[%s3 + $0x108] sm:$0xff]
      %v2412 = vld [vmem:[%s3 + $0x110] sm:$0xff]
      %v2413 = vld [vmem:[%s3 + $0x118] sm:$0xff]
      %v2414 = vld [vmem:[%s3 + $0x120] sm:$0xff]
      %v2415 = vld [vmem:[%s3 + $0x128] sm:$0xff]
      %v2416 = vld [vmem:[%s3 + $0x130] sm:$0xff]
      %v2417 = vld [vmem:[%s3 + $0x138] sm:$0xff]
      %v2418 = vld [vmem:[%s3 + $0x140] sm:$0xff]
      %v2419 = vld [vmem:[%s3 + $0x148] sm:$0xff]
      %v2420 = vld [vmem:[%s3 + $0x150] sm:$0xff]
      %v2421 = vld [vmem:[%s3 + $0x158] sm:$0xff]
      %v2422 = vld [vmem:[%s3 + $0x160] sm:$0xff]
      %v2423 = vld [vmem:[%s3 + $0x168] sm:$0xff]
      %v2424 = vld [vmem:[%s3 + $0x170] sm:$0xff]
      %v2425 = vld [vmem:[%s3 + $0x178] sm:$0xff]
      %v2426 = vld [vmem:[%s3 + $0x180] sm:$0xff]
      %v2427 = vld [vmem:[%s3 + $0x188] sm:$0xff]
      %v2428 = vld [vmem:[%s3 + $0x190] sm:$0xff]
      %v2429 = vld [vmem:[%s3 + $0x198] sm:$0xff]
      %v2430 = vld [vmem:[%s3 + $0x1a0] sm:$0xff]
      %v2431 = vld [vmem:[%s3 + $0x1a8] sm:$0xff]
      %v2432 = vld [vmem:[%s3 + $0x1b0] sm:$0xff]
      %v2433 = vld [vmem:[%s3 + $0x1b8] sm:$0xff]
      %v2434 = vld [vmem:[%s3 + $0x1c0] sm:$0xff]
      %v2435 = vld [vmem:[%s3 + $0x1c8] sm:$0xff]
      %v2436 = vld [vmem:[%s3 + $0x1d0] sm:$0xff]
      %v2437 = vld [vmem:[%s3 + $0x1d8] sm:$0xff]
      %v2438 = vld [vmem:[%s3 + $0x1e0] sm:$0xff]
      %v2439 = vld [vmem:[%s3 + $0x1e8] sm:$0xff]
      %v2440 = vld [vmem:[%s3 + $0x1f0] sm:$0xff]
      %v2441 = vld [vmem:[%s3 + $0x1f8] sm:$0xff]
      %v2442 = vld [vmem:[%s3 + $0x200] sm:$0xff]
      %v2443 = vld [vmem:[%s3 + $0x208] sm:$0xff]
      %v2444 = vld [vmem:[%s3 + $0x210] sm:$0xff]
      %v2445 = vld [vmem:[%s3 + $0x218] sm:$0xff]
      %v2446 = vld [vmem:[%s3 + $0x220] sm:$0xff]
      %v2447 = vld [vmem:[%s3 + $0x228] sm:$0xff]
      %v2448 = vld [vmem:[%s3 + $0x230] sm:$0xff]
      %v2449 = vld [vmem:[%s3 + $0x238] sm:$0xff]
      %v2450 = vld [vmem:[%s3 + $0x240] sm:$0xff]
      %v2451 = vld [vmem:[%s3 + $0x248] sm:$0xff]
      %v2452 = vld [vmem:[%s3 + $0x250] sm:$0xff]
      %v2453 = vld [vmem:[%s3 + $0x258] sm:$0xff]
      %v2454 = vld [vmem:[%s3 + $0x260] sm:$0xff]
      %v2455 = vld [vmem:[%s3 + $0x268] sm:$0xff]
      %v2456 = vld [vmem:[%s3 + $0x270] sm:$0xff]
      %v2457 = vld [vmem:[%s3 + $0x278] sm:$0xff]
      %v2458 = vld [vmem:[%s3 + $0x280] sm:$0xff]
      %v2459 = vld [vmem:[%s3 + $0x288] sm:$0xff]
      %v2460 = vld [vmem:[%s3 + $0x290] sm:$0xff]
      %v2461 = vld [vmem:[%s3 + $0x298] sm:$0xff]
      %v2462 = vld [vmem:[%s3 + $0x2a0] sm:$0xff]
      %v2463 = vld [vmem:[%s3 + $0x2a8] sm:$0xff]
      %v2464 = vld [vmem:[%s3 + $0x2b0] sm:$0xff]
      %v2465 = vld [vmem:[%s3 + $0x2b8] sm:$0xff]
      %v2466 = vld [vmem:[%s3 + $0x2c0] sm:$0xff]
      %v2467 = vld [vmem:[%s3 + $0x2c8] sm:$0xff]
      %v2468 = vld [vmem:[%s3 + $0x2d0] sm:$0xff]
      %v2469 = vld [vmem:[%s3 + $0x2d8] sm:$0xff]
      %v2470 = vld [vmem:[%s3 + $0x2e0] sm:$0xff]
      %v2471 = vld [vmem:[%s3 + $0x2e8] sm:$0xff]
      %v2472 = vld [vmem:[%s3 + $0x2f0] sm:$0xff]
      %v2473 = vld [vmem:[%s3 + $0x2f8] sm:$0xff]
      %v2474 = vld [vmem:[%s3 + $0x300] sm:$0xff]
      %v2475 = vld [vmem:[%s3 + $0x308] sm:$0xff]
      %v2476 = vld [vmem:[%s3 + $0x310] sm:$0xff]
      %v2477 = vld [vmem:[%s3 + $0x318] sm:$0xff]
      %v2478 = vld [vmem:[%s3 + $0x320] sm:$0xff]
      %v2479 = vld [vmem:[%s3 + $0x328] sm:$0xff]
      %v2480 = vld [vmem:[%s3 + $0x330] sm:$0xff]
      %v2481 = vld [vmem:[%s3 + $0x338] sm:$0xff]
      %v2482 = vld [vmem:[%s3 + $0x340] sm:$0xff]
      %v2483 = vld [vmem:[%s3 + $0x348] sm:$0xff]
      %v2484 = vld [vmem:[%s3 + $0x350] sm:$0xff]
      %v2485 = vld [vmem:[%s3 + $0x358] sm:$0xff]
      %v2486 = vld [vmem:[%s3 + $0x360] sm:$0xff]
      %v2487 = vld [vmem:[%s3 + $0x368] sm:$0xff]
      %v2488 = vld [vmem:[%s3 + $0x370] sm:$0xff]
      %v2489 = vld [vmem:[%s3 + $0x378] sm:$0xff]
      %v2490 = vld [vmem:[%s3 + $0x380] sm:$0xff]
      %v2491 = vld [vmem:[%s3 + $0x388] sm:$0xff]
      %v2492 = vld [vmem:[%s3 + $0x390] sm:$0xff]
      %v2493 = vld [vmem:[%s3 + $0x398] sm:$0xff]
      %v2494 = vld [vmem:[%s3 + $0x3a0] sm:$0xff]
      %v2495 = vld [vmem:[%s3 + $0x3a8] sm:$0xff]
      %v2496 = vld [vmem:[%s3 + $0x3b0] sm:$0xff]
      %v2497 = vld [vmem:[%s3 + $0x3b8] sm:$0xff]
      %v2498 = vld [vmem:[%s3 + $0x3c0] sm:$0xff]
      %v2499 = vld [vmem:[%s3 + $0x3c8] sm:$0xff]
      %v2500 = vld [vmem:[%s3 + $0x3d0] sm:$0xff]
      %v2501 = vld [vmem:[%s3 + $0x3d8] sm:$0xff]
      %v2502 = vld [vmem:[%s3 + $0x3e0] sm:$0xff]
      %v2503 = vld [vmem:[%s3 + $0x3e8] sm:$0xff]
      %v2504 = vld [vmem:[%s3 + $0x3f0] sm:$0xff]
      %v2505 = vld [vmem:[%s3 + $0x3f8] sm:$0xff]
      %v2506 = vld [vmem:[%s3 + $0x400] sm:$0xff]
      %v2507 = vld [vmem:[%s3 + $0x408] sm:$0xff]
      %v2508 = vld [vmem:[%s3 + $0x410] sm:$0xff]
      %v2509 = vld [vmem:[%s3 + $0x418] sm:$0xff]
      %v2510 = vld [vmem:[%s3 + $0x420] sm:$0xff]
      %v2511 = vld [vmem:[%s3 + $0x428] sm:$0xff]
      %v2512 = vld [vmem:[%s3 + $0x430] sm:$0xff]
      %v2513 = vld [vmem:[%s3 + $0x438] sm:$0xff]
      %v2514 = vld [vmem:[%s3 + $0x440] sm:$0xff]
      %v2515 = vld [vmem:[%s3 + $0x448] sm:$0xff]
      %v2516 = vld [vmem:[%s3 + $0x450] sm:$0xff]
      %v2517 = vld [vmem:[%s3 + $0x458] sm:$0xff]
      %v2518 = vld [vmem:[%s3 + $0x460] sm:$0xff]
      %v2519 = vld [vmem:[%s3 + $0x468] sm:$0xff]
      %v2520 = vld [vmem:[%s3 + $0x470] sm:$0xff]
      %v2521 = vld [vmem:[%s3 + $0x478] sm:$0xff]
      %v2522 = vld [vmem:[%s3 + $0x480] sm:$0xff]
      %v2523 = vld [vmem:[%s3 + $0x488] sm:$0xff]
      %v2524 = vld [vmem:[%s3 + $0x490] sm:$0xff]
      %v2525 = vld [vmem:[%s3 + $0x498] sm:$0xff]
      %v2526 = vld [vmem:[%s3 + $0x4a0] sm:$0xff]
      %v2527 = vld [vmem:[%s3 + $0x4a8] sm:$0xff]
      %v2528 = vld [vmem:[%s3 + $0x4b0] sm:$0xff]
      %v2529 = vld [vmem:[%s3 + $0x4b8] sm:$0xff]
      %v2530 = vld [vmem:[%s3 + $0x4c0] sm:$0xff]
      %v2531 = vld [vmem:[%s3 + $0x4c8] sm:$0xff]
      %v2532 = vld [vmem:[%s3 + $0x4d0] sm:$0xff]
      %v2533 = vld [vmem:[%s3 + $0x4d8] sm:$0xff]
      %v2534 = vld [vmem:[%s3 + $0x4e0] sm:$0xff]
      %v2535 = vld [vmem:[%s3 + $0x4e8] sm:$0xff]
      %v2536 = vld [vmem:[%s3 + $0x4f0] sm:$0xff]
      %v2537 = vld [vmem:[%s3 + $0x4f8] sm:$0xff]
      %v2538 = vld [vmem:[%s3 + $0x500] sm:$0xff]
      %v2539 = vld [vmem:[%s3 + $0x508] sm:$0xff]
      %v2540 = vld [vmem:[%s3 + $0x510] sm:$0xff]
      %v2541 = vld [vmem:[%s3 + $0x518] sm:$0xff]
      %v2542 = vld [vmem:[%s3 + $0x520] sm:$0xff]
      %v2543 = vld [vmem:[%s3 + $0x528] sm:$0xff]
      %v2544 = vld [vmem:[%s3 + $0x530] sm:$0xff]
      %v2545 = vld [vmem:[%s3 + $0x538] sm:$0xff]
      %v2546 = vld [vmem:[%s3 + $0x540] sm:$0xff]
      %v2547 = vld [vmem:[%s3 + $0x548] sm:$0xff]
      %v2548 = vld [vmem:[%s3 + $0x550] sm:$0xff]
      %v2549 = vld [vmem:[%s3 + $0x558] sm:$0xff]
      %v2550 = vld [vmem:[%s3 + $0x560] sm:$0xff]
      %v2551 = vld [vmem:[%s3 + $0x568] sm:$0xff]
      %v2552 = vld [vmem:[%s3 + $0x570] sm:$0xff]
      %v2553 = vld [vmem:[%s3 + $0x578] sm:$0xff]
      %v2554 = vld [vmem:[%s3 + $0x580] sm:$0xff]
      %v2555 = vld [vmem:[%s3 + $0x588] sm:$0xff]
      %v2556 = vld [vmem:[%s3 + $0x590] sm:$0xff]
      %v2557 = vld [vmem:[%s3 + $0x598] sm:$0xff]
      %v2558 = vld [vmem:[%s3 + $0x5a0] sm:$0xff]
      %v2559 = vld [vmem:[%s3 + $0x5a8] sm:$0xff]
      %v2560 = vld [vmem:[%s3 + $0x5b0] sm:$0xff]
      %v2561 = vld [vmem:[%s3 + $0x5b8] sm:$0xff]
      %v2562 = vld [vmem:[%s3 + $0x5c0] sm:$0xff]
      %v2563 = vld [vmem:[%s3 + $0x5c8] sm:$0xff]
      %v2564 = vld [vmem:[%s3 + $0x5d0] sm:$0xff]
      %v2565 = vld [vmem:[%s3 + $0x5d8] sm:$0xff]
      %v2566 = vld [vmem:[%s3 + $0x5e0] sm:$0xff]
      %v2567 = vld [vmem:[%s3 + $0x5e8] sm:$0xff]
      %v2568 = vld [vmem:[%s3 + $0x5f0] sm:$0xff]
      %v2569 = vld [vmem:[%s3 + $0x5f8] sm:$0xff]
      %v2570 = vld [vmem:[%s3 + $0x600] sm:$0xff]
      %v2571 = vld [vmem:[%s3 + $0x608] sm:$0xff]
      %v2572 = vld [vmem:[%s3 + $0x610] sm:$0xff]
      %v2573 = vld [vmem:[%s3 + $0x618] sm:$0xff]
      %v2574 = vld [vmem:[%s3 + $0x620] sm:$0xff]
      %v2575 = vld [vmem:[%s3 + $0x628] sm:$0xff]
      %v2576 = vld [vmem:[%s3 + $0x630] sm:$0xff]
      %v2577 = vld [vmem:[%s3 + $0x638] sm:$0xff]
      %v2578 = vld [vmem:[%s3 + $0x640] sm:$0xff]
      %v2579 = vld [vmem:[%s3 + $0x648] sm:$0xff]
      %v2580 = vld [vmem:[%s3 + $0x650] sm:$0xff]
      %v2581 = vld [vmem:[%s3 + $0x658] sm:$0xff]
      %v2582 = vld [vmem:[%s3 + $0x660] sm:$0xff]
      %v2583 = vld [vmem:[%s3 + $0x668] sm:$0xff]
      %v2584 = vld [vmem:[%s3 + $0x670] sm:$0xff]
      %v2585 = vld [vmem:[%s3 + $0x678] sm:$0xff]
      %v2586 = vld [vmem:[%s3 + $0x680] sm:$0xff]
      %v2587 = vld [vmem:[%s3 + $0x688] sm:$0xff]
      %v2588 = vld [vmem:[%s3 + $0x690] sm:$0xff]
      %v2589 = vld [vmem:[%s3 + $0x698] sm:$0xff]
      %v2590 = vld [vmem:[%s3 + $0x6a0] sm:$0xff]
      %v2591 = vld [vmem:[%s3 + $0x6a8] sm:$0xff]
      %v2592 = vld [vmem:[%s3 + $0x6b0] sm:$0xff]
      %v2593 = vld [vmem:[%s3 + $0x6b8] sm:$0xff]
      %v2594 = vld [vmem:[%s3 + $0x6c0] sm:$0xff]
      %v2595 = vld [vmem:[%s3 + $0x6c8] sm:$0xff]
      %v2596 = vld [vmem:[%s3 + $0x6d0] sm:$0xff]
      %v2597 = vld [vmem:[%s3 + $0x6d8] sm:$0xff]
      %v2598 = vld [vmem:[%s3 + $0x6e0] sm:$0xff]
      %v2599 = vld [vmem:[%s3 + $0x6e8] sm:$0xff]
      %v2600 = vld [vmem:[%s3 + $0x6f0] sm:$0xff]
      %v2601 = vld [vmem:[%s3 + $0x6f8] sm:$0xff]
      %v2602 = vld [vmem:[%s3 + $0x700] sm:$0xff]
      %v2603 = vld [vmem:[%s3 + $0x708] sm:$0xff]
      %v2604 = vld [vmem:[%s3 + $0x710] sm:$0xff]
      %v2605 = vld [vmem:[%s3 + $0x718] sm:$0xff]
      %v2606 = vld [vmem:[%s3 + $0x720] sm:$0xff]
      %v2607 = vld [vmem:[%s3 + $0x728] sm:$0xff]
      %v2608 = vld [vmem:[%s3 + $0x730] sm:$0xff]
      %v2609 = vld [vmem:[%s3 + $0x738] sm:$0xff]
      %v2610 = vld [vmem:[%s3 + $0x740] sm:$0xff]
      %v2611 = vld [vmem:[%s3 + $0x748] sm:$0xff]
      %v2612 = vld [vmem:[%s3 + $0x750] sm:$0xff]
      %v2613 = vld [vmem:[%s3 + $0x758] sm:$0xff]
      %v2614 = vld [vmem:[%s3 + $0x760] sm:$0xff]
      %v2615 = vld [vmem:[%s3 + $0x768] sm:$0xff]
      %v2616 = vld [vmem:[%s3 + $0x770] sm:$0xff]
      %v2617 = vld [vmem:[%s3 + $0x778] sm:$0xff]
      %v2618 = vld [vmem:[%s3 + $0x780] sm:$0xff]
      %v2619 = vld [vmem:[%s3 + $0x788] sm:$0xff]
      %v2620 = vld [vmem:[%s3 + $0x790] sm:$0xff]
      %v2621 = vld [vmem:[%s3 + $0x798] sm:$0xff]
      %v2622 = vld [vmem:[%s3 + $0x7a0] sm:$0xff]
      %v2623 = vld [vmem:[%s3 + $0x7a8] sm:$0xff]
      %v2624 = vld [vmem:[%s3 + $0x7b0] sm:$0xff]
      %v2625 = vld [vmem:[%s3 + $0x7b8] sm:$0xff]
      %v2626 = vld [vmem:[%s3 + $0x7c0] sm:$0xff]
      %v2627 = vld [vmem:[%s3 + $0x7c8] sm:$0xff]
      %v2628 = vld [vmem:[%s3 + $0x7d0] sm:$0xff]
      %v2629 = vld [vmem:[%s3 + $0x7d8] sm:$0xff]
      %v2630 = vld [vmem:[%s3 + $0x7e0] sm:$0xff]
      %v2631 = vld [vmem:[%s3 + $0x7e8] sm:$0xff]
      %v2632 = vld [vmem:[%s3 + $0x7f0] sm:$0xff]
      %v2633 = vld [vmem:[%s3 + $0x7f8] sm:$0xff]
      %2635 = vset.pattern.permute.xlu0 0
      %2636 = vperm.xlu0 %2635, %v2378
      %v2637 = vpop.permute.xlu0 %2636
      %2640 = vset.pattern.permute.xlu0 0
      %2641 = vperm.xlu0 %2640, %v2379
      %v2642 = vpop.permute.xlu0 %2641
      %2645 = vset.pattern.permute.xlu0 0
      %2646 = vperm.xlu0 %2645, %v2380
      %v2647 = vpop.permute.xlu0 %2646
      %2650 = vset.pattern.permute.xlu0 0
      %2651 = vperm.xlu0 %2650, %v2381
      %v2652 = vpop.permute.xlu0 %2651
      %2655 = vset.pattern.permute.xlu0 0
      %2656 = vperm.xlu0 %2655, %v2382
      %v2657 = vpop.permute.xlu0 %2656
      %2660 = vset.pattern.permute.xlu0 0
      %2661 = vperm.xlu0 %2660, %v2383
      %v2662 = vpop.permute.xlu0 %2661
      %2665 = vset.pattern.permute.xlu0 0
      %2666 = vperm.xlu0 %2665, %v2384
      %v2667 = vpop.permute.xlu0 %2666
      %2670 = vset.pattern.permute.xlu0 0
      %2671 = vperm.xlu0 %2670, %v2385
      %v2672 = vpop.permute.xlu0 %2671
      %2675 = vset.pattern.permute.xlu0 0
      %2676 = vperm.xlu0 %2675, %v2386
      %v2677 = vpop.permute.xlu0 %2676
      %2680 = vset.pattern.permute.xlu0 0
      %2681 = vperm.xlu0 %2680, %v2387
      %v2682 = vpop.permute.xlu0 %2681
      %2685 = vset.pattern.permute.xlu0 0
      %2686 = vperm.xlu0 %2685, %v2388
      %v2687 = vpop.permute.xlu0 %2686
      %2690 = vset.pattern.permute.xlu0 0
      %2691 = vperm.xlu0 %2690, %v2389
      %v2692 = vpop.permute.xlu0 %2691
      %2695 = vset.pattern.permute.xlu0 0
      %2696 = vperm.xlu0 %2695, %v2390
      %v2697 = vpop.permute.xlu0 %2696
      %2700 = vset.pattern.permute.xlu0 0
      %2701 = vperm.xlu0 %2700, %v2391
      %v2702 = vpop.permute.xlu0 %2701
      %2705 = vset.pattern.permute.xlu0 0
      %2706 = vperm.xlu0 %2705, %v2392
      %v2707 = vpop.permute.xlu0 %2706
      %2710 = vset.pattern.permute.xlu0 0
      %2711 = vperm.xlu0 %2710, %v2393
      %v2712 = vpop.permute.xlu0 %2711
      %2715 = vset.pattern.permute.xlu0 0
      %2716 = vperm.xlu0 %2715, %v2394
      %v2717 = vpop.permute.xlu0 %2716
      %2720 = vset.pattern.permute.xlu0 0
      %2721 = vperm.xlu0 %2720, %v2395
      %v2722 = vpop.permute.xlu0 %2721
      %2725 = vset.pattern.permute.xlu0 0
      %2726 = vperm.xlu0 %2725, %v2396
      %v2727 = vpop.permute.xlu0 %2726
      %2730 = vset.pattern.permute.xlu0 0
      %2731 = vperm.xlu0 %2730, %v2397
      %v2732 = vpop.permute.xlu0 %2731
      %2735 = vset.pattern.permute.xlu0 0
      %2736 = vperm.xlu0 %2735, %v2398
      %v2737 = vpop.permute.xlu0 %2736
      %2740 = vset.pattern.permute.xlu0 0
      %2741 = vperm.xlu0 %2740, %v2399
      %v2742 = vpop.permute.xlu0 %2741
      %2745 = vset.pattern.permute.xlu0 0
      %2746 = vperm.xlu0 %2745, %v2400
      %v2747 = vpop.permute.xlu0 %2746
      %2750 = vset.pattern.permute.xlu0 0
      %2751 = vperm.xlu0 %2750, %v2401
      %v2752 = vpop.permute.xlu0 %2751
      %2755 = vset.pattern.permute.xlu0 0
      %2756 = vperm.xlu0 %2755, %v2402
      %v2757 = vpop.permute.xlu0 %2756
      %2760 = vset.pattern.permute.xlu0 0
      %2761 = vperm.xlu0 %2760, %v2403
      %v2762 = vpop.permute.xlu0 %2761
      %2765 = vset.pattern.permute.xlu0 0
      %2766 = vperm.xlu0 %2765, %v2404
      %v2767 = vpop.permute.xlu0 %2766
      %2770 = vset.pattern.permute.xlu0 0
      %2771 = vperm.xlu0 %2770, %v2405
      %v2772 = vpop.permute.xlu0 %2771
      %2775 = vset.pattern.permute.xlu0 0
      %2776 = vperm.xlu0 %2775, %v2406
      %v2777 = vpop.permute.xlu0 %2776
      %2780 = vset.pattern.permute.xlu0 0
      %2781 = vperm.xlu0 %2780, %v2407
      %v2782 = vpop.permute.xlu0 %2781
      %2785 = vset.pattern.permute.xlu0 0
      %2786 = vperm.xlu0 %2785, %v2408
      %v2787 = vpop.permute.xlu0 %2786
      %2790 = vset.pattern.permute.xlu0 0
      %2791 = vperm.xlu0 %2790, %v2409
      %v2792 = vpop.permute.xlu0 %2791
      %2795 = vset.pattern.permute.xlu0 0
      %2796 = vperm.xlu0 %2795, %v2410
      %v2797 = vpop.permute.xlu0 %2796
      %2800 = vset.pattern.permute.xlu0 0
      %2801 = vperm.xlu0 %2800, %v2411
      %v2802 = vpop.permute.xlu0 %2801
      %2805 = vset.pattern.permute.xlu0 0
      %2806 = vperm.xlu0 %2805, %v2412
      %v2807 = vpop.permute.xlu0 %2806
      %2810 = vset.pattern.permute.xlu0 0
      %2811 = vperm.xlu0 %2810, %v2413
      %v2812 = vpop.permute.xlu0 %2811
      %2815 = vset.pattern.permute.xlu0 0
      %2816 = vperm.xlu0 %2815, %v2414
      %v2817 = vpop.permute.xlu0 %2816
      %2820 = vset.pattern.permute.xlu0 0
      %2821 = vperm.xlu0 %2820, %v2415
      %v2822 = vpop.permute.xlu0 %2821
      %2825 = vset.pattern.permute.xlu0 0
      %2826 = vperm.xlu0 %2825, %v2416
      %v2827 = vpop.permute.xlu0 %2826
      %2830 = vset.pattern.permute.xlu0 0
      %2831 = vperm.xlu0 %2830, %v2417
      %v2832 = vpop.permute.xlu0 %2831
      %2835 = vset.pattern.permute.xlu0 0
      %2836 = vperm.xlu0 %2835, %v2418
      %v2837 = vpop.permute.xlu0 %2836
      %2840 = vset.pattern.permute.xlu0 0
      %2841 = vperm.xlu0 %2840, %v2419
      %v2842 = vpop.permute.xlu0 %2841
      %2845 = vset.pattern.permute.xlu0 0
      %2846 = vperm.xlu0 %2845, %v2420
      %v2847 = vpop.permute.xlu0 %2846
      %2850 = vset.pattern.permute.xlu0 0
      %2851 = vperm.xlu0 %2850, %v2421
      %v2852 = vpop.permute.xlu0 %2851
      %2855 = vset.pattern.permute.xlu0 0
      %2856 = vperm.xlu0 %2855, %v2422
      %v2857 = vpop.permute.xlu0 %2856
      %2860 = vset.pattern.permute.xlu0 0
      %2861 = vperm.xlu0 %2860, %v2423
      %v2862 = vpop.permute.xlu0 %2861
      %2865 = vset.pattern.permute.xlu0 0
      %2866 = vperm.xlu0 %2865, %v2424
      %v2867 = vpop.permute.xlu0 %2866
      %2870 = vset.pattern.permute.xlu0 0
      %2871 = vperm.xlu0 %2870, %v2425
      %v2872 = vpop.permute.xlu0 %2871
      %2875 = vset.pattern.permute.xlu0 0
      %2876 = vperm.xlu0 %2875, %v2426
      %v2877 = vpop.permute.xlu0 %2876
      %2880 = vset.pattern.permute.xlu0 0
      %2881 = vperm.xlu0 %2880, %v2427
      %v2882 = vpop.permute.xlu0 %2881
      %2885 = vset.pattern.permute.xlu0 0
      %2886 = vperm.xlu0 %2885, %v2428
      %v2887 = vpop.permute.xlu0 %2886
      %2890 = vset.pattern.permute.xlu0 0
      %2891 = vperm.xlu0 %2890, %v2429
      %v2892 = vpop.permute.xlu0 %2891
      %2895 = vset.pattern.permute.xlu0 0
      %2896 = vperm.xlu0 %2895, %v2430
      %v2897 = vpop.permute.xlu0 %2896
      %2900 = vset.pattern.permute.xlu0 0
      %2901 = vperm.xlu0 %2900, %v2431
      %v2902 = vpop.permute.xlu0 %2901
      %2905 = vset.pattern.permute.xlu0 0
      %2906 = vperm.xlu0 %2905, %v2432
      %v2907 = vpop.permute.xlu0 %2906
      %2910 = vset.pattern.permute.xlu0 0
      %2911 = vperm.xlu0 %2910, %v2433
      %v2912 = vpop.permute.xlu0 %2911
      %2915 = vset.pattern.permute.xlu0 0
      %2916 = vperm.xlu0 %2915, %v2434
      %v2917 = vpop.permute.xlu0 %2916
      %2920 = vset.pattern.permute.xlu0 0
      %2921 = vperm.xlu0 %2920, %v2435
      %v2922 = vpop.permute.xlu0 %2921
      %2925 = vset.pattern.permute.xlu0 0
      %2926 = vperm.xlu0 %2925, %v2436
      %v2927 = vpop.permute.xlu0 %2926
      %2930 = vset.pattern.permute.xlu0 0
      %2931 = vperm.xlu0 %2930, %v2437
      %v2932 = vpop.permute.xlu0 %2931
      %2935 = vset.pattern.permute.xlu0 0
      %2936 = vperm.xlu0 %2935, %v2438
      %v2937 = vpop.permute.xlu0 %2936
      %2940 = vset.pattern.permute.xlu0 0
      %2941 = vperm.xlu0 %2940, %v2439
      %v2942 = vpop.permute.xlu0 %2941
      %2945 = vset.pattern.permute.xlu0 0
      %2946 = vperm.xlu0 %2945, %v2440
      %v2947 = vpop.permute.xlu0 %2946
      %2950 = vset.pattern.permute.xlu0 0
      %2951 = vperm.xlu0 %2950, %v2441
      %v2952 = vpop.permute.xlu0 %2951
      %2955 = vset.pattern.permute.xlu0 0
      %2956 = vperm.xlu0 %2955, %v2442
      %v2957 = vpop.permute.xlu0 %2956
      %2960 = vset.pattern.permute.xlu0 0
      %2961 = vperm.xlu0 %2960, %v2443
      %v2962 = vpop.permute.xlu0 %2961
      %2965 = vset.pattern.permute.xlu0 0
      %2966 = vperm.xlu0 %2965, %v2444
      %v2967 = vpop.permute.xlu0 %2966
      %2970 = vset.pattern.permute.xlu0 0
      %2971 = vperm.xlu0 %2970, %v2445
      %v2972 = vpop.permute.xlu0 %2971
      %2975 = vset.pattern.permute.xlu0 0
      %2976 = vperm.xlu0 %2975, %v2446
      %v2977 = vpop.permute.xlu0 %2976
      %2980 = vset.pattern.permute.xlu0 0
      %2981 = vperm.xlu0 %2980, %v2447
      %v2982 = vpop.permute.xlu0 %2981
      %2985 = vset.pattern.permute.xlu0 0
      %2986 = vperm.xlu0 %2985, %v2448
      %v2987 = vpop.permute.xlu0 %2986
      %2990 = vset.pattern.permute.xlu0 0
      %2991 = vperm.xlu0 %2990, %v2449
      %v2992 = vpop.permute.xlu0 %2991
      %2995 = vset.pattern.permute.xlu0 0
      %2996 = vperm.xlu0 %2995, %v2450
      %v2997 = vpop.permute.xlu0 %2996
      %3000 = vset.pattern.permute.xlu0 0
      %3001 = vperm.xlu0 %3000, %v2451
      %v3002 = vpop.permute.xlu0 %3001
      %3005 = vset.pattern.permute.xlu0 0
      %3006 = vperm.xlu0 %3005, %v2452
      %v3007 = vpop.permute.xlu0 %3006
      %3010 = vset.pattern.permute.xlu0 0
      %3011 = vperm.xlu0 %3010, %v2453
      %v3012 = vpop.permute.xlu0 %3011
      %3015 = vset.pattern.permute.xlu0 0
      %3016 = vperm.xlu0 %3015, %v2454
      %v3017 = vpop.permute.xlu0 %3016
      %3020 = vset.pattern.permute.xlu0 0
      %3021 = vperm.xlu0 %3020, %v2455
      %v3022 = vpop.permute.xlu0 %3021
      %3025 = vset.pattern.permute.xlu0 0
      %3026 = vperm.xlu0 %3025, %v2456
      %v3027 = vpop.permute.xlu0 %3026
      %3030 = vset.pattern.permute.xlu0 0
      %3031 = vperm.xlu0 %3030, %v2457
      %v3032 = vpop.permute.xlu0 %3031
      %3035 = vset.pattern.permute.xlu0 0
      %3036 = vperm.xlu0 %3035, %v2458
      %v3037 = vpop.permute.xlu0 %3036
      %3040 = vset.pattern.permute.xlu0 0
      %3041 = vperm.xlu0 %3040, %v2459
      %v3042 = vpop.permute.xlu0 %3041
      %3045 = vset.pattern.permute.xlu0 0
      %3046 = vperm.xlu0 %3045, %v2460
      %v3047 = vpop.permute.xlu0 %3046
      %3050 = vset.pattern.permute.xlu0 0
      %3051 = vperm.xlu0 %3050, %v2461
      %v3052 = vpop.permute.xlu0 %3051
      %3055 = vset.pattern.permute.xlu0 0
      %3056 = vperm.xlu0 %3055, %v2462
      %v3057 = vpop.permute.xlu0 %3056
      %3060 = vset.pattern.permute.xlu0 0
      %3061 = vperm.xlu0 %3060, %v2463
      %v3062 = vpop.permute.xlu0 %3061
      %3065 = vset.pattern.permute.xlu0 0
      %3066 = vperm.xlu0 %3065, %v2464
      %v3067 = vpop.permute.xlu0 %3066
      %3070 = vset.pattern.permute.xlu0 0
      %3071 = vperm.xlu0 %3070, %v2465
      %v3072 = vpop.permute.xlu0 %3071
      %3075 = vset.pattern.permute.xlu0 0
      %3076 = vperm.xlu0 %3075, %v2466
      %v3077 = vpop.permute.xlu0 %3076
      %3080 = vset.pattern.permute.xlu0 0
      %3081 = vperm.xlu0 %3080, %v2467
      %v3082 = vpop.permute.xlu0 %3081
      %3085 = vset.pattern.permute.xlu0 0
      %3086 = vperm.xlu0 %3085, %v2468
      %v3087 = vpop.permute.xlu0 %3086
      %3090 = vset.pattern.permute.xlu0 0
      %3091 = vperm.xlu0 %3090, %v2469
      %v3092 = vpop.permute.xlu0 %3091
      %3095 = vset.pattern.permute.xlu0 0
      %3096 = vperm.xlu0 %3095, %v2470
      %v3097 = vpop.permute.xlu0 %3096
      %3100 = vset.pattern.permute.xlu0 0
      %3101 = vperm.xlu0 %3100, %v2471
      %v3102 = vpop.permute.xlu0 %3101
      %3105 = vset.pattern.permute.xlu0 0
      %3106 = vperm.xlu0 %3105, %v2472
      %v3107 = vpop.permute.xlu0 %3106
      %3110 = vset.pattern.permute.xlu0 0
      %3111 = vperm.xlu0 %3110, %v2473
      %v3112 = vpop.permute.xlu0 %3111
      %3115 = vset.pattern.permute.xlu0 0
      %3116 = vperm.xlu0 %3115, %v2474
      %v3117 = vpop.permute.xlu0 %3116
      %3120 = vset.pattern.permute.xlu0 0
      %3121 = vperm.xlu0 %3120, %v2475
      %v3122 = vpop.permute.xlu0 %3121
      %3125 = vset.pattern.permute.xlu0 0
      %3126 = vperm.xlu0 %3125, %v2476
      %v3127 = vpop.permute.xlu0 %3126
      %3130 = vset.pattern.permute.xlu0 0
      %3131 = vperm.xlu0 %3130, %v2477
      %v3132 = vpop.permute.xlu0 %3131
      %3135 = vset.pattern.permute.xlu0 0
      %3136 = vperm.xlu0 %3135, %v2478
      %v3137 = vpop.permute.xlu0 %3136
      %3140 = vset.pattern.permute.xlu0 0
      %3141 = vperm.xlu0 %3140, %v2479
      %v3142 = vpop.permute.xlu0 %3141
      %3145 = vset.pattern.permute.xlu0 0
      %3146 = vperm.xlu0 %3145, %v2480
      %v3147 = vpop.permute.xlu0 %3146
      %3150 = vset.pattern.permute.xlu0 0
      %3151 = vperm.xlu0 %3150, %v2481
      %v3152 = vpop.permute.xlu0 %3151
      %3155 = vset.pattern.permute.xlu0 0
      %3156 = vperm.xlu0 %3155, %v2482
      %v3157 = vpop.permute.xlu0 %3156
      %3160 = vset.pattern.permute.xlu0 0
      %3161 = vperm.xlu0 %3160, %v2483
      %v3162 = vpop.permute.xlu0 %3161
      %3165 = vset.pattern.permute.xlu0 0
      %3166 = vperm.xlu0 %3165, %v2484
      %v3167 = vpop.permute.xlu0 %3166
      %3170 = vset.pattern.permute.xlu0 0
      %3171 = vperm.xlu0 %3170, %v2485
      %v3172 = vpop.permute.xlu0 %3171
      %3175 = vset.pattern.permute.xlu0 0
      %3176 = vperm.xlu0 %3175, %v2486
      %v3177 = vpop.permute.xlu0 %3176
      %3180 = vset.pattern.permute.xlu0 0
      %3181 = vperm.xlu0 %3180, %v2487
      %v3182 = vpop.permute.xlu0 %3181
      %3185 = vset.pattern.permute.xlu0 0
      %3186 = vperm.xlu0 %3185, %v2488
      %v3187 = vpop.permute.xlu0 %3186
      %3190 = vset.pattern.permute.xlu0 0
      %3191 = vperm.xlu0 %3190, %v2489
      %v3192 = vpop.permute.xlu0 %3191
      %3195 = vset.pattern.permute.xlu0 0
      %3196 = vperm.xlu0 %3195, %v2490
      %v3197 = vpop.permute.xlu0 %3196
      %3200 = vset.pattern.permute.xlu0 0
      %3201 = vperm.xlu0 %3200, %v2491
      %v3202 = vpop.permute.xlu0 %3201
      %3205 = vset.pattern.permute.xlu0 0
      %3206 = vperm.xlu0 %3205, %v2492
      %v3207 = vpop.permute.xlu0 %3206
      %3210 = vset.pattern.permute.xlu0 0
      %3211 = vperm.xlu0 %3210, %v2493
      %v3212 = vpop.permute.xlu0 %3211
      %3215 = vset.pattern.permute.xlu0 0
      %3216 = vperm.xlu0 %3215, %v2494
      %v3217 = vpop.permute.xlu0 %3216
      %3220 = vset.pattern.permute.xlu0 0
      %3221 = vperm.xlu0 %3220, %v2495
      %v3222 = vpop.permute.xlu0 %3221
      %3225 = vset.pattern.permute.xlu0 0
      %3226 = vperm.xlu0 %3225, %v2496
      %v3227 = vpop.permute.xlu0 %3226
      %3230 = vset.pattern.permute.xlu0 0
      %3231 = vperm.xlu0 %3230, %v2497
      %v3232 = vpop.permute.xlu0 %3231
      %3235 = vset.pattern.permute.xlu0 0
      %3236 = vperm.xlu0 %3235, %v2498
      %v3237 = vpop.permute.xlu0 %3236
      %3240 = vset.pattern.permute.xlu0 0
      %3241 = vperm.xlu0 %3240, %v2499
      %v3242 = vpop.permute.xlu0 %3241
      %3245 = vset.pattern.permute.xlu0 0
      %3246 = vperm.xlu0 %3245, %v2500
      %v3247 = vpop.permute.xlu0 %3246
      %3250 = vset.pattern.permute.xlu0 0
      %3251 = vperm.xlu0 %3250, %v2501
      %v3252 = vpop.permute.xlu0 %3251
      %3255 = vset.pattern.permute.xlu0 0
      %3256 = vperm.xlu0 %3255, %v2502
      %v3257 = vpop.permute.xlu0 %3256
      %3260 = vset.pattern.permute.xlu0 0
      %3261 = vperm.xlu0 %3260, %v2503
      %v3262 = vpop.permute.xlu0 %3261
      %3265 = vset.pattern.permute.xlu0 0
      %3266 = vperm.xlu0 %3265, %v2504
      %v3267 = vpop.permute.xlu0 %3266
      %3270 = vset.pattern.permute.xlu0 0
      %3271 = vperm.xlu0 %3270, %v2505
      %v3272 = vpop.permute.xlu0 %3271
      %3275 = vset.pattern.permute.xlu0 0
      %3276 = vperm.xlu0 %3275, %v2506
      %v3277 = vpop.permute.xlu0 %3276
      %3280 = vset.pattern.permute.xlu0 0
      %3281 = vperm.xlu0 %3280, %v2507
      %v3282 = vpop.permute.xlu0 %3281
      %3285 = vset.pattern.permute.xlu0 0
      %3286 = vperm.xlu0 %3285, %v2508
      %v3287 = vpop.permute.xlu0 %3286
      %3290 = vset.pattern.permute.xlu0 0
      %3291 = vperm.xlu0 %3290, %v2509
      %v3292 = vpop.permute.xlu0 %3291
      %3295 = vset.pattern.permute.xlu0 0
      %3296 = vperm.xlu0 %3295, %v2510
      %v3297 = vpop.permute.xlu0 %3296
      %3300 = vset.pattern.permute.xlu0 0
      %3301 = vperm.xlu0 %3300, %v2511
      %v3302 = vpop.permute.xlu0 %3301
      %3305 = vset.pattern.permute.xlu0 0
      %3306 = vperm.xlu0 %3305, %v2512
      %v3307 = vpop.permute.xlu0 %3306
      %3310 = vset.pattern.permute.xlu0 0
      %3311 = vperm.xlu0 %3310, %v2513
      %v3312 = vpop.permute.xlu0 %3311
      %3315 = vset.pattern.permute.xlu0 0
      %3316 = vperm.xlu0 %3315, %v2514
      %v3317 = vpop.permute.xlu0 %3316
      %3320 = vset.pattern.permute.xlu0 0
      %3321 = vperm.xlu0 %3320, %v2515
      %v3322 = vpop.permute.xlu0 %3321
      %3325 = vset.pattern.permute.xlu0 0
      %3326 = vperm.xlu0 %3325, %v2516
      %v3327 = vpop.permute.xlu0 %3326
      %3330 = vset.pattern.permute.xlu0 0
      %3331 = vperm.xlu0 %3330, %v2517
      %v3332 = vpop.permute.xlu0 %3331
      %3335 = vset.pattern.permute.xlu0 0
      %3336 = vperm.xlu0 %3335, %v2518
      %v3337 = vpop.permute.xlu0 %3336
      %3340 = vset.pattern.permute.xlu0 0
      %3341 = vperm.xlu0 %3340, %v2519
      %v3342 = vpop.permute.xlu0 %3341
      %3345 = vset.pattern.permute.xlu0 0
      %3346 = vperm.xlu0 %3345, %v2520
      %v3347 = vpop.permute.xlu0 %3346
      %3350 = vset.pattern.permute.xlu0 0
      %3351 = vperm.xlu0 %3350, %v2521
      %v3352 = vpop.permute.xlu0 %3351
      %3355 = vset.pattern.permute.xlu0 0
      %3356 = vperm.xlu0 %3355, %v2522
      %v3357 = vpop.permute.xlu0 %3356
      %3360 = vset.pattern.permute.xlu0 0
      %3361 = vperm.xlu0 %3360, %v2523
      %v3362 = vpop.permute.xlu0 %3361
      %3365 = vset.pattern.permute.xlu0 0
      %3366 = vperm.xlu0 %3365, %v2524
      %v3367 = vpop.permute.xlu0 %3366
      %3370 = vset.pattern.permute.xlu0 0
      %3371 = vperm.xlu0 %3370, %v2525
      %v3372 = vpop.permute.xlu0 %3371
      %3375 = vset.pattern.permute.xlu0 0
      %3376 = vperm.xlu0 %3375, %v2526
      %v3377 = vpop.permute.xlu0 %3376
      %3380 = vset.pattern.permute.xlu0 0
      %3381 = vperm.xlu0 %3380, %v2527
      %v3382 = vpop.permute.xlu0 %3381
      %3385 = vset.pattern.permute.xlu0 0
      %3386 = vperm.xlu0 %3385, %v2528
      %v3387 = vpop.permute.xlu0 %3386
      %3390 = vset.pattern.permute.xlu0 0
      %3391 = vperm.xlu0 %3390, %v2529
      %v3392 = vpop.permute.xlu0 %3391
      %3395 = vset.pattern.permute.xlu0 0
      %3396 = vperm.xlu0 %3395, %v2530
      %v3397 = vpop.permute.xlu0 %3396
      %3400 = vset.pattern.permute.xlu0 0
      %3401 = vperm.xlu0 %3400, %v2531
      %v3402 = vpop.permute.xlu0 %3401
      %3405 = vset.pattern.permute.xlu0 0
      %3406 = vperm.xlu0 %3405, %v2532
      %v3407 = vpop.permute.xlu0 %3406
      %3410 = vset.pattern.permute.xlu0 0
      %3411 = vperm.xlu0 %3410, %v2533
      %v3412 = vpop.permute.xlu0 %3411
      %3415 = vset.pattern.permute.xlu0 0
      %3416 = vperm.xlu0 %3415, %v2534
      %v3417 = vpop.permute.xlu0 %3416
      %3420 = vset.pattern.permute.xlu0 0
      %3421 = vperm.xlu0 %3420, %v2535
      %v3422 = vpop.permute.xlu0 %3421
      %3425 = vset.pattern.permute.xlu0 0
      %3426 = vperm.xlu0 %3425, %v2536
      %v3427 = vpop.permute.xlu0 %3426
      %3430 = vset.pattern.permute.xlu0 0
      %3431 = vperm.xlu0 %3430, %v2537
      %v3432 = vpop.permute.xlu0 %3431
      %3435 = vset.pattern.permute.xlu0 0
      %3436 = vperm.xlu0 %3435, %v2538
      %v3437 = vpop.permute.xlu0 %3436
      %3440 = vset.pattern.permute.xlu0 0
      %3441 = vperm.xlu0 %3440, %v2539
      %v3442 = vpop.permute.xlu0 %3441
      %3445 = vset.pattern.permute.xlu0 0
      %3446 = vperm.xlu0 %3445, %v2540
      %v3447 = vpop.permute.xlu0 %3446
      %3450 = vset.pattern.permute.xlu0 0
      %3451 = vperm.xlu0 %3450, %v2541
      %v3452 = vpop.permute.xlu0 %3451
      %3455 = vset.pattern.permute.xlu0 0
      %3456 = vperm.xlu0 %3455, %v2542
      %v3457 = vpop.permute.xlu0 %3456
      %3460 = vset.pattern.permute.xlu0 0
      %3461 = vperm.xlu0 %3460, %v2543
      %v3462 = vpop.permute.xlu0 %3461
      %3465 = vset.pattern.permute.xlu0 0
      %3466 = vperm.xlu0 %3465, %v2544
      %v3467 = vpop.permute.xlu0 %3466
      %3470 = vset.pattern.permute.xlu0 0
      %3471 = vperm.xlu0 %3470, %v2545
      %v3472 = vpop.permute.xlu0 %3471
      %3475 = vset.pattern.permute.xlu0 0
      %3476 = vperm.xlu0 %3475, %v2546
      %v3477 = vpop.permute.xlu0 %3476
      %3480 = vset.pattern.permute.xlu0 0
      %3481 = vperm.xlu0 %3480, %v2547
      %v3482 = vpop.permute.xlu0 %3481
      %3485 = vset.pattern.permute.xlu0 0
      %3486 = vperm.xlu0 %3485, %v2548
      %v3487 = vpop.permute.xlu0 %3486
      %3490 = vset.pattern.permute.xlu0 0
      %3491 = vperm.xlu0 %3490, %v2549
      %v3492 = vpop.permute.xlu0 %3491
      %3495 = vset.pattern.permute.xlu0 0
      %3496 = vperm.xlu0 %3495, %v2550
      %v3497 = vpop.permute.xlu0 %3496
      %3500 = vset.pattern.permute.xlu0 0
      %3501 = vperm.xlu0 %3500, %v2551
      %v3502 = vpop.permute.xlu0 %3501
      %3505 = vset.pattern.permute.xlu0 0
      %3506 = vperm.xlu0 %3505, %v2552
      %v3507 = vpop.permute.xlu0 %3506
      %3510 = vset.pattern.permute.xlu0 0
      %3511 = vperm.xlu0 %3510, %v2553
      %v3512 = vpop.permute.xlu0 %3511
      %3515 = vset.pattern.permute.xlu0 0
      %3516 = vperm.xlu0 %3515, %v2554
      %v3517 = vpop.permute.xlu0 %3516
      %3520 = vset.pattern.permute.xlu0 0
      %3521 = vperm.xlu0 %3520, %v2555
      %v3522 = vpop.permute.xlu0 %3521
      %3525 = vset.pattern.permute.xlu0 0
      %3526 = vperm.xlu0 %3525, %v2556
      %v3527 = vpop.permute.xlu0 %3526
      %3530 = vset.pattern.permute.xlu0 0
      %3531 = vperm.xlu0 %3530, %v2557
      %v3532 = vpop.permute.xlu0 %3531
      %3535 = vset.pattern.permute.xlu0 0
      %3536 = vperm.xlu0 %3535, %v2558
      %v3537 = vpop.permute.xlu0 %3536
      %3540 = vset.pattern.permute.xlu0 0
      %3541 = vperm.xlu0 %3540, %v2559
      %v3542 = vpop.permute.xlu0 %3541
      %3545 = vset.pattern.permute.xlu0 0
      %3546 = vperm.xlu0 %3545, %v2560
      %v3547 = vpop.permute.xlu0 %3546
      %3550 = vset.pattern.permute.xlu0 0
      %3551 = vperm.xlu0 %3550, %v2561
      %v3552 = vpop.permute.xlu0 %3551
      %3555 = vset.pattern.permute.xlu0 0
      %3556 = vperm.xlu0 %3555, %v2562
      %v3557 = vpop.permute.xlu0 %3556
      %3560 = vset.pattern.permute.xlu0 0
      %3561 = vperm.xlu0 %3560, %v2563
      %v3562 = vpop.permute.xlu0 %3561
      %3565 = vset.pattern.permute.xlu0 0
      %3566 = vperm.xlu0 %3565, %v2564
      %v3567 = vpop.permute.xlu0 %3566
      %3570 = vset.pattern.permute.xlu0 0
      %3571 = vperm.xlu0 %3570, %v2565
      %v3572 = vpop.permute.xlu0 %3571
      %3575 = vset.pattern.permute.xlu0 0
      %3576 = vperm.xlu0 %3575, %v2566
      %v3577 = vpop.permute.xlu0 %3576
      %3580 = vset.pattern.permute.xlu0 0
      %3581 = vperm.xlu0 %3580, %v2567
      %v3582 = vpop.permute.xlu0 %3581
      %3585 = vset.pattern.permute.xlu0 0
      %3586 = vperm.xlu0 %3585, %v2568
      %v3587 = vpop.permute.xlu0 %3586
      %3590 = vset.pattern.permute.xlu0 0
      %3591 = vperm.xlu0 %3590, %v2569
      %v3592 = vpop.permute.xlu0 %3591
      %3595 = vset.pattern.permute.xlu0 0
      %3596 = vperm.xlu0 %3595, %v2570
      %v3597 = vpop.permute.xlu0 %3596
      %3600 = vset.pattern.permute.xlu0 0
      %3601 = vperm.xlu0 %3600, %v2571
      %v3602 = vpop.permute.xlu0 %3601
      %3605 = vset.pattern.permute.xlu0 0
      %3606 = vperm.xlu0 %3605, %v2572
      %v3607 = vpop.permute.xlu0 %3606
      %3610 = vset.pattern.permute.xlu0 0
      %3611 = vperm.xlu0 %3610, %v2573
      %v3612 = vpop.permute.xlu0 %3611
      %3615 = vset.pattern.permute.xlu0 0
      %3616 = vperm.xlu0 %3615, %v2574
      %v3617 = vpop.permute.xlu0 %3616
      %3620 = vset.pattern.permute.xlu0 0
      %3621 = vperm.xlu0 %3620, %v2575
      %v3622 = vpop.permute.xlu0 %3621
      %3625 = vset.pattern.permute.xlu0 0
      %3626 = vperm.xlu0 %3625, %v2576
      %v3627 = vpop.permute.xlu0 %3626
      %3630 = vset.pattern.permute.xlu0 0
      %3631 = vperm.xlu0 %3630, %v2577
      %v3632 = vpop.permute.xlu0 %3631
      %3635 = vset.pattern.permute.xlu0 0
      %3636 = vperm.xlu0 %3635, %v2578
      %v3637 = vpop.permute.xlu0 %3636
      %3640 = vset.pattern.permute.xlu0 0
      %3641 = vperm.xlu0 %3640, %v2579
      %v3642 = vpop.permute.xlu0 %3641
      %3645 = vset.pattern.permute.xlu0 0
      %3646 = vperm.xlu0 %3645, %v2580
      %v3647 = vpop.permute.xlu0 %3646
      %3650 = vset.pattern.permute.xlu0 0
      %3651 = vperm.xlu0 %3650, %v2581
      %v3652 = vpop.permute.xlu0 %3651
      %3655 = vset.pattern.permute.xlu0 0
      %3656 = vperm.xlu0 %3655, %v2582
      %v3657 = vpop.permute.xlu0 %3656
      %3660 = vset.pattern.permute.xlu0 0
      %3661 = vperm.xlu0 %3660, %v2583
      %v3662 = vpop.permute.xlu0 %3661
      %3665 = vset.pattern.permute.xlu0 0
      %3666 = vperm.xlu0 %3665, %v2584
      %v3667 = vpop.permute.xlu0 %3666
      %3670 = vset.pattern.permute.xlu0 0
      %3671 = vperm.xlu0 %3670, %v2585
      %v3672 = vpop.permute.xlu0 %3671
      %3675 = vset.pattern.permute.xlu0 0
      %3676 = vperm.xlu0 %3675, %v2586
      %v3677 = vpop.permute.xlu0 %3676
      %3680 = vset.pattern.permute.xlu0 0
      %3681 = vperm.xlu0 %3680, %v2587
      %v3682 = vpop.permute.xlu0 %3681
      %3685 = vset.pattern.permute.xlu0 0
      %3686 = vperm.xlu0 %3685, %v2588
      %v3687 = vpop.permute.xlu0 %3686
      %3690 = vset.pattern.permute.xlu0 0
      %3691 = vperm.xlu0 %3690, %v2589
      %v3692 = vpop.permute.xlu0 %3691
      %3695 = vset.pattern.permute.xlu0 0
      %3696 = vperm.xlu0 %3695, %v2590
      %v3697 = vpop.permute.xlu0 %3696
      %3700 = vset.pattern.permute.xlu0 0
      %3701 = vperm.xlu0 %3700, %v2591
      %v3702 = vpop.permute.xlu0 %3701
      %3705 = vset.pattern.permute.xlu0 0
      %3706 = vperm.xlu0 %3705, %v2592
      %v3707 = vpop.permute.xlu0 %3706
      %3710 = vset.pattern.permute.xlu0 0
      %3711 = vperm.xlu0 %3710, %v2593
      %v3712 = vpop.permute.xlu0 %3711
      %3715 = vset.pattern.permute.xlu0 0
      %3716 = vperm.xlu0 %3715, %v2594
      %v3717 = vpop.permute.xlu0 %3716
      %3720 = vset.pattern.permute.xlu0 0
      %3721 = vperm.xlu0 %3720, %v2595
      %v3722 = vpop.permute.xlu0 %3721
      %3725 = vset.pattern.permute.xlu0 0
      %3726 = vperm.xlu0 %3725, %v2596
      %v3727 = vpop.permute.xlu0 %3726
      %3730 = vset.pattern.permute.xlu0 0
      %3731 = vperm.xlu0 %3730, %v2597
      %v3732 = vpop.permute.xlu0 %3731
      %3735 = vset.pattern.permute.xlu0 0
      %3736 = vperm.xlu0 %3735, %v2598
      %v3737 = vpop.permute.xlu0 %3736
      %3740 = vset.pattern.permute.xlu0 0
      %3741 = vperm.xlu0 %3740, %v2599
      %v3742 = vpop.permute.xlu0 %3741
      %3745 = vset.pattern.permute.xlu0 0
      %3746 = vperm.xlu0 %3745, %v2600
      %v3747 = vpop.permute.xlu0 %3746
      %3750 = vset.pattern.permute.xlu0 0
      %3751 = vperm.xlu0 %3750, %v2601
      %v3752 = vpop.permute.xlu0 %3751
      %3755 = vset.pattern.permute.xlu0 0
      %3756 = vperm.xlu0 %3755, %v2602
      %v3757 = vpop.permute.xlu0 %3756
      %3760 = vset.pattern.permute.xlu0 0
      %3761 = vperm.xlu0 %3760, %v2603
      %v3762 = vpop.permute.xlu0 %3761
      %3765 = vset.pattern.permute.xlu0 0
      %3766 = vperm.xlu0 %3765, %v2604
      %v3767 = vpop.permute.xlu0 %3766
      %3770 = vset.pattern.permute.xlu0 0
      %3771 = vperm.xlu0 %3770, %v2605
      %v3772 = vpop.permute.xlu0 %3771
      %3775 = vset.pattern.permute.xlu0 0
      %3776 = vperm.xlu0 %3775, %v2606
      %v3777 = vpop.permute.xlu0 %3776
      %3780 = vset.pattern.permute.xlu0 0
      %3781 = vperm.xlu0 %3780, %v2607
      %v3782 = vpop.permute.xlu0 %3781
      %3785 = vset.pattern.permute.xlu0 0
      %3786 = vperm.xlu0 %3785, %v2608
      %v3787 = vpop.permute.xlu0 %3786
      %3790 = vset.pattern.permute.xlu0 0
      %3791 = vperm.xlu0 %3790, %v2609
      %v3792 = vpop.permute.xlu0 %3791
      %3795 = vset.pattern.permute.xlu0 0
      %3796 = vperm.xlu0 %3795, %v2610
      %v3797 = vpop.permute.xlu0 %3796
      %3800 = vset.pattern.permute.xlu0 0
      %3801 = vperm.xlu0 %3800, %v2611
      %v3802 = vpop.permute.xlu0 %3801
      %3805 = vset.pattern.permute.xlu0 0
      %3806 = vperm.xlu0 %3805, %v2612
      %v3807 = vpop.permute.xlu0 %3806
      %3810 = vset.pattern.permute.xlu0 0
      %3811 = vperm.xlu0 %3810, %v2613
      %v3812 = vpop.permute.xlu0 %3811
      %3815 = vset.pattern.permute.xlu0 0
      %3816 = vperm.xlu0 %3815, %v2614
      %v3817 = vpop.permute.xlu0 %3816
      %3820 = vset.pattern.permute.xlu0 0
      %3821 = vperm.xlu0 %3820, %v2615
      %v3822 = vpop.permute.xlu0 %3821
      %3825 = vset.pattern.permute.xlu0 0
      %3826 = vperm.xlu0 %3825, %v2616
      %v3827 = vpop.permute.xlu0 %3826
      %3830 = vset.pattern.permute.xlu0 0
      %3831 = vperm.xlu0 %3830, %v2617
      %v3832 = vpop.permute.xlu0 %3831
      %3835 = vset.pattern.permute.xlu0 0
      %3836 = vperm.xlu0 %3835, %v2618
      %v3837 = vpop.permute.xlu0 %3836
      %3840 = vset.pattern.permute.xlu0 0
      %3841 = vperm.xlu0 %3840, %v2619
      %v3842 = vpop.permute.xlu0 %3841
      %3845 = vset.pattern.permute.xlu0 0
      %3846 = vperm.xlu0 %3845, %v2620
      %v3847 = vpop.permute.xlu0 %3846
      %3850 = vset.pattern.permute.xlu0 0
      %3851 = vperm.xlu0 %3850, %v2621
      %v3852 = vpop.permute.xlu0 %3851
      %3855 = vset.pattern.permute.xlu0 0
      %3856 = vperm.xlu0 %3855, %v2622
      %v3857 = vpop.permute.xlu0 %3856
      %3860 = vset.pattern.permute.xlu0 0
      %3861 = vperm.xlu0 %3860, %v2623
      %v3862 = vpop.permute.xlu0 %3861
      %3865 = vset.pattern.permute.xlu0 0
      %3866 = vperm.xlu0 %3865, %v2624
      %v3867 = vpop.permute.xlu0 %3866
      %3870 = vset.pattern.permute.xlu0 0
      %3871 = vperm.xlu0 %3870, %v2625
      %v3872 = vpop.permute.xlu0 %3871
      %3875 = vset.pattern.permute.xlu0 0
      %3876 = vperm.xlu0 %3875, %v2626
      %v3877 = vpop.permute.xlu0 %3876
      %3880 = vset.pattern.permute.xlu0 0
      %3881 = vperm.xlu0 %3880, %v2627
      %v3882 = vpop.permute.xlu0 %3881
      %3885 = vset.pattern.permute.xlu0 0
      %3886 = vperm.xlu0 %3885, %v2628
      %v3887 = vpop.permute.xlu0 %3886
      %3890 = vset.pattern.permute.xlu0 0
      %3891 = vperm.xlu0 %3890, %v2629
      %v3892 = vpop.permute.xlu0 %3891
      %3895 = vset.pattern.permute.xlu0 0
      %3896 = vperm.xlu0 %3895, %v2630
      %v3897 = vpop.permute.xlu0 %3896
      %3900 = vset.pattern.permute.xlu0 0
      %3901 = vperm.xlu0 %3900, %v2631
      %v3902 = vpop.permute.xlu0 %3901
      %3905 = vset.pattern.permute.xlu0 0
      %3906 = vperm.xlu0 %3905, %v2632
      %v3907 = vpop.permute.xlu0 %3906
      %3910 = vset.pattern.permute.xlu0 0
      %3911 = vperm.xlu0 %3910, %v2633
      %v3912 = vpop.permute.xlu0 %3911
      %v3914 = vadd.f32 %v2122, %v2637
      %v3915 = vadd.f32 %v2123, %v2642
      %v3916 = vadd.f32 %v2124, %v2647
      %v3917 = vadd.f32 %v2125, %v2652
      %v3918 = vadd.f32 %v2126, %v2657
      %v3919 = vadd.f32 %v2127, %v2662
      %v3920 = vadd.f32 %v2128, %v2667
      %v3921 = vadd.f32 %v2129, %v2672
      %v3922 = vadd.f32 %v2130, %v2677
      %v3923 = vadd.f32 %v2131, %v2682
      %v3924 = vadd.f32 %v2132, %v2687
      %v3925 = vadd.f32 %v2133, %v2692
      %v3926 = vadd.f32 %v2134, %v2697
      %v3927 = vadd.f32 %v2135, %v2702
      %v3928 = vadd.f32 %v2136, %v2707
      %v3929 = vadd.f32 %v2137, %v2712
      %v3930 = vadd.f32 %v2138, %v2717
      %v3931 = vadd.f32 %v2139, %v2722
      %v3932 = vadd.f32 %v2140, %v2727
      %v3933 = vadd.f32 %v2141, %v2732
      %v3934 = vadd.f32 %v2142, %v2737
      %v3935 = vadd.f32 %v2143, %v2742
      %v3936 = vadd.f32 %v2144, %v2747
      %v3937 = vadd.f32 %v2145, %v2752
      %v3938 = vadd.f32 %v2146, %v2757
      %v3939 = vadd.f32 %v2147, %v2762
      %v3940 = vadd.f32 %v2148, %v2767
      %v3941 = vadd.f32 %v2149, %v2772
      %v3942 = vadd.f32 %v2150, %v2777
      %v3943 = vadd.f32 %v2151, %v2782
      %v3944 = vadd.f32 %v2152, %v2787
      %v3945 = vadd.f32 %v2153, %v2792
      %v3946 = vadd.f32 %v2154, %v2797
      %v3947 = vadd.f32 %v2155, %v2802
      %v3948 = vadd.f32 %v2156, %v2807
      %v3949 = vadd.f32 %v2157, %v2812
      %v3950 = vadd.f32 %v2158, %v2817
      %v3951 = vadd.f32 %v2159, %v2822
      %v3952 = vadd.f32 %v2160, %v2827
      %v3953 = vadd.f32 %v2161, %v2832
      %v3954 = vadd.f32 %v2162, %v2837
      %v3955 = vadd.f32 %v2163, %v2842
      %v3956 = vadd.f32 %v2164, %v2847
      %v3957 = vadd.f32 %v2165, %v2852
      %v3958 = vadd.f32 %v2166, %v2857
      %v3959 = vadd.f32 %v2167, %v2862
      %v3960 = vadd.f32 %v2168, %v2867
      %v3961 = vadd.f32 %v2169, %v2872
      %v3962 = vadd.f32 %v2170, %v2877
      %v3963 = vadd.f32 %v2171, %v2882
      %v3964 = vadd.f32 %v2172, %v2887
      %v3965 = vadd.f32 %v2173, %v2892
      %v3966 = vadd.f32 %v2174, %v2897
      %v3967 = vadd.f32 %v2175, %v2902
      %v3968 = vadd.f32 %v2176, %v2907
      %v3969 = vadd.f32 %v2177, %v2912
      %v3970 = vadd.f32 %v2178, %v2917
      %v3971 = vadd.f32 %v2179, %v2922
      %v3972 = vadd.f32 %v2180, %v2927
      %v3973 = vadd.f32 %v2181, %v2932
      %v3974 = vadd.f32 %v2182, %v2937
      %v3975 = vadd.f32 %v2183, %v2942
      %v3976 = vadd.f32 %v2184, %v2947
      %v3977 = vadd.f32 %v2185, %v2952
      %v3978 = vadd.f32 %v2186, %v2957
      %v3979 = vadd.f32 %v2187, %v2962
      %v3980 = vadd.f32 %v2188, %v2967
      %v3981 = vadd.f32 %v2189, %v2972
      %v3982 = vadd.f32 %v2190, %v2977
      %v3983 = vadd.f32 %v2191, %v2982
      %v3984 = vadd.f32 %v2192, %v2987
      %v3985 = vadd.f32 %v2193, %v2992
      %v3986 = vadd.f32 %v2194, %v2997
      %v3987 = vadd.f32 %v2195, %v3002
      %v3988 = vadd.f32 %v2196, %v3007
      %v3989 = vadd.f32 %v2197, %v3012
      %v3990 = vadd.f32 %v2198, %v3017
      %v3991 = vadd.f32 %v2199, %v3022
      %v3992 = vadd.f32 %v2200, %v3027
      %v3993 = vadd.f32 %v2201, %v3032
      %v3994 = vadd.f32 %v2202, %v3037
      %v3995 = vadd.f32 %v2203, %v3042
      %v3996 = vadd.f32 %v2204, %v3047
      %v3997 = vadd.f32 %v2205, %v3052
      %v3998 = vadd.f32 %v2206, %v3057
      %v3999 = vadd.f32 %v2207, %v3062
      %v4000 = vadd.f32 %v2208, %v3067
      %v4001 = vadd.f32 %v2209, %v3072
      %v4002 = vadd.f32 %v2210, %v3077
      %v4003 = vadd.f32 %v2211, %v3082
      %v4004 = vadd.f32 %v2212, %v3087
      %v4005 = vadd.f32 %v2213, %v3092
      %v4006 = vadd.f32 %v2214, %v3097
      %v4007 = vadd.f32 %v2215, %v3102
      %v4008 = vadd.f32 %v2216, %v3107
      %v4009 = vadd.f32 %v2217, %v3112
      %v4010 = vadd.f32 %v2218, %v3117
      %v4011 = vadd.f32 %v2219, %v3122
      %v4012 = vadd.f32 %v2220, %v3127
      %v4013 = vadd.f32 %v2221, %v3132
      %v4014 = vadd.f32 %v2222, %v3137
      %v4015 = vadd.f32 %v2223, %v3142
      %v4016 = vadd.f32 %v2224, %v3147
      %v4017 = vadd.f32 %v2225, %v3152
      %v4018 = vadd.f32 %v2226, %v3157
      %v4019 = vadd.f32 %v2227, %v3162
      %v4020 = vadd.f32 %v2228, %v3167
      %v4021 = vadd.f32 %v2229, %v3172
      %v4022 = vadd.f32 %v2230, %v3177
      %v4023 = vadd.f32 %v2231, %v3182
      %v4024 = vadd.f32 %v2232, %v3187
      %v4025 = vadd.f32 %v2233, %v3192
      %v4026 = vadd.f32 %v2234, %v3197
      %v4027 = vadd.f32 %v2235, %v3202
      %v4028 = vadd.f32 %v2236, %v3207
      %v4029 = vadd.f32 %v2237, %v3212
      %v4030 = vadd.f32 %v2238, %v3217
      %v4031 = vadd.f32 %v2239, %v3222
      %v4032 = vadd.f32 %v2240, %v3227
      %v4033 = vadd.f32 %v2241, %v3232
      %v4034 = vadd.f32 %v2242, %v3237
      %v4035 = vadd.f32 %v2243, %v3242
      %v4036 = vadd.f32 %v2244, %v3247
      %v4037 = vadd.f32 %v2245, %v3252
      %v4038 = vadd.f32 %v2246, %v3257
      %v4039 = vadd.f32 %v2247, %v3262
      %v4040 = vadd.f32 %v2248, %v3267
      %v4041 = vadd.f32 %v2249, %v3272
      %v4042 = vadd.f32 %v2250, %v3277
      %v4043 = vadd.f32 %v2251, %v3282
      %v4044 = vadd.f32 %v2252, %v3287
      %v4045 = vadd.f32 %v2253, %v3292
      %v4046 = vadd.f32 %v2254, %v3297
      %v4047 = vadd.f32 %v2255, %v3302
      %v4048 = vadd.f32 %v2256, %v3307
      %v4049 = vadd.f32 %v2257, %v3312
      %v4050 = vadd.f32 %v2258, %v3317
      %v4051 = vadd.f32 %v2259, %v3322
      %v4052 = vadd.f32 %v2260, %v3327
      %v4053 = vadd.f32 %v2261, %v3332
      %v4054 = vadd.f32 %v2262, %v3337
      %v4055 = vadd.f32 %v2263, %v3342
      %v4056 = vadd.f32 %v2264, %v3347
      %v4057 = vadd.f32 %v2265, %v3352
      %v4058 = vadd.f32 %v2266, %v3357
      %v4059 = vadd.f32 %v2267, %v3362
      %v4060 = vadd.f32 %v2268, %v3367
      %v4061 = vadd.f32 %v2269, %v3372
      %v4062 = vadd.f32 %v2270, %v3377
      %v4063 = vadd.f32 %v2271, %v3382
      %v4064 = vadd.f32 %v2272, %v3387
      %v4065 = vadd.f32 %v2273, %v3392
      %v4066 = vadd.f32 %v2274, %v3397
      %v4067 = vadd.f32 %v2275, %v3402
      %v4068 = vadd.f32 %v2276, %v3407
      %v4069 = vadd.f32 %v2277, %v3412
      %v4070 = vadd.f32 %v2278, %v3417
      %v4071 = vadd.f32 %v2279, %v3422
      %v4072 = vadd.f32 %v2280, %v3427
      %v4073 = vadd.f32 %v2281, %v3432
      %v4074 = vadd.f32 %v2282, %v3437
      %v4075 = vadd.f32 %v2283, %v3442
      %v4076 = vadd.f32 %v2284, %v3447
      %v4077 = vadd.f32 %v2285, %v3452
      %v4078 = vadd.f32 %v2286, %v3457
      %v4079 = vadd.f32 %v2287, %v3462
      %v4080 = vadd.f32 %v2288, %v3467
      %v4081 = vadd.f32 %v2289, %v3472
      %v4082 = vadd.f32 %v2290, %v3477
      %v4083 = vadd.f32 %v2291, %v3482
      %v4084 = vadd.f32 %v2292, %v3487
      %v4085 = vadd.f32 %v2293, %v3492
      %v4086 = vadd.f32 %v2294, %v3497
      %v4087 = vadd.f32 %v2295, %v3502
      %v4088 = vadd.f32 %v2296, %v3507
      %v4089 = vadd.f32 %v2297, %v3512
      %v4090 = vadd.f32 %v2298, %v3517
      %v4091 = vadd.f32 %v2299, %v3522
      %v4092 = vadd.f32 %v2300, %v3527
      %v4093 = vadd.f32 %v2301, %v3532
      %v4094 = vadd.f32 %v2302, %v3537
      %v4095 = vadd.f32 %v2303, %v3542
      %v4096 = vadd.f32 %v2304, %v3547
      %v4097 = vadd.f32 %v2305, %v3552
      %v4098 = vadd.f32 %v2306, %v3557
      %v4099 = vadd.f32 %v2307, %v3562
      %v4100 = vadd.f32 %v2308, %v3567
      %v4101 = vadd.f32 %v2309, %v3572
      %v4102 = vadd.f32 %v2310, %v3577
      %v4103 = vadd.f32 %v2311, %v3582
      %v4104 = vadd.f32 %v2312, %v3587
      %v4105 = vadd.f32 %v2313, %v3592
      %v4106 = vadd.f32 %v2314, %v3597
      %v4107 = vadd.f32 %v2315, %v3602
      %v4108 = vadd.f32 %v2316, %v3607
      %v4109 = vadd.f32 %v2317, %v3612
      %v4110 = vadd.f32 %v2318, %v3617
      %v4111 = vadd.f32 %v2319, %v3622
      %v4112 = vadd.f32 %v2320, %v3627
      %v4113 = vadd.f32 %v2321, %v3632
      %v4114 = vadd.f32 %v2322, %v3637
      %v4115 = vadd.f32 %v2323, %v3642
      %v4116 = vadd.f32 %v2324, %v3647
      %v4117 = vadd.f32 %v2325, %v3652
      %v4118 = vadd.f32 %v2326, %v3657
      %v4119 = vadd.f32 %v2327, %v3662
      %v4120 = vadd.f32 %v2328, %v3667
      %v4121 = vadd.f32 %v2329, %v3672
      %v4122 = vadd.f32 %v2330, %v3677
      %v4123 = vadd.f32 %v2331, %v3682
      %v4124 = vadd.f32 %v2332, %v3687
      %v4125 = vadd.f32 %v2333, %v3692
      %v4126 = vadd.f32 %v2334, %v3697
      %v4127 = vadd.f32 %v2335, %v3702
      %v4128 = vadd.f32 %v2336, %v3707
      %v4129 = vadd.f32 %v2337, %v3712
      %v4130 = vadd.f32 %v2338, %v3717
      %v4131 = vadd.f32 %v2339, %v3722
      %v4132 = vadd.f32 %v2340, %v3727
      %v4133 = vadd.f32 %v2341, %v3732
      %v4134 = vadd.f32 %v2342, %v3737
      %v4135 = vadd.f32 %v2343, %v3742
      %v4136 = vadd.f32 %v2344, %v3747
      %v4137 = vadd.f32 %v2345, %v3752
      %v4138 = vadd.f32 %v2346, %v3757
      %v4139 = vadd.f32 %v2347, %v3762
      %v4140 = vadd.f32 %v2348, %v3767
      %v4141 = vadd.f32 %v2349, %v3772
      %v4142 = vadd.f32 %v2350, %v3777
      %v4143 = vadd.f32 %v2351, %v3782
      %v4144 = vadd.f32 %v2352, %v3787
      %v4145 = vadd.f32 %v2353, %v3792
      %v4146 = vadd.f32 %v2354, %v3797
      %v4147 = vadd.f32 %v2355, %v3802
      %v4148 = vadd.f32 %v2356, %v3807
      %v4149 = vadd.f32 %v2357, %v3812
      %v4150 = vadd.f32 %v2358, %v3817
      %v4151 = vadd.f32 %v2359, %v3822
      %v4152 = vadd.f32 %v2360, %v3827
      %v4153 = vadd.f32 %v2361, %v3832
      %v4154 = vadd.f32 %v2362, %v3837
      %v4155 = vadd.f32 %v2363, %v3842
      %v4156 = vadd.f32 %v2364, %v3847
      %v4157 = vadd.f32 %v2365, %v3852
      %v4158 = vadd.f32 %v2366, %v3857
      %v4159 = vadd.f32 %v2367, %v3862
      %v4160 = vadd.f32 %v2368, %v3867
      %v4161 = vadd.f32 %v2369, %v3872
      %v4162 = vadd.f32 %v2370, %v3877
      %v4163 = vadd.f32 %v2371, %v3882
      %v4164 = vadd.f32 %v2372, %v3887
      %v4165 = vadd.f32 %v2373, %v3892
      %v4166 = vadd.f32 %v2374, %v3897
      %v4167 = vadd.f32 %v2375, %v3902
      %v4168 = vadd.f32 %v2376, %v3907
      %v4169 = vadd.f32 %v2377, %v3912
      %v4170 = vld [vmem:[%s1] sm:$0xff]
      %v4171 = vld [vmem:[%s1 + $0x8] sm:$0xff]
      %v4172 = vld [vmem:[%s1 + $0x10] sm:$0xff]
      %v4173 = vld [vmem:[%s1 + $0x18] sm:$0xff]
      %v4174 = vld [vmem:[%s1 + $0x20] sm:$0xff]
      %v4175 = vld [vmem:[%s1 + $0x28] sm:$0xff]
      %v4176 = vld [vmem:[%s1 + $0x30] sm:$0xff]
      %v4177 = vld [vmem:[%s1 + $0x38] sm:$0xff]
      %v4178 = vld [vmem:[%s1 + $0x40] sm:$0xff]
      %v4179 = vld [vmem:[%s1 + $0x48] sm:$0xff]
      %v4180 = vld [vmem:[%s1 + $0x50] sm:$0xff]
      %v4181 = vld [vmem:[%s1 + $0x58] sm:$0xff]
      %v4182 = vld [vmem:[%s1 + $0x60] sm:$0xff]
      %v4183 = vld [vmem:[%s1 + $0x68] sm:$0xff]
      %v4184 = vld [vmem:[%s1 + $0x70] sm:$0xff]
      %v4185 = vld [vmem:[%s1 + $0x78] sm:$0xff]
      %v4186 = vld [vmem:[%s1 + $0x80] sm:$0xff]
      %v4187 = vld [vmem:[%s1 + $0x88] sm:$0xff]
      %v4188 = vld [vmem:[%s1 + $0x90] sm:$0xff]
      %v4189 = vld [vmem:[%s1 + $0x98] sm:$0xff]
      %v4190 = vld [vmem:[%s1 + $0xa0] sm:$0xff]
      %v4191 = vld [vmem:[%s1 + $0xa8] sm:$0xff]
      %v4192 = vld [vmem:[%s1 + $0xb0] sm:$0xff]
      %v4193 = vld [vmem:[%s1 + $0xb8] sm:$0xff]
      %v4194 = vld [vmem:[%s1 + $0xc0] sm:$0xff]
      %v4195 = vld [vmem:[%s1 + $0xc8] sm:$0xff]
      %v4196 = vld [vmem:[%s1 + $0xd0] sm:$0xff]
      %v4197 = vld [vmem:[%s1 + $0xd8] sm:$0xff]
      %v4198 = vld [vmem:[%s1 + $0xe0] sm:$0xff]
      %v4199 = vld [vmem:[%s1 + $0xe8] sm:$0xff]
      %v4200 = vld [vmem:[%s1 + $0xf0] sm:$0xff]
      %v4201 = vld [vmem:[%s1 + $0xf8] sm:$0xff]
      %v4202 = vld [vmem:[%s1 + $0x100] sm:$0xff]
      %v4203 = vld [vmem:[%s1 + $0x108] sm:$0xff]
      %v4204 = vld [vmem:[%s1 + $0x110] sm:$0xff]
      %v4205 = vld [vmem:[%s1 + $0x118] sm:$0xff]
      %v4206 = vld [vmem:[%s1 + $0x120] sm:$0xff]
      %v4207 = vld [vmem:[%s1 + $0x128] sm:$0xff]
      %v4208 = vld [vmem:[%s1 + $0x130] sm:$0xff]
      %v4209 = vld [vmem:[%s1 + $0x138] sm:$0xff]
      %v4210 = vld [vmem:[%s1 + $0x140] sm:$0xff]
      %v4211 = vld [vmem:[%s1 + $0x148] sm:$0xff]
      %v4212 = vld [vmem:[%s1 + $0x150] sm:$0xff]
      %v4213 = vld [vmem:[%s1 + $0x158] sm:$0xff]
      %v4214 = vld [vmem:[%s1 + $0x160] sm:$0xff]
      %v4215 = vld [vmem:[%s1 + $0x168] sm:$0xff]
      %v4216 = vld [vmem:[%s1 + $0x170] sm:$0xff]
      %v4217 = vld [vmem:[%s1 + $0x178] sm:$0xff]
      %v4218 = vld [vmem:[%s1 + $0x180] sm:$0xff]
      %v4219 = vld [vmem:[%s1 + $0x188] sm:$0xff]
      %v4220 = vld [vmem:[%s1 + $0x190] sm:$0xff]
      %v4221 = vld [vmem:[%s1 + $0x198] sm:$0xff]
      %v4222 = vld [vmem:[%s1 + $0x1a0] sm:$0xff]
      %v4223 = vld [vmem:[%s1 + $0x1a8] sm:$0xff]
      %v4224 = vld [vmem:[%s1 + $0x1b0] sm:$0xff]
      %v4225 = vld [vmem:[%s1 + $0x1b8] sm:$0xff]
      %v4226 = vld [vmem:[%s1 + $0x1c0] sm:$0xff]
      %v4227 = vld [vmem:[%s1 + $0x1c8] sm:$0xff]
      %v4228 = vld [vmem:[%s1 + $0x1d0] sm:$0xff]
      %v4229 = vld [vmem:[%s1 + $0x1d8] sm:$0xff]
      %v4230 = vld [vmem:[%s1 + $0x1e0] sm:$0xff]
      %v4231 = vld [vmem:[%s1 + $0x1e8] sm:$0xff]
      %v4232 = vld [vmem:[%s1 + $0x1f0] sm:$0xff]
      %v4233 = vld [vmem:[%s1 + $0x1f8] sm:$0xff]
      %v4234 = vld [vmem:[%s1 + $0x200] sm:$0xff]
      %v4235 = vld [vmem:[%s1 + $0x208] sm:$0xff]
      %v4236 = vld [vmem:[%s1 + $0x210] sm:$0xff]
      %v4237 = vld [vmem:[%s1 + $0x218] sm:$0xff]
      %v4238 = vld [vmem:[%s1 + $0x220] sm:$0xff]
      %v4239 = vld [vmem:[%s1 + $0x228] sm:$0xff]
      %v4240 = vld [vmem:[%s1 + $0x230] sm:$0xff]
      %v4241 = vld [vmem:[%s1 + $0x238] sm:$0xff]
      %v4242 = vld [vmem:[%s1 + $0x240] sm:$0xff]
      %v4243 = vld [vmem:[%s1 + $0x248] sm:$0xff]
      %v4244 = vld [vmem:[%s1 + $0x250] sm:$0xff]
      %v4245 = vld [vmem:[%s1 + $0x258] sm:$0xff]
      %v4246 = vld [vmem:[%s1 + $0x260] sm:$0xff]
      %v4247 = vld [vmem:[%s1 + $0x268] sm:$0xff]
      %v4248 = vld [vmem:[%s1 + $0x270] sm:$0xff]
      %v4249 = vld [vmem:[%s1 + $0x278] sm:$0xff]
      %v4250 = vld [vmem:[%s1 + $0x280] sm:$0xff]
      %v4251 = vld [vmem:[%s1 + $0x288] sm:$0xff]
      %v4252 = vld [vmem:[%s1 + $0x290] sm:$0xff]
      %v4253 = vld [vmem:[%s1 + $0x298] sm:$0xff]
      %v4254 = vld [vmem:[%s1 + $0x2a0] sm:$0xff]
      %v4255 = vld [vmem:[%s1 + $0x2a8] sm:$0xff]
      %v4256 = vld [vmem:[%s1 + $0x2b0] sm:$0xff]
      %v4257 = vld [vmem:[%s1 + $0x2b8] sm:$0xff]
      %v4258 = vld [vmem:[%s1 + $0x2c0] sm:$0xff]
      %v4259 = vld [vmem:[%s1 + $0x2c8] sm:$0xff]
      %v4260 = vld [vmem:[%s1 + $0x2d0] sm:$0xff]
      %v4261 = vld [vmem:[%s1 + $0x2d8] sm:$0xff]
      %v4262 = vld [vmem:[%s1 + $0x2e0] sm:$0xff]
      %v4263 = vld [vmem:[%s1 + $0x2e8] sm:$0xff]
      %v4264 = vld [vmem:[%s1 + $0x2f0] sm:$0xff]
      %v4265 = vld [vmem:[%s1 + $0x2f8] sm:$0xff]
      %v4266 = vld [vmem:[%s1 + $0x300] sm:$0xff]
      %v4267 = vld [vmem:[%s1 + $0x308] sm:$0xff]
      %v4268 = vld [vmem:[%s1 + $0x310] sm:$0xff]
      %v4269 = vld [vmem:[%s1 + $0x318] sm:$0xff]
      %v4270 = vld [vmem:[%s1 + $0x320] sm:$0xff]
      %v4271 = vld [vmem:[%s1 + $0x328] sm:$0xff]
      %v4272 = vld [vmem:[%s1 + $0x330] sm:$0xff]
      %v4273 = vld [vmem:[%s1 + $0x338] sm:$0xff]
      %v4274 = vld [vmem:[%s1 + $0x340] sm:$0xff]
      %v4275 = vld [vmem:[%s1 + $0x348] sm:$0xff]
      %v4276 = vld [vmem:[%s1 + $0x350] sm:$0xff]
      %v4277 = vld [vmem:[%s1 + $0x358] sm:$0xff]
      %v4278 = vld [vmem:[%s1 + $0x360] sm:$0xff]
      %v4279 = vld [vmem:[%s1 + $0x368] sm:$0xff]
      %v4280 = vld [vmem:[%s1 + $0x370] sm:$0xff]
      %v4281 = vld [vmem:[%s1 + $0x378] sm:$0xff]
      %v4282 = vld [vmem:[%s1 + $0x380] sm:$0xff]
      %v4283 = vld [vmem:[%s1 + $0x388] sm:$0xff]
      %v4284 = vld [vmem:[%s1 + $0x390] sm:$0xff]
      %v4285 = vld [vmem:[%s1 + $0x398] sm:$0xff]
      %v4286 = vld [vmem:[%s1 + $0x3a0] sm:$0xff]
      %v4287 = vld [vmem:[%s1 + $0x3a8] sm:$0xff]
      %v4288 = vld [vmem:[%s1 + $0x3b0] sm:$0xff]
      %v4289 = vld [vmem:[%s1 + $0x3b8] sm:$0xff]
      %v4290 = vld [vmem:[%s1 + $0x3c0] sm:$0xff]
      %v4291 = vld [vmem:[%s1 + $0x3c8] sm:$0xff]
      %v4292 = vld [vmem:[%s1 + $0x3d0] sm:$0xff]
      %v4293 = vld [vmem:[%s1 + $0x3d8] sm:$0xff]
      %v4294 = vld [vmem:[%s1 + $0x3e0] sm:$0xff]
      %v4295 = vld [vmem:[%s1 + $0x3e8] sm:$0xff]
      %v4296 = vld [vmem:[%s1 + $0x3f0] sm:$0xff]
      %v4297 = vld [vmem:[%s1 + $0x3f8] sm:$0xff]
      %v4298 = vld [vmem:[%s1 + $0x400] sm:$0xff]
      %v4299 = vld [vmem:[%s1 + $0x408] sm:$0xff]
      %v4300 = vld [vmem:[%s1 + $0x410] sm:$0xff]
      %v4301 = vld [vmem:[%s1 + $0x418] sm:$0xff]
      %v4302 = vld [vmem:[%s1 + $0x420] sm:$0xff]
      %v4303 = vld [vmem:[%s1 + $0x428] sm:$0xff]
      %v4304 = vld [vmem:[%s1 + $0x430] sm:$0xff]
      %v4305 = vld [vmem:[%s1 + $0x438] sm:$0xff]
      %v4306 = vld [vmem:[%s1 + $0x440] sm:$0xff]
      %v4307 = vld [vmem:[%s1 + $0x448] sm:$0xff]
      %v4308 = vld [vmem:[%s1 + $0x450] sm:$0xff]
      %v4309 = vld [vmem:[%s1 + $0x458] sm:$0xff]
      %v4310 = vld [vmem:[%s1 + $0x460] sm:$0xff]
      %v4311 = vld [vmem:[%s1 + $0x468] sm:$0xff]
      %v4312 = vld [vmem:[%s1 + $0x470] sm:$0xff]
      %v4313 = vld [vmem:[%s1 + $0x478] sm:$0xff]
      %v4314 = vld [vmem:[%s1 + $0x480] sm:$0xff]
      %v4315 = vld [vmem:[%s1 + $0x488] sm:$0xff]
      %v4316 = vld [vmem:[%s1 + $0x490] sm:$0xff]
      %v4317 = vld [vmem:[%s1 + $0x498] sm:$0xff]
      %v4318 = vld [vmem:[%s1 + $0x4a0] sm:$0xff]
      %v4319 = vld [vmem:[%s1 + $0x4a8] sm:$0xff]
      %v4320 = vld [vmem:[%s1 + $0x4b0] sm:$0xff]
      %v4321 = vld [vmem:[%s1 + $0x4b8] sm:$0xff]
      %v4322 = vld [vmem:[%s1 + $0x4c0] sm:$0xff]
      %v4323 = vld [vmem:[%s1 + $0x4c8] sm:$0xff]
      %v4324 = vld [vmem:[%s1 + $0x4d0] sm:$0xff]
      %v4325 = vld [vmem:[%s1 + $0x4d8] sm:$0xff]
      %v4326 = vld [vmem:[%s1 + $0x4e0] sm:$0xff]
      %v4327 = vld [vmem:[%s1 + $0x4e8] sm:$0xff]
      %v4328 = vld [vmem:[%s1 + $0x4f0] sm:$0xff]
      %v4329 = vld [vmem:[%s1 + $0x4f8] sm:$0xff]
      %v4330 = vld [vmem:[%s1 + $0x500] sm:$0xff]
      %v4331 = vld [vmem:[%s1 + $0x508] sm:$0xff]
      %v4332 = vld [vmem:[%s1 + $0x510] sm:$0xff]
      %v4333 = vld [vmem:[%s1 + $0x518] sm:$0xff]
      %v4334 = vld [vmem:[%s1 + $0x520] sm:$0xff]
      %v4335 = vld [vmem:[%s1 + $0x528] sm:$0xff]
      %v4336 = vld [vmem:[%s1 + $0x530] sm:$0xff]
      %v4337 = vld [vmem:[%s1 + $0x538] sm:$0xff]
      %v4338 = vld [vmem:[%s1 + $0x540] sm:$0xff]
      %v4339 = vld [vmem:[%s1 + $0x548] sm:$0xff]
      %v4340 = vld [vmem:[%s1 + $0x550] sm:$0xff]
      %v4341 = vld [vmem:[%s1 + $0x558] sm:$0xff]
      %v4342 = vld [vmem:[%s1 + $0x560] sm:$0xff]
      %v4343 = vld [vmem:[%s1 + $0x568] sm:$0xff]
      %v4344 = vld [vmem:[%s1 + $0x570] sm:$0xff]
      %v4345 = vld [vmem:[%s1 + $0x578] sm:$0xff]
      %v4346 = vld [vmem:[%s1 + $0x580] sm:$0xff]
      %v4347 = vld [vmem:[%s1 + $0x588] sm:$0xff]
      %v4348 = vld [vmem:[%s1 + $0x590] sm:$0xff]
      %v4349 = vld [vmem:[%s1 + $0x598] sm:$0xff]
      %v4350 = vld [vmem:[%s1 + $0x5a0] sm:$0xff]
      %v4351 = vld [vmem:[%s1 + $0x5a8] sm:$0xff]
      %v4352 = vld [vmem:[%s1 + $0x5b0] sm:$0xff]
      %v4353 = vld [vmem:[%s1 + $0x5b8] sm:$0xff]
      %v4354 = vld [vmem:[%s1 + $0x5c0] sm:$0xff]
      %v4355 = vld [vmem:[%s1 + $0x5c8] sm:$0xff]
      %v4356 = vld [vmem:[%s1 + $0x5d0] sm:$0xff]
      %v4357 = vld [vmem:[%s1 + $0x5d8] sm:$0xff]
      %v4358 = vld [vmem:[%s1 + $0x5e0] sm:$0xff]
      %v4359 = vld [vmem:[%s1 + $0x5e8] sm:$0xff]
      %v4360 = vld [vmem:[%s1 + $0x5f0] sm:$0xff]
      %v4361 = vld [vmem:[%s1 + $0x5f8] sm:$0xff]
      %v4362 = vld [vmem:[%s1 + $0x600] sm:$0xff]
      %v4363 = vld [vmem:[%s1 + $0x608] sm:$0xff]
      %v4364 = vld [vmem:[%s1 + $0x610] sm:$0xff]
      %v4365 = vld [vmem:[%s1 + $0x618] sm:$0xff]
      %v4366 = vld [vmem:[%s1 + $0x620] sm:$0xff]
      %v4367 = vld [vmem:[%s1 + $0x628] sm:$0xff]
      %v4368 = vld [vmem:[%s1 + $0x630] sm:$0xff]
      %v4369 = vld [vmem:[%s1 + $0x638] sm:$0xff]
      %v4370 = vld [vmem:[%s1 + $0x640] sm:$0xff]
      %v4371 = vld [vmem:[%s1 + $0x648] sm:$0xff]
      %v4372 = vld [vmem:[%s1 + $0x650] sm:$0xff]
      %v4373 = vld [vmem:[%s1 + $0x658] sm:$0xff]
      %v4374 = vld [vmem:[%s1 + $0x660] sm:$0xff]
      %v4375 = vld [vmem:[%s1 + $0x668] sm:$0xff]
      %v4376 = vld [vmem:[%s1 + $0x670] sm:$0xff]
      %v4377 = vld [vmem:[%s1 + $0x678] sm:$0xff]
      %v4378 = vld [vmem:[%s1 + $0x680] sm:$0xff]
      %v4379 = vld [vmem:[%s1 + $0x688] sm:$0xff]
      %v4380 = vld [vmem:[%s1 + $0x690] sm:$0xff]
      %v4381 = vld [vmem:[%s1 + $0x698] sm:$0xff]
      %v4382 = vld [vmem:[%s1 + $0x6a0] sm:$0xff]
      %v4383 = vld [vmem:[%s1 + $0x6a8] sm:$0xff]
      %v4384 = vld [vmem:[%s1 + $0x6b0] sm:$0xff]
      %v4385 = vld [vmem:[%s1 + $0x6b8] sm:$0xff]
      %v4386 = vld [vmem:[%s1 + $0x6c0] sm:$0xff]
      %v4387 = vld [vmem:[%s1 + $0x6c8] sm:$0xff]
      %v4388 = vld [vmem:[%s1 + $0x6d0] sm:$0xff]
      %v4389 = vld [vmem:[%s1 + $0x6d8] sm:$0xff]
      %v4390 = vld [vmem:[%s1 + $0x6e0] sm:$0xff]
      %v4391 = vld [vmem:[%s1 + $0x6e8] sm:$0xff]
      %v4392 = vld [vmem:[%s1 + $0x6f0] sm:$0xff]
      %v4393 = vld [vmem:[%s1 + $0x6f8] sm:$0xff]
      %v4394 = vld [vmem:[%s1 + $0x700] sm:$0xff]
      %v4395 = vld [vmem:[%s1 + $0x708] sm:$0xff]
      %v4396 = vld [vmem:[%s1 + $0x710] sm:$0xff]
      %v4397 = vld [vmem:[%s1 + $0x718] sm:$0xff]
      %v4398 = vld [vmem:[%s1 + $0x720] sm:$0xff]
      %v4399 = vld [vmem:[%s1 + $0x728] sm:$0xff]
      %v4400 = vld [vmem:[%s1 + $0x730] sm:$0xff]
      %v4401 = vld [vmem:[%s1 + $0x738] sm:$0xff]
      %v4402 = vld [vmem:[%s1 + $0x740] sm:$0xff]
      %v4403 = vld [vmem:[%s1 + $0x748] sm:$0xff]
      %v4404 = vld [vmem:[%s1 + $0x750] sm:$0xff]
      %v4405 = vld [vmem:[%s1 + $0x758] sm:$0xff]
      %v4406 = vld [vmem:[%s1 + $0x760] sm:$0xff]
      %v4407 = vld [vmem:[%s1 + $0x768] sm:$0xff]
      %v4408 = vld [vmem:[%s1 + $0x770] sm:$0xff]
      %v4409 = vld [vmem:[%s1 + $0x778] sm:$0xff]
      %v4410 = vld [vmem:[%s1 + $0x780] sm:$0xff]
      %v4411 = vld [vmem:[%s1 + $0x788] sm:$0xff]
      %v4412 = vld [vmem:[%s1 + $0x790] sm:$0xff]
      %v4413 = vld [vmem:[%s1 + $0x798] sm:$0xff]
      %v4414 = vld [vmem:[%s1 + $0x7a0] sm:$0xff]
      %v4415 = vld [vmem:[%s1 + $0x7a8] sm:$0xff]
      %v4416 = vld [vmem:[%s1 + $0x7b0] sm:$0xff]
      %v4417 = vld [vmem:[%s1 + $0x7b8] sm:$0xff]
      %v4418 = vld [vmem:[%s1 + $0x7c0] sm:$0xff]
      %v4419 = vld [vmem:[%s1 + $0x7c8] sm:$0xff]
      %v4420 = vld [vmem:[%s1 + $0x7d0] sm:$0xff]
      %v4421 = vld [vmem:[%s1 + $0x7d8] sm:$0xff]
      %v4422 = vld [vmem:[%s1 + $0x7e0] sm:$0xff]
      %v4423 = vld [vmem:[%s1 + $0x7e8] sm:$0xff]
      %v4424 = vld [vmem:[%s1 + $0x7f0] sm:$0xff]
      %v4425 = vld [vmem:[%s1 + $0x7f8] sm:$0xff]
      %v4426 = vadd.f32 %v3914, %v4170
      %v4427 = vadd.f32 %v3915, %v4171
      %v4428 = vadd.f32 %v3916, %v4172
      %v4429 = vadd.f32 %v3917, %v4173
      %v4430 = vadd.f32 %v3918, %v4174
      %v4431 = vadd.f32 %v3919, %v4175
      %v4432 = vadd.f32 %v3920, %v4176
      %v4433 = vadd.f32 %v3921, %v4177
      %v4434 = vadd.f32 %v3922, %v4178
      %v4435 = vadd.f32 %v3923, %v4179
      %v4436 = vadd.f32 %v3924, %v4180
      %v4437 = vadd.f32 %v3925, %v4181
      %v4438 = vadd.f32 %v3926, %v4182
      %v4439 = vadd.f32 %v3927, %v4183
      %v4440 = vadd.f32 %v3928, %v4184
      %v4441 = vadd.f32 %v3929, %v4185
      %v4442 = vadd.f32 %v3930, %v4186
      %v4443 = vadd.f32 %v3931, %v4187
      %v4444 = vadd.f32 %v3932, %v4188
      %v4445 = vadd.f32 %v3933, %v4189
      %v4446 = vadd.f32 %v3934, %v4190
      %v4447 = vadd.f32 %v3935, %v4191
      %v4448 = vadd.f32 %v3936, %v4192
      %v4449 = vadd.f32 %v3937, %v4193
      %v4450 = vadd.f32 %v3938, %v4194
      %v4451 = vadd.f32 %v3939, %v4195
      %v4452 = vadd.f32 %v3940, %v4196
      %v4453 = vadd.f32 %v3941, %v4197
      %v4454 = vadd.f32 %v3942, %v4198
      %v4455 = vadd.f32 %v3943, %v4199
      %v4456 = vadd.f32 %v3944, %v4200
      %v4457 = vadd.f32 %v3945, %v4201
      %v4458 = vadd.f32 %v3946, %v4202
      %v4459 = vadd.f32 %v3947, %v4203
      %v4460 = vadd.f32 %v3948, %v4204
      %v4461 = vadd.f32 %v3949, %v4205
      %v4462 = vadd.f32 %v3950, %v4206
      %v4463 = vadd.f32 %v3951, %v4207
      %v4464 = vadd.f32 %v3952, %v4208
      %v4465 = vadd.f32 %v3953, %v4209
      %v4466 = vadd.f32 %v3954, %v4210
      %v4467 = vadd.f32 %v3955, %v4211
      %v4468 = vadd.f32 %v3956, %v4212
      %v4469 = vadd.f32 %v3957, %v4213
      %v4470 = vadd.f32 %v3958, %v4214
      %v4471 = vadd.f32 %v3959, %v4215
      %v4472 = vadd.f32 %v3960, %v4216
      %v4473 = vadd.f32 %v3961, %v4217
      %v4474 = vadd.f32 %v3962, %v4218
      %v4475 = vadd.f32 %v3963, %v4219
      %v4476 = vadd.f32 %v3964, %v4220
      %v4477 = vadd.f32 %v3965, %v4221
      %v4478 = vadd.f32 %v3966, %v4222
      %v4479 = vadd.f32 %v3967, %v4223
      %v4480 = vadd.f32 %v3968, %v4224
      %v4481 = vadd.f32 %v3969, %v4225
      %v4482 = vadd.f32 %v3970, %v4226
      %v4483 = vadd.f32 %v3971, %v4227
      %v4484 = vadd.f32 %v3972, %v4228
      %v4485 = vadd.f32 %v3973, %v4229
      %v4486 = vadd.f32 %v3974, %v4230
      %v4487 = vadd.f32 %v3975, %v4231
      %v4488 = vadd.f32 %v3976, %v4232
      %v4489 = vadd.f32 %v3977, %v4233
      %v4490 = vadd.f32 %v3978, %v4234
      %v4491 = vadd.f32 %v3979, %v4235
      %v4492 = vadd.f32 %v3980, %v4236
      %v4493 = vadd.f32 %v3981, %v4237
      %v4494 = vadd.f32 %v3982, %v4238
      %v4495 = vadd.f32 %v3983, %v4239
      %v4496 = vadd.f32 %v3984, %v4240
      %v4497 = vadd.f32 %v3985, %v4241
      %v4498 = vadd.f32 %v3986, %v4242
      %v4499 = vadd.f32 %v3987, %v4243
      %v4500 = vadd.f32 %v3988, %v4244
      %v4501 = vadd.f32 %v3989, %v4245
      %v4502 = vadd.f32 %v3990, %v4246
      %v4503 = vadd.f32 %v3991, %v4247
      %v4504 = vadd.f32 %v3992, %v4248
      %v4505 = vadd.f32 %v3993, %v4249
      %v4506 = vadd.f32 %v3994, %v4250
      %v4507 = vadd.f32 %v3995, %v4251
      %v4508 = vadd.f32 %v3996, %v4252
      %v4509 = vadd.f32 %v3997, %v4253
      %v4510 = vadd.f32 %v3998, %v4254
      %v4511 = vadd.f32 %v3999, %v4255
      %v4512 = vadd.f32 %v4000, %v4256
      %v4513 = vadd.f32 %v4001, %v4257
      %v4514 = vadd.f32 %v4002, %v4258
      %v4515 = vadd.f32 %v4003, %v4259
      %v4516 = vadd.f32 %v4004, %v4260
      %v4517 = vadd.f32 %v4005, %v4261
      %v4518 = vadd.f32 %v4006, %v4262
      %v4519 = vadd.f32 %v4007, %v4263
      %v4520 = vadd.f32 %v4008, %v4264
      %v4521 = vadd.f32 %v4009, %v4265
      %v4522 = vadd.f32 %v4010, %v4266
      %v4523 = vadd.f32 %v4011, %v4267
      %v4524 = vadd.f32 %v4012, %v4268
      %v4525 = vadd.f32 %v4013, %v4269
      %v4526 = vadd.f32 %v4014, %v4270
      %v4527 = vadd.f32 %v4015, %v4271
      %v4528 = vadd.f32 %v4016, %v4272
      %v4529 = vadd.f32 %v4017, %v4273
      %v4530 = vadd.f32 %v4018, %v4274
      %v4531 = vadd.f32 %v4019, %v4275
      %v4532 = vadd.f32 %v4020, %v4276
      %v4533 = vadd.f32 %v4021, %v4277
      %v4534 = vadd.f32 %v4022, %v4278
      %v4535 = vadd.f32 %v4023, %v4279
      %v4536 = vadd.f32 %v4024, %v4280
      %v4537 = vadd.f32 %v4025, %v4281
      %v4538 = vadd.f32 %v4026, %v4282
      %v4539 = vadd.f32 %v4027, %v4283
      %v4540 = vadd.f32 %v4028, %v4284
      %v4541 = vadd.f32 %v4029, %v4285
      %v4542 = vadd.f32 %v4030, %v4286
      %v4543 = vadd.f32 %v4031, %v4287
      %v4544 = vadd.f32 %v4032, %v4288
      %v4545 = vadd.f32 %v4033, %v4289
      %v4546 = vadd.f32 %v4034, %v4290
      %v4547 = vadd.f32 %v4035, %v4291
      %v4548 = vadd.f32 %v4036, %v4292
      %v4549 = vadd.f32 %v4037, %v4293
      %v4550 = vadd.f32 %v4038, %v4294
      %v4551 = vadd.f32 %v4039, %v4295
      %v4552 = vadd.f32 %v4040, %v4296
      %v4553 = vadd.f32 %v4041, %v4297
      %v4554 = vadd.f32 %v4042, %v4298
      %v4555 = vadd.f32 %v4043, %v4299
      %v4556 = vadd.f32 %v4044, %v4300
      %v4557 = vadd.f32 %v4045, %v4301
      %v4558 = vadd.f32 %v4046, %v4302
      %v4559 = vadd.f32 %v4047, %v4303
      %v4560 = vadd.f32 %v4048, %v4304
      %v4561 = vadd.f32 %v4049, %v4305
      %v4562 = vadd.f32 %v4050, %v4306
      %v4563 = vadd.f32 %v4051, %v4307
      %v4564 = vadd.f32 %v4052, %v4308
      %v4565 = vadd.f32 %v4053, %v4309
      %v4566 = vadd.f32 %v4054, %v4310
      %v4567 = vadd.f32 %v4055, %v4311
      %v4568 = vadd.f32 %v4056, %v4312
      %v4569 = vadd.f32 %v4057, %v4313
      %v4570 = vadd.f32 %v4058, %v4314
      %v4571 = vadd.f32 %v4059, %v4315
      %v4572 = vadd.f32 %v4060, %v4316
      %v4573 = vadd.f32 %v4061, %v4317
      %v4574 = vadd.f32 %v4062, %v4318
      %v4575 = vadd.f32 %v4063, %v4319
      %v4576 = vadd.f32 %v4064, %v4320
      %v4577 = vadd.f32 %v4065, %v4321
      %v4578 = vadd.f32 %v4066, %v4322
      %v4579 = vadd.f32 %v4067, %v4323
      %v4580 = vadd.f32 %v4068, %v4324
      %v4581 = vadd.f32 %v4069, %v4325
      %v4582 = vadd.f32 %v4070, %v4326
      %v4583 = vadd.f32 %v4071, %v4327
      %v4584 = vadd.f32 %v4072, %v4328
      %v4585 = vadd.f32 %v4073, %v4329
      %v4586 = vadd.f32 %v4074, %v4330
      %v4587 = vadd.f32 %v4075, %v4331
      %v4588 = vadd.f32 %v4076, %v4332
      %v4589 = vadd.f32 %v4077, %v4333
      %v4590 = vadd.f32 %v4078, %v4334
      %v4591 = vadd.f32 %v4079, %v4335
      %v4592 = vadd.f32 %v4080, %v4336
      %v4593 = vadd.f32 %v4081, %v4337
      %v4594 = vadd.f32 %v4082, %v4338
      %v4595 = vadd.f32 %v4083, %v4339
      %v4596 = vadd.f32 %v4084, %v4340
      %v4597 = vadd.f32 %v4085, %v4341
      %v4598 = vadd.f32 %v4086, %v4342
      %v4599 = vadd.f32 %v4087, %v4343
      %v4600 = vadd.f32 %v4088, %v4344
      %v4601 = vadd.f32 %v4089, %v4345
      %v4602 = vadd.f32 %v4090, %v4346
      %v4603 = vadd.f32 %v4091, %v4347
      %v4604 = vadd.f32 %v4092, %v4348
      %v4605 = vadd.f32 %v4093, %v4349
      %v4606 = vadd.f32 %v4094, %v4350
      %v4607 = vadd.f32 %v4095, %v4351
      %v4608 = vadd.f32 %v4096, %v4352
      %v4609 = vadd.f32 %v4097, %v4353
      %v4610 = vadd.f32 %v4098, %v4354
      %v4611 = vadd.f32 %v4099, %v4355
      %v4612 = vadd.f32 %v4100, %v4356
      %v4613 = vadd.f32 %v4101, %v4357
      %v4614 = vadd.f32 %v4102, %v4358
      %v4615 = vadd.f32 %v4103, %v4359
      %v4616 = vadd.f32 %v4104, %v4360
      %v4617 = vadd.f32 %v4105, %v4361
      %v4618 = vadd.f32 %v4106, %v4362
      %v4619 = vadd.f32 %v4107, %v4363
      %v4620 = vadd.f32 %v4108, %v4364
      %v4621 = vadd.f32 %v4109, %v4365
      %v4622 = vadd.f32 %v4110, %v4366
      %v4623 = vadd.f32 %v4111, %v4367
      %v4624 = vadd.f32 %v4112, %v4368
      %v4625 = vadd.f32 %v4113, %v4369
      %v4626 = vadd.f32 %v4114, %v4370
      %v4627 = vadd.f32 %v4115, %v4371
      %v4628 = vadd.f32 %v4116, %v4372
      %v4629 = vadd.f32 %v4117, %v4373
      %v4630 = vadd.f32 %v4118, %v4374
      %v4631 = vadd.f32 %v4119, %v4375
      %v4632 = vadd.f32 %v4120, %v4376
      %v4633 = vadd.f32 %v4121, %v4377
      %v4634 = vadd.f32 %v4122, %v4378
      %v4635 = vadd.f32 %v4123, %v4379
      %v4636 = vadd.f32 %v4124, %v4380
      %v4637 = vadd.f32 %v4125, %v4381
      %v4638 = vadd.f32 %v4126, %v4382
      %v4639 = vadd.f32 %v4127, %v4383
      %v4640 = vadd.f32 %v4128, %v4384
      %v4641 = vadd.f32 %v4129, %v4385
      %v4642 = vadd.f32 %v4130, %v4386
      %v4643 = vadd.f32 %v4131, %v4387
      %v4644 = vadd.f32 %v4132, %v4388
      %v4645 = vadd.f32 %v4133, %v4389
      %v4646 = vadd.f32 %v4134, %v4390
      %v4647 = vadd.f32 %v4135, %v4391
      %v4648 = vadd.f32 %v4136, %v4392
      %v4649 = vadd.f32 %v4137, %v4393
      %v4650 = vadd.f32 %v4138, %v4394
      %v4651 = vadd.f32 %v4139, %v4395
      %v4652 = vadd.f32 %v4140, %v4396
      %v4653 = vadd.f32 %v4141, %v4397
      %v4654 = vadd.f32 %v4142, %v4398
      %v4655 = vadd.f32 %v4143, %v4399
      %v4656 = vadd.f32 %v4144, %v4400
      %v4657 = vadd.f32 %v4145, %v4401
      %v4658 = vadd.f32 %v4146, %v4402
      %v4659 = vadd.f32 %v4147, %v4403
      %v4660 = vadd.f32 %v4148, %v4404
      %v4661 = vadd.f32 %v4149, %v4405
      %v4662 = vadd.f32 %v4150, %v4406
      %v4663 = vadd.f32 %v4151, %v4407
      %v4664 = vadd.f32 %v4152, %v4408
      %v4665 = vadd.f32 %v4153, %v4409
      %v4666 = vadd.f32 %v4154, %v4410
      %v4667 = vadd.f32 %v4155, %v4411
      %v4668 = vadd.f32 %v4156, %v4412
      %v4669 = vadd.f32 %v4157, %v4413
      %v4670 = vadd.f32 %v4158, %v4414
      %v4671 = vadd.f32 %v4159, %v4415
      %v4672 = vadd.f32 %v4160, %v4416
      %v4673 = vadd.f32 %v4161, %v4417
      %v4674 = vadd.f32 %v4162, %v4418
      %v4675 = vadd.f32 %v4163, %v4419
      %v4676 = vadd.f32 %v4164, %v4420
      %v4677 = vadd.f32 %v4165, %v4421
      %v4678 = vadd.f32 %v4166, %v4422
      %v4679 = vadd.f32 %v4167, %v4423
      %v4680 = vadd.f32 %v4168, %v4424
      %v4681 = vadd.f32 %v4169, %v4425
      %v4682 = vmax.f32 %v4426, 0.0
      %v4683 = vmax.f32 %v4427, 0.0
      %v4684 = vmax.f32 %v4428, 0.0
      %v4685 = vmax.f32 %v4429, 0.0
      %v4686 = vmax.f32 %v4430, 0.0
      %v4687 = vmax.f32 %v4431, 0.0
      %v4688 = vmax.f32 %v4432, 0.0
      %v4689 = vmax.f32 %v4433, 0.0
      %v4690 = vmax.f32 %v4434, 0.0
      %v4691 = vmax.f32 %v4435, 0.0
      %v4692 = vmax.f32 %v4436, 0.0
      %v4693 = vmax.f32 %v4437, 0.0
      %v4694 = vmax.f32 %v4438, 0.0
      %v4695 = vmax.f32 %v4439, 0.0
      %v4696 = vmax.f32 %v4440, 0.0
      %v4697 = vmax.f32 %v4441, 0.0
      %v4698 = vmax.f32 %v4442, 0.0
      %v4699 = vmax.f32 %v4443, 0.0
      %v4700 = vmax.f32 %v4444, 0.0
      %v4701 = vmax.f32 %v4445, 0.0
      %v4702 = vmax.f32 %v4446, 0.0
      %v4703 = vmax.f32 %v4447, 0.0
      %v4704 = vmax.f32 %v4448, 0.0
      %v4705 = vmax.f32 %v4449, 0.0
      %v4706 = vmax.f32 %v4450, 0.0
      %v4707 = vmax.f32 %v4451, 0.0
      %v4708 = vmax.f32 %v4452, 0.0
      %v4709 = vmax.f32 %v4453, 0.0
      %v4710 = vmax.f32 %v4454, 0.0
      %v4711 = vmax.f32 %v4455, 0.0
      %v4712 = vmax.f32 %v4456, 0.0
      %v4713 = vmax.f32 %v4457, 0.0
      %v4714 = vmax.f32 %v4458, 0.0
      %v4715 = vmax.f32 %v4459, 0.0
      %v4716 = vmax.f32 %v4460, 0.0
      %v4717 = vmax.f32 %v4461, 0.0
      %v4718 = vmax.f32 %v4462, 0.0
      %v4719 = vmax.f32 %v4463, 0.0
      %v4720 = vmax.f32 %v4464, 0.0
      %v4721 = vmax.f32 %v4465, 0.0
      %v4722 = vmax.f32 %v4466, 0.0
      %v4723 = vmax.f32 %v4467, 0.0
      %v4724 = vmax.f32 %v4468, 0.0
      %v4725 = vmax.f32 %v4469, 0.0
      %v4726 = vmax.f32 %v4470, 0.0
      %v4727 = vmax.f32 %v4471, 0.0
      %v4728 = vmax.f32 %v4472, 0.0
      %v4729 = vmax.f32 %v4473, 0.0
      %v4730 = vmax.f32 %v4474, 0.0
      %v4731 = vmax.f32 %v4475, 0.0
      %v4732 = vmax.f32 %v4476, 0.0
      %v4733 = vmax.f32 %v4477, 0.0
      %v4734 = vmax.f32 %v4478, 0.0
      %v4735 = vmax.f32 %v4479, 0.0
      %v4736 = vmax.f32 %v4480, 0.0
      %v4737 = vmax.f32 %v4481, 0.0
      %v4738 = vmax.f32 %v4482, 0.0
      %v4739 = vmax.f32 %v4483, 0.0
      %v4740 = vmax.f32 %v4484, 0.0
      %v4741 = vmax.f32 %v4485, 0.0
      %v4742 = vmax.f32 %v4486, 0.0
      %v4743 = vmax.f32 %v4487, 0.0
      %v4744 = vmax.f32 %v4488, 0.0
      %v4745 = vmax.f32 %v4489, 0.0
      %v4746 = vmax.f32 %v4490, 0.0
      %v4747 = vmax.f32 %v4491, 0.0
      %v4748 = vmax.f32 %v4492, 0.0
      %v4749 = vmax.f32 %v4493, 0.0
      %v4750 = vmax.f32 %v4494, 0.0
      %v4751 = vmax.f32 %v4495, 0.0
      %v4752 = vmax.f32 %v4496, 0.0
      %v4753 = vmax.f32 %v4497, 0.0
      %v4754 = vmax.f32 %v4498, 0.0
      %v4755 = vmax.f32 %v4499, 0.0
      %v4756 = vmax.f32 %v4500, 0.0
      %v4757 = vmax.f32 %v4501, 0.0
      %v4758 = vmax.f32 %v4502, 0.0
      %v4759 = vmax.f32 %v4503, 0.0
      %v4760 = vmax.f32 %v4504, 0.0
      %v4761 = vmax.f32 %v4505, 0.0
      %v4762 = vmax.f32 %v4506, 0.0
      %v4763 = vmax.f32 %v4507, 0.0
      %v4764 = vmax.f32 %v4508, 0.0
      %v4765 = vmax.f32 %v4509, 0.0
      %v4766 = vmax.f32 %v4510, 0.0
      %v4767 = vmax.f32 %v4511, 0.0
      %v4768 = vmax.f32 %v4512, 0.0
      %v4769 = vmax.f32 %v4513, 0.0
      %v4770 = vmax.f32 %v4514, 0.0
      %v4771 = vmax.f32 %v4515, 0.0
      %v4772 = vmax.f32 %v4516, 0.0
      %v4773 = vmax.f32 %v4517, 0.0
      %v4774 = vmax.f32 %v4518, 0.0
      %v4775 = vmax.f32 %v4519, 0.0
      %v4776 = vmax.f32 %v4520, 0.0
      %v4777 = vmax.f32 %v4521, 0.0
      %v4778 = vmax.f32 %v4522, 0.0
      %v4779 = vmax.f32 %v4523, 0.0
      %v4780 = vmax.f32 %v4524, 0.0
      %v4781 = vmax.f32 %v4525, 0.0
      %v4782 = vmax.f32 %v4526, 0.0
      %v4783 = vmax.f32 %v4527, 0.0
      %v4784 = vmax.f32 %v4528, 0.0
      %v4785 = vmax.f32 %v4529, 0.0
      %v4786 = vmax.f32 %v4530, 0.0
      %v4787 = vmax.f32 %v4531, 0.0
      %v4788 = vmax.f32 %v4532, 0.0
      %v4789 = vmax.f32 %v4533, 0.0
      %v4790 = vmax.f32 %v4534, 0.0
      %v4791 = vmax.f32 %v4535, 0.0
      %v4792 = vmax.f32 %v4536, 0.0
      %v4793 = vmax.f32 %v4537, 0.0
      %v4794 = vmax.f32 %v4538, 0.0
      %v4795 = vmax.f32 %v4539, 0.0
      %v4796 = vmax.f32 %v4540, 0.0
      %v4797 = vmax.f32 %v4541, 0.0
      %v4798 = vmax.f32 %v4542, 0.0
      %v4799 = vmax.f32 %v4543, 0.0
      %v4800 = vmax.f32 %v4544, 0.0
      %v4801 = vmax.f32 %v4545, 0.0
      %v4802 = vmax.f32 %v4546, 0.0
      %v4803 = vmax.f32 %v4547, 0.0
      %v4804 = vmax.f32 %v4548, 0.0
      %v4805 = vmax.f32 %v4549, 0.0
      %v4806 = vmax.f32 %v4550, 0.0
      %v4807 = vmax.f32 %v4551, 0.0
      %v4808 = vmax.f32 %v4552, 0.0
      %v4809 = vmax.f32 %v4553, 0.0
      %v4810 = vmax.f32 %v4554, 0.0
      %v4811 = vmax.f32 %v4555, 0.0
      %v4812 = vmax.f32 %v4556, 0.0
      %v4813 = vmax.f32 %v4557, 0.0
      %v4814 = vmax.f32 %v4558, 0.0
      %v4815 = vmax.f32 %v4559, 0.0
      %v4816 = vmax.f32 %v4560, 0.0
      %v4817 = vmax.f32 %v4561, 0.0
      %v4818 = vmax.f32 %v4562, 0.0
      %v4819 = vmax.f32 %v4563, 0.0
      %v4820 = vmax.f32 %v4564, 0.0
      %v4821 = vmax.f32 %v4565, 0.0
      %v4822 = vmax.f32 %v4566, 0.0
      %v4823 = vmax.f32 %v4567, 0.0
      %v4824 = vmax.f32 %v4568, 0.0
      %v4825 = vmax.f32 %v4569, 0.0
      %v4826 = vmax.f32 %v4570, 0.0
      %v4827 = vmax.f32 %v4571, 0.0
      %v4828 = vmax.f32 %v4572, 0.0
      %v4829 = vmax.f32 %v4573, 0.0
      %v4830 = vmax.f32 %v4574, 0.0
      %v4831 = vmax.f32 %v4575, 0.0
      %v4832 = vmax.f32 %v4576, 0.0
      %v4833 = vmax.f32 %v4577, 0.0
      %v4834 = vmax.f32 %v4578, 0.0
      %v4835 = vmax.f32 %v4579, 0.0
      %v4836 = vmax.f32 %v4580, 0.0
      %v4837 = vmax.f32 %v4581, 0.0
      %v4838 = vmax.f32 %v4582, 0.0
      %v4839 = vmax.f32 %v4583, 0.0
      %v4840 = vmax.f32 %v4584, 0.0
      %v4841 = vmax.f32 %v4585, 0.0
      %v4842 = vmax.f32 %v4586, 0.0
      %v4843 = vmax.f32 %v4587, 0.0
      %v4844 = vmax.f32 %v4588, 0.0
      %v4845 = vmax.f32 %v4589, 0.0
      %v4846 = vmax.f32 %v4590, 0.0
      %v4847 = vmax.f32 %v4591, 0.0
      %v4848 = vmax.f32 %v4592, 0.0
      %v4849 = vmax.f32 %v4593, 0.0
      %v4850 = vmax.f32 %v4594, 0.0
      %v4851 = vmax.f32 %v4595, 0.0
      %v4852 = vmax.f32 %v4596, 0.0
      %v4853 = vmax.f32 %v4597, 0.0
      %v4854 = vmax.f32 %v4598, 0.0
      %v4855 = vmax.f32 %v4599, 0.0
      %v4856 = vmax.f32 %v4600, 0.0
      %v4857 = vmax.f32 %v4601, 0.0
      %v4858 = vmax.f32 %v4602, 0.0
      %v4859 = vmax.f32 %v4603, 0.0
      %v4860 = vmax.f32 %v4604, 0.0
      %v4861 = vmax.f32 %v4605, 0.0
      %v4862 = vmax.f32 %v4606, 0.0
      %v4863 = vmax.f32 %v4607, 0.0
      %v4864 = vmax.f32 %v4608, 0.0
      %v4865 = vmax.f32 %v4609, 0.0
      %v4866 = vmax.f32 %v4610, 0.0
      %v4867 = vmax.f32 %v4611, 0.0
      %v4868 = vmax.f32 %v4612, 0.0
      %v4869 = vmax.f32 %v4613, 0.0
      %v4870 = vmax.f32 %v4614, 0.0
      %v4871 = vmax.f32 %v4615, 0.0
      %v4872 = vmax.f32 %v4616, 0.0
      %v4873 = vmax.f32 %v4617, 0.0
      %v4874 = vmax.f32 %v4618, 0.0
      %v4875 = vmax.f32 %v4619, 0.0
      %v4876 = vmax.f32 %v4620, 0.0
      %v4877 = vmax.f32 %v4621, 0.0
      %v4878 = vmax.f32 %v4622, 0.0
      %v4879 = vmax.f32 %v4623, 0.0
      %v4880 = vmax.f32 %v4624, 0.0
      %v4881 = vmax.f32 %v4625, 0.0
      %v4882 = vmax.f32 %v4626, 0.0
      %v4883 = vmax.f32 %v4627, 0.0
      %v4884 = vmax.f32 %v4628, 0.0
      %v4885 = vmax.f32 %v4629, 0.0
      %v4886 = vmax.f32 %v4630, 0.0
      %v4887 = vmax.f32 %v4631, 0.0
      %v4888 = vmax.f32 %v4632, 0.0
      %v4889 = vmax.f32 %v4633, 0.0
      %v4890 = vmax.f32 %v4634, 0.0
      %v4891 = vmax.f32 %v4635, 0.0
      %v4892 = vmax.f32 %v4636, 0.0
      %v4893 = vmax.f32 %v4637, 0.0
      %v4894 = vmax.f32 %v4638, 0.0
      %v4895 = vmax.f32 %v4639, 0.0
      %v4896 = vmax.f32 %v4640, 0.0
      %v4897 = vmax.f32 %v4641, 0.0
      %v4898 = vmax.f32 %v4642, 0.0
      %v4899 = vmax.f32 %v4643, 0.0
      %v4900 = vmax.f32 %v4644, 0.0
      %v4901 = vmax.f32 %v4645, 0.0
      %v4902 = vmax.f32 %v4646, 0.0
      %v4903 = vmax.f32 %v4647, 0.0
      %v4904 = vmax.f32 %v4648, 0.0
      %v4905 = vmax.f32 %v4649, 0.0
      %v4906 = vmax.f32 %v4650, 0.0
      %v4907 = vmax.f32 %v4651, 0.0
      %v4908 = vmax.f32 %v4652, 0.0
      %v4909 = vmax.f32 %v4653, 0.0
      %v4910 = vmax.f32 %v4654, 0.0
      %v4911 = vmax.f32 %v4655, 0.0
      %v4912 = vmax.f32 %v4656, 0.0
      %v4913 = vmax.f32 %v4657, 0.0
      %v4914 = vmax.f32 %v4658, 0.0
      %v4915 = vmax.f32 %v4659, 0.0
      %v4916 = vmax.f32 %v4660, 0.0
      %v4917 = vmax.f32 %v4661, 0.0
      %v4918 = vmax.f32 %v4662, 0.0
      %v4919 = vmax.f32 %v4663, 0.0
      %v4920 = vmax.f32 %v4664, 0.0
      %v4921 = vmax.f32 %v4665, 0.0
      %v4922 = vmax.f32 %v4666, 0.0
      %v4923 = vmax.f32 %v4667, 0.0
      %v4924 = vmax.f32 %v4668, 0.0
      %v4925 = vmax.f32 %v4669, 0.0
      %v4926 = vmax.f32 %v4670, 0.0
      %v4927 = vmax.f32 %v4671, 0.0
      %v4928 = vmax.f32 %v4672, 0.0
      %v4929 = vmax.f32 %v4673, 0.0
      %v4930 = vmax.f32 %v4674, 0.0
      %v4931 = vmax.f32 %v4675, 0.0
      %v4932 = vmax.f32 %v4676, 0.0
      %v4933 = vmax.f32 %v4677, 0.0
      %v4934 = vmax.f32 %v4678, 0.0
      %v4935 = vmax.f32 %v4679, 0.0
      %v4936 = vmax.f32 %v4680, 0.0
      %v4937 = vmax.f32 %v4681, 0.0
      %v4938 = vpack.c.bf16 %v4683, %v4682
      %v4939 = vpack.c.bf16 %v4685, %v4684
      %v4940 = vpack.c.bf16 %v4687, %v4686
      %v4941 = vpack.c.bf16 %v4689, %v4688
      %v4942 = vpack.c.bf16 %v4691, %v4690
      %v4943 = vpack.c.bf16 %v4693, %v4692
      %v4944 = vpack.c.bf16 %v4695, %v4694
      %v4945 = vpack.c.bf16 %v4697, %v4696
      %v4946 = vpack.c.bf16 %v4699, %v4698
      %v4947 = vpack.c.bf16 %v4701, %v4700
      %v4948 = vpack.c.bf16 %v4703, %v4702
      %v4949 = vpack.c.bf16 %v4705, %v4704
      %v4950 = vpack.c.bf16 %v4707, %v4706
      %v4951 = vpack.c.bf16 %v4709, %v4708
      %v4952 = vpack.c.bf16 %v4711, %v4710
      %v4953 = vpack.c.bf16 %v4713, %v4712
      %v4954 = vpack.c.bf16 %v4715, %v4714
      %v4955 = vpack.c.bf16 %v4717, %v4716
      %v4956 = vpack.c.bf16 %v4719, %v4718
      %v4957 = vpack.c.bf16 %v4721, %v4720
      %v4958 = vpack.c.bf16 %v4723, %v4722
      %v4959 = vpack.c.bf16 %v4725, %v4724
      %v4960 = vpack.c.bf16 %v4727, %v4726
      %v4961 = vpack.c.bf16 %v4729, %v4728
      %v4962 = vpack.c.bf16 %v4731, %v4730
      %v4963 = vpack.c.bf16 %v4733, %v4732
      %v4964 = vpack.c.bf16 %v4735, %v4734
      %v4965 = vpack.c.bf16 %v4737, %v4736
      %v4966 = vpack.c.bf16 %v4739, %v4738
      %v4967 = vpack.c.bf16 %v4741, %v4740
      %v4968 = vpack.c.bf16 %v4743, %v4742
      %v4969 = vpack.c.bf16 %v4745, %v4744
      %v4970 = vpack.c.bf16 %v4747, %v4746
      %v4971 = vpack.c.bf16 %v4749, %v4748
      %v4972 = vpack.c.bf16 %v4751, %v4750
      %v4973 = vpack.c.bf16 %v4753, %v4752
      %v4974 = vpack.c.bf16 %v4755, %v4754
      %v4975 = vpack.c.bf16 %v4757, %v4756
      %v4976 = vpack.c.bf16 %v4759, %v4758
      %v4977 = vpack.c.bf16 %v4761, %v4760
      %v4978 = vpack.c.bf16 %v4763, %v4762
      %v4979 = vpack.c.bf16 %v4765, %v4764
      %v4980 = vpack.c.bf16 %v4767, %v4766
      %v4981 = vpack.c.bf16 %v4769, %v4768
      %v4982 = vpack.c.bf16 %v4771, %v4770
      %v4983 = vpack.c.bf16 %v4773, %v4772
      %v4984 = vpack.c.bf16 %v4775, %v4774
      %v4985 = vpack.c.bf16 %v4777, %v4776
      %v4986 = vpack.c.bf16 %v4779, %v4778
      %v4987 = vpack.c.bf16 %v4781, %v4780
      %v4988 = vpack.c.bf16 %v4783, %v4782
      %v4989 = vpack.c.bf16 %v4785, %v4784
      %v4990 = vpack.c.bf16 %v4787, %v4786
      %v4991 = vpack.c.bf16 %v4789, %v4788
      %v4992 = vpack.c.bf16 %v4791, %v4790
      %v4993 = vpack.c.bf16 %v4793, %v4792
      %v4994 = vpack.c.bf16 %v4795, %v4794
      %v4995 = vpack.c.bf16 %v4797, %v4796
      %v4996 = vpack.c.bf16 %v4799, %v4798
      %v4997 = vpack.c.bf16 %v4801, %v4800
      %v4998 = vpack.c.bf16 %v4803, %v4802
      %v4999 = vpack.c.bf16 %v4805, %v4804
      %v5000 = vpack.c.bf16 %v4807, %v4806
      %v5001 = vpack.c.bf16 %v4809, %v4808
      %v5002 = vpack.c.bf16 %v4811, %v4810
      %v5003 = vpack.c.bf16 %v4813, %v4812
      %v5004 = vpack.c.bf16 %v4815, %v4814
      %v5005 = vpack.c.bf16 %v4817, %v4816
      %v5006 = vpack.c.bf16 %v4819, %v4818
      %v5007 = vpack.c.bf16 %v4821, %v4820
      %v5008 = vpack.c.bf16 %v4823, %v4822
      %v5009 = vpack.c.bf16 %v4825, %v4824
      %v5010 = vpack.c.bf16 %v4827, %v4826
      %v5011 = vpack.c.bf16 %v4829, %v4828
      %v5012 = vpack.c.bf16 %v4831, %v4830
      %v5013 = vpack.c.bf16 %v4833, %v4832
      %v5014 = vpack.c.bf16 %v4835, %v4834
      %v5015 = vpack.c.bf16 %v4837, %v4836
      %v5016 = vpack.c.bf16 %v4839, %v4838
      %v5017 = vpack.c.bf16 %v4841, %v4840
      %v5018 = vpack.c.bf16 %v4843, %v4842
      %v5019 = vpack.c.bf16 %v4845, %v4844
      %v5020 = vpack.c.bf16 %v4847, %v4846
      %v5021 = vpack.c.bf16 %v4849, %v4848
      %v5022 = vpack.c.bf16 %v4851, %v4850
      %v5023 = vpack.c.bf16 %v4853, %v4852
      %v5024 = vpack.c.bf16 %v4855, %v4854
      %v5025 = vpack.c.bf16 %v4857, %v4856
      %v5026 = vpack.c.bf16 %v4859, %v4858
      %v5027 = vpack.c.bf16 %v4861, %v4860
      %v5028 = vpack.c.bf16 %v4863, %v4862
      %v5029 = vpack.c.bf16 %v4865, %v4864
      %v5030 = vpack.c.bf16 %v4867, %v4866
      %v5031 = vpack.c.bf16 %v4869, %v4868
      %v5032 = vpack.c.bf16 %v4871, %v4870
      %v5033 = vpack.c.bf16 %v4873, %v4872
      %v5034 = vpack.c.bf16 %v4875, %v4874
      %v5035 = vpack.c.bf16 %v4877, %v4876
      %v5036 = vpack.c.bf16 %v4879, %v4878
      %v5037 = vpack.c.bf16 %v4881, %v4880
      %v5038 = vpack.c.bf16 %v4883, %v4882
      %v5039 = vpack.c.bf16 %v4885, %v4884
      %v5040 = vpack.c.bf16 %v4887, %v4886
      %v5041 = vpack.c.bf16 %v4889, %v4888
      %v5042 = vpack.c.bf16 %v4891, %v4890
      %v5043 = vpack.c.bf16 %v4893, %v4892
      %v5044 = vpack.c.bf16 %v4895, %v4894
      %v5045 = vpack.c.bf16 %v4897, %v4896
      %v5046 = vpack.c.bf16 %v4899, %v4898
      %v5047 = vpack.c.bf16 %v4901, %v4900
      %v5048 = vpack.c.bf16 %v4903, %v4902
      %v5049 = vpack.c.bf16 %v4905, %v4904
      %v5050 = vpack.c.bf16 %v4907, %v4906
      %v5051 = vpack.c.bf16 %v4909, %v4908
      %v5052 = vpack.c.bf16 %v4911, %v4910
      %v5053 = vpack.c.bf16 %v4913, %v4912
      %v5054 = vpack.c.bf16 %v4915, %v4914
      %v5055 = vpack.c.bf16 %v4917, %v4916
      %v5056 = vpack.c.bf16 %v4919, %v4918
      %v5057 = vpack.c.bf16 %v4921, %v4920
      %v5058 = vpack.c.bf16 %v4923, %v4922
      %v5059 = vpack.c.bf16 %v4925, %v4924
      %v5060 = vpack.c.bf16 %v4927, %v4926
      %v5061 = vpack.c.bf16 %v4929, %v4928
      %v5062 = vpack.c.bf16 %v4931, %v4930
      %v5063 = vpack.c.bf16 %v4933, %v4932
      %v5064 = vpack.c.bf16 %v4935, %v4934
      %v5065 = vpack.c.bf16 %v4937, %v4936
      %v5066 = vld [vmem:[%s309] sm:$0xff]
      %v5067 = vld [vmem:[%s309 + $0x8] sm:$0xff]
      %v5068 = vld [vmem:[%s309 + $0x10] sm:$0xff]
      %v5069 = vld [vmem:[%s309 + $0x18] sm:$0xff]
      %v5070 = vld [vmem:[%s309 + $0x20] sm:$0xff]
      %v5071 = vld [vmem:[%s309 + $0x28] sm:$0xff]
      %v5072 = vld [vmem:[%s309 + $0x30] sm:$0xff]
      %v5073 = vld [vmem:[%s309 + $0x38] sm:$0xff]
      %v5074 = vld [vmem:[%s309 + $0x40] sm:$0xff]
      %v5075 = vld [vmem:[%s309 + $0x48] sm:$0xff]
      %v5076 = vld [vmem:[%s309 + $0x50] sm:$0xff]
      %v5077 = vld [vmem:[%s309 + $0x58] sm:$0xff]
      %v5078 = vld [vmem:[%s309 + $0x60] sm:$0xff]
      %v5079 = vld [vmem:[%s309 + $0x68] sm:$0xff]
      %v5080 = vld [vmem:[%s309 + $0x70] sm:$0xff]
      %v5081 = vld [vmem:[%s309 + $0x78] sm:$0xff]
      %v5082 = vld [vmem:[%s309 + $0x80] sm:$0xff]
      %v5083 = vld [vmem:[%s309 + $0x88] sm:$0xff]
      %v5084 = vld [vmem:[%s309 + $0x90] sm:$0xff]
      %v5085 = vld [vmem:[%s309 + $0x98] sm:$0xff]
      %v5086 = vld [vmem:[%s309 + $0xa0] sm:$0xff]
      %v5087 = vld [vmem:[%s309 + $0xa8] sm:$0xff]
      %v5088 = vld [vmem:[%s309 + $0xb0] sm:$0xff]
      %v5089 = vld [vmem:[%s309 + $0xb8] sm:$0xff]
      %v5090 = vld [vmem:[%s309 + $0xc0] sm:$0xff]
      %v5091 = vld [vmem:[%s309 + $0xc8] sm:$0xff]
      %v5092 = vld [vmem:[%s309 + $0xd0] sm:$0xff]
      %v5093 = vld [vmem:[%s309 + $0xd8] sm:$0xff]
      %v5094 = vld [vmem:[%s309 + $0xe0] sm:$0xff]
      %v5095 = vld [vmem:[%s309 + $0xe8] sm:$0xff]
      %v5096 = vld [vmem:[%s309 + $0xf0] sm:$0xff]
      %v5097 = vld [vmem:[%s309 + $0xf8] sm:$0xff]
      %v5098 = vld [vmem:[%s309 + $0x100] sm:$0xff]
      %v5099 = vld [vmem:[%s309 + $0x108] sm:$0xff]
      %v5100 = vld [vmem:[%s309 + $0x110] sm:$0xff]
      %v5101 = vld [vmem:[%s309 + $0x118] sm:$0xff]
      %v5102 = vld [vmem:[%s309 + $0x120] sm:$0xff]
      %v5103 = vld [vmem:[%s309 + $0x128] sm:$0xff]
      %v5104 = vld [vmem:[%s309 + $0x130] sm:$0xff]
      %v5105 = vld [vmem:[%s309 + $0x138] sm:$0xff]
      %v5106 = vld [vmem:[%s309 + $0x140] sm:$0xff]
      %v5107 = vld [vmem:[%s309 + $0x148] sm:$0xff]
      %v5108 = vld [vmem:[%s309 + $0x150] sm:$0xff]
      %v5109 = vld [vmem:[%s309 + $0x158] sm:$0xff]
      %v5110 = vld [vmem:[%s309 + $0x160] sm:$0xff]
      %v5111 = vld [vmem:[%s309 + $0x168] sm:$0xff]
      %v5112 = vld [vmem:[%s309 + $0x170] sm:$0xff]
      %v5113 = vld [vmem:[%s309 + $0x178] sm:$0xff]
      %v5114 = vld [vmem:[%s309 + $0x180] sm:$0xff]
      %v5115 = vld [vmem:[%s309 + $0x188] sm:$0xff]
      %v5116 = vld [vmem:[%s309 + $0x190] sm:$0xff]
      %v5117 = vld [vmem:[%s309 + $0x198] sm:$0xff]
      %v5118 = vld [vmem:[%s309 + $0x1a0] sm:$0xff]
      %v5119 = vld [vmem:[%s309 + $0x1a8] sm:$0xff]
      %v5120 = vld [vmem:[%s309 + $0x1b0] sm:$0xff]
      %v5121 = vld [vmem:[%s309 + $0x1b8] sm:$0xff]
      %v5122 = vld [vmem:[%s309 + $0x1c0] sm:$0xff]
      %v5123 = vld [vmem:[%s309 + $0x1c8] sm:$0xff]
      %v5124 = vld [vmem:[%s309 + $0x1d0] sm:$0xff]
      %v5125 = vld [vmem:[%s309 + $0x1d8] sm:$0xff]
      %v5126 = vld [vmem:[%s309 + $0x1e0] sm:$0xff]
      %v5127 = vld [vmem:[%s309 + $0x1e8] sm:$0xff]
      %v5128 = vld [vmem:[%s309 + $0x1f0] sm:$0xff]
      %v5129 = vld [vmem:[%s309 + $0x1f8] sm:$0xff]
      %v5130 = vld [vmem:[%s309 + $0x200] sm:$0xff]
      %v5131 = vld [vmem:[%s309 + $0x208] sm:$0xff]
      %v5132 = vld [vmem:[%s309 + $0x210] sm:$0xff]
      %v5133 = vld [vmem:[%s309 + $0x218] sm:$0xff]
      %v5134 = vld [vmem:[%s309 + $0x220] sm:$0xff]
      %v5135 = vld [vmem:[%s309 + $0x228] sm:$0xff]
      %v5136 = vld [vmem:[%s309 + $0x230] sm:$0xff]
      %v5137 = vld [vmem:[%s309 + $0x238] sm:$0xff]
      %v5138 = vld [vmem:[%s309 + $0x240] sm:$0xff]
      %v5139 = vld [vmem:[%s309 + $0x248] sm:$0xff]
      %v5140 = vld [vmem:[%s309 + $0x250] sm:$0xff]
      %v5141 = vld [vmem:[%s309 + $0x258] sm:$0xff]
      %v5142 = vld [vmem:[%s309 + $0x260] sm:$0xff]
      %v5143 = vld [vmem:[%s309 + $0x268] sm:$0xff]
      %v5144 = vld [vmem:[%s309 + $0x270] sm:$0xff]
      %v5145 = vld [vmem:[%s309 + $0x278] sm:$0xff]
      %v5146 = vld [vmem:[%s309 + $0x280] sm:$0xff]
      %v5147 = vld [vmem:[%s309 + $0x288] sm:$0xff]
      %v5148 = vld [vmem:[%s309 + $0x290] sm:$0xff]
      %v5149 = vld [vmem:[%s309 + $0x298] sm:$0xff]
      %v5150 = vld [vmem:[%s309 + $0x2a0] sm:$0xff]
      %v5151 = vld [vmem:[%s309 + $0x2a8] sm:$0xff]
      %v5152 = vld [vmem:[%s309 + $0x2b0] sm:$0xff]
      %v5153 = vld [vmem:[%s309 + $0x2b8] sm:$0xff]
      %v5154 = vld [vmem:[%s309 + $0x2c0] sm:$0xff]
      %v5155 = vld [vmem:[%s309 + $0x2c8] sm:$0xff]
      %v5156 = vld [vmem:[%s309 + $0x2d0] sm:$0xff]
      %v5157 = vld [vmem:[%s309 + $0x2d8] sm:$0xff]
      %v5158 = vld [vmem:[%s309 + $0x2e0] sm:$0xff]
      %v5159 = vld [vmem:[%s309 + $0x2e8] sm:$0xff]
      %v5160 = vld [vmem:[%s309 + $0x2f0] sm:$0xff]
      %v5161 = vld [vmem:[%s309 + $0x2f8] sm:$0xff]
      %v5162 = vld [vmem:[%s309 + $0x300] sm:$0xff]
      %v5163 = vld [vmem:[%s309 + $0x308] sm:$0xff]
      %v5164 = vld [vmem:[%s309 + $0x310] sm:$0xff]
      %v5165 = vld [vmem:[%s309 + $0x318] sm:$0xff]
      %v5166 = vld [vmem:[%s309 + $0x320] sm:$0xff]
      %v5167 = vld [vmem:[%s309 + $0x328] sm:$0xff]
      %v5168 = vld [vmem:[%s309 + $0x330] sm:$0xff]
      %v5169 = vld [vmem:[%s309 + $0x338] sm:$0xff]
      %v5170 = vld [vmem:[%s309 + $0x340] sm:$0xff]
      %v5171 = vld [vmem:[%s309 + $0x348] sm:$0xff]
      %v5172 = vld [vmem:[%s309 + $0x350] sm:$0xff]
      %v5173 = vld [vmem:[%s309 + $0x358] sm:$0xff]
      %v5174 = vld [vmem:[%s309 + $0x360] sm:$0xff]
      %v5175 = vld [vmem:[%s309 + $0x368] sm:$0xff]
      %v5176 = vld [vmem:[%s309 + $0x370] sm:$0xff]
      %v5177 = vld [vmem:[%s309 + $0x378] sm:$0xff]
      %v5178 = vld [vmem:[%s309 + $0x380] sm:$0xff]
      %v5179 = vld [vmem:[%s309 + $0x388] sm:$0xff]
      %v5180 = vld [vmem:[%s309 + $0x390] sm:$0xff]
      %v5181 = vld [vmem:[%s309 + $0x398] sm:$0xff]
      %v5182 = vld [vmem:[%s309 + $0x3a0] sm:$0xff]
      %v5183 = vld [vmem:[%s309 + $0x3a8] sm:$0xff]
      %v5184 = vld [vmem:[%s309 + $0x3b0] sm:$0xff]
      %v5185 = vld [vmem:[%s309 + $0x3b8] sm:$0xff]
      %v5186 = vld [vmem:[%s309 + $0x3c0] sm:$0xff]
      %v5187 = vld [vmem:[%s309 + $0x3c8] sm:$0xff]
      %v5188 = vld [vmem:[%s309 + $0x3d0] sm:$0xff]
      %v5189 = vld [vmem:[%s309 + $0x3d8] sm:$0xff]
      %v5190 = vld [vmem:[%s309 + $0x3e0] sm:$0xff]
      %v5191 = vld [vmem:[%s309 + $0x3e8] sm:$0xff]
      %v5192 = vld [vmem:[%s309 + $0x3f0] sm:$0xff]
      %v5193 = vld [vmem:[%s309 + $0x3f8] sm:$0xff]
      %v5194 = vld [vmem:[%s309 + $0x400] sm:$0xff]
      %v5195 = vld [vmem:[%s309 + $0x408] sm:$0xff]
      %v5196 = vld [vmem:[%s309 + $0x410] sm:$0xff]
      %v5197 = vld [vmem:[%s309 + $0x418] sm:$0xff]
      %v5198 = vld [vmem:[%s309 + $0x420] sm:$0xff]
      %v5199 = vld [vmem:[%s309 + $0x428] sm:$0xff]
      %v5200 = vld [vmem:[%s309 + $0x430] sm:$0xff]
      %v5201 = vld [vmem:[%s309 + $0x438] sm:$0xff]
      %v5202 = vld [vmem:[%s309 + $0x440] sm:$0xff]
      %v5203 = vld [vmem:[%s309 + $0x448] sm:$0xff]
      %v5204 = vld [vmem:[%s309 + $0x450] sm:$0xff]
      %v5205 = vld [vmem:[%s309 + $0x458] sm:$0xff]
      %v5206 = vld [vmem:[%s309 + $0x460] sm:$0xff]
      %v5207 = vld [vmem:[%s309 + $0x468] sm:$0xff]
      %v5208 = vld [vmem:[%s309 + $0x470] sm:$0xff]
      %v5209 = vld [vmem:[%s309 + $0x478] sm:$0xff]
      %v5210 = vld [vmem:[%s309 + $0x480] sm:$0xff]
      %v5211 = vld [vmem:[%s309 + $0x488] sm:$0xff]
      %v5212 = vld [vmem:[%s309 + $0x490] sm:$0xff]
      %v5213 = vld [vmem:[%s309 + $0x498] sm:$0xff]
      %v5214 = vld [vmem:[%s309 + $0x4a0] sm:$0xff]
      %v5215 = vld [vmem:[%s309 + $0x4a8] sm:$0xff]
      %v5216 = vld [vmem:[%s309 + $0x4b0] sm:$0xff]
      %v5217 = vld [vmem:[%s309 + $0x4b8] sm:$0xff]
      %v5218 = vld [vmem:[%s309 + $0x4c0] sm:$0xff]
      %v5219 = vld [vmem:[%s309 + $0x4c8] sm:$0xff]
      %v5220 = vld [vmem:[%s309 + $0x4d0] sm:$0xff]
      %v5221 = vld [vmem:[%s309 + $0x4d8] sm:$0xff]
      %v5222 = vld [vmem:[%s309 + $0x4e0] sm:$0xff]
      %v5223 = vld [vmem:[%s309 + $0x4e8] sm:$0xff]
      %v5224 = vld [vmem:[%s309 + $0x4f0] sm:$0xff]
      %v5225 = vld [vmem:[%s309 + $0x4f8] sm:$0xff]
      %v5226 = vld [vmem:[%s309 + $0x500] sm:$0xff]
      %v5227 = vld [vmem:[%s309 + $0x508] sm:$0xff]
      %v5228 = vld [vmem:[%s309 + $0x510] sm:$0xff]
      %v5229 = vld [vmem:[%s309 + $0x518] sm:$0xff]
      %v5230 = vld [vmem:[%s309 + $0x520] sm:$0xff]
      %v5231 = vld [vmem:[%s309 + $0x528] sm:$0xff]
      %v5232 = vld [vmem:[%s309 + $0x530] sm:$0xff]
      %v5233 = vld [vmem:[%s309 + $0x538] sm:$0xff]
      %v5234 = vld [vmem:[%s309 + $0x540] sm:$0xff]
      %v5235 = vld [vmem:[%s309 + $0x548] sm:$0xff]
      %v5236 = vld [vmem:[%s309 + $0x550] sm:$0xff]
      %v5237 = vld [vmem:[%s309 + $0x558] sm:$0xff]
      %v5238 = vld [vmem:[%s309 + $0x560] sm:$0xff]
      %v5239 = vld [vmem:[%s309 + $0x568] sm:$0xff]
      %v5240 = vld [vmem:[%s309 + $0x570] sm:$0xff]
      %v5241 = vld [vmem:[%s309 + $0x578] sm:$0xff]
      %v5242 = vld [vmem:[%s309 + $0x580] sm:$0xff]
      %v5243 = vld [vmem:[%s309 + $0x588] sm:$0xff]
      %v5244 = vld [vmem:[%s309 + $0x590] sm:$0xff]
      %v5245 = vld [vmem:[%s309 + $0x598] sm:$0xff]
      %v5246 = vld [vmem:[%s309 + $0x5a0] sm:$0xff]
      %v5247 = vld [vmem:[%s309 + $0x5a8] sm:$0xff]
      %v5248 = vld [vmem:[%s309 + $0x5b0] sm:$0xff]
      %v5249 = vld [vmem:[%s309 + $0x5b8] sm:$0xff]
      %v5250 = vld [vmem:[%s309 + $0x5c0] sm:$0xff]
      %v5251 = vld [vmem:[%s309 + $0x5c8] sm:$0xff]
      %v5252 = vld [vmem:[%s309 + $0x5d0] sm:$0xff]
      %v5253 = vld [vmem:[%s309 + $0x5d8] sm:$0xff]
      %v5254 = vld [vmem:[%s309 + $0x5e0] sm:$0xff]
      %v5255 = vld [vmem:[%s309 + $0x5e8] sm:$0xff]
      %v5256 = vld [vmem:[%s309 + $0x5f0] sm:$0xff]
      %v5257 = vld [vmem:[%s309 + $0x5f8] sm:$0xff]
      %v5258 = vld [vmem:[%s309 + $0x600] sm:$0xff]
      %v5259 = vld [vmem:[%s309 + $0x608] sm:$0xff]
      %v5260 = vld [vmem:[%s309 + $0x610] sm:$0xff]
      %v5261 = vld [vmem:[%s309 + $0x618] sm:$0xff]
      %v5262 = vld [vmem:[%s309 + $0x620] sm:$0xff]
      %v5263 = vld [vmem:[%s309 + $0x628] sm:$0xff]
      %v5264 = vld [vmem:[%s309 + $0x630] sm:$0xff]
      %v5265 = vld [vmem:[%s309 + $0x638] sm:$0xff]
      %v5266 = vld [vmem:[%s309 + $0x640] sm:$0xff]
      %v5267 = vld [vmem:[%s309 + $0x648] sm:$0xff]
      %v5268 = vld [vmem:[%s309 + $0x650] sm:$0xff]
      %v5269 = vld [vmem:[%s309 + $0x658] sm:$0xff]
      %v5270 = vld [vmem:[%s309 + $0x660] sm:$0xff]
      %v5271 = vld [vmem:[%s309 + $0x668] sm:$0xff]
      %v5272 = vld [vmem:[%s309 + $0x670] sm:$0xff]
      %v5273 = vld [vmem:[%s309 + $0x678] sm:$0xff]
      %v5274 = vld [vmem:[%s309 + $0x680] sm:$0xff]
      %v5275 = vld [vmem:[%s309 + $0x688] sm:$0xff]
      %v5276 = vld [vmem:[%s309 + $0x690] sm:$0xff]
      %v5277 = vld [vmem:[%s309 + $0x698] sm:$0xff]
      %v5278 = vld [vmem:[%s309 + $0x6a0] sm:$0xff]
      %v5279 = vld [vmem:[%s309 + $0x6a8] sm:$0xff]
      %v5280 = vld [vmem:[%s309 + $0x6b0] sm:$0xff]
      %v5281 = vld [vmem:[%s309 + $0x6b8] sm:$0xff]
      %v5282 = vld [vmem:[%s309 + $0x6c0] sm:$0xff]
      %v5283 = vld [vmem:[%s309 + $0x6c8] sm:$0xff]
      %v5284 = vld [vmem:[%s309 + $0x6d0] sm:$0xff]
      %v5285 = vld [vmem:[%s309 + $0x6d8] sm:$0xff]
      %v5286 = vld [vmem:[%s309 + $0x6e0] sm:$0xff]
      %v5287 = vld [vmem:[%s309 + $0x6e8] sm:$0xff]
      %v5288 = vld [vmem:[%s309 + $0x6f0] sm:$0xff]
      %v5289 = vld [vmem:[%s309 + $0x6f8] sm:$0xff]
      %v5290 = vld [vmem:[%s309 + $0x700] sm:$0xff]
      %v5291 = vld [vmem:[%s309 + $0x708] sm:$0xff]
      %v5292 = vld [vmem:[%s309 + $0x710] sm:$0xff]
      %v5293 = vld [vmem:[%s309 + $0x718] sm:$0xff]
      %v5294 = vld [vmem:[%s309 + $0x720] sm:$0xff]
      %v5295 = vld [vmem:[%s309 + $0x728] sm:$0xff]
      %v5296 = vld [vmem:[%s309 + $0x730] sm:$0xff]
      %v5297 = vld [vmem:[%s309 + $0x738] sm:$0xff]
      %v5298 = vld [vmem:[%s309 + $0x740] sm:$0xff]
      %v5299 = vld [vmem:[%s309 + $0x748] sm:$0xff]
      %v5300 = vld [vmem:[%s309 + $0x750] sm:$0xff]
      %v5301 = vld [vmem:[%s309 + $0x758] sm:$0xff]
      %v5302 = vld [vmem:[%s309 + $0x760] sm:$0xff]
      %v5303 = vld [vmem:[%s309 + $0x768] sm:$0xff]
      %v5304 = vld [vmem:[%s309 + $0x770] sm:$0xff]
      %v5305 = vld [vmem:[%s309 + $0x778] sm:$0xff]
      %v5306 = vld [vmem:[%s309 + $0x780] sm:$0xff]
      %v5307 = vld [vmem:[%s309 + $0x788] sm:$0xff]
      %v5308 = vld [vmem:[%s309 + $0x790] sm:$0xff]
      %v5309 = vld [vmem:[%s309 + $0x798] sm:$0xff]
      %v5310 = vld [vmem:[%s309 + $0x7a0] sm:$0xff]
      %v5311 = vld [vmem:[%s309 + $0x7a8] sm:$0xff]
      %v5312 = vld [vmem:[%s309 + $0x7b0] sm:$0xff]
      %v5313 = vld [vmem:[%s309 + $0x7b8] sm:$0xff]
      %v5314 = vld [vmem:[%s309 + $0x7c0] sm:$0xff]
      %v5315 = vld [vmem:[%s309 + $0x7c8] sm:$0xff]
      %v5316 = vld [vmem:[%s309 + $0x7d0] sm:$0xff]
      %v5317 = vld [vmem:[%s309 + $0x7d8] sm:$0xff]
      %v5318 = vld [vmem:[%s309 + $0x7e0] sm:$0xff]
      %v5319 = vld [vmem:[%s309 + $0x7e8] sm:$0xff]
      %v5320 = vld [vmem:[%s309 + $0x7f0] sm:$0xff]
      %v5321 = vld [vmem:[%s309 + $0x7f8] sm:$0xff]
      %v5578 = vunpack.c.l.b16 %v5066
      %v5579 = vunpack.c.h.b16 %v5066
      %v5580 = vunpack.c.l.b16 %v5067
      %v5581 = vunpack.c.h.b16 %v5067
      %v5582 = vunpack.c.l.b16 %v5068
      %v5583 = vunpack.c.h.b16 %v5068
      %v5584 = vunpack.c.l.b16 %v5069
      %v5585 = vunpack.c.h.b16 %v5069
      %v5586 = vunpack.c.l.b16 %v5070
      %v5587 = vunpack.c.h.b16 %v5070
      %v5588 = vunpack.c.l.b16 %v5071
      %v5589 = vunpack.c.h.b16 %v5071
      %v5590 = vunpack.c.l.b16 %v5072
      %v5591 = vunpack.c.h.b16 %v5072
      %v5592 = vunpack.c.l.b16 %v5073
      %v5593 = vunpack.c.h.b16 %v5073
      %v5594 = vunpack.c.l.b16 %v5074
      %v5595 = vunpack.c.h.b16 %v5074
      %v5596 = vunpack.c.l.b16 %v5075
      %v5597 = vunpack.c.h.b16 %v5075
      %v5598 = vunpack.c.l.b16 %v5076
      %v5599 = vunpack.c.h.b16 %v5076
      %v5600 = vunpack.c.l.b16 %v5077
      %v5601 = vunpack.c.h.b16 %v5077
      %v5602 = vunpack.c.l.b16 %v5078
      %v5603 = vunpack.c.h.b16 %v5078
      %v5604 = vunpack.c.l.b16 %v5079
      %v5605 = vunpack.c.h.b16 %v5079
      %v5606 = vunpack.c.l.b16 %v5080
      %v5607 = vunpack.c.h.b16 %v5080
      %v5608 = vunpack.c.l.b16 %v5081
      %v5609 = vunpack.c.h.b16 %v5081
      %v5610 = vunpack.c.l.b16 %v5082
      %v5611 = vunpack.c.h.b16 %v5082
      %v5612 = vunpack.c.l.b16 %v5083
      %v5613 = vunpack.c.h.b16 %v5083
      %v5614 = vunpack.c.l.b16 %v5084
      %v5615 = vunpack.c.h.b16 %v5084
      %v5616 = vunpack.c.l.b16 %v5085
      %v5617 = vunpack.c.h.b16 %v5085
      %v5618 = vunpack.c.l.b16 %v5086
      %v5619 = vunpack.c.h.b16 %v5086
      %v5620 = vunpack.c.l.b16 %v5087
      %v5621 = vunpack.c.h.b16 %v5087
      %v5622 = vunpack.c.l.b16 %v5088
      %v5623 = vunpack.c.h.b16 %v5088
      %v5624 = vunpack.c.l.b16 %v5089
      %v5625 = vunpack.c.h.b16 %v5089
      %v5626 = vunpack.c.l.b16 %v5090
      %v5627 = vunpack.c.h.b16 %v5090
      %v5628 = vunpack.c.l.b16 %v5091
      %v5629 = vunpack.c.h.b16 %v5091
      %v5630 = vunpack.c.l.b16 %v5092
      %v5631 = vunpack.c.h.b16 %v5092
      %v5632 = vunpack.c.l.b16 %v5093
      %v5633 = vunpack.c.h.b16 %v5093
      %v5634 = vunpack.c.l.b16 %v5094
      %v5635 = vunpack.c.h.b16 %v5094
      %v5636 = vunpack.c.l.b16 %v5095
      %v5637 = vunpack.c.h.b16 %v5095
      %v5638 = vunpack.c.l.b16 %v5096
      %v5639 = vunpack.c.h.b16 %v5096
      %v5640 = vunpack.c.l.b16 %v5097
      %v5641 = vunpack.c.h.b16 %v5097
      %v5642 = vunpack.c.l.b16 %v5098
      %v5643 = vunpack.c.h.b16 %v5098
      %v5644 = vunpack.c.l.b16 %v5099
      %v5645 = vunpack.c.h.b16 %v5099
      %v5646 = vunpack.c.l.b16 %v5100
      %v5647 = vunpack.c.h.b16 %v5100
      %v5648 = vunpack.c.l.b16 %v5101
      %v5649 = vunpack.c.h.b16 %v5101
      %v5650 = vunpack.c.l.b16 %v5102
      %v5651 = vunpack.c.h.b16 %v5102
      %v5652 = vunpack.c.l.b16 %v5103
      %v5653 = vunpack.c.h.b16 %v5103
      %v5654 = vunpack.c.l.b16 %v5104
      %v5655 = vunpack.c.h.b16 %v5104
      %v5656 = vunpack.c.l.b16 %v5105
      %v5657 = vunpack.c.h.b16 %v5105
      %v5658 = vunpack.c.l.b16 %v5106
      %v5659 = vunpack.c.h.b16 %v5106
      %v5660 = vunpack.c.l.b16 %v5107
      %v5661 = vunpack.c.h.b16 %v5107
      %v5662 = vunpack.c.l.b16 %v5108
      %v5663 = vunpack.c.h.b16 %v5108
      %v5664 = vunpack.c.l.b16 %v5109
      %v5665 = vunpack.c.h.b16 %v5109
      %v5666 = vunpack.c.l.b16 %v5110
      %v5667 = vunpack.c.h.b16 %v5110
      %v5668 = vunpack.c.l.b16 %v5111
      %v5669 = vunpack.c.h.b16 %v5111
      %v5670 = vunpack.c.l.b16 %v5112
      %v5671 = vunpack.c.h.b16 %v5112
      %v5672 = vunpack.c.l.b16 %v5113
      %v5673 = vunpack.c.h.b16 %v5113
      %v5674 = vunpack.c.l.b16 %v5114
      %v5675 = vunpack.c.h.b16 %v5114
      %v5676 = vunpack.c.l.b16 %v5115
      %v5677 = vunpack.c.h.b16 %v5115
      %v5678 = vunpack.c.l.b16 %v5116
      %v5679 = vunpack.c.h.b16 %v5116
      %v5680 = vunpack.c.l.b16 %v5117
      %v5681 = vunpack.c.h.b16 %v5117
      %v5682 = vunpack.c.l.b16 %v5118
      %v5683 = vunpack.c.h.b16 %v5118
      %v5684 = vunpack.c.l.b16 %v5119
      %v5685 = vunpack.c.h.b16 %v5119
      %v5686 = vunpack.c.l.b16 %v5120
      %v5687 = vunpack.c.h.b16 %v5120
      %v5688 = vunpack.c.l.b16 %v5121
      %v5689 = vunpack.c.h.b16 %v5121
      %v5690 = vunpack.c.l.b16 %v5122
      %v5691 = vunpack.c.h.b16 %v5122
      %v5692 = vunpack.c.l.b16 %v5123
      %v5693 = vunpack.c.h.b16 %v5123
      %v5694 = vunpack.c.l.b16 %v5124
      %v5695 = vunpack.c.h.b16 %v5124
      %v5696 = vunpack.c.l.b16 %v5125
      %v5697 = vunpack.c.h.b16 %v5125
      %v5698 = vunpack.c.l.b16 %v5126
      %v5699 = vunpack.c.h.b16 %v5126
      %v5700 = vunpack.c.l.b16 %v5127
      %v5701 = vunpack.c.h.b16 %v5127
      %v5702 = vunpack.c.l.b16 %v5128
      %v5703 = vunpack.c.h.b16 %v5128
      %v5704 = vunpack.c.l.b16 %v5129
      %v5705 = vunpack.c.h.b16 %v5129
      %v5706 = vunpack.c.l.b16 %v5130
      %v5707 = vunpack.c.h.b16 %v5130
      %v5708 = vunpack.c.l.b16 %v5131
      %v5709 = vunpack.c.h.b16 %v5131
      %v5710 = vunpack.c.l.b16 %v5132
      %v5711 = vunpack.c.h.b16 %v5132
      %v5712 = vunpack.c.l.b16 %v5133
      %v5713 = vunpack.c.h.b16 %v5133
      %v5714 = vunpack.c.l.b16 %v5134
      %v5715 = vunpack.c.h.b16 %v5134
      %v5716 = vunpack.c.l.b16 %v5135
      %v5717 = vunpack.c.h.b16 %v5135
      %v5718 = vunpack.c.l.b16 %v5136
      %v5719 = vunpack.c.h.b16 %v5136
      %v5720 = vunpack.c.l.b16 %v5137
      %v5721 = vunpack.c.h.b16 %v5137
      %v5722 = vunpack.c.l.b16 %v5138
      %v5723 = vunpack.c.h.b16 %v5138
      %v5724 = vunpack.c.l.b16 %v5139
      %v5725 = vunpack.c.h.b16 %v5139
      %v5726 = vunpack.c.l.b16 %v5140
      %v5727 = vunpack.c.h.b16 %v5140
      %v5728 = vunpack.c.l.b16 %v5141
      %v5729 = vunpack.c.h.b16 %v5141
      %v5730 = vunpack.c.l.b16 %v5142
      %v5731 = vunpack.c.h.b16 %v5142
      %v5732 = vunpack.c.l.b16 %v5143
      %v5733 = vunpack.c.h.b16 %v5143
      %v5734 = vunpack.c.l.b16 %v5144
      %v5735 = vunpack.c.h.b16 %v5144
      %v5736 = vunpack.c.l.b16 %v5145
      %v5737 = vunpack.c.h.b16 %v5145
      %v5738 = vunpack.c.l.b16 %v5146
      %v5739 = vunpack.c.h.b16 %v5146
      %v5740 = vunpack.c.l.b16 %v5147
      %v5741 = vunpack.c.h.b16 %v5147
      %v5742 = vunpack.c.l.b16 %v5148
      %v5743 = vunpack.c.h.b16 %v5148
      %v5744 = vunpack.c.l.b16 %v5149
      %v5745 = vunpack.c.h.b16 %v5149
      %v5746 = vunpack.c.l.b16 %v5150
      %v5747 = vunpack.c.h.b16 %v5150
      %v5748 = vunpack.c.l.b16 %v5151
      %v5749 = vunpack.c.h.b16 %v5151
      %v5750 = vunpack.c.l.b16 %v5152
      %v5751 = vunpack.c.h.b16 %v5152
      %v5752 = vunpack.c.l.b16 %v5153
      %v5753 = vunpack.c.h.b16 %v5153
      %v5754 = vunpack.c.l.b16 %v5154
      %v5755 = vunpack.c.h.b16 %v5154
      %v5756 = vunpack.c.l.b16 %v5155
      %v5757 = vunpack.c.h.b16 %v5155
      %v5758 = vunpack.c.l.b16 %v5156
      %v5759 = vunpack.c.h.b16 %v5156
      %v5760 = vunpack.c.l.b16 %v5157
      %v5761 = vunpack.c.h.b16 %v5157
      %v5762 = vunpack.c.l.b16 %v5158
      %v5763 = vunpack.c.h.b16 %v5158
      %v5764 = vunpack.c.l.b16 %v5159
      %v5765 = vunpack.c.h.b16 %v5159
      %v5766 = vunpack.c.l.b16 %v5160
      %v5767 = vunpack.c.h.b16 %v5160
      %v5768 = vunpack.c.l.b16 %v5161
      %v5769 = vunpack.c.h.b16 %v5161
      %v5770 = vunpack.c.l.b16 %v5162
      %v5771 = vunpack.c.h.b16 %v5162
      %v5772 = vunpack.c.l.b16 %v5163
      %v5773 = vunpack.c.h.b16 %v5163
      %v5774 = vunpack.c.l.b16 %v5164
      %v5775 = vunpack.c.h.b16 %v5164
      %v5776 = vunpack.c.l.b16 %v5165
      %v5777 = vunpack.c.h.b16 %v5165
      %v5778 = vunpack.c.l.b16 %v5166
      %v5779 = vunpack.c.h.b16 %v5166
      %v5780 = vunpack.c.l.b16 %v5167
      %v5781 = vunpack.c.h.b16 %v5167
      %v5782 = vunpack.c.l.b16 %v5168
      %v5783 = vunpack.c.h.b16 %v5168
      %v5784 = vunpack.c.l.b16 %v5169
      %v5785 = vunpack.c.h.b16 %v5169
      %v5786 = vunpack.c.l.b16 %v5170
      %v5787 = vunpack.c.h.b16 %v5170
      %v5788 = vunpack.c.l.b16 %v5171
      %v5789 = vunpack.c.h.b16 %v5171
      %v5790 = vunpack.c.l.b16 %v5172
      %v5791 = vunpack.c.h.b16 %v5172
      %v5792 = vunpack.c.l.b16 %v5173
      %v5793 = vunpack.c.h.b16 %v5173
      %v5794 = vunpack.c.l.b16 %v5174
      %v5795 = vunpack.c.h.b16 %v5174
      %v5796 = vunpack.c.l.b16 %v5175
      %v5797 = vunpack.c.h.b16 %v5175
      %v5798 = vunpack.c.l.b16 %v5176
      %v5799 = vunpack.c.h.b16 %v5176
      %v5800 = vunpack.c.l.b16 %v5177
      %v5801 = vunpack.c.h.b16 %v5177
      %v5802 = vunpack.c.l.b16 %v5178
      %v5803 = vunpack.c.h.b16 %v5178
      %v5804 = vunpack.c.l.b16 %v5179
      %v5805 = vunpack.c.h.b16 %v5179
      %v5806 = vunpack.c.l.b16 %v5180
      %v5807 = vunpack.c.h.b16 %v5180
      %v5808 = vunpack.c.l.b16 %v5181
      %v5809 = vunpack.c.h.b16 %v5181
      %v5810 = vunpack.c.l.b16 %v5182
      %v5811 = vunpack.c.h.b16 %v5182
      %v5812 = vunpack.c.l.b16 %v5183
      %v5813 = vunpack.c.h.b16 %v5183
      %v5814 = vunpack.c.l.b16 %v5184
      %v5815 = vunpack.c.h.b16 %v5184
      %v5816 = vunpack.c.l.b16 %v5185
      %v5817 = vunpack.c.h.b16 %v5185
      %v5818 = vunpack.c.l.b16 %v5186
      %v5819 = vunpack.c.h.b16 %v5186
      %v5820 = vunpack.c.l.b16 %v5187
      %v5821 = vunpack.c.h.b16 %v5187
      %v5822 = vunpack.c.l.b16 %v5188
      %v5823 = vunpack.c.h.b16 %v5188
      %v5824 = vunpack.c.l.b16 %v5189
      %v5825 = vunpack.c.h.b16 %v5189
      %v5826 = vunpack.c.l.b16 %v5190
      %v5827 = vunpack.c.h.b16 %v5190
      %v5828 = vunpack.c.l.b16 %v5191
      %v5829 = vunpack.c.h.b16 %v5191
      %v5830 = vunpack.c.l.b16 %v5192
      %v5831 = vunpack.c.h.b16 %v5192
      %v5832 = vunpack.c.l.b16 %v5193
      %v5833 = vunpack.c.h.b16 %v5193
      %v5834 = vunpack.c.l.b16 %v5194
      %v5835 = vunpack.c.h.b16 %v5194
      %v5836 = vunpack.c.l.b16 %v5195
      %v5837 = vunpack.c.h.b16 %v5195
      %v5838 = vunpack.c.l.b16 %v5196
      %v5839 = vunpack.c.h.b16 %v5196
      %v5840 = vunpack.c.l.b16 %v5197
      %v5841 = vunpack.c.h.b16 %v5197
      %v5842 = vunpack.c.l.b16 %v5198
      %v5843 = vunpack.c.h.b16 %v5198
      %v5844 = vunpack.c.l.b16 %v5199
      %v5845 = vunpack.c.h.b16 %v5199
      %v5846 = vunpack.c.l.b16 %v5200
      %v5847 = vunpack.c.h.b16 %v5200
      %v5848 = vunpack.c.l.b16 %v5201
      %v5849 = vunpack.c.h.b16 %v5201
      %v5850 = vunpack.c.l.b16 %v5202
      %v5851 = vunpack.c.h.b16 %v5202
      %v5852 = vunpack.c.l.b16 %v5203
      %v5853 = vunpack.c.h.b16 %v5203
      %v5854 = vunpack.c.l.b16 %v5204
      %v5855 = vunpack.c.h.b16 %v5204
      %v5856 = vunpack.c.l.b16 %v5205
      %v5857 = vunpack.c.h.b16 %v5205
      %v5858 = vunpack.c.l.b16 %v5206
      %v5859 = vunpack.c.h.b16 %v5206
      %v5860 = vunpack.c.l.b16 %v5207
      %v5861 = vunpack.c.h.b16 %v5207
      %v5862 = vunpack.c.l.b16 %v5208
      %v5863 = vunpack.c.h.b16 %v5208
      %v5864 = vunpack.c.l.b16 %v5209
      %v5865 = vunpack.c.h.b16 %v5209
      %v5866 = vunpack.c.l.b16 %v5210
      %v5867 = vunpack.c.h.b16 %v5210
      %v5868 = vunpack.c.l.b16 %v5211
      %v5869 = vunpack.c.h.b16 %v5211
      %v5870 = vunpack.c.l.b16 %v5212
      %v5871 = vunpack.c.h.b16 %v5212
      %v5872 = vunpack.c.l.b16 %v5213
      %v5873 = vunpack.c.h.b16 %v5213
      %v5874 = vunpack.c.l.b16 %v5214
      %v5875 = vunpack.c.h.b16 %v5214
      %v5876 = vunpack.c.l.b16 %v5215
      %v5877 = vunpack.c.h.b16 %v5215
      %v5878 = vunpack.c.l.b16 %v5216
      %v5879 = vunpack.c.h.b16 %v5216
      %v5880 = vunpack.c.l.b16 %v5217
      %v5881 = vunpack.c.h.b16 %v5217
      %v5882 = vunpack.c.l.b16 %v5218
      %v5883 = vunpack.c.h.b16 %v5218
      %v5884 = vunpack.c.l.b16 %v5219
      %v5885 = vunpack.c.h.b16 %v5219
      %v5886 = vunpack.c.l.b16 %v5220
      %v5887 = vunpack.c.h.b16 %v5220
      %v5888 = vunpack.c.l.b16 %v5221
      %v5889 = vunpack.c.h.b16 %v5221
      %v5890 = vunpack.c.l.b16 %v5222
      %v5891 = vunpack.c.h.b16 %v5222
      %v5892 = vunpack.c.l.b16 %v5223
      %v5893 = vunpack.c.h.b16 %v5223
      %v5894 = vunpack.c.l.b16 %v5224
      %v5895 = vunpack.c.h.b16 %v5224
      %v5896 = vunpack.c.l.b16 %v5225
      %v5897 = vunpack.c.h.b16 %v5225
      %v5898 = vunpack.c.l.b16 %v5226
      %v5899 = vunpack.c.h.b16 %v5226
      %v5900 = vunpack.c.l.b16 %v5227
      %v5901 = vunpack.c.h.b16 %v5227
      %v5902 = vunpack.c.l.b16 %v5228
      %v5903 = vunpack.c.h.b16 %v5228
      %v5904 = vunpack.c.l.b16 %v5229
      %v5905 = vunpack.c.h.b16 %v5229
      %v5906 = vunpack.c.l.b16 %v5230
      %v5907 = vunpack.c.h.b16 %v5230
      %v5908 = vunpack.c.l.b16 %v5231
      %v5909 = vunpack.c.h.b16 %v5231
      %v5910 = vunpack.c.l.b16 %v5232
      %v5911 = vunpack.c.h.b16 %v5232
      %v5912 = vunpack.c.l.b16 %v5233
      %v5913 = vunpack.c.h.b16 %v5233
      %v5914 = vunpack.c.l.b16 %v5234
      %v5915 = vunpack.c.h.b16 %v5234
      %v5916 = vunpack.c.l.b16 %v5235
      %v5917 = vunpack.c.h.b16 %v5235
      %v5918 = vunpack.c.l.b16 %v5236
      %v5919 = vunpack.c.h.b16 %v5236
      %v5920 = vunpack.c.l.b16 %v5237
      %v5921 = vunpack.c.h.b16 %v5237
      %v5922 = vunpack.c.l.b16 %v5238
      %v5923 = vunpack.c.h.b16 %v5238
      %v5924 = vunpack.c.l.b16 %v5239
      %v5925 = vunpack.c.h.b16 %v5239
      %v5926 = vunpack.c.l.b16 %v5240
      %v5927 = vunpack.c.h.b16 %v5240
      %v5928 = vunpack.c.l.b16 %v5241
      %v5929 = vunpack.c.h.b16 %v5241
      %v5930 = vunpack.c.l.b16 %v5242
      %v5931 = vunpack.c.h.b16 %v5242
      %v5932 = vunpack.c.l.b16 %v5243
      %v5933 = vunpack.c.h.b16 %v5243
      %v5934 = vunpack.c.l.b16 %v5244
      %v5935 = vunpack.c.h.b16 %v5244
      %v5936 = vunpack.c.l.b16 %v5245
      %v5937 = vunpack.c.h.b16 %v5245
      %v5938 = vunpack.c.l.b16 %v5246
      %v5939 = vunpack.c.h.b16 %v5246
      %v5940 = vunpack.c.l.b16 %v5247
      %v5941 = vunpack.c.h.b16 %v5247
      %v5942 = vunpack.c.l.b16 %v5248
      %v5943 = vunpack.c.h.b16 %v5248
      %v5944 = vunpack.c.l.b16 %v5249
      %v5945 = vunpack.c.h.b16 %v5249
      %v5946 = vunpack.c.l.b16 %v5250
      %v5947 = vunpack.c.h.b16 %v5250
      %v5948 = vunpack.c.l.b16 %v5251
      %v5949 = vunpack.c.h.b16 %v5251
      %v5950 = vunpack.c.l.b16 %v5252
      %v5951 = vunpack.c.h.b16 %v5252
      %v5952 = vunpack.c.l.b16 %v5253
      %v5953 = vunpack.c.h.b16 %v5253
      %v5954 = vunpack.c.l.b16 %v5254
      %v5955 = vunpack.c.h.b16 %v5254
      %v5956 = vunpack.c.l.b16 %v5255
      %v5957 = vunpack.c.h.b16 %v5255
      %v5958 = vunpack.c.l.b16 %v5256
      %v5959 = vunpack.c.h.b16 %v5256
      %v5960 = vunpack.c.l.b16 %v5257
      %v5961 = vunpack.c.h.b16 %v5257
      %v5962 = vunpack.c.l.b16 %v5258
      %v5963 = vunpack.c.h.b16 %v5258
      %v5964 = vunpack.c.l.b16 %v5259
      %v5965 = vunpack.c.h.b16 %v5259
      %v5966 = vunpack.c.l.b16 %v5260
      %v5967 = vunpack.c.h.b16 %v5260
      %v5968 = vunpack.c.l.b16 %v5261
      %v5969 = vunpack.c.h.b16 %v5261
      %v5970 = vunpack.c.l.b16 %v5262
      %v5971 = vunpack.c.h.b16 %v5262
      %v5972 = vunpack.c.l.b16 %v5263
      %v5973 = vunpack.c.h.b16 %v5263
      %v5974 = vunpack.c.l.b16 %v5264
      %v5975 = vunpack.c.h.b16 %v5264
      %v5976 = vunpack.c.l.b16 %v5265
      %v5977 = vunpack.c.h.b16 %v5265
      %v5978 = vunpack.c.l.b16 %v5266
      %v5979 = vunpack.c.h.b16 %v5266
      %v5980 = vunpack.c.l.b16 %v5267
      %v5981 = vunpack.c.h.b16 %v5267
      %v5982 = vunpack.c.l.b16 %v5268
      %v5983 = vunpack.c.h.b16 %v5268
      %v5984 = vunpack.c.l.b16 %v5269
      %v5985 = vunpack.c.h.b16 %v5269
      %v5986 = vunpack.c.l.b16 %v5270
      %v5987 = vunpack.c.h.b16 %v5270
      %v5988 = vunpack.c.l.b16 %v5271
      %v5989 = vunpack.c.h.b16 %v5271
      %v5990 = vunpack.c.l.b16 %v5272
      %v5991 = vunpack.c.h.b16 %v5272
      %v5992 = vunpack.c.l.b16 %v5273
      %v5993 = vunpack.c.h.b16 %v5273
      %v5994 = vunpack.c.l.b16 %v5274
      %v5995 = vunpack.c.h.b16 %v5274
      %v5996 = vunpack.c.l.b16 %v5275
      %v5997 = vunpack.c.h.b16 %v5275
      %v5998 = vunpack.c.l.b16 %v5276
      %v5999 = vunpack.c.h.b16 %v5276
      %v6000 = vunpack.c.l.b16 %v5277
      %v6001 = vunpack.c.h.b16 %v5277
      %v6002 = vunpack.c.l.b16 %v5278
      %v6003 = vunpack.c.h.b16 %v5278
      %v6004 = vunpack.c.l.b16 %v5279
      %v6005 = vunpack.c.h.b16 %v5279
      %v6006 = vunpack.c.l.b16 %v5280
      %v6007 = vunpack.c.h.b16 %v5280
      %v6008 = vunpack.c.l.b16 %v5281
      %v6009 = vunpack.c.h.b16 %v5281
      %v6010 = vunpack.c.l.b16 %v5282
      %v6011 = vunpack.c.h.b16 %v5282
      %v6012 = vunpack.c.l.b16 %v5283
      %v6013 = vunpack.c.h.b16 %v5283
      %v6014 = vunpack.c.l.b16 %v5284
      %v6015 = vunpack.c.h.b16 %v5284
      %v6016 = vunpack.c.l.b16 %v5285
      %v6017 = vunpack.c.h.b16 %v5285
      %v6018 = vunpack.c.l.b16 %v5286
      %v6019 = vunpack.c.h.b16 %v5286
      %v6020 = vunpack.c.l.b16 %v5287
      %v6021 = vunpack.c.h.b16 %v5287
      %v6022 = vunpack.c.l.b16 %v5288
      %v6023 = vunpack.c.h.b16 %v5288
      %v6024 = vunpack.c.l.b16 %v5289
      %v6025 = vunpack.c.h.b16 %v5289
      %v6026 = vunpack.c.l.b16 %v5290
      %v6027 = vunpack.c.h.b16 %v5290
      %v6028 = vunpack.c.l.b16 %v5291
      %v6029 = vunpack.c.h.b16 %v5291
      %v6030 = vunpack.c.l.b16 %v5292
      %v6031 = vunpack.c.h.b16 %v5292
      %v6032 = vunpack.c.l.b16 %v5293
      %v6033 = vunpack.c.h.b16 %v5293
      %v6034 = vunpack.c.l.b16 %v5294
      %v6035 = vunpack.c.h.b16 %v5294
      %v6036 = vunpack.c.l.b16 %v5295
      %v6037 = vunpack.c.h.b16 %v5295
      %v6038 = vunpack.c.l.b16 %v5296
      %v6039 = vunpack.c.h.b16 %v5296
      %v6040 = vunpack.c.l.b16 %v5297
      %v6041 = vunpack.c.h.b16 %v5297
      %v6042 = vunpack.c.l.b16 %v5298
      %v6043 = vunpack.c.h.b16 %v5298
      %v6044 = vunpack.c.l.b16 %v5299
      %v6045 = vunpack.c.h.b16 %v5299
      %v6046 = vunpack.c.l.b16 %v5300
      %v6047 = vunpack.c.h.b16 %v5300
      %v6048 = vunpack.c.l.b16 %v5301
      %v6049 = vunpack.c.h.b16 %v5301
      %v6050 = vunpack.c.l.b16 %v5302
      %v6051 = vunpack.c.h.b16 %v5302
      %v6052 = vunpack.c.l.b16 %v5303
      %v6053 = vunpack.c.h.b16 %v5303
      %v6054 = vunpack.c.l.b16 %v5304
      %v6055 = vunpack.c.h.b16 %v5304
      %v6056 = vunpack.c.l.b16 %v5305
      %v6057 = vunpack.c.h.b16 %v5305
      %v6058 = vunpack.c.l.b16 %v5306
      %v6059 = vunpack.c.h.b16 %v5306
      %v6060 = vunpack.c.l.b16 %v5307
      %v6061 = vunpack.c.h.b16 %v5307
      %v6062 = vunpack.c.l.b16 %v5308
      %v6063 = vunpack.c.h.b16 %v5308
      %v6064 = vunpack.c.l.b16 %v5309
      %v6065 = vunpack.c.h.b16 %v5309
      %v6066 = vunpack.c.l.b16 %v5310
      %v6067 = vunpack.c.h.b16 %v5310
      %v6068 = vunpack.c.l.b16 %v5311
      %v6069 = vunpack.c.h.b16 %v5311
      %v6070 = vunpack.c.l.b16 %v5312
      %v6071 = vunpack.c.h.b16 %v5312
      %v6072 = vunpack.c.l.b16 %v5313
      %v6073 = vunpack.c.h.b16 %v5313
      %v6074 = vunpack.c.l.b16 %v5314
      %v6075 = vunpack.c.h.b16 %v5314
      %v6076 = vunpack.c.l.b16 %v5315
      %v6077 = vunpack.c.h.b16 %v5315
      %v6078 = vunpack.c.l.b16 %v5316
      %v6079 = vunpack.c.h.b16 %v5316
      %v6080 = vunpack.c.l.b16 %v5317
      %v6081 = vunpack.c.h.b16 %v5317
      %v6082 = vunpack.c.l.b16 %v5318
      %v6083 = vunpack.c.h.b16 %v5318
      %v6084 = vunpack.c.l.b16 %v5319
      %v6085 = vunpack.c.h.b16 %v5319
      %v6086 = vunpack.c.l.b16 %v5320
      %v6087 = vunpack.c.h.b16 %v5320
      %v6088 = vunpack.c.l.b16 %v5321
      %v6089 = vunpack.c.h.b16 %v5321
      %v6090 = vpack.c.b16 %v5594, %v5578
      %v6091 = vpack.c.b16 %v5595, %v5579
      %v6092 = vpack.c.b16 %v5596, %v5580
      %v6093 = vpack.c.b16 %v5597, %v5581
      %v6094 = vpack.c.b16 %v5598, %v5582
      %v6095 = vpack.c.b16 %v5599, %v5583
      %v6096 = vpack.c.b16 %v5600, %v5584
      %v6097 = vpack.c.b16 %v5601, %v5585
      %v6098 = vpack.c.b16 %v5602, %v5586
      %v6099 = vpack.c.b16 %v5603, %v5587
      %v6100 = vpack.c.b16 %v5604, %v5588
      %v6101 = vpack.c.b16 %v5605, %v5589
      %v6102 = vpack.c.b16 %v5606, %v5590
      %v6103 = vpack.c.b16 %v5607, %v5591
      %v6104 = vpack.c.b16 %v5608, %v5592
      %v6105 = vpack.c.b16 %v5609, %v5593
      %v6106 = vpack.c.b16 %v5626, %v5610
      %v6107 = vpack.c.b16 %v5627, %v5611
      %v6108 = vpack.c.b16 %v5628, %v5612
      %v6109 = vpack.c.b16 %v5629, %v5613
      %v6110 = vpack.c.b16 %v5630, %v5614
      %v6111 = vpack.c.b16 %v5631, %v5615
      %v6112 = vpack.c.b16 %v5632, %v5616
      %v6113 = vpack.c.b16 %v5633, %v5617
      %v6114 = vpack.c.b16 %v5634, %v5618
      %v6115 = vpack.c.b16 %v5635, %v5619
      %v6116 = vpack.c.b16 %v5636, %v5620
      %v6117 = vpack.c.b16 %v5637, %v5621
      %v6118 = vpack.c.b16 %v5638, %v5622
      %v6119 = vpack.c.b16 %v5639, %v5623
      %v6120 = vpack.c.b16 %v5640, %v5624
      %v6121 = vpack.c.b16 %v5641, %v5625
      %v6122 = vpack.c.b16 %v5658, %v5642
      %v6123 = vpack.c.b16 %v5659, %v5643
      %v6124 = vpack.c.b16 %v5660, %v5644
      %v6125 = vpack.c.b16 %v5661, %v5645
      %v6126 = vpack.c.b16 %v5662, %v5646
      %v6127 = vpack.c.b16 %v5663, %v5647
      %v6128 = vpack.c.b16 %v5664, %v5648
      %v6129 = vpack.c.b16 %v5665, %v5649
      %v6130 = vpack.c.b16 %v5666, %v5650
      %v6131 = vpack.c.b16 %v5667, %v5651
      %v6132 = vpack.c.b16 %v5668, %v5652
      %v6133 = vpack.c.b16 %v5669, %v5653
      %v6134 = vpack.c.b16 %v5670, %v5654
      %v6135 = vpack.c.b16 %v5671, %v5655
      %v6136 = vpack.c.b16 %v5672, %v5656
      %v6137 = vpack.c.b16 %v5673, %v5657
      %v6138 = vpack.c.b16 %v5690, %v5674
      %v6139 = vpack.c.b16 %v5691, %v5675
      %v6140 = vpack.c.b16 %v5692, %v5676
      %v6141 = vpack.c.b16 %v5693, %v5677
      %v6142 = vpack.c.b16 %v5694, %v5678
      %v6143 = vpack.c.b16 %v5695, %v5679
      %v6144 = vpack.c.b16 %v5696, %v5680
      %v6145 = vpack.c.b16 %v5697, %v5681
      %v6146 = vpack.c.b16 %v5698, %v5682
      %v6147 = vpack.c.b16 %v5699, %v5683
      %v6148 = vpack.c.b16 %v5700, %v5684
      %v6149 = vpack.c.b16 %v5701, %v5685
      %v6150 = vpack.c.b16 %v5702, %v5686
      %v6151 = vpack.c.b16 %v5703, %v5687
      %v6152 = vpack.c.b16 %v5704, %v5688
      %v6153 = vpack.c.b16 %v5705, %v5689
      %v6154 = vpack.c.b16 %v5722, %v5706
      %v6155 = vpack.c.b16 %v5723, %v5707
      %v6156 = vpack.c.b16 %v5724, %v5708
      %v6157 = vpack.c.b16 %v5725, %v5709
      %v6158 = vpack.c.b16 %v5726, %v5710
      %v6159 = vpack.c.b16 %v5727, %v5711
      %v6160 = vpack.c.b16 %v5728, %v5712
      %v6161 = vpack.c.b16 %v5729, %v5713
      %v6162 = vpack.c.b16 %v5730, %v5714
      %v6163 = vpack.c.b16 %v5731, %v5715
      %v6164 = vpack.c.b16 %v5732, %v5716
      %v6165 = vpack.c.b16 %v5733, %v5717
      %v6166 = vpack.c.b16 %v5734, %v5718
      %v6167 = vpack.c.b16 %v5735, %v5719
      %v6168 = vpack.c.b16 %v5736, %v5720
      %v6169 = vpack.c.b16 %v5737, %v5721
      %v6170 = vpack.c.b16 %v5754, %v5738
      %v6171 = vpack.c.b16 %v5755, %v5739
      %v6172 = vpack.c.b16 %v5756, %v5740
      %v6173 = vpack.c.b16 %v5757, %v5741
      %v6174 = vpack.c.b16 %v5758, %v5742
      %v6175 = vpack.c.b16 %v5759, %v5743
      %v6176 = vpack.c.b16 %v5760, %v5744
      %v6177 = vpack.c.b16 %v5761, %v5745
      %v6178 = vpack.c.b16 %v5762, %v5746
      %v6179 = vpack.c.b16 %v5763, %v5747
      %v6180 = vpack.c.b16 %v5764, %v5748
      %v6181 = vpack.c.b16 %v5765, %v5749
      %v6182 = vpack.c.b16 %v5766, %v5750
      %v6183 = vpack.c.b16 %v5767, %v5751
      %v6184 = vpack.c.b16 %v5768, %v5752
      %v6185 = vpack.c.b16 %v5769, %v5753
      %v6186 = vpack.c.b16 %v5786, %v5770
      %v6187 = vpack.c.b16 %v5787, %v5771
      %v6188 = vpack.c.b16 %v5788, %v5772
      %v6189 = vpack.c.b16 %v5789, %v5773
      %v6190 = vpack.c.b16 %v5790, %v5774
      %v6191 = vpack.c.b16 %v5791, %v5775
      %v6192 = vpack.c.b16 %v5792, %v5776
      %v6193 = vpack.c.b16 %v5793, %v5777
      %v6194 = vpack.c.b16 %v5794, %v5778
      %v6195 = vpack.c.b16 %v5795, %v5779
      %v6196 = vpack.c.b16 %v5796, %v5780
      %v6197 = vpack.c.b16 %v5797, %v5781
      %v6198 = vpack.c.b16 %v5798, %v5782
      %v6199 = vpack.c.b16 %v5799, %v5783
      %v6200 = vpack.c.b16 %v5800, %v5784
      %v6201 = vpack.c.b16 %v5801, %v5785
      %v6202 = vpack.c.b16 %v5818, %v5802
      %v6203 = vpack.c.b16 %v5819, %v5803
      %v6204 = vpack.c.b16 %v5820, %v5804
      %v6205 = vpack.c.b16 %v5821, %v5805
      %v6206 = vpack.c.b16 %v5822, %v5806
      %v6207 = vpack.c.b16 %v5823, %v5807
      %v6208 = vpack.c.b16 %v5824, %v5808
      %v6209 = vpack.c.b16 %v5825, %v5809
      %v6210 = vpack.c.b16 %v5826, %v5810
      %v6211 = vpack.c.b16 %v5827, %v5811
      %v6212 = vpack.c.b16 %v5828, %v5812
      %v6213 = vpack.c.b16 %v5829, %v5813
      %v6214 = vpack.c.b16 %v5830, %v5814
      %v6215 = vpack.c.b16 %v5831, %v5815
      %v6216 = vpack.c.b16 %v5832, %v5816
      %v6217 = vpack.c.b16 %v5833, %v5817
      %v6218 = vpack.c.b16 %v5850, %v5834
      %v6219 = vpack.c.b16 %v5851, %v5835
      %v6220 = vpack.c.b16 %v5852, %v5836
      %v6221 = vpack.c.b16 %v5853, %v5837
      %v6222 = vpack.c.b16 %v5854, %v5838
      %v6223 = vpack.c.b16 %v5855, %v5839
      %v6224 = vpack.c.b16 %v5856, %v5840
      %v6225 = vpack.c.b16 %v5857, %v5841
      %v6226 = vpack.c.b16 %v5858, %v5842
      %v6227 = vpack.c.b16 %v5859, %v5843
      %v6228 = vpack.c.b16 %v5860, %v5844
      %v6229 = vpack.c.b16 %v5861, %v5845
      %v6230 = vpack.c.b16 %v5862, %v5846
      %v6231 = vpack.c.b16 %v5863, %v5847
      %v6232 = vpack.c.b16 %v5864, %v5848
      %v6233 = vpack.c.b16 %v5865, %v5849
      %v6234 = vpack.c.b16 %v5882, %v5866
      %v6235 = vpack.c.b16 %v5883, %v5867
      %v6236 = vpack.c.b16 %v5884, %v5868
      %v6237 = vpack.c.b16 %v5885, %v5869
      %v6238 = vpack.c.b16 %v5886, %v5870
      %v6239 = vpack.c.b16 %v5887, %v5871
      %v6240 = vpack.c.b16 %v5888, %v5872
      %v6241 = vpack.c.b16 %v5889, %v5873
      %v6242 = vpack.c.b16 %v5890, %v5874
      %v6243 = vpack.c.b16 %v5891, %v5875
      %v6244 = vpack.c.b16 %v5892, %v5876
      %v6245 = vpack.c.b16 %v5893, %v5877
      %v6246 = vpack.c.b16 %v5894, %v5878
      %v6247 = vpack.c.b16 %v5895, %v5879
      %v6248 = vpack.c.b16 %v5896, %v5880
      %v6249 = vpack.c.b16 %v5897, %v5881
      %v6250 = vpack.c.b16 %v5914, %v5898
      %v6251 = vpack.c.b16 %v5915, %v5899
      %v6252 = vpack.c.b16 %v5916, %v5900
      %v6253 = vpack.c.b16 %v5917, %v5901
      %v6254 = vpack.c.b16 %v5918, %v5902
      %v6255 = vpack.c.b16 %v5919, %v5903
      %v6256 = vpack.c.b16 %v5920, %v5904
      %v6257 = vpack.c.b16 %v5921, %v5905
      %v6258 = vpack.c.b16 %v5922, %v5906
      %v6259 = vpack.c.b16 %v5923, %v5907
      %v6260 = vpack.c.b16 %v5924, %v5908
      %v6261 = vpack.c.b16 %v5925, %v5909
      %v6262 = vpack.c.b16 %v5926, %v5910
      %v6263 = vpack.c.b16 %v5927, %v5911
      %v6264 = vpack.c.b16 %v5928, %v5912
      %v6265 = vpack.c.b16 %v5929, %v5913
      %v6266 = vpack.c.b16 %v5946, %v5930
      %v6267 = vpack.c.b16 %v5947, %v5931
      %v6268 = vpack.c.b16 %v5948, %v5932
      %v6269 = vpack.c.b16 %v5949, %v5933
      %v6270 = vpack.c.b16 %v5950, %v5934
      %v6271 = vpack.c.b16 %v5951, %v5935
      %v6272 = vpack.c.b16 %v5952, %v5936
      %v6273 = vpack.c.b16 %v5953, %v5937
      %v6274 = vpack.c.b16 %v5954, %v5938
      %v6275 = vpack.c.b16 %v5955, %v5939
      %v6276 = vpack.c.b16 %v5956, %v5940
      %v6277 = vpack.c.b16 %v5957, %v5941
      %v6278 = vpack.c.b16 %v5958, %v5942
      %v6279 = vpack.c.b16 %v5959, %v5943
      %v6280 = vpack.c.b16 %v5960, %v5944
      %v6281 = vpack.c.b16 %v5961, %v5945
      %v6282 = vpack.c.b16 %v5978, %v5962
      %v6283 = vpack.c.b16 %v5979, %v5963
      %v6284 = vpack.c.b16 %v5980, %v5964
      %v6285 = vpack.c.b16 %v5981, %v5965
      %v6286 = vpack.c.b16 %v5982, %v5966
      %v6287 = vpack.c.b16 %v5983, %v5967
      %v6288 = vpack.c.b16 %v5984, %v5968
      %v6289 = vpack.c.b16 %v5985, %v5969
      %v6290 = vpack.c.b16 %v5986, %v5970
      %v6291 = vpack.c.b16 %v5987, %v5971
      %v6292 = vpack.c.b16 %v5988, %v5972
      %v6293 = vpack.c.b16 %v5989, %v5973
      %v6294 = vpack.c.b16 %v5990, %v5974
      %v6295 = vpack.c.b16 %v5991, %v5975
      %v6296 = vpack.c.b16 %v5992, %v5976
      %v6297 = vpack.c.b16 %v5993, %v5977
      %v6298 = vpack.c.b16 %v6010, %v5994
      %v6299 = vpack.c.b16 %v6011, %v5995
      %v6300 = vpack.c.b16 %v6012, %v5996
      %v6301 = vpack.c.b16 %v6013, %v5997
      %v6302 = vpack.c.b16 %v6014, %v5998
      %v6303 = vpack.c.b16 %v6015, %v5999
      %v6304 = vpack.c.b16 %v6016, %v6000
      %v6305 = vpack.c.b16 %v6017, %v6001
      %v6306 = vpack.c.b16 %v6018, %v6002
      %v6307 = vpack.c.b16 %v6019, %v6003
      %v6308 = vpack.c.b16 %v6020, %v6004
      %v6309 = vpack.c.b16 %v6021, %v6005
      %v6310 = vpack.c.b16 %v6022, %v6006
      %v6311 = vpack.c.b16 %v6023, %v6007
      %v6312 = vpack.c.b16 %v6024, %v6008
      %v6313 = vpack.c.b16 %v6025, %v6009
      %v6314 = vpack.c.b16 %v6042, %v6026
      %v6315 = vpack.c.b16 %v6043, %v6027
      %v6316 = vpack.c.b16 %v6044, %v6028
      %v6317 = vpack.c.b16 %v6045, %v6029
      %v6318 = vpack.c.b16 %v6046, %v6030
      %v6319 = vpack.c.b16 %v6047, %v6031
      %v6320 = vpack.c.b16 %v6048, %v6032
      %v6321 = vpack.c.b16 %v6049, %v6033
      %v6322 = vpack.c.b16 %v6050, %v6034
      %v6323 = vpack.c.b16 %v6051, %v6035
      %v6324 = vpack.c.b16 %v6052, %v6036
      %v6325 = vpack.c.b16 %v6053, %v6037
      %v6326 = vpack.c.b16 %v6054, %v6038
      %v6327 = vpack.c.b16 %v6055, %v6039
      %v6328 = vpack.c.b16 %v6056, %v6040
      %v6329 = vpack.c.b16 %v6057, %v6041
      %v6330 = vpack.c.b16 %v6074, %v6058
      %v6331 = vpack.c.b16 %v6075, %v6059
      %v6332 = vpack.c.b16 %v6076, %v6060
      %v6333 = vpack.c.b16 %v6077, %v6061
      %v6334 = vpack.c.b16 %v6078, %v6062
      %v6335 = vpack.c.b16 %v6079, %v6063
      %v6336 = vpack.c.b16 %v6080, %v6064
      %v6337 = vpack.c.b16 %v6081, %v6065
      %v6338 = vpack.c.b16 %v6082, %v6066
      %v6339 = vpack.c.b16 %v6083, %v6067
      %v6340 = vpack.c.b16 %v6084, %v6068
      %v6341 = vpack.c.b16 %v6085, %v6069
      %v6342 = vpack.c.b16 %v6086, %v6070
      %v6343 = vpack.c.b16 %v6087, %v6071
      %v6344 = vpack.c.b16 %v6088, %v6072
      %v6345 = vpack.c.b16 %v6089, %v6073
      %6602 = vmatprep.subr.bf16.mxu0 0
      %6603 = vmatpush1.bf16.msra.mxu0 %v4938
      %6604 = vmatprep.subr.bf16.mxu0 0
      %6605 = vmatpush1.bf16.msra.mxu0 %v4939
      %6606 = vmatprep.subr.bf16.mxu0 0
      %6607 = vmatpush1.bf16.msra.mxu0 %v4940
      %6608 = vmatprep.subr.bf16.mxu0 0
      %6609 = vmatpush1.bf16.msra.mxu0 %v4941
      %6610 = vmatprep.subr.bf16.mxu0 0
      %6611 = vmatpush1.bf16.msra.mxu0 %v4942
      %6612 = vmatprep.subr.bf16.mxu0 0
      %6613 = vmatpush1.bf16.msra.mxu0 %v4943
      %6614 = vmatprep.subr.bf16.mxu0 0
      %6615 = vmatpush1.bf16.msra.mxu0 %v4944
      %6616 = vmatprep.subr.bf16.mxu0 0
      %6617 = vmatpush1.bf16.msra.mxu0 %v4945
      %6618 = vmatprep.subr.bf16.mxu0 0
      %6619 = vmatpush1.bf16.msra.mxu0 %v4946
      %6620 = vmatprep.subr.bf16.mxu0 0
      %6621 = vmatpush1.bf16.msra.mxu0 %v4947
      %6622 = vmatprep.subr.bf16.mxu0 0
      %6623 = vmatpush1.bf16.msra.mxu0 %v4948
      %6624 = vmatprep.subr.bf16.mxu0 0
      %6625 = vmatpush1.bf16.msra.mxu0 %v4949
      %6626 = vmatprep.subr.bf16.mxu0 0
      %6627 = vmatpush1.bf16.msra.mxu0 %v4950
      %6628 = vmatprep.subr.bf16.mxu0 0
      %6629 = vmatpush1.bf16.msra.mxu0 %v4951
      %6630 = vmatprep.subr.bf16.mxu0 0
      %6631 = vmatpush1.bf16.msra.mxu0 %v4952
      %6632 = vmatprep.subr.bf16.mxu0 0
      %6633 = vmatpush1.bf16.msra.mxu0 %v4953
      %6634 = vmatprep.mubr.bf16.mxu0 %v6091
      %6635 = vmatmul.mubr.bf16.gmra.mrb[0].mxu0 %v6090
      %v6636 = vpop.f32.mrb[0].mxu0
      %v6637 = vadd.f32 0.0, %v6636
      %v6638 = vpop.f32.mrb[0].mxu0
      %v6639 = vpop.f32.mrb[0].mxu0
      %v6640 = vadd.f32 0.0, %v6639
      %v6641 = vpop.f32.mrb[0].mxu0
      %6642 = vmatprep.mubr.bf16.mxu0 %v6107
      %6643 = vmatmul.mubr.bf16.gmra.mrb[0].mxu0 %v6106
      %v6644 = vpop.f32.mrb[0].mxu0
      %v6645 = vadd.f32 0.0, %v6644
      %v6646 = vpop.f32.mrb[0].mxu0
      %v6647 = vpop.f32.mrb[0].mxu0
      %v6648 = vadd.f32 0.0, %v6647
      %v6649 = vpop.f32.mrb[0].mxu0
      %6650 = vmatprep.mubr.bf16.mxu0 %v6123
      %6651 = vmatmul.mubr.bf16.gmra.mrb[0].mxu0 %v6122
      %v6652 = vpop.f32.mrb[0].mxu0
      %v6653 = vadd.f32 0.0, %v6652
      %v6654 = vpop.f32.mrb[0].mxu0
      %v6655 = vpop.f32.mrb[0].mxu0
      %v6656 = vadd.f32 0.0, %v6655
      %v6657 = vpop.f32.mrb[0].mxu0
      %6658 = vmatprep.mubr.bf16.mxu0 %v6139
      %6659 = vmatmul.mubr.bf16.gmra.mrb[0].mxu0 %v6138
      %v6660 = vpop.f32.mrb[0].mxu0
      %v6661 = vadd.f32 0.0, %v6660
      %v6662 = vpop.f32.mrb[0].mxu0
      %v6663 = vpop.f32.mrb[0].mxu0
      %v6664 = vadd.f32 0.0, %v6663
      %v6665 = vpop.f32.mrb[0].mxu0
      %6666 = vmatprep.mubr.bf16.mxu0 %v6155
      %6667 = vmatmul.mubr.bf16.gmra.mrb[0].mxu0 %v6154
      %v6668 = vpop.f32.mrb[0].mxu0
      %v6669 = vadd.f32 0.0, %v6668
      %v6670 = vpop.f32.mrb[0].mxu0
      %v6671 = vpop.f32.mrb[0].mxu0
      %v6672 = vadd.f32 0.0, %v6671
      %v6673 = vpop.f32.mrb[0].mxu0
      %6674 = vmatprep.mubr.bf16.mxu0 %v6171
      %6675 = vmatmul.mubr.bf16.gmra.mrb[0].mxu0 %v6170
      %v6676 = vpop.f32.mrb[0].mxu0
      %v6677 = vadd.f32 0.0, %v6676
      %v6678 = vpop.f32.mrb[0].mxu0
      %v6679 = vpop.f32.mrb[0].mxu0
      %v6680 = vadd.f32 0.0, %v6679
      %v6681 = vpop.f32.mrb[0].mxu0
      %6682 = vmatprep.mubr.bf16.mxu0 %v6187
      %6683 = vmatmul.mubr.bf16.gmra.mrb[0].mxu0 %v6186
      %v6684 = vpop.f32.mrb[0].mxu0
      %v6685 = vadd.f32 0.0, %v6684
      %v6686 = vpop.f32.mrb[0].mxu0
      %v6687 = vpop.f32.mrb[0].mxu0
      %v6688 = vadd.f32 0.0, %v6687
      %v6689 = vpop.f32.mrb[0].mxu0
      %6690 = vmatprep.mubr.bf16.mxu0 %v6203
      %6691 = vmatmul.mubr.bf16.gmra.mrb[0].mxu0 %v6202
      %v6692 = vpop.f32.mrb[0].mxu0
      %v6693 = vadd.f32 0.0, %v6692
      %v6694 = vpop.f32.mrb[0].mxu0
      %v6695 = vpop.f32.mrb[0].mxu0
      %v6696 = vadd.f32 0.0, %v6695
      %v6697 = vpop.f32.mrb[0].mxu0
      %6698 = vmatprep.mubr.bf16.mxu0 %v6219
      %6699 = vmatmul.mubr.bf16.gmra.mrb[0].mxu0 %v6218
      %v6700 = vpop.f32.mrb[0].mxu0
      %v6701 = vadd.f32 0.0, %v6700
      %v6702 = vpop.f32.mrb[0].mxu0
      %v6703 = vpop.f32.mrb[0].mxu0
      %v6704 = vadd.f32 0.0, %v6703
      %v6705 = vpop.f32.mrb[0].mxu0
      %6706 = vmatprep.mubr.bf16.mxu0 %v6235
      %6707 = vmatmul.mubr.bf16.gmra.mrb[0].mxu0 %v6234
      %v6708 = vpop.f32.mrb[0].mxu0
      %v6709 = vadd.f32 0.0, %v6708
      %v6710 = vpop.f32.mrb[0].mxu0
      %v6711 = vpop.f32.mrb[0].mxu0
      %v6712 = vadd.f32 0.0, %v6711
      %v6713 = vpop.f32.mrb[0].mxu0
      %6714 = vmatprep.mubr.bf16.mxu0 %v6251
      %6715 = vmatmul.mubr.bf16.gmra.mrb[0].mxu0 %v6250
      %v6716 = vpop.f32.mrb[0].mxu0
      %v6717 = vadd.f32 0.0, %v6716
      %v6718 = vpop.f32.mrb[0].mxu0
      %v6719 = vpop.f32.mrb[0].mxu0
      %v6720 = vadd.f32 0.0, %v6719
      %v6721 = vpop.f32.mrb[0].mxu0
      %6722 = vmatprep.mubr.bf16.mxu0 %v6267
      %6723 = vmatmul.mubr.bf16.gmra.mrb[0].mxu0 %v6266
      %v6724 = vpop.f32.mrb[0].mxu0
      %v6725 = vadd.f32 0.0, %v6724
      %v6726 = vpop.f32.mrb[0].mxu0
      %v6727 = vpop.f32.mrb[0].mxu0
      %v6728 = vadd.f32 0.0, %v6727
      %v6729 = vpop.f32.mrb[0].mxu0
      %6730 = vmatprep.mubr.bf16.mxu0 %v6283
      %6731 = vmatmul.mubr.bf16.gmra.mrb[0].mxu0 %v6282
      %v6732 = vpop.f32.mrb[0].mxu0
      %v6733 = vadd.f32 0.0, %v6732
      %v6734 = vpop.f32.mrb[0].mxu0
      %v6735 = vpop.f32.mrb[0].mxu0
      %v6736 = vadd.f32 0.0, %v6735
      %v6737 = vpop.f32.mrb[0].mxu0
      %6738 = vmatprep.mubr.bf16.mxu0 %v6299
      %6739 = vmatmul.mubr.bf16.gmra.mrb[0].mxu0 %v6298
      %v6740 = vpop.f32.mrb[0].mxu0
      %v6741 = vadd.f32 0.0, %v6740
      %v6742 = vpop.f32.mrb[0].mxu0
      %v6743 = vpop.f32.mrb[0].mxu0
      %v6744 = vadd.f32 0.0, %v6743
      %v6745 = vpop.f32.mrb[0].mxu0
      %6746 = vmatprep.mubr.bf16.mxu0 %v6315
      %6747 = vmatmul.mubr.bf16.gmra.mrb[0].mxu0 %v6314
      %v6748 = vpop.f32.mrb[0].mxu0
      %v6749 = vadd.f32 0.0, %v6748
      %v6750 = vpop.f32.mrb[0].mxu0
      %v6751 = vpop.f32.mrb[0].mxu0
      %v6752 = vadd.f32 0.0, %v6751
      %v6753 = vpop.f32.mrb[0].mxu0
      %6754 = vmatprep.mubr.bf16.mxu0 %v6331
      %6755 = vmatmul.mubr.bf16.gmra.mrb[0].mxu0 %v6330
      %v6756 = vpop.f32.mrb[0].mxu0
      %v6757 = vadd.f32 0.0, %v6756
      %v6758 = vpop.f32.mrb[0].mxu0
      %v6759 = vpop.f32.mrb[0].mxu0
      %v6760 = vadd.f32 0.0, %v6759
      %v6761 = vpop.f32.mrb[0].mxu0
      %6762 = vdwg.mxu0
      %6763 = vmatprep.subr.bf16.mxu0 0
      %6764 = vmatpush1.bf16.msra.mxu0 %v4954
      %6765 = vmatprep.subr.bf16.mxu0 0
      %6766 = vmatpush1.bf16.msra.mxu0 %v4955
      %6767 = vmatprep.subr.bf16.mxu0 0
      %6768 = vmatpush1.bf16.msra.mxu0 %v4956
      %6769 = vmatprep.subr.bf16.mxu0 0
      %6770 = vmatpush1.bf16.msra.mxu0 %v4957
      %6771 = vmatprep.subr.bf16.mxu0 0
      %6772 = vmatpush1.bf16.msra.mxu0 %v4958
      %6773 = vmatprep.subr.bf16.mxu0 0
      %6774 = vmatpush1.bf16.msra.mxu0 %v4959
      %6775 = vmatprep.subr.bf16.mxu0 0
      %6776 = vmatpush1.bf16.msra.mxu0 %v4960
      %6777 = vmatprep.subr.bf16.mxu0 0
      %6778 = vmatpush1.bf16.msra.mxu0 %v4961
      %6779 = vmatprep.subr.bf16.mxu0 0
      %6780 = vmatpush1.bf16.msra.mxu0 %v4962
      %6781 = vmatprep.subr.bf16.mxu0 0
      %6782 = vmatpush1.bf16.msra.mxu0 %v4963
      %6783 = vmatprep.subr.bf16.mxu0 0
      %6784 = vmatpush1.bf16.msra.mxu0 %v4964
      %6785 = vmatprep.subr.bf16.mxu0 0
      %6786 = vmatpush1.bf16.msra.mxu0 %v4965
      %6787 = vmatprep.subr.bf16.mxu0 0
      %6788 = vmatpush1.bf16.msra.mxu0 %v4966
      %6789 = vmatprep.subr.bf16.mxu0 0
      %6790 = vmatpush1.bf16.msra.mxu0 %v4967
      %6791 = vmatprep.subr.bf16.mxu0 0
      %6792 = vmatpush1.bf16.msra.mxu0 %v4968
      %6793 = vmatprep.subr.bf16.mxu0 0
      %6794 = vmatpush1.bf16.msra.mxu0 %v4969
      %6795 = vmatprep.mubr.bf16.mxu0 %v6093
      %6796 = vmatmul.mubr.bf16.gmra.mrb[0].mxu0 %v6092
      %v6797 = vpop.f32.mrb[0].mxu0
      %v6798 = vadd.f32 %v6637, %v6797
      %v6799 = vpop.f32.mrb[0].mxu0
      %v6800 = vpop.f32.mrb[0].mxu0
      %v6801 = vadd.f32 %v6640, %v6800
      %v6802 = vpop.f32.mrb[0].mxu0
      %6803 = vmatprep.mubr.bf16.mxu0 %v6109
      %6804 = vmatmul.mubr.bf16.gmra.mrb[0].mxu0 %v6108
      %v6805 = vpop.f32.mrb[0].mxu0
      %v6806 = vadd.f32 %v6645, %v6805
      %v6807 = vpop.f32.mrb[0].mxu0
      %v6808 = vpop.f32.mrb[0].mxu0
      %v6809 = vadd.f32 %v6648, %v6808
      %v6810 = vpop.f32.mrb[0].mxu0
      %6811 = vmatprep.mubr.bf16.mxu0 %v6125
      %6812 = vmatmul.mubr.bf16.gmra.mrb[0].mxu0 %v6124
      %v6813 = vpop.f32.mrb[0].mxu0
      %v6814 = vadd.f32 %v6653, %v6813
      %v6815 = vpop.f32.mrb[0].mxu0
      %v6816 = vpop.f32.mrb[0].mxu0
      %v6817 = vadd.f32 %v6656, %v6816
      %v6818 = vpop.f32.mrb[0].mxu0
      %6819 = vmatprep.mubr.bf16.mxu0 %v6141
      %6820 = vmatmul.mubr.bf16.gmra.mrb[0].mxu0 %v6140
      %v6821 = vpop.f32.mrb[0].mxu0
      %v6822 = vadd.f32 %v6661, %v6821
      %v6823 = vpop.f32.mrb[0].mxu0
      %v6824 = vpop.f32.mrb[0].mxu0
      %v6825 = vadd.f32 %v6664, %v6824
      %v6826 = vpop.f32.mrb[0].mxu0
      %6827 = vmatprep.mubr.bf16.mxu0 %v6157
      %6828 = vmatmul.mubr.bf16.gmra.mrb[0].mxu0 %v6156
      %v6829 = vpop.f32.mrb[0].mxu0
      %v6830 = vadd.f32 %v6669, %v6829
      %v6831 = vpop.f32.mrb[0].mxu0
      %v6832 = vpop.f32.mrb[0].mxu0
      %v6833 = vadd.f32 %v6672, %v6832
      %v6834 = vpop.f32.mrb[0].mxu0
      %6835 = vmatprep.mubr.bf16.mxu0 %v6173
      %6836 = vmatmul.mubr.bf16.gmra.mrb[0].mxu0 %v6172
      %v6837 = vpop.f32.mrb[0].mxu0
      %v6838 = vadd.f32 %v6677, %v6837
      %v6839 = vpop.f32.mrb[0].mxu0
      %v6840 = vpop.f32.mrb[0].mxu0
      %v6841 = vadd.f32 %v6680, %v6840
      %v6842 = vpop.f32.mrb[0].mxu0
      %6843 = vmatprep.mubr.bf16.mxu0 %v6189
      %6844 = vmatmul.mubr.bf16.gmra.mrb[0].mxu0 %v6188
      %v6845 = vpop.f32.mrb[0].mxu0
      %v6846 = vadd.f32 %v6685, %v6845
      %v6847 = vpop.f32.mrb[0].mxu0
      %v6848 = vpop.f32.mrb[0].mxu0
      %v6849 = vadd.f32 %v6688, %v6848
      %v6850 = vpop.f32.mrb[0].mxu0
      %6851 = vmatprep.mubr.bf16.mxu0 %v6205
      %6852 = vmatmul.mubr.bf16.gmra.mrb[0].mxu0 %v6204
      %v6853 = vpop.f32.mrb[0].mxu0
      %v6854 = vadd.f32 %v6693, %v6853
      %v6855 = vpop.f32.mrb[0].mxu0
      %v6856 = vpop.f32.mrb[0].mxu0
      %v6857 = vadd.f32 %v6696, %v6856
      %v6858 = vpop.f32.mrb[0].mxu0
      %6859 = vmatprep.mubr.bf16.mxu0 %v6221
      %6860 = vmatmul.mubr.bf16.gmra.mrb[0].mxu0 %v6220
      %v6861 = vpop.f32.mrb[0].mxu0
      %v6862 = vadd.f32 %v6701, %v6861
      %v6863 = vpop.f32.mrb[0].mxu0
      %v6864 = vpop.f32.mrb[0].mxu0
      %v6865 = vadd.f32 %v6704, %v6864
      %v6866 = vpop.f32.mrb[0].mxu0
      %6867 = vmatprep.mubr.bf16.mxu0 %v6237
      %6868 = vmatmul.mubr.bf16.gmra.mrb[0].mxu0 %v6236
      %v6869 = vpop.f32.mrb[0].mxu0
      %v6870 = vadd.f32 %v6709, %v6869
      %v6871 = vpop.f32.mrb[0].mxu0
      %v6872 = vpop.f32.mrb[0].mxu0
      %v6873 = vadd.f32 %v6712, %v6872
      %v6874 = vpop.f32.mrb[0].mxu0
      %6875 = vmatprep.mubr.bf16.mxu0 %v6253
      %6876 = vmatmul.mubr.bf16.gmra.mrb[0].mxu0 %v6252
      %v6877 = vpop.f32.mrb[0].mxu0
      %v6878 = vadd.f32 %v6717, %v6877
      %v6879 = vpop.f32.mrb[0].mxu0
      %v6880 = vpop.f32.mrb[0].mxu0
      %v6881 = vadd.f32 %v6720, %v6880
      %v6882 = vpop.f32.mrb[0].mxu0
      %6883 = vmatprep.mubr.bf16.mxu0 %v6269
      %6884 = vmatmul.mubr.bf16.gmra.mrb[0].mxu0 %v6268
      %v6885 = vpop.f32.mrb[0].mxu0
      %v6886 = vadd.f32 %v6725, %v6885
      %v6887 = vpop.f32.mrb[0].mxu0
      %v6888 = vpop.f32.mrb[0].mxu0
      %v6889 = vadd.f32 %v6728, %v6888
      %v6890 = vpop.f32.mrb[0].mxu0
      %6891 = vmatprep.mubr.bf16.mxu0 %v6285
      %6892 = vmatmul.mubr.bf16.gmra.mrb[0].mxu0 %v6284
      %v6893 = vpop.f32.mrb[0].mxu0
      %v6894 = vadd.f32 %v6733, %v6893
      %v6895 = vpop.f32.mrb[0].mxu0
      %v6896 = vpop.f32.mrb[0].mxu0
      %v6897 = vadd.f32 %v6736, %v6896
      %v6898 = vpop.f32.mrb[0].mxu0
      %6899 = vmatprep.mubr.bf16.mxu0 %v6301
      %6900 = vmatmul.mubr.bf16.gmra.mrb[0].mxu0 %v6300
      %v6901 = vpop.f32.mrb[0].mxu0
      %v6902 = vadd.f32 %v6741, %v6901
      %v6903 = vpop.f32.mrb[0].mxu0
      %v6904 = vpop.f32.mrb[0].mxu0
      %v6905 = vadd.f32 %v6744, %v6904
      %v6906 = vpop.f32.mrb[0].mxu0
      %6907 = vmatprep.mubr.bf16.mxu0 %v6317
      %6908 = vmatmul.mubr.bf16.gmra.mrb[0].mxu0 %v6316
      %v6909 = vpop.f32.mrb[0].mxu0
      %v6910 = vadd.f32 %v6749, %v6909
      %v6911 = vpop.f32.mrb[0].mxu0
      %v6912 = vpop.f32.mrb[0].mxu0
      %v6913 = vadd.f32 %v6752, %v6912
      %v6914 = vpop.f32.mrb[0].mxu0
      %6915 = vmatprep.mubr.bf16.mxu0 %v6333
      %6916 = vmatmul.mubr.bf16.gmra.mrb[0].mxu0 %v6332
      %v6917 = vpop.f32.mrb[0].mxu0
      %v6918 = vadd.f32 %v6757, %v6917
      %v6919 = vpop.f32.mrb[0].mxu0
      %v6920 = vpop.f32.mrb[0].mxu0
      %v6921 = vadd.f32 %v6760, %v6920
      %v6922 = vpop.f32.mrb[0].mxu0
      %6923 = vdwg.mxu0
      %6924 = vmatprep.subr.bf16.mxu0 0
      %6925 = vmatpush1.bf16.msra.mxu0 %v4970
      %6926 = vmatprep.subr.bf16.mxu0 0
      %6927 = vmatpush1.bf16.msra.mxu0 %v4971
      %6928 = vmatprep.subr.bf16.mxu0 0
      %6929 = vmatpush1.bf16.msra.mxu0 %v4972
      %6930 = vmatprep.subr.bf16.mxu0 0
      %6931 = vmatpush1.bf16.msra.mxu0 %v4973
      %6932 = vmatprep.subr.bf16.mxu0 0
      %6933 = vmatpush1.bf16.msra.mxu0 %v4974
      %6934 = vmatprep.subr.bf16.mxu0 0
      %6935 = vmatpush1.bf16.msra.mxu0 %v4975
      %6936 = vmatprep.subr.bf16.mxu0 0
      %6937 = vmatpush1.bf16.msra.mxu0 %v4976
      %6938 = vmatprep.subr.bf16.mxu0 0
      %6939 = vmatpush1.bf16.msra.mxu0 %v4977
      %6940 = vmatprep.subr.bf16.mxu0 0
      %6941 = vmatpush1.bf16.msra.mxu0 %v4978
      %6942 = vmatprep.subr.bf16.mxu0 0
      %6943 = vmatpush1.bf16.msra.mxu0 %v4979
      %6944 = vmatprep.subr.bf16.mxu0 0
      %6945 = vmatpush1.bf16.msra.mxu0 %v4980
      %6946 = vmatprep.subr.bf16.mxu0 0
      %6947 = vmatpush1.bf16.msra.mxu0 %v4981
      %6948 = vmatprep.subr.bf16.mxu0 0
      %6949 = vmatpush1.bf16.msra.mxu0 %v4982
      %6950 = vmatprep.subr.bf16.mxu0 0
      %6951 = vmatpush1.bf16.msra.mxu0 %v4983
      %6952 = vmatprep.subr.bf16.mxu0 0
      %6953 = vmatpush1.bf16.msra.mxu0 %v4984
      %6954 = vmatprep.subr.bf16.mxu0 0
      %6955 = vmatpush1.bf16.msra.mxu0 %v4985
      %6956 = vmatprep.mubr.bf16.mxu0 %v6095
      %6957 = vmatmul.mubr.bf16.gmra.mrb[0].mxu0 %v6094
      %v6958 = vpop.f32.mrb[0].mxu0
      %v6959 = vadd.f32 %v6798, %v6958
      %v6960 = vpop.f32.mrb[0].mxu0
      %v6961 = vpop.f32.mrb[0].mxu0
      %v6962 = vadd.f32 %v6801, %v6961
      %v6963 = vpop.f32.mrb[0].mxu0
      %6964 = vmatprep.mubr.bf16.mxu0 %v6111
      %6965 = vmatmul.mubr.bf16.gmra.mrb[0].mxu0 %v6110
      %v6966 = vpop.f32.mrb[0].mxu0
      %v6967 = vadd.f32 %v6806, %v6966
      %v6968 = vpop.f32.mrb[0].mxu0
      %v6969 = vpop.f32.mrb[0].mxu0
      %v6970 = vadd.f32 %v6809, %v6969
      %v6971 = vpop.f32.mrb[0].mxu0
      %6972 = vmatprep.mubr.bf16.mxu0 %v6127
      %6973 = vmatmul.mubr.bf16.gmra.mrb[0].mxu0 %v6126
      %v6974 = vpop.f32.mrb[0].mxu0
      %v6975 = vadd.f32 %v6814, %v6974
      %v6976 = vpop.f32.mrb[0].mxu0
      %v6977 = vpop.f32.mrb[0].mxu0
      %v6978 = vadd.f32 %v6817, %v6977
      %v6979 = vpop.f32.mrb[0].mxu0
      %6980 = vmatprep.mubr.bf16.mxu0 %v6143
      %6981 = vmatmul.mubr.bf16.gmra.mrb[0].mxu0 %v6142
      %v6982 = vpop.f32.mrb[0].mxu0
      %v6983 = vadd.f32 %v6822, %v6982
      %v6984 = vpop.f32.mrb[0].mxu0
      %v6985 = vpop.f32.mrb[0].mxu0
      %v6986 = vadd.f32 %v6825, %v6985
      %v6987 = vpop.f32.mrb[0].mxu0
      %6988 = vmatprep.mubr.bf16.mxu0 %v6159
      %6989 = vmatmul.mubr.bf16.gmra.mrb[0].mxu0 %v6158
      %v6990 = vpop.f32.mrb[0].mxu0
      %v6991 = vadd.f32 %v6830, %v6990
      %v6992 = vpop.f32.mrb[0].mxu0
      %v6993 = vpop.f32.mrb[0].mxu0
      %v6994 = vadd.f32 %v6833, %v6993
      %v6995 = vpop.f32.mrb[0].mxu0
      %6996 = vmatprep.mubr.bf16.mxu0 %v6175
      %6997 = vmatmul.mubr.bf16.gmra.mrb[0].mxu0 %v6174
      %v6998 = vpop.f32.mrb[0].mxu0
      %v6999 = vadd.f32 %v6838, %v6998
      %v7000 = vpop.f32.mrb[0].mxu0
      %v7001 = vpop.f32.mrb[0].mxu0
      %v7002 = vadd.f32 %v6841, %v7001
      %v7003 = vpop.f32.mrb[0].mxu0
      %7004 = vmatprep.mubr.bf16.mxu0 %v6191
      %7005 = vmatmul.mubr.bf16.gmra.mrb[0].mxu0 %v6190
      %v7006 = vpop.f32.mrb[0].mxu0
      %v7007 = vadd.f32 %v6846, %v7006
      %v7008 = vpop.f32.mrb[0].mxu0
      %v7009 = vpop.f32.mrb[0].mxu0
      %v7010 = vadd.f32 %v6849, %v7009
      %v7011 = vpop.f32.mrb[0].mxu0
      %7012 = vmatprep.mubr.bf16.mxu0 %v6207
      %7013 = vmatmul.mubr.bf16.gmra.mrb[0].mxu0 %v6206
      %v7014 = vpop.f32.mrb[0].mxu0
      %v7015 = vadd.f32 %v6854, %v7014
      %v7016 = vpop.f32.mrb[0].mxu0
      %v7017 = vpop.f32.mrb[0].mxu0
      %v7018 = vadd.f32 %v6857, %v7017
      %v7019 = vpop.f32.mrb[0].mxu0
      %7020 = vmatprep.mubr.bf16.mxu0 %v6223
      %7021 = vmatmul.mubr.bf16.gmra.mrb[0].mxu0 %v6222
      %v7022 = vpop.f32.mrb[0].mxu0
      %v7023 = vadd.f32 %v6862, %v7022
      %v7024 = vpop.f32.mrb[0].mxu0
      %v7025 = vpop.f32.mrb[0].mxu0
      %v7026 = vadd.f32 %v6865, %v7025
      %v7027 = vpop.f32.mrb[0].mxu0
      %7028 = vmatprep.mubr.bf16.mxu0 %v6239
      %7029 = vmatmul.mubr.bf16.gmra.mrb[0].mxu0 %v6238
      %v7030 = vpop.f32.mrb[0].mxu0
      %v7031 = vadd.f32 %v6870, %v7030
      %v7032 = vpop.f32.mrb[0].mxu0
      %v7033 = vpop.f32.mrb[0].mxu0
      %v7034 = vadd.f32 %v6873, %v7033
      %v7035 = vpop.f32.mrb[0].mxu0
      %7036 = vmatprep.mubr.bf16.mxu0 %v6255
      %7037 = vmatmul.mubr.bf16.gmra.mrb[0].mxu0 %v6254
      %v7038 = vpop.f32.mrb[0].mxu0
      %v7039 = vadd.f32 %v6878, %v7038
      %v7040 = vpop.f32.mrb[0].mxu0
      %v7041 = vpop.f32.mrb[0].mxu0
      %v7042 = vadd.f32 %v6881, %v7041
      %v7043 = vpop.f32.mrb[0].mxu0
      %7044 = vmatprep.mubr.bf16.mxu0 %v6271
      %7045 = vmatmul.mubr.bf16.gmra.mrb[0].mxu0 %v6270
      %v7046 = vpop.f32.mrb[0].mxu0
      %v7047 = vadd.f32 %v6886, %v7046
      %v7048 = vpop.f32.mrb[0].mxu0
      %v7049 = vpop.f32.mrb[0].mxu0
      %v7050 = vadd.f32 %v6889, %v7049
      %v7051 = vpop.f32.mrb[0].mxu0
      %7052 = vmatprep.mubr.bf16.mxu0 %v6287
      %7053 = vmatmul.mubr.bf16.gmra.mrb[0].mxu0 %v6286
      %v7054 = vpop.f32.mrb[0].mxu0
      %v7055 = vadd.f32 %v6894, %v7054
      %v7056 = vpop.f32.mrb[0].mxu0
      %v7057 = vpop.f32.mrb[0].mxu0
      %v7058 = vadd.f32 %v6897, %v7057
      %v7059 = vpop.f32.mrb[0].mxu0
      %7060 = vmatprep.mubr.bf16.mxu0 %v6303
      %7061 = vmatmul.mubr.bf16.gmra.mrb[0].mxu0 %v6302
      %v7062 = vpop.f32.mrb[0].mxu0
      %v7063 = vadd.f32 %v6902, %v7062
      %v7064 = vpop.f32.mrb[0].mxu0
      %v7065 = vpop.f32.mrb[0].mxu0
      %v7066 = vadd.f32 %v6905, %v7065
      %v7067 = vpop.f32.mrb[0].mxu0
      %7068 = vmatprep.mubr.bf16.mxu0 %v6319
      %7069 = vmatmul.mubr.bf16.gmra.mrb[0].mxu0 %v6318
      %v7070 = vpop.f32.mrb[0].mxu0
      %v7071 = vadd.f32 %v6910, %v7070
      %v7072 = vpop.f32.mrb[0].mxu0
      %v7073 = vpop.f32.mrb[0].mxu0
      %v7074 = vadd.f32 %v6913, %v7073
      %v7075 = vpop.f32.mrb[0].mxu0
      %7076 = vmatprep.mubr.bf16.mxu0 %v6335
      %7077 = vmatmul.mubr.bf16.gmra.mrb[0].mxu0 %v6334
      %v7078 = vpop.f32.mrb[0].mxu0
      %v7079 = vadd.f32 %v6918, %v7078
      %v7080 = vpop.f32.mrb[0].mxu0
      %v7081 = vpop.f32.mrb[0].mxu0
      %v7082 = vadd.f32 %v6921, %v7081
      %v7083 = vpop.f32.mrb[0].mxu0
      %7084 = vdwg.mxu0
      %7085 = vmatprep.subr.bf16.mxu0 0
      %7086 = vmatpush1.bf16.msra.mxu0 %v4986
      %7087 = vmatprep.subr.bf16.mxu0 0
      %7088 = vmatpush1.bf16.msra.mxu0 %v4987
      %7089 = vmatprep.subr.bf16.mxu0 0
      %7090 = vmatpush1.bf16.msra.mxu0 %v4988
      %7091 = vmatprep.subr.bf16.mxu0 0
      %7092 = vmatpush1.bf16.msra.mxu0 %v4989
      %7093 = vmatprep.subr.bf16.mxu0 0
      %7094 = vmatpush1.bf16.msra.mxu0 %v4990
      %7095 = vmatprep.subr.bf16.mxu0 0
      %7096 = vmatpush1.bf16.msra.mxu0 %v4991
      %7097 = vmatprep.subr.bf16.mxu0 0
      %7098 = vmatpush1.bf16.msra.mxu0 %v4992
      %7099 = vmatprep.subr.bf16.mxu0 0
      %7100 = vmatpush1.bf16.msra.mxu0 %v4993
      %7101 = vmatprep.subr.bf16.mxu0 0
      %7102 = vmatpush1.bf16.msra.mxu0 %v4994
      %7103 = vmatprep.subr.bf16.mxu0 0
      %7104 = vmatpush1.bf16.msra.mxu0 %v4995
      %7105 = vmatprep.subr.bf16.mxu0 0
      %7106 = vmatpush1.bf16.msra.mxu0 %v4996
      %7107 = vmatprep.subr.bf16.mxu0 0
      %7108 = vmatpush1.bf16.msra.mxu0 %v4997
      %7109 = vmatprep.subr.bf16.mxu0 0
      %7110 = vmatpush1.bf16.msra.mxu0 %v4998
      %7111 = vmatprep.subr.bf16.mxu0 0
      %7112 = vmatpush1.bf16.msra.mxu0 %v4999
      %7113 = vmatprep.subr.bf16.mxu0 0
      %7114 = vmatpush1.bf16.msra.mxu0 %v5000
      %7115 = vmatprep.subr.bf16.mxu0 0
      %7116 = vmatpush1.bf16.msra.mxu0 %v5001
      %7117 = vmatprep.mubr.bf16.mxu0 %v6097
      %7118 = vmatmul.mubr.bf16.gmra.mrb[0].mxu0 %v6096
      %v7119 = vpop.f32.mrb[0].mxu0
      %v7120 = vadd.f32 %v6959, %v7119
      %v7121 = vpop.f32.mrb[0].mxu0
      %v7122 = vpop.f32.mrb[0].mxu0
      %v7123 = vadd.f32 %v6962, %v7122
      %v7124 = vpop.f32.mrb[0].mxu0
      %7125 = vmatprep.mubr.bf16.mxu0 %v6113
      %7126 = vmatmul.mubr.bf16.gmra.mrb[0].mxu0 %v6112
      %v7127 = vpop.f32.mrb[0].mxu0
      %v7128 = vadd.f32 %v6967, %v7127
      %v7129 = vpop.f32.mrb[0].mxu0
      %v7130 = vpop.f32.mrb[0].mxu0
      %v7131 = vadd.f32 %v6970, %v7130
      %v7132 = vpop.f32.mrb[0].mxu0
      %7133 = vmatprep.mubr.bf16.mxu0 %v6129
      %7134 = vmatmul.mubr.bf16.gmra.mrb[0].mxu0 %v6128
      %v7135 = vpop.f32.mrb[0].mxu0
      %v7136 = vadd.f32 %v6975, %v7135
      %v7137 = vpop.f32.mrb[0].mxu0
      %v7138 = vpop.f32.mrb[0].mxu0
      %v7139 = vadd.f32 %v6978, %v7138
      %v7140 = vpop.f32.mrb[0].mxu0
      %7141 = vmatprep.mubr.bf16.mxu0 %v6145
      %7142 = vmatmul.mubr.bf16.gmra.mrb[0].mxu0 %v6144
      %v7143 = vpop.f32.mrb[0].mxu0
      %v7144 = vadd.f32 %v6983, %v7143
      %v7145 = vpop.f32.mrb[0].mxu0
      %v7146 = vpop.f32.mrb[0].mxu0
      %v7147 = vadd.f32 %v6986, %v7146
      %v7148 = vpop.f32.mrb[0].mxu0
      %7149 = vmatprep.mubr.bf16.mxu0 %v6161
      %7150 = vmatmul.mubr.bf16.gmra.mrb[0].mxu0 %v6160
      %v7151 = vpop.f32.mrb[0].mxu0
      %v7152 = vadd.f32 %v6991, %v7151
      %v7153 = vpop.f32.mrb[0].mxu0
      %v7154 = vpop.f32.mrb[0].mxu0
      %v7155 = vadd.f32 %v6994, %v7154
      %v7156 = vpop.f32.mrb[0].mxu0
      %7157 = vmatprep.mubr.bf16.mxu0 %v6177
      %7158 = vmatmul.mubr.bf16.gmra.mrb[0].mxu0 %v6176
      %v7159 = vpop.f32.mrb[0].mxu0
      %v7160 = vadd.f32 %v6999, %v7159
      %v7161 = vpop.f32.mrb[0].mxu0
      %v7162 = vpop.f32.mrb[0].mxu0
      %v7163 = vadd.f32 %v7002, %v7162
      %v7164 = vpop.f32.mrb[0].mxu0
      %7165 = vmatprep.mubr.bf16.mxu0 %v6193
      %7166 = vmatmul.mubr.bf16.gmra.mrb[0].mxu0 %v6192
      %v7167 = vpop.f32.mrb[0].mxu0
      %v7168 = vadd.f32 %v7007, %v7167
      %v7169 = vpop.f32.mrb[0].mxu0
      %v7170 = vpop.f32.mrb[0].mxu0
      %v7171 = vadd.f32 %v7010, %v7170
      %v7172 = vpop.f32.mrb[0].mxu0
      %7173 = vmatprep.mubr.bf16.mxu0 %v6209
      %7174 = vmatmul.mubr.bf16.gmra.mrb[0].mxu0 %v6208
      %v7175 = vpop.f32.mrb[0].mxu0
      %v7176 = vadd.f32 %v7015, %v7175
      %v7177 = vpop.f32.mrb[0].mxu0
      %v7178 = vpop.f32.mrb[0].mxu0
      %v7179 = vadd.f32 %v7018, %v7178
      %v7180 = vpop.f32.mrb[0].mxu0
      %7181 = vmatprep.mubr.bf16.mxu0 %v6225
      %7182 = vmatmul.mubr.bf16.gmra.mrb[0].mxu0 %v6224
      %v7183 = vpop.f32.mrb[0].mxu0
      %v7184 = vadd.f32 %v7023, %v7183
      %v7185 = vpop.f32.mrb[0].mxu0
      %v7186 = vpop.f32.mrb[0].mxu0
      %v7187 = vadd.f32 %v7026, %v7186
      %v7188 = vpop.f32.mrb[0].mxu0
      %7189 = vmatprep.mubr.bf16.mxu0 %v6241
      %7190 = vmatmul.mubr.bf16.gmra.mrb[0].mxu0 %v6240
      %v7191 = vpop.f32.mrb[0].mxu0
      %v7192 = vadd.f32 %v7031, %v7191
      %v7193 = vpop.f32.mrb[0].mxu0
      %v7194 = vpop.f32.mrb[0].mxu0
      %v7195 = vadd.f32 %v7034, %v7194
      %v7196 = vpop.f32.mrb[0].mxu0
      %7197 = vmatprep.mubr.bf16.mxu0 %v6257
      %7198 = vmatmul.mubr.bf16.gmra.mrb[0].mxu0 %v6256
      %v7199 = vpop.f32.mrb[0].mxu0
      %v7200 = vadd.f32 %v7039, %v7199
      %v7201 = vpop.f32.mrb[0].mxu0
      %v7202 = vpop.f32.mrb[0].mxu0
      %v7203 = vadd.f32 %v7042, %v7202
      %v7204 = vpop.f32.mrb[0].mxu0
      %7205 = vmatprep.mubr.bf16.mxu0 %v6273
      %7206 = vmatmul.mubr.bf16.gmra.mrb[0].mxu0 %v6272
      %v7207 = vpop.f32.mrb[0].mxu0
      %v7208 = vadd.f32 %v7047, %v7207
      %v7209 = vpop.f32.mrb[0].mxu0
      %v7210 = vpop.f32.mrb[0].mxu0
      %v7211 = vadd.f32 %v7050, %v7210
      %v7212 = vpop.f32.mrb[0].mxu0
      %7213 = vmatprep.mubr.bf16.mxu0 %v6289
      %7214 = vmatmul.mubr.bf16.gmra.mrb[0].mxu0 %v6288
      %v7215 = vpop.f32.mrb[0].mxu0
      %v7216 = vadd.f32 %v7055, %v7215
      %v7217 = vpop.f32.mrb[0].mxu0
      %v7218 = vpop.f32.mrb[0].mxu0
      %v7219 = vadd.f32 %v7058, %v7218
      %v7220 = vpop.f32.mrb[0].mxu0
      %7221 = vmatprep.mubr.bf16.mxu0 %v6305
      %7222 = vmatmul.mubr.bf16.gmra.mrb[0].mxu0 %v6304
      %v7223 = vpop.f32.mrb[0].mxu0
      %v7224 = vadd.f32 %v7063, %v7223
      %v7225 = vpop.f32.mrb[0].mxu0
      %v7226 = vpop.f32.mrb[0].mxu0
      %v7227 = vadd.f32 %v7066, %v7226
      %v7228 = vpop.f32.mrb[0].mxu0
      %7229 = vmatprep.mubr.bf16.mxu0 %v6321
      %7230 = vmatmul.mubr.bf16.gmra.mrb[0].mxu0 %v6320
      %v7231 = vpop.f32.mrb[0].mxu0
      %v7232 = vadd.f32 %v7071, %v7231
      %v7233 = vpop.f32.mrb[0].mxu0
      %v7234 = vpop.f32.mrb[0].mxu0
      %v7235 = vadd.f32 %v7074, %v7234
      %v7236 = vpop.f32.mrb[0].mxu0
      %7237 = vmatprep.mubr.bf16.mxu0 %v6337
      %7238 = vmatmul.mubr.bf16.gmra.mrb[0].mxu0 %v6336
      %v7239 = vpop.f32.mrb[0].mxu0
      %v7240 = vadd.f32 %v7079, %v7239
      %v7241 = vpop.f32.mrb[0].mxu0
      %v7242 = vpop.f32.mrb[0].mxu0
      %v7243 = vadd.f32 %v7082, %v7242
      %v7244 = vpop.f32.mrb[0].mxu0
      %7245 = vdwg.mxu0
      %7246 = vmatprep.subr.bf16.mxu0 0
      %7247 = vmatpush1.bf16.msra.mxu0 %v5002
      %7248 = vmatprep.subr.bf16.mxu0 0
      %7249 = vmatpush1.bf16.msra.mxu0 %v5003
      %7250 = vmatprep.subr.bf16.mxu0 0
      %7251 = vmatpush1.bf16.msra.mxu0 %v5004
      %7252 = vmatprep.subr.bf16.mxu0 0
      %7253 = vmatpush1.bf16.msra.mxu0 %v5005
      %7254 = vmatprep.subr.bf16.mxu0 0
      %7255 = vmatpush1.bf16.msra.mxu0 %v5006
      %7256 = vmatprep.subr.bf16.mxu0 0
      %7257 = vmatpush1.bf16.msra.mxu0 %v5007
      %7258 = vmatprep.subr.bf16.mxu0 0
      %7259 = vmatpush1.bf16.msra.mxu0 %v5008
      %7260 = vmatprep.subr.bf16.mxu0 0
      %7261 = vmatpush1.bf16.msra.mxu0 %v5009
      %7262 = vmatprep.subr.bf16.mxu0 0
      %7263 = vmatpush1.bf16.msra.mxu0 %v5010
      %7264 = vmatprep.subr.bf16.mxu0 0
      %7265 = vmatpush1.bf16.msra.mxu0 %v5011
      %7266 = vmatprep.subr.bf16.mxu0 0
      %7267 = vmatpush1.bf16.msra.mxu0 %v5012
      %7268 = vmatprep.subr.bf16.mxu0 0
      %7269 = vmatpush1.bf16.msra.mxu0 %v5013
      %7270 = vmatprep.subr.bf16.mxu0 0
      %7271 = vmatpush1.bf16.msra.mxu0 %v5014
      %7272 = vmatprep.subr.bf16.mxu0 0
      %7273 = vmatpush1.bf16.msra.mxu0 %v5015
      %7274 = vmatprep.subr.bf16.mxu0 0
      %7275 = vmatpush1.bf16.msra.mxu0 %v5016
      %7276 = vmatprep.subr.bf16.mxu0 0
      %7277 = vmatpush1.bf16.msra.mxu0 %v5017
      %7278 = vmatprep.mubr.bf16.mxu0 %v6099
      %7279 = vmatmul.mubr.bf16.gmra.mrb[0].mxu0 %v6098
      %v7280 = vpop.f32.mrb[0].mxu0
      %v7281 = vadd.f32 %v7120, %v7280
      %v7282 = vpop.f32.mrb[0].mxu0
      %v7283 = vpop.f32.mrb[0].mxu0
      %v7284 = vadd.f32 %v7123, %v7283
      %v7285 = vpop.f32.mrb[0].mxu0
      %7286 = vmatprep.mubr.bf16.mxu0 %v6115
      %7287 = vmatmul.mubr.bf16.gmra.mrb[0].mxu0 %v6114
      %v7288 = vpop.f32.mrb[0].mxu0
      %v7289 = vadd.f32 %v7128, %v7288
      %v7290 = vpop.f32.mrb[0].mxu0
      %v7291 = vpop.f32.mrb[0].mxu0
      %v7292 = vadd.f32 %v7131, %v7291
      %v7293 = vpop.f32.mrb[0].mxu0
      %7294 = vmatprep.mubr.bf16.mxu0 %v6131
      %7295 = vmatmul.mubr.bf16.gmra.mrb[0].mxu0 %v6130
      %v7296 = vpop.f32.mrb[0].mxu0
      %v7297 = vadd.f32 %v7136, %v7296
      %v7298 = vpop.f32.mrb[0].mxu0
      %v7299 = vpop.f32.mrb[0].mxu0
      %v7300 = vadd.f32 %v7139, %v7299
      %v7301 = vpop.f32.mrb[0].mxu0
      %7302 = vmatprep.mubr.bf16.mxu0 %v6147
      %7303 = vmatmul.mubr.bf16.gmra.mrb[0].mxu0 %v6146
      %v7304 = vpop.f32.mrb[0].mxu0
      %v7305 = vadd.f32 %v7144, %v7304
      %v7306 = vpop.f32.mrb[0].mxu0
      %v7307 = vpop.f32.mrb[0].mxu0
      %v7308 = vadd.f32 %v7147, %v7307
      %v7309 = vpop.f32.mrb[0].mxu0
      %7310 = vmatprep.mubr.bf16.mxu0 %v6163
      %7311 = vmatmul.mubr.bf16.gmra.mrb[0].mxu0 %v6162
      %v7312 = vpop.f32.mrb[0].mxu0
      %v7313 = vadd.f32 %v7152, %v7312
      %v7314 = vpop.f32.mrb[0].mxu0
      %v7315 = vpop.f32.mrb[0].mxu0
      %v7316 = vadd.f32 %v7155, %v7315
      %v7317 = vpop.f32.mrb[0].mxu0
      %7318 = vmatprep.mubr.bf16.mxu0 %v6179
      %7319 = vmatmul.mubr.bf16.gmra.mrb[0].mxu0 %v6178
      %v7320 = vpop.f32.mrb[0].mxu0
      %v7321 = vadd.f32 %v7160, %v7320
      %v7322 = vpop.f32.mrb[0].mxu0
      %v7323 = vpop.f32.mrb[0].mxu0
      %v7324 = vadd.f32 %v7163, %v7323
      %v7325 = vpop.f32.mrb[0].mxu0
      %7326 = vmatprep.mubr.bf16.mxu0 %v6195
      %7327 = vmatmul.mubr.bf16.gmra.mrb[0].mxu0 %v6194
      %v7328 = vpop.f32.mrb[0].mxu0
      %v7329 = vadd.f32 %v7168, %v7328
      %v7330 = vpop.f32.mrb[0].mxu0
      %v7331 = vpop.f32.mrb[0].mxu0
      %v7332 = vadd.f32 %v7171, %v7331
      %v7333 = vpop.f32.mrb[0].mxu0
      %7334 = vmatprep.mubr.bf16.mxu0 %v6211
      %7335 = vmatmul.mubr.bf16.gmra.mrb[0].mxu0 %v6210
      %v7336 = vpop.f32.mrb[0].mxu0
      %v7337 = vadd.f32 %v7176, %v7336
      %v7338 = vpop.f32.mrb[0].mxu0
      %v7339 = vpop.f32.mrb[0].mxu0
      %v7340 = vadd.f32 %v7179, %v7339
      %v7341 = vpop.f32.mrb[0].mxu0
      %7342 = vmatprep.mubr.bf16.mxu0 %v6227
      %7343 = vmatmul.mubr.bf16.gmra.mrb[0].mxu0 %v6226
      %v7344 = vpop.f32.mrb[0].mxu0
      %v7345 = vadd.f32 %v7184, %v7344
      %v7346 = vpop.f32.mrb[0].mxu0
      %v7347 = vpop.f32.mrb[0].mxu0
      %v7348 = vadd.f32 %v7187, %v7347
      %v7349 = vpop.f32.mrb[0].mxu0
      %7350 = vmatprep.mubr.bf16.mxu0 %v6243
      %7351 = vmatmul.mubr.bf16.gmra.mrb[0].mxu0 %v6242
      %v7352 = vpop.f32.mrb[0].mxu0
      %v7353 = vadd.f32 %v7192, %v7352
      %v7354 = vpop.f32.mrb[0].mxu0
      %v7355 = vpop.f32.mrb[0].mxu0
      %v7356 = vadd.f32 %v7195, %v7355
      %v7357 = vpop.f32.mrb[0].mxu0
      %7358 = vmatprep.mubr.bf16.mxu0 %v6259
      %7359 = vmatmul.mubr.bf16.gmra.mrb[0].mxu0 %v6258
      %v7360 = vpop.f32.mrb[0].mxu0
      %v7361 = vadd.f32 %v7200, %v7360
      %v7362 = vpop.f32.mrb[0].mxu0
      %v7363 = vpop.f32.mrb[0].mxu0
      %v7364 = vadd.f32 %v7203, %v7363
      %v7365 = vpop.f32.mrb[0].mxu0
      %7366 = vmatprep.mubr.bf16.mxu0 %v6275
      %7367 = vmatmul.mubr.bf16.gmra.mrb[0].mxu0 %v6274
      %v7368 = vpop.f32.mrb[0].mxu0
      %v7369 = vadd.f32 %v7208, %v7368
      %v7370 = vpop.f32.mrb[0].mxu0
      %v7371 = vpop.f32.mrb[0].mxu0
      %v7372 = vadd.f32 %v7211, %v7371
      %v7373 = vpop.f32.mrb[0].mxu0
      %7374 = vmatprep.mubr.bf16.mxu0 %v6291
      %7375 = vmatmul.mubr.bf16.gmra.mrb[0].mxu0 %v6290
      %v7376 = vpop.f32.mrb[0].mxu0
      %v7377 = vadd.f32 %v7216, %v7376
      %v7378 = vpop.f32.mrb[0].mxu0
      %v7379 = vpop.f32.mrb[0].mxu0
      %v7380 = vadd.f32 %v7219, %v7379
      %v7381 = vpop.f32.mrb[0].mxu0
      %7382 = vmatprep.mubr.bf16.mxu0 %v6307
      %7383 = vmatmul.mubr.bf16.gmra.mrb[0].mxu0 %v6306
      %v7384 = vpop.f32.mrb[0].mxu0
      %v7385 = vadd.f32 %v7224, %v7384
      %v7386 = vpop.f32.mrb[0].mxu0
      %v7387 = vpop.f32.mrb[0].mxu0
      %v7388 = vadd.f32 %v7227, %v7387
      %v7389 = vpop.f32.mrb[0].mxu0
      %7390 = vmatprep.mubr.bf16.mxu0 %v6323
      %7391 = vmatmul.mubr.bf16.gmra.mrb[0].mxu0 %v6322
      %v7392 = vpop.f32.mrb[0].mxu0
      %v7393 = vadd.f32 %v7232, %v7392
      %v7394 = vpop.f32.mrb[0].mxu0
      %v7395 = vpop.f32.mrb[0].mxu0
      %v7396 = vadd.f32 %v7235, %v7395
      %v7397 = vpop.f32.mrb[0].mxu0
      %7398 = vmatprep.mubr.bf16.mxu0 %v6339
      %7399 = vmatmul.mubr.bf16.gmra.mrb[0].mxu0 %v6338
      %v7400 = vpop.f32.mrb[0].mxu0
      %v7401 = vadd.f32 %v7240, %v7400
      %v7402 = vpop.f32.mrb[0].mxu0
      %v7403 = vpop.f32.mrb[0].mxu0
      %v7404 = vadd.f32 %v7243, %v7403
      %v7405 = vpop.f32.mrb[0].mxu0
      %7406 = vdwg.mxu0
      %7407 = vmatprep.subr.bf16.mxu0 0
      %7408 = vmatpush1.bf16.msra.mxu0 %v5018
      %7409 = vmatprep.subr.bf16.mxu0 0
      %7410 = vmatpush1.bf16.msra.mxu0 %v5019
      %7411 = vmatprep.subr.bf16.mxu0 0
      %7412 = vmatpush1.bf16.msra.mxu0 %v5020
      %7413 = vmatprep.subr.bf16.mxu0 0
      %7414 = vmatpush1.bf16.msra.mxu0 %v5021
      %7415 = vmatprep.subr.bf16.mxu0 0
      %7416 = vmatpush1.bf16.msra.mxu0 %v5022
      %7417 = vmatprep.subr.bf16.mxu0 0
      %7418 = vmatpush1.bf16.msra.mxu0 %v5023
      %7419 = vmatprep.subr.bf16.mxu0 0
      %7420 = vmatpush1.bf16.msra.mxu0 %v5024
      %7421 = vmatprep.subr.bf16.mxu0 0
      %7422 = vmatpush1.bf16.msra.mxu0 %v5025
      %7423 = vmatprep.subr.bf16.mxu0 0
      %7424 = vmatpush1.bf16.msra.mxu0 %v5026
      %7425 = vmatprep.subr.bf16.mxu0 0
      %7426 = vmatpush1.bf16.msra.mxu0 %v5027
      %7427 = vmatprep.subr.bf16.mxu0 0
      %7428 = vmatpush1.bf16.msra.mxu0 %v5028
      %7429 = vmatprep.subr.bf16.mxu0 0
      %7430 = vmatpush1.bf16.msra.mxu0 %v5029
      %7431 = vmatprep.subr.bf16.mxu0 0
      %7432 = vmatpush1.bf16.msra.mxu0 %v5030
      %7433 = vmatprep.subr.bf16.mxu0 0
      %7434 = vmatpush1.bf16.msra.mxu0 %v5031
      %7435 = vmatprep.subr.bf16.mxu0 0
      %7436 = vmatpush1.bf16.msra.mxu0 %v5032
      %7437 = vmatprep.subr.bf16.mxu0 0
      %7438 = vmatpush1.bf16.msra.mxu0 %v5033
      %7439 = vmatprep.mubr.bf16.mxu0 %v6101
      %7440 = vmatmul.mubr.bf16.gmra.mrb[0].mxu0 %v6100
      %v7441 = vpop.f32.mrb[0].mxu0
      %v7442 = vadd.f32 %v7281, %v7441
      %v7443 = vpop.f32.mrb[0].mxu0
      %v7444 = vpop.f32.mrb[0].mxu0
      %v7445 = vadd.f32 %v7284, %v7444
      %v7446 = vpop.f32.mrb[0].mxu0
      %7447 = vmatprep.mubr.bf16.mxu0 %v6117
      %7448 = vmatmul.mubr.bf16.gmra.mrb[0].mxu0 %v6116
      %v7449 = vpop.f32.mrb[0].mxu0
      %v7450 = vadd.f32 %v7289, %v7449
      %v7451 = vpop.f32.mrb[0].mxu0
      %v7452 = vpop.f32.mrb[0].mxu0
      %v7453 = vadd.f32 %v7292, %v7452
      %v7454 = vpop.f32.mrb[0].mxu0
      %7455 = vmatprep.mubr.bf16.mxu0 %v6133
      %7456 = vmatmul.mubr.bf16.gmra.mrb[0].mxu0 %v6132
      %v7457 = vpop.f32.mrb[0].mxu0
      %v7458 = vadd.f32 %v7297, %v7457
      %v7459 = vpop.f32.mrb[0].mxu0
      %v7460 = vpop.f32.mrb[0].mxu0
      %v7461 = vadd.f32 %v7300, %v7460
      %v7462 = vpop.f32.mrb[0].mxu0
      %7463 = vmatprep.mubr.bf16.mxu0 %v6149
      %7464 = vmatmul.mubr.bf16.gmra.mrb[0].mxu0 %v6148
      %v7465 = vpop.f32.mrb[0].mxu0
      %v7466 = vadd.f32 %v7305, %v7465
      %v7467 = vpop.f32.mrb[0].mxu0
      %v7468 = vpop.f32.mrb[0].mxu0
      %v7469 = vadd.f32 %v7308, %v7468
      %v7470 = vpop.f32.mrb[0].mxu0
      %7471 = vmatprep.mubr.bf16.mxu0 %v6165
      %7472 = vmatmul.mubr.bf16.gmra.mrb[0].mxu0 %v6164
      %v7473 = vpop.f32.mrb[0].mxu0
      %v7474 = vadd.f32 %v7313, %v7473
      %v7475 = vpop.f32.mrb[0].mxu0
      %v7476 = vpop.f32.mrb[0].mxu0
      %v7477 = vadd.f32 %v7316, %v7476
      %v7478 = vpop.f32.mrb[0].mxu0
      %7479 = vmatprep.mubr.bf16.mxu0 %v6181
      %7480 = vmatmul.mubr.bf16.gmra.mrb[0].mxu0 %v6180
      %v7481 = vpop.f32.mrb[0].mxu0
      %v7482 = vadd.f32 %v7321, %v7481
      %v7483 = vpop.f32.mrb[0].mxu0
      %v7484 = vpop.f32.mrb[0].mxu0
      %v7485 = vadd.f32 %v7324, %v7484
      %v7486 = vpop.f32.mrb[0].mxu0
      %7487 = vmatprep.mubr.bf16.mxu0 %v6197
      %7488 = vmatmul.mubr.bf16.gmra.mrb[0].mxu0 %v6196
      %v7489 = vpop.f32.mrb[0].mxu0
      %v7490 = vadd.f32 %v7329, %v7489
      %v7491 = vpop.f32.mrb[0].mxu0
      %v7492 = vpop.f32.mrb[0].mxu0
      %v7493 = vadd.f32 %v7332, %v7492
      %v7494 = vpop.f32.mrb[0].mxu0
      %7495 = vmatprep.mubr.bf16.mxu0 %v6213
      %7496 = vmatmul.mubr.bf16.gmra.mrb[0].mxu0 %v6212
      %v7497 = vpop.f32.mrb[0].mxu0
      %v7498 = vadd.f32 %v7337, %v7497
      %v7499 = vpop.f32.mrb[0].mxu0
      %v7500 = vpop.f32.mrb[0].mxu0
      %v7501 = vadd.f32 %v7340, %v7500
      %v7502 = vpop.f32.mrb[0].mxu0
      %7503 = vmatprep.mubr.bf16.mxu0 %v6229
      %7504 = vmatmul.mubr.bf16.gmra.mrb[0].mxu0 %v6228
      %v7505 = vpop.f32.mrb[0].mxu0
      %v7506 = vadd.f32 %v7345, %v7505
      %v7507 = vpop.f32.mrb[0].mxu0
      %v7508 = vpop.f32.mrb[0].mxu0
      %v7509 = vadd.f32 %v7348, %v7508
      %v7510 = vpop.f32.mrb[0].mxu0
      %7511 = vmatprep.mubr.bf16.mxu0 %v6245
      %7512 = vmatmul.mubr.bf16.gmra.mrb[0].mxu0 %v6244
      %v7513 = vpop.f32.mrb[0].mxu0
      %v7514 = vadd.f32 %v7353, %v7513
      %v7515 = vpop.f32.mrb[0].mxu0
      %v7516 = vpop.f32.mrb[0].mxu0
      %v7517 = vadd.f32 %v7356, %v7516
      %v7518 = vpop.f32.mrb[0].mxu0
      %7519 = vmatprep.mubr.bf16.mxu0 %v6261
      %7520 = vmatmul.mubr.bf16.gmra.mrb[0].mxu0 %v6260
      %v7521 = vpop.f32.mrb[0].mxu0
      %v7522 = vadd.f32 %v7361, %v7521
      %v7523 = vpop.f32.mrb[0].mxu0
      %v7524 = vpop.f32.mrb[0].mxu0
      %v7525 = vadd.f32 %v7364, %v7524
      %v7526 = vpop.f32.mrb[0].mxu0
      %7527 = vmatprep.mubr.bf16.mxu0 %v6277
      %7528 = vmatmul.mubr.bf16.gmra.mrb[0].mxu0 %v6276
      %v7529 = vpop.f32.mrb[0].mxu0
      %v7530 = vadd.f32 %v7369, %v7529
      %v7531 = vpop.f32.mrb[0].mxu0
      %v7532 = vpop.f32.mrb[0].mxu0
      %v7533 = vadd.f32 %v7372, %v7532
      %v7534 = vpop.f32.mrb[0].mxu0
      %7535 = vmatprep.mubr.bf16.mxu0 %v6293
      %7536 = vmatmul.mubr.bf16.gmra.mrb[0].mxu0 %v6292
      %v7537 = vpop.f32.mrb[0].mxu0
      %v7538 = vadd.f32 %v7377, %v7537
      %v7539 = vpop.f32.mrb[0].mxu0
      %v7540 = vpop.f32.mrb[0].mxu0
      %v7541 = vadd.f32 %v7380, %v7540
      %v7542 = vpop.f32.mrb[0].mxu0
      %7543 = vmatprep.mubr.bf16.mxu0 %v6309
      %7544 = vmatmul.mubr.bf16.gmra.mrb[0].mxu0 %v6308
      %v7545 = vpop.f32.mrb[0].mxu0
      %v7546 = vadd.f32 %v7385, %v7545
      %v7547 = vpop.f32.mrb[0].mxu0
      %v7548 = vpop.f32.mrb[0].mxu0
      %v7549 = vadd.f32 %v7388, %v7548
      %v7550 = vpop.f32.mrb[0].mxu0
      %7551 = vmatprep.mubr.bf16.mxu0 %v6325
      %7552 = vmatmul.mubr.bf16.gmra.mrb[0].mxu0 %v6324
      %v7553 = vpop.f32.mrb[0].mxu0
      %v7554 = vadd.f32 %v7393, %v7553
      %v7555 = vpop.f32.mrb[0].mxu0
      %v7556 = vpop.f32.mrb[0].mxu0
      %v7557 = vadd.f32 %v7396, %v7556
      %v7558 = vpop.f32.mrb[0].mxu0
      %7559 = vmatprep.mubr.bf16.mxu0 %v6341
      %7560 = vmatmul.mubr.bf16.gmra.mrb[0].mxu0 %v6340
      %v7561 = vpop.f32.mrb[0].mxu0
      %v7562 = vadd.f32 %v7401, %v7561
      %v7563 = vpop.f32.mrb[0].mxu0
      %v7564 = vpop.f32.mrb[0].mxu0
      %v7565 = vadd.f32 %v7404, %v7564
      %v7566 = vpop.f32.mrb[0].mxu0
      %7567 = vdwg.mxu0
      %7568 = vmatprep.subr.bf16.mxu0 0
      %7569 = vmatpush1.bf16.msra.mxu0 %v5034
      %7570 = vmatprep.subr.bf16.mxu0 0
      %7571 = vmatpush1.bf16.msra.mxu0 %v5035
      %7572 = vmatprep.subr.bf16.mxu0 0
      %7573 = vmatpush1.bf16.msra.mxu0 %v5036
      %7574 = vmatprep.subr.bf16.mxu0 0
      %7575 = vmatpush1.bf16.msra.mxu0 %v5037
      %7576 = vmatprep.subr.bf16.mxu0 0
      %7577 = vmatpush1.bf16.msra.mxu0 %v5038
      %7578 = vmatprep.subr.bf16.mxu0 0
      %7579 = vmatpush1.bf16.msra.mxu0 %v5039
      %7580 = vmatprep.subr.bf16.mxu0 0
      %7581 = vmatpush1.bf16.msra.mxu0 %v5040
      %7582 = vmatprep.subr.bf16.mxu0 0
      %7583 = vmatpush1.bf16.msra.mxu0 %v5041
      %7584 = vmatprep.subr.bf16.mxu0 0
      %7585 = vmatpush1.bf16.msra.mxu0 %v5042
      %7586 = vmatprep.subr.bf16.mxu0 0
      %7587 = vmatpush1.bf16.msra.mxu0 %v5043
      %7588 = vmatprep.subr.bf16.mxu0 0
      %7589 = vmatpush1.bf16.msra.mxu0 %v5044
      %7590 = vmatprep.subr.bf16.mxu0 0
      %7591 = vmatpush1.bf16.msra.mxu0 %v5045
      %7592 = vmatprep.subr.bf16.mxu0 0
      %7593 = vmatpush1.bf16.msra.mxu0 %v5046
      %7594 = vmatprep.subr.bf16.mxu0 0
      %7595 = vmatpush1.bf16.msra.mxu0 %v5047
      %7596 = vmatprep.subr.bf16.mxu0 0
      %7597 = vmatpush1.bf16.msra.mxu0 %v5048
      %7598 = vmatprep.subr.bf16.mxu0 0
      %7599 = vmatpush1.bf16.msra.mxu0 %v5049
      %7600 = vmatprep.mubr.bf16.mxu0 %v6103
      %7601 = vmatmul.mubr.bf16.gmra.mrb[0].mxu0 %v6102
      %v7602 = vpop.f32.mrb[0].mxu0
      %v7603 = vadd.f32 %v7442, %v7602
      %v7604 = vpop.f32.mrb[0].mxu0
      %v7605 = vpop.f32.mrb[0].mxu0
      %v7606 = vadd.f32 %v7445, %v7605
      %v7607 = vpop.f32.mrb[0].mxu0
      %7608 = vmatprep.mubr.bf16.mxu0 %v6119
      %7609 = vmatmul.mubr.bf16.gmra.mrb[0].mxu0 %v6118
      %v7610 = vpop.f32.mrb[0].mxu0
      %v7611 = vadd.f32 %v7450, %v7610
      %v7612 = vpop.f32.mrb[0].mxu0
      %v7613 = vpop.f32.mrb[0].mxu0
      %v7614 = vadd.f32 %v7453, %v7613
      %v7615 = vpop.f32.mrb[0].mxu0
      %7616 = vmatprep.mubr.bf16.mxu0 %v6135
      %7617 = vmatmul.mubr.bf16.gmra.mrb[0].mxu0 %v6134
      %v7618 = vpop.f32.mrb[0].mxu0
      %v7619 = vadd.f32 %v7458, %v7618
      %v7620 = vpop.f32.mrb[0].mxu0
      %v7621 = vpop.f32.mrb[0].mxu0
      %v7622 = vadd.f32 %v7461, %v7621
      %v7623 = vpop.f32.mrb[0].mxu0
      %7624 = vmatprep.mubr.bf16.mxu0 %v6151
      %7625 = vmatmul.mubr.bf16.gmra.mrb[0].mxu0 %v6150
      %v7626 = vpop.f32.mrb[0].mxu0
      %v7627 = vadd.f32 %v7466, %v7626
      %v7628 = vpop.f32.mrb[0].mxu0
      %v7629 = vpop.f32.mrb[0].mxu0
      %v7630 = vadd.f32 %v7469, %v7629
      %v7631 = vpop.f32.mrb[0].mxu0
      %7632 = vmatprep.mubr.bf16.mxu0 %v6167
      %7633 = vmatmul.mubr.bf16.gmra.mrb[0].mxu0 %v6166
      %v7634 = vpop.f32.mrb[0].mxu0
      %v7635 = vadd.f32 %v7474, %v7634
      %v7636 = vpop.f32.mrb[0].mxu0
      %v7637 = vpop.f32.mrb[0].mxu0
      %v7638 = vadd.f32 %v7477, %v7637
      %v7639 = vpop.f32.mrb[0].mxu0
      %7640 = vmatprep.mubr.bf16.mxu0 %v6183
      %7641 = vmatmul.mubr.bf16.gmra.mrb[0].mxu0 %v6182
      %v7642 = vpop.f32.mrb[0].mxu0
      %v7643 = vadd.f32 %v7482, %v7642
      %v7644 = vpop.f32.mrb[0].mxu0
      %v7645 = vpop.f32.mrb[0].mxu0
      %v7646 = vadd.f32 %v7485, %v7645
      %v7647 = vpop.f32.mrb[0].mxu0
      %7648 = vmatprep.mubr.bf16.mxu0 %v6199
      %7649 = vmatmul.mubr.bf16.gmra.mrb[0].mxu0 %v6198
      %v7650 = vpop.f32.mrb[0].mxu0
      %v7651 = vadd.f32 %v7490, %v7650
      %v7652 = vpop.f32.mrb[0].mxu0
      %v7653 = vpop.f32.mrb[0].mxu0
      %v7654 = vadd.f32 %v7493, %v7653
      %v7655 = vpop.f32.mrb[0].mxu0
      %7656 = vmatprep.mubr.bf16.mxu0 %v6215
      %7657 = vmatmul.mubr.bf16.gmra.mrb[0].mxu0 %v6214
      %v7658 = vpop.f32.mrb[0].mxu0
      %v7659 = vadd.f32 %v7498, %v7658
      %v7660 = vpop.f32.mrb[0].mxu0
      %v7661 = vpop.f32.mrb[0].mxu0
      %v7662 = vadd.f32 %v7501, %v7661
      %v7663 = vpop.f32.mrb[0].mxu0
      %7664 = vmatprep.mubr.bf16.mxu0 %v6231
      %7665 = vmatmul.mubr.bf16.gmra.mrb[0].mxu0 %v6230
      %v7666 = vpop.f32.mrb[0].mxu0
      %v7667 = vadd.f32 %v7506, %v7666
      %v7668 = vpop.f32.mrb[0].mxu0
      %v7669 = vpop.f32.mrb[0].mxu0
      %v7670 = vadd.f32 %v7509, %v7669
      %v7671 = vpop.f32.mrb[0].mxu0
      %7672 = vmatprep.mubr.bf16.mxu0 %v6247
      %7673 = vmatmul.mubr.bf16.gmra.mrb[0].mxu0 %v6246
      %v7674 = vpop.f32.mrb[0].mxu0
      %v7675 = vadd.f32 %v7514, %v7674
      %v7676 = vpop.f32.mrb[0].mxu0
      %v7677 = vpop.f32.mrb[0].mxu0
      %v7678 = vadd.f32 %v7517, %v7677
      %v7679 = vpop.f32.mrb[0].mxu0
      %7680 = vmatprep.mubr.bf16.mxu0 %v6263
      %7681 = vmatmul.mubr.bf16.gmra.mrb[0].mxu0 %v6262
      %v7682 = vpop.f32.mrb[0].mxu0
      %v7683 = vadd.f32 %v7522, %v7682
      %v7684 = vpop.f32.mrb[0].mxu0
      %v7685 = vpop.f32.mrb[0].mxu0
      %v7686 = vadd.f32 %v7525, %v7685
      %v7687 = vpop.f32.mrb[0].mxu0
      %7688 = vmatprep.mubr.bf16.mxu0 %v6279
      %7689 = vmatmul.mubr.bf16.gmra.mrb[0].mxu0 %v6278
      %v7690 = vpop.f32.mrb[0].mxu0
      %v7691 = vadd.f32 %v7530, %v7690
      %v7692 = vpop.f32.mrb[0].mxu0
      %v7693 = vpop.f32.mrb[0].mxu0
      %v7694 = vadd.f32 %v7533, %v7693
      %v7695 = vpop.f32.mrb[0].mxu0
      %7696 = vmatprep.mubr.bf16.mxu0 %v6295
      %7697 = vmatmul.mubr.bf16.gmra.mrb[0].mxu0 %v6294
      %v7698 = vpop.f32.mrb[0].mxu0
      %v7699 = vadd.f32 %v7538, %v7698
      %v7700 = vpop.f32.mrb[0].mxu0
      %v7701 = vpop.f32.mrb[0].mxu0
      %v7702 = vadd.f32 %v7541, %v7701
      %v7703 = vpop.f32.mrb[0].mxu0
      %7704 = vmatprep.mubr.bf16.mxu0 %v6311
      %7705 = vmatmul.mubr.bf16.gmra.mrb[0].mxu0 %v6310
      %v7706 = vpop.f32.mrb[0].mxu0
      %v7707 = vadd.f32 %v7546, %v7706
      %v7708 = vpop.f32.mrb[0].mxu0
      %v7709 = vpop.f32.mrb[0].mxu0
      %v7710 = vadd.f32 %v7549, %v7709
      %v7711 = vpop.f32.mrb[0].mxu0
      %7712 = vmatprep.mubr.bf16.mxu0 %v6327
      %7713 = vmatmul.mubr.bf16.gmra.mrb[0].mxu0 %v6326
      %v7714 = vpop.f32.mrb[0].mxu0
      %v7715 = vadd.f32 %v7554, %v7714
      %v7716 = vpop.f32.mrb[0].mxu0
      %v7717 = vpop.f32.mrb[0].mxu0
      %v7718 = vadd.f32 %v7557, %v7717
      %v7719 = vpop.f32.mrb[0].mxu0
      %7720 = vmatprep.mubr.bf16.mxu0 %v6343
      %7721 = vmatmul.mubr.bf16.gmra.mrb[0].mxu0 %v6342
      %v7722 = vpop.f32.mrb[0].mxu0
      %v7723 = vadd.f32 %v7562, %v7722
      %v7724 = vpop.f32.mrb[0].mxu0
      %v7725 = vpop.f32.mrb[0].mxu0
      %v7726 = vadd.f32 %v7565, %v7725
      %v7727 = vpop.f32.mrb[0].mxu0
      %7728 = vdwg.mxu0
      %7729 = vmatprep.subr.bf16.mxu0 0
      %7730 = vmatpush1.bf16.msra.mxu0 %v5050
      %7731 = vmatprep.subr.bf16.mxu0 0
      %7732 = vmatpush1.bf16.msra.mxu0 %v5051
      %7733 = vmatprep.subr.bf16.mxu0 0
      %7734 = vmatpush1.bf16.msra.mxu0 %v5052
      %7735 = vmatprep.subr.bf16.mxu0 0
      %7736 = vmatpush1.bf16.msra.mxu0 %v5053
      %7737 = vmatprep.subr.bf16.mxu0 0
      %7738 = vmatpush1.bf16.msra.mxu0 %v5054
      %7739 = vmatprep.subr.bf16.mxu0 0
      %7740 = vmatpush1.bf16.msra.mxu0 %v5055
      %7741 = vmatprep.subr.bf16.mxu0 0
      %7742 = vmatpush1.bf16.msra.mxu0 %v5056
      %7743 = vmatprep.subr.bf16.mxu0 0
      %7744 = vmatpush1.bf16.msra.mxu0 %v5057
      %7745 = vmatprep.subr.bf16.mxu0 0
      %7746 = vmatpush1.bf16.msra.mxu0 %v5058
      %7747 = vmatprep.subr.bf16.mxu0 0
      %7748 = vmatpush1.bf16.msra.mxu0 %v5059
      %7749 = vmatprep.subr.bf16.mxu0 0
      %7750 = vmatpush1.bf16.msra.mxu0 %v5060
      %7751 = vmatprep.subr.bf16.mxu0 0
      %7752 = vmatpush1.bf16.msra.mxu0 %v5061
      %7753 = vmatprep.subr.bf16.mxu0 0
      %7754 = vmatpush1.bf16.msra.mxu0 %v5062
      %7755 = vmatprep.subr.bf16.mxu0 0
      %7756 = vmatpush1.bf16.msra.mxu0 %v5063
      %7757 = vmatprep.subr.bf16.mxu0 0
      %7758 = vmatpush1.bf16.msra.mxu0 %v5064
      %7759 = vmatprep.subr.bf16.mxu0 0
      %7760 = vmatpush1.bf16.msra.mxu0 %v5065
      %7761 = vmatprep.mubr.bf16.mxu0 %v6105
      %7762 = vmatmul.mubr.bf16.gmra.mrb[0].mxu0 %v6104
      %v7763 = vpop.f32.mrb[0].mxu0
      %v7764 = vadd.f32 %v7603, %v7763
      %v7765 = vpop.f32.mrb[0].mxu0
      %v7766 = vpop.f32.mrb[0].mxu0
      %v7767 = vadd.f32 %v7606, %v7766
      %v7768 = vpop.f32.mrb[0].mxu0
      %7769 = vmatprep.mubr.bf16.mxu0 %v6121
      %7770 = vmatmul.mubr.bf16.gmra.mrb[0].mxu0 %v6120
      %v7771 = vpop.f32.mrb[0].mxu0
      %v7772 = vadd.f32 %v7611, %v7771
      %v7773 = vpop.f32.mrb[0].mxu0
      %v7774 = vpop.f32.mrb[0].mxu0
      %v7775 = vadd.f32 %v7614, %v7774
      %v7776 = vpop.f32.mrb[0].mxu0
      %7777 = vmatprep.mubr.bf16.mxu0 %v6137
      %7778 = vmatmul.mubr.bf16.gmra.mrb[0].mxu0 %v6136
      %v7779 = vpop.f32.mrb[0].mxu0
      %v7780 = vadd.f32 %v7619, %v7779
      %v7781 = vpop.f32.mrb[0].mxu0
      %v7782 = vpop.f32.mrb[0].mxu0
      %v7783 = vadd.f32 %v7622, %v7782
      %v7784 = vpop.f32.mrb[0].mxu0
      %7785 = vmatprep.mubr.bf16.mxu0 %v6153
      %7786 = vmatmul.mubr.bf16.gmra.mrb[0].mxu0 %v6152
      %v7787 = vpop.f32.mrb[0].mxu0
      %v7788 = vadd.f32 %v7627, %v7787
      %v7789 = vpop.f32.mrb[0].mxu0
      %v7790 = vpop.f32.mrb[0].mxu0
      %v7791 = vadd.f32 %v7630, %v7790
      %v7792 = vpop.f32.mrb[0].mxu0
      %7793 = vmatprep.mubr.bf16.mxu0 %v6169
      %7794 = vmatmul.mubr.bf16.gmra.mrb[0].mxu0 %v6168
      %v7795 = vpop.f32.mrb[0].mxu0
      %v7796 = vadd.f32 %v7635, %v7795
      %v7797 = vpop.f32.mrb[0].mxu0
      %v7798 = vpop.f32.mrb[0].mxu0
      %v7799 = vadd.f32 %v7638, %v7798
      %v7800 = vpop.f32.mrb[0].mxu0
      %7801 = vmatprep.mubr.bf16.mxu0 %v6185
      %7802 = vmatmul.mubr.bf16.gmra.mrb[0].mxu0 %v6184
      %v7803 = vpop.f32.mrb[0].mxu0
      %v7804 = vadd.f32 %v7643, %v7803
      %v7805 = vpop.f32.mrb[0].mxu0
      %v7806 = vpop.f32.mrb[0].mxu0
      %v7807 = vadd.f32 %v7646, %v7806
      %v7808 = vpop.f32.mrb[0].mxu0
      %7809 = vmatprep.mubr.bf16.mxu0 %v6201
      %7810 = vmatmul.mubr.bf16.gmra.mrb[0].mxu0 %v6200
      %v7811 = vpop.f32.mrb[0].mxu0
      %v7812 = vadd.f32 %v7651, %v7811
      %v7813 = vpop.f32.mrb[0].mxu0
      %v7814 = vpop.f32.mrb[0].mxu0
      %v7815 = vadd.f32 %v7654, %v7814
      %v7816 = vpop.f32.mrb[0].mxu0
      %7817 = vmatprep.mubr.bf16.mxu0 %v6217
      %7818 = vmatmul.mubr.bf16.gmra.mrb[0].mxu0 %v6216
      %v7819 = vpop.f32.mrb[0].mxu0
      %v7820 = vadd.f32 %v7659, %v7819
      %v7821 = vpop.f32.mrb[0].mxu0
      %v7822 = vpop.f32.mrb[0].mxu0
      %v7823 = vadd.f32 %v7662, %v7822
      %v7824 = vpop.f32.mrb[0].mxu0
      %7825 = vmatprep.mubr.bf16.mxu0 %v6233
      %7826 = vmatmul.mubr.bf16.gmra.mrb[0].mxu0 %v6232
      %v7827 = vpop.f32.mrb[0].mxu0
      %v7828 = vadd.f32 %v7667, %v7827
      %v7829 = vpop.f32.mrb[0].mxu0
      %v7830 = vpop.f32.mrb[0].mxu0
      %v7831 = vadd.f32 %v7670, %v7830
      %v7832 = vpop.f32.mrb[0].mxu0
      %7833 = vmatprep.mubr.bf16.mxu0 %v6249
      %7834 = vmatmul.mubr.bf16.gmra.mrb[0].mxu0 %v6248
      %v7835 = vpop.f32.mrb[0].mxu0
      %v7836 = vadd.f32 %v7675, %v7835
      %v7837 = vpop.f32.mrb[0].mxu0
      %v7838 = vpop.f32.mrb[0].mxu0
      %v7839 = vadd.f32 %v7678, %v7838
      %v7840 = vpop.f32.mrb[0].mxu0
      %7841 = vmatprep.mubr.bf16.mxu0 %v6265
      %7842 = vmatmul.mubr.bf16.gmra.mrb[0].mxu0 %v6264
      %v7843 = vpop.f32.mrb[0].mxu0
      %v7844 = vadd.f32 %v7683, %v7843
      %v7845 = vpop.f32.mrb[0].mxu0
      %v7846 = vpop.f32.mrb[0].mxu0
      %v7847 = vadd.f32 %v7686, %v7846
      %v7848 = vpop.f32.mrb[0].mxu0
      %7849 = vmatprep.mubr.bf16.mxu0 %v6281
      %7850 = vmatmul.mubr.bf16.gmra.mrb[0].mxu0 %v6280
      %v7851 = vpop.f32.mrb[0].mxu0
      %v7852 = vadd.f32 %v7691, %v7851
      %v7853 = vpop.f32.mrb[0].mxu0
      %v7854 = vpop.f32.mrb[0].mxu0
      %v7855 = vadd.f32 %v7694, %v7854
      %v7856 = vpop.f32.mrb[0].mxu0
      %7857 = vmatprep.mubr.bf16.mxu0 %v6297
      %7858 = vmatmul.mubr.bf16.gmra.mrb[0].mxu0 %v6296
      %v7859 = vpop.f32.mrb[0].mxu0
      %v7860 = vadd.f32 %v7699, %v7859
      %v7861 = vpop.f32.mrb[0].mxu0
      %v7862 = vpop.f32.mrb[0].mxu0
      %v7863 = vadd.f32 %v7702, %v7862
      %v7864 = vpop.f32.mrb[0].mxu0
      %7865 = vmatprep.mubr.bf16.mxu0 %v6313
      %7866 = vmatmul.mubr.bf16.gmra.mrb[0].mxu0 %v6312
      %v7867 = vpop.f32.mrb[0].mxu0
      %v7868 = vadd.f32 %v7707, %v7867
      %v7869 = vpop.f32.mrb[0].mxu0
      %v7870 = vpop.f32.mrb[0].mxu0
      %v7871 = vadd.f32 %v7710, %v7870
      %v7872 = vpop.f32.mrb[0].mxu0
      %7873 = vmatprep.mubr.bf16.mxu0 %v6329
      %7874 = vmatmul.mubr.bf16.gmra.mrb[0].mxu0 %v6328
      %v7875 = vpop.f32.mrb[0].mxu0
      %v7876 = vadd.f32 %v7715, %v7875
      %v7877 = vpop.f32.mrb[0].mxu0
      %v7878 = vpop.f32.mrb[0].mxu0
      %v7879 = vadd.f32 %v7718, %v7878
      %v7880 = vpop.f32.mrb[0].mxu0
      %7881 = vmatprep.mubr.bf16.mxu0 %v6345
      %7882 = vmatmul.mubr.bf16.gmra.mrb[0].mxu0 %v6344
      %v7883 = vpop.f32.mrb[0].mxu0
      %v7884 = vadd.f32 %v7723, %v7883
      %v7885 = vpop.f32.mrb[0].mxu0
      %v7886 = vpop.f32.mrb[0].mxu0
      %v7887 = vadd.f32 %v7726, %v7886
      %v7888 = vpop.f32.mrb[0].mxu0
      %7889 = vdwg.mxu0
      %v7890 = vld [vmem:[%s315] sm:$0xff]
      %v7891 = vld [vmem:[%s315 + $0x8] sm:$0xff]
      %v7892 = vld [vmem:[%s315 + $0x10] sm:$0xff]
      %v7893 = vld [vmem:[%s315 + $0x18] sm:$0xff]
      %v7894 = vld [vmem:[%s315 + $0x20] sm:$0xff]
      %v7895 = vld [vmem:[%s315 + $0x28] sm:$0xff]
      %v7896 = vld [vmem:[%s315 + $0x30] sm:$0xff]
      %v7897 = vld [vmem:[%s315 + $0x38] sm:$0xff]
      %v7898 = vld [vmem:[%s315 + $0x40] sm:$0xff]
      %v7899 = vld [vmem:[%s315 + $0x48] sm:$0xff]
      %v7900 = vld [vmem:[%s315 + $0x50] sm:$0xff]
      %v7901 = vld [vmem:[%s315 + $0x58] sm:$0xff]
      %v7902 = vld [vmem:[%s315 + $0x60] sm:$0xff]
      %v7903 = vld [vmem:[%s315 + $0x68] sm:$0xff]
      %v7904 = vld [vmem:[%s315 + $0x70] sm:$0xff]
      %v7905 = vld [vmem:[%s315 + $0x78] sm:$0xff]
      %v7906 = vld [vmem:[%s315 + $0x80] sm:$0xff]
      %v7907 = vld [vmem:[%s315 + $0x88] sm:$0xff]
      %v7908 = vld [vmem:[%s315 + $0x90] sm:$0xff]
      %v7909 = vld [vmem:[%s315 + $0x98] sm:$0xff]
      %v7910 = vld [vmem:[%s315 + $0xa0] sm:$0xff]
      %v7911 = vld [vmem:[%s315 + $0xa8] sm:$0xff]
      %v7912 = vld [vmem:[%s315 + $0xb0] sm:$0xff]
      %v7913 = vld [vmem:[%s315 + $0xb8] sm:$0xff]
      %v7914 = vld [vmem:[%s315 + $0xc0] sm:$0xff]
      %v7915 = vld [vmem:[%s315 + $0xc8] sm:$0xff]
      %v7916 = vld [vmem:[%s315 + $0xd0] sm:$0xff]
      %v7917 = vld [vmem:[%s315 + $0xd8] sm:$0xff]
      %v7918 = vld [vmem:[%s315 + $0xe0] sm:$0xff]
      %v7919 = vld [vmem:[%s315 + $0xe8] sm:$0xff]
      %v7920 = vld [vmem:[%s315 + $0xf0] sm:$0xff]
      %v7921 = vld [vmem:[%s315 + $0xf8] sm:$0xff]
      %7923 = vset.pattern.permute.xlu0 0
      %7924 = vperm.xlu0 %7923, %v7890
      %v7925 = vpop.permute.xlu0 %7924
      %7928 = vset.pattern.permute.xlu0 0
      %7929 = vperm.xlu0 %7928, %v7891
      %v7930 = vpop.permute.xlu0 %7929
      %7933 = vset.pattern.permute.xlu0 0
      %7934 = vperm.xlu0 %7933, %v7892
      %v7935 = vpop.permute.xlu0 %7934
      %7938 = vset.pattern.permute.xlu0 0
      %7939 = vperm.xlu0 %7938, %v7893
      %v7940 = vpop.permute.xlu0 %7939
      %7943 = vset.pattern.permute.xlu0 0
      %7944 = vperm.xlu0 %7943, %v7894
      %v7945 = vpop.permute.xlu0 %7944
      %7948 = vset.pattern.permute.xlu0 0
      %7949 = vperm.xlu0 %7948, %v7895
      %v7950 = vpop.permute.xlu0 %7949
      %7953 = vset.pattern.permute.xlu0 0
      %7954 = vperm.xlu0 %7953, %v7896
      %v7955 = vpop.permute.xlu0 %7954
      %7958 = vset.pattern.permute.xlu0 0
      %7959 = vperm.xlu0 %7958, %v7897
      %v7960 = vpop.permute.xlu0 %7959
      %7963 = vset.pattern.permute.xlu0 0
      %7964 = vperm.xlu0 %7963, %v7898
      %v7965 = vpop.permute.xlu0 %7964
      %7968 = vset.pattern.permute.xlu0 0
      %7969 = vperm.xlu0 %7968, %v7899
      %v7970 = vpop.permute.xlu0 %7969
      %7973 = vset.pattern.permute.xlu0 0
      %7974 = vperm.xlu0 %7973, %v7900
      %v7975 = vpop.permute.xlu0 %7974
      %7978 = vset.pattern.permute.xlu0 0
      %7979 = vperm.xlu0 %7978, %v7901
      %v7980 = vpop.permute.xlu0 %7979
      %7983 = vset.pattern.permute.xlu0 0
      %7984 = vperm.xlu0 %7983, %v7902
      %v7985 = vpop.permute.xlu0 %7984
      %7988 = vset.pattern.permute.xlu0 0
      %7989 = vperm.xlu0 %7988, %v7903
      %v7990 = vpop.permute.xlu0 %7989
      %7993 = vset.pattern.permute.xlu0 0
      %7994 = vperm.xlu0 %7993, %v7904
      %v7995 = vpop.permute.xlu0 %7994
      %7998 = vset.pattern.permute.xlu0 0
      %7999 = vperm.xlu0 %7998, %v7905
      %v8000 = vpop.permute.xlu0 %7999
      %8003 = vset.pattern.permute.xlu0 0
      %8004 = vperm.xlu0 %8003, %v7906
      %v8005 = vpop.permute.xlu0 %8004
      %8008 = vset.pattern.permute.xlu0 0
      %8009 = vperm.xlu0 %8008, %v7907
      %v8010 = vpop.permute.xlu0 %8009
      %8013 = vset.pattern.permute.xlu0 0
      %8014 = vperm.xlu0 %8013, %v7908
      %v8015 = vpop.permute.xlu0 %8014
      %8018 = vset.pattern.permute.xlu0 0
      %8019 = vperm.xlu0 %8018, %v7909
      %v8020 = vpop.permute.xlu0 %8019
      %8023 = vset.pattern.permute.xlu0 0
      %8024 = vperm.xlu0 %8023, %v7910
      %v8025 = vpop.permute.xlu0 %8024
      %8028 = vset.pattern.permute.xlu0 0
      %8029 = vperm.xlu0 %8028, %v7911
      %v8030 = vpop.permute.xlu0 %8029
      %8033 = vset.pattern.permute.xlu0 0
      %8034 = vperm.xlu0 %8033, %v7912
      %v8035 = vpop.permute.xlu0 %8034
      %8038 = vset.pattern.permute.xlu0 0
      %8039 = vperm.xlu0 %8038, %v7913
      %v8040 = vpop.permute.xlu0 %8039
      %8043 = vset.pattern.permute.xlu0 0
      %8044 = vperm.xlu0 %8043, %v7914
      %v8045 = vpop.permute.xlu0 %8044
      %8048 = vset.pattern.permute.xlu0 0
      %8049 = vperm.xlu0 %8048, %v7915
      %v8050 = vpop.permute.xlu0 %8049
      %8053 = vset.pattern.permute.xlu0 0
      %8054 = vperm.xlu0 %8053, %v7916
      %v8055 = vpop.permute.xlu0 %8054
      %8058 = vset.pattern.permute.xlu0 0
      %8059 = vperm.xlu0 %8058, %v7917
      %v8060 = vpop.permute.xlu0 %8059
      %8063 = vset.pattern.permute.xlu0 0
      %8064 = vperm.xlu0 %8063, %v7918
      %v8065 = vpop.permute.xlu0 %8064
      %8068 = vset.pattern.permute.xlu0 0
      %8069 = vperm.xlu0 %8068, %v7919
      %v8070 = vpop.permute.xlu0 %8069
      %8073 = vset.pattern.permute.xlu0 0
      %8074 = vperm.xlu0 %8073, %v7920
      %v8075 = vpop.permute.xlu0 %8074
      %8078 = vset.pattern.permute.xlu0 0
      %8079 = vperm.xlu0 %8078, %v7921
      %v8080 = vpop.permute.xlu0 %8079
      %v8082 = vmul.f32 %v7764, %v7925
      %v8083 = vmul.f32 %v7767, %v7930
      %v8084 = vmul.f32 %v7772, %v7935
      %v8085 = vmul.f32 %v7775, %v7940
      %v8086 = vmul.f32 %v7780, %v7945
      %v8087 = vmul.f32 %v7783, %v7950
      %v8088 = vmul.f32 %v7788, %v7955
      %v8089 = vmul.f32 %v7791, %v7960
      %v8090 = vmul.f32 %v7796, %v7965
      %v8091 = vmul.f32 %v7799, %v7970
      %v8092 = vmul.f32 %v7804, %v7975
      %v8093 = vmul.f32 %v7807, %v7980
      %v8094 = vmul.f32 %v7812, %v7985
      %v8095 = vmul.f32 %v7815, %v7990
      %v8096 = vmul.f32 %v7820, %v7995
      %v8097 = vmul.f32 %v7823, %v8000
      %v8098 = vmul.f32 %v7828, %v8005
      %v8099 = vmul.f32 %v7831, %v8010
      %v8100 = vmul.f32 %v7836, %v8015
      %v8101 = vmul.f32 %v7839, %v8020
      %v8102 = vmul.f32 %v7844, %v8025
      %v8103 = vmul.f32 %v7847, %v8030
      %v8104 = vmul.f32 %v7852, %v8035
      %v8105 = vmul.f32 %v7855, %v8040
      %v8106 = vmul.f32 %v7860, %v8045
      %v8107 = vmul.f32 %v7863, %v8050
      %v8108 = vmul.f32 %v7868, %v8055
      %v8109 = vmul.f32 %v7871, %v8060
      %v8110 = vmul.f32 %v7876, %v8065
      %v8111 = vmul.f32 %v7879, %v8070
      %v8112 = vmul.f32 %v7884, %v8075
      %v8113 = vmul.f32 %v7887, %v8080
      %v8114 = vld [vmem:[%s321] sm:$0xff]
      %v8115 = vld [vmem:[%s321 + $0x8] sm:$0xff]
      %v8116 = vld [vmem:[%s321 + $0x10] sm:$0xff]
      %v8117 = vld [vmem:[%s321 + $0x18] sm:$0xff]
      %v8118 = vld [vmem:[%s321 + $0x20] sm:$0xff]
      %v8119 = vld [vmem:[%s321 + $0x28] sm:$0xff]
      %v8120 = vld [vmem:[%s321 + $0x30] sm:$0xff]
      %v8121 = vld [vmem:[%s321 + $0x38] sm:$0xff]
      %v8122 = vld [vmem:[%s321 + $0x40] sm:$0xff]
      %v8123 = vld [vmem:[%s321 + $0x48] sm:$0xff]
      %v8124 = vld [vmem:[%s321 + $0x50] sm:$0xff]
      %v8125 = vld [vmem:[%s321 + $0x58] sm:$0xff]
      %v8126 = vld [vmem:[%s321 + $0x60] sm:$0xff]
      %v8127 = vld [vmem:[%s321 + $0x68] sm:$0xff]
      %v8128 = vld [vmem:[%s321 + $0x70] sm:$0xff]
      %v8129 = vld [vmem:[%s321 + $0x78] sm:$0xff]
      %v8130 = vld [vmem:[%s321 + $0x80] sm:$0xff]
      %v8131 = vld [vmem:[%s321 + $0x88] sm:$0xff]
      %v8132 = vld [vmem:[%s321 + $0x90] sm:$0xff]
      %v8133 = vld [vmem:[%s321 + $0x98] sm:$0xff]
      %v8134 = vld [vmem:[%s321 + $0xa0] sm:$0xff]
      %v8135 = vld [vmem:[%s321 + $0xa8] sm:$0xff]
      %v8136 = vld [vmem:[%s321 + $0xb0] sm:$0xff]
      %v8137 = vld [vmem:[%s321 + $0xb8] sm:$0xff]
      %v8138 = vld [vmem:[%s321 + $0xc0] sm:$0xff]
      %v8139 = vld [vmem:[%s321 + $0xc8] sm:$0xff]
      %v8140 = vld [vmem:[%s321 + $0xd0] sm:$0xff]
      %v8141 = vld [vmem:[%s321 + $0xd8] sm:$0xff]
      %v8142 = vld [vmem:[%s321 + $0xe0] sm:$0xff]
      %v8143 = vld [vmem:[%s321 + $0xe8] sm:$0xff]
      %v8144 = vld [vmem:[%s321 + $0xf0] sm:$0xff]
      %v8145 = vld [vmem:[%s321 + $0xf8] sm:$0xff]
      %8147 = vset.pattern.permute.xlu0 0
      %8148 = vperm.xlu0 %8147, %v8114
      %v8149 = vpop.permute.xlu0 %8148
      %8152 = vset.pattern.permute.xlu0 0
      %8153 = vperm.xlu0 %8152, %v8115
      %v8154 = vpop.permute.xlu0 %8153
      %8157 = vset.pattern.permute.xlu0 0
      %8158 = vperm.xlu0 %8157, %v8116
      %v8159 = vpop.permute.xlu0 %8158
      %8162 = vset.pattern.permute.xlu0 0
      %8163 = vperm.xlu0 %8162, %v8117
      %v8164 = vpop.permute.xlu0 %8163
      %8167 = vset.pattern.permute.xlu0 0
      %8168 = vperm.xlu0 %8167, %v8118
      %v8169 = vpop.permute.xlu0 %8168
      %8172 = vset.pattern.permute.xlu0 0
      %8173 = vperm.xlu0 %8172, %v8119
      %v8174 = vpop.permute.xlu0 %8173
      %8177 = vset.pattern.permute.xlu0 0
      %8178 = vperm.xlu0 %8177, %v8120
      %v8179 = vpop.permute.xlu0 %8178
      %8182 = vset.pattern.permute.xlu0 0
      %8183 = vperm.xlu0 %8182, %v8121
      %v8184 = vpop.permute.xlu0 %8183
      %8187 = vset.pattern.permute.xlu0 0
      %8188 = vperm.xlu0 %8187, %v8122
      %v8189 = vpop.permute.xlu0 %8188
      %8192 = vset.pattern.permute.xlu0 0
      %8193 = vperm.xlu0 %8192, %v8123
      %v8194 = vpop.permute.xlu0 %8193
      %8197 = vset.pattern.permute.xlu0 0
      %8198 = vperm.xlu0 %8197, %v8124
      %v8199 = vpop.permute.xlu0 %8198
      %8202 = vset.pattern.permute.xlu0 0
      %8203 = vperm.xlu0 %8202, %v8125
      %v8204 = vpop.permute.xlu0 %8203
      %8207 = vset.pattern.permute.xlu0 0
      %8208 = vperm.xlu0 %8207, %v8126
      %v8209 = vpop.permute.xlu0 %8208
      %8212 = vset.pattern.permute.xlu0 0
      %8213 = vperm.xlu0 %8212, %v8127
      %v8214 = vpop.permute.xlu0 %8213
      %8217 = vset.pattern.permute.xlu0 0
      %8218 = vperm.xlu0 %8217, %v8128
      %v8219 = vpop.permute.xlu0 %8218
      %8222 = vset.pattern.permute.xlu0 0
      %8223 = vperm.xlu0 %8222, %v8129
      %v8224 = vpop.permute.xlu0 %8223
      %8227 = vset.pattern.permute.xlu0 0
      %8228 = vperm.xlu0 %8227, %v8130
      %v8229 = vpop.permute.xlu0 %8228
      %8232 = vset.pattern.permute.xlu0 0
      %8233 = vperm.xlu0 %8232, %v8131
      %v8234 = vpop.permute.xlu0 %8233
      %8237 = vset.pattern.permute.xlu0 0
      %8238 = vperm.xlu0 %8237, %v8132
      %v8239 = vpop.permute.xlu0 %8238
      %8242 = vset.pattern.permute.xlu0 0
      %8243 = vperm.xlu0 %8242, %v8133
      %v8244 = vpop.permute.xlu0 %8243
      %8247 = vset.pattern.permute.xlu0 0
      %8248 = vperm.xlu0 %8247, %v8134
      %v8249 = vpop.permute.xlu0 %8248
      %8252 = vset.pattern.permute.xlu0 0
      %8253 = vperm.xlu0 %8252, %v8135
      %v8254 = vpop.permute.xlu0 %8253
      %8257 = vset.pattern.permute.xlu0 0
      %8258 = vperm.xlu0 %8257, %v8136
      %v8259 = vpop.permute.xlu0 %8258
      %8262 = vset.pattern.permute.xlu0 0
      %8263 = vperm.xlu0 %8262, %v8137
      %v8264 = vpop.permute.xlu0 %8263
      %8267 = vset.pattern.permute.xlu0 0
      %8268 = vperm.xlu0 %8267, %v8138
      %v8269 = vpop.permute.xlu0 %8268
      %8272 = vset.pattern.permute.xlu0 0
      %8273 = vperm.xlu0 %8272, %v8139
      %v8274 = vpop.permute.xlu0 %8273
      %8277 = vset.pattern.permute.xlu0 0
      %8278 = vperm.xlu0 %8277, %v8140
      %v8279 = vpop.permute.xlu0 %8278
      %8282 = vset.pattern.permute.xlu0 0
      %8283 = vperm.xlu0 %8282, %v8141
      %v8284 = vpop.permute.xlu0 %8283
      %8287 = vset.pattern.permute.xlu0 0
      %8288 = vperm.xlu0 %8287, %v8142
      %v8289 = vpop.permute.xlu0 %8288
      %8292 = vset.pattern.permute.xlu0 0
      %8293 = vperm.xlu0 %8292, %v8143
      %v8294 = vpop.permute.xlu0 %8293
      %8297 = vset.pattern.permute.xlu0 0
      %8298 = vperm.xlu0 %8297, %v8144
      %v8299 = vpop.permute.xlu0 %8298
      %8302 = vset.pattern.permute.xlu0 0
      %8303 = vperm.xlu0 %8302, %v8145
      %v8304 = vpop.permute.xlu0 %8303
      %v8306 = vadd.f32 %v8082, %v8149
      %v8307 = vadd.f32 %v8083, %v8154
      %v8308 = vadd.f32 %v8084, %v8159
      %v8309 = vadd.f32 %v8085, %v8164
      %v8310 = vadd.f32 %v8086, %v8169
      %v8311 = vadd.f32 %v8087, %v8174
      %v8312 = vadd.f32 %v8088, %v8179
      %v8313 = vadd.f32 %v8089, %v8184
      %v8314 = vadd.f32 %v8090, %v8189
      %v8315 = vadd.f32 %v8091, %v8194
      %v8316 = vadd.f32 %v8092, %v8199
      %v8317 = vadd.f32 %v8093, %v8204
      %v8318 = vadd.f32 %v8094, %v8209
      %v8319 = vadd.f32 %v8095, %v8214
      %v8320 = vadd.f32 %v8096, %v8219
      %v8321 = vadd.f32 %v8097, %v8224
      %v8322 = vadd.f32 %v8098, %v8229
      %v8323 = vadd.f32 %v8099, %v8234
      %v8324 = vadd.f32 %v8100, %v8239
      %v8325 = vadd.f32 %v8101, %v8244
      %v8326 = vadd.f32 %v8102, %v8249
      %v8327 = vadd.f32 %v8103, %v8254
      %v8328 = vadd.f32 %v8104, %v8259
      %v8329 = vadd.f32 %v8105, %v8264
      %v8330 = vadd.f32 %v8106, %v8269
      %v8331 = vadd.f32 %v8107, %v8274
      %v8332 = vadd.f32 %v8108, %v8279
      %v8333 = vadd.f32 %v8109, %v8284
      %v8334 = vadd.f32 %v8110, %v8289
      %v8335 = vadd.f32 %v8111, %v8294
      %v8336 = vadd.f32 %v8112, %v8299
      %v8337 = vadd.f32 %v8113, %v8304
      %8338 = vst [vmem:[%s327] sm:$0xff] %v8306
      %8339 = vst [vmem:[%s327 + $0x8] sm:$0xff] %v8307
      %8340 = vst [vmem:[%s327 + $0x10] sm:$0xff] %v8308
      %8341 = vst [vmem:[%s327 + $0x18] sm:$0xff] %v8309
      %8342 = vst [vmem:[%s327 + $0x20] sm:$0xff] %v8310
      %8343 = vst [vmem:[%s327 + $0x28] sm:$0xff] %v8311
      %8344 = vst [vmem:[%s327 + $0x30] sm:$0xff] %v8312
      %8345 = vst [vmem:[%s327 + $0x38] sm:$0xff] %v8313
      %8346 = vst [vmem:[%s327 + $0x40] sm:$0xff] %v8314
      %8347 = vst [vmem:[%s327 + $0x48] sm:$0xff] %v8315
      %8348 = vst [vmem:[%s327 + $0x50] sm:$0xff] %v8316
      %8349 = vst [vmem:[%s327 + $0x58] sm:$0xff] %v8317
      %8350 = vst [vmem:[%s327 + $0x60] sm:$0xff] %v8318
      %8351 = vst [vmem:[%s327 + $0x68] sm:$0xff] %v8319
      %8352 = vst [vmem:[%s327 + $0x70] sm:$0xff] %v8320
      %8353 = vst [vmem:[%s327 + $0x78] sm:$0xff] %v8321
      %8354 = vst [vmem:[%s327 + $0x80] sm:$0xff] %v8322
      %8355 = vst [vmem:[%s327 + $0x88] sm:$0xff] %v8323
      %8356 = vst [vmem:[%s327 + $0x90] sm:$0xff] %v8324
      %8357 = vst [vmem:[%s327 + $0x98] sm:$0xff] %v8325
      %8358 = vst [vmem:[%s327 + $0xa0] sm:$0xff] %v8326
      %8359 = vst [vmem:[%s327 + $0xa8] sm:$0xff] %v8327
      %8360 = vst [vmem:[%s327 + $0xb0] sm:$0xff] %v8328
      %8361 = vst [vmem:[%s327 + $0xb8] sm:$0xff] %v8329
      %8362 = vst [vmem:[%s327 + $0xc0] sm:$0xff] %v8330
      %8363 = vst [vmem:[%s327 + $0xc8] sm:$0xff] %v8331
      %8364 = vst [vmem:[%s327 + $0xd0] sm:$0xff] %v8332
      %8365 = vst [vmem:[%s327 + $0xd8] sm:$0xff] %v8333
      %8366 = vst [vmem:[%s327 + $0xe0] sm:$0xff] %v8334
      %8367 = vst [vmem:[%s327 + $0xe8] sm:$0xff] %v8335
      %8368 = vst [vmem:[%s327 + $0xf0] sm:$0xff] %v8336
      %8369 = vst [vmem:[%s327 + $0xf8] sm:$0xff] %v8337
      %s8370 = smul.u32 32, %s18
      %p8371 = scmp.lt.s32.totalorder %s8370, 127
      %s8372 = scalar_select %p8371, %s8370, 127
      %s8373 = smul.addr %s8372, 8
      %s8374 = scalar_lea.vmem %s7, %s8373
      // Predicated region
      $region49: #{fused_forward.1} parent=47 // pred_check
        %p8375 = pneg %p198
      $region50: #{fused_forward.1} parent=47 // pred_check_branch
        %8377 = sbr.rel (%p8375) target = $region52
      $region51: #{fused_forward.1} parent=47 // pred_region
        %s8378 = smul.u32 32, %s18
      $region52: #{fused_forward.1} parent=47 // pred_fallthru
        _
    $region48: #{fused_forward.1} parent=5 // pred_fallthru
      _
    %p8379 = scmp.le.s32.totalorder 2, %s13
    // Predicated region
    $region53: #{fused_forward.1} parent=5 // pred_check
      %p8380 = pneg %p8379
    $region54: #{fused_forward.1} parent=5 // pred_check_branch
      %8382 = sbr.rel (%p8380) target = $region56
    $region55: #{fused_forward.1} parent=5 // pred_region
      %s8383 = ssub.s32 %s13, 2
      // Predicated region
      $region57: #{fused_forward.1} parent=55 // pred_check
        %p8384 = pneg %p204
      $region58: #{fused_forward.1} parent=55 // pred_check_branch
        %8386 = sbr.rel (%p8384) target = $region60
      $region59: #{fused_forward.1} parent=55 // pred_region
        %s8387 = smul.u32 32, %s19
        %p8388 = scmp.lt.s32.totalorder %s8387, 127
        %s8389 = scalar_select %p8388, %s8387, 127
        %s8390 = smul.addr %s8389, 8
        %s8391 = scalar_lea.vmem %s7, %s8390
      $region60: #{fused_forward.1} parent=55 // pred_fallthru
        _
    $region56: #{fused_forward.1} parent=5 // pred_fallthru
      _
  $region6: #{fused_forward.1} parent=0 // loop_footer
    %s17 = sadd.s32 1, %s13
  $region7: #{fused_forward.1} parent=0 // loop_footer_branch
    %12 = sbr.rel target = $region3
  $region8: #{fused_forward.1} parent=0 // loop_exit
    _

</llo_original>
